<compile_context>
chip_gen: v7x
topology: tpu7x:2x2x1
jax: 0.10.0
libtpu: 0.0.40
codegen_flags: <defaults>
</compile_context>

<pallas_src>
import functools

import jax
import jax.numpy as jnp
from jax import lax
from jax.experimental import pallas as pl

# Make the pure-JAX reference (and in-kernel dots) use exact f32 matmuls so the
# numerical comparison is meaningful.
jax.config.update("jax_default_matmul_precision", "highest")


def _lstm_step(x, h, c, w_ih, w_hh, b, hidden):
    """One PyTorch-ordered (i, f, g, o) LSTM cell step. All f32, lane-dense gates."""
    gates = (jnp.dot(x, w_ih, preferred_element_type=jnp.float32)
             + jnp.dot(h, w_hh, preferred_element_type=jnp.float32)
             + b)                                             # (B, 4H)
    i = jax.nn.sigmoid(gates[:, 0 * hidden:1 * hidden])
    f = jax.nn.sigmoid(gates[:, 1 * hidden:2 * hidden])
    g = jnp.tanh(gates[:, 2 * hidden:3 * hidden])
    o = jax.nn.sigmoid(gates[:, 3 * hidden:4 * hidden])
    c_new = f * c + i * g
    h_new = o * jnp.tanh(c_new)
    return h_new, c_new


def _seq2seq_kernel(prec_window,
                    src1_ref, src2_ref,
                    epre_w_ref, epre_b_ref,
                    e_wih_ref, e_whh_ref, e_b_ref,
                    efc_w_ref, efc_b_ref,
                    dpre_wc_ref, dpre_wp_ref, dpre_b_ref,
                    d_wih_ref, d_whh_ref, d_b_ref,
                    dfc_w_ref, dfc_b_ref,
                    out_ref):
    t_src, batch, _ = src1_ref.shape
    hidden = e_whh_ref.shape[0]
    trg_len = out_ref.shape[0] - 1
    prec_idx = (-prec_window) % t_src        # PyTorch index [:, -prec_window, :]

    # ----- encoder weights -----
    epre_w = epre_w_ref[...]
    epre_b = epre_b_ref[...]
    e_wih = e_wih_ref[...]
    e_whh = e_whh_ref[...]
    e_b = e_b_ref[...]
    efc_w = efc_w_ref[...]
    efc_b = efc_b_ref[...]

    def enc_body(t, carry):
        h, c = carry
        x = src1_ref[t]                                          # (B, Fin)
        x = jnp.maximum(
            jnp.dot(x, epre_w, preferred_element_type=jnp.float32) + epre_b, 0.0)
        return _lstm_step(x, h, c, e_wih, e_whh, e_b, hidden)

    h0 = jnp.zeros((batch, hidden), jnp.float32)
    c0 = jnp.zeros((batch, hidden), jnp.float32)
    # Run encoder up to (and including) the step whose output is prepended,
    # then to the end of the source sequence.
    h_prec, c_prec = lax.fori_loop(0, prec_idx + 1, enc_body, (h0, c0))
    h_last, c_last = lax.fori_loop(prec_idx + 1, t_src, enc_body, (h_prec, c_prec))

    # encoder_outputs[:, -prec_window, :] -> first row of the result
    out_ref[0] = (jnp.dot(h_prec, efc_w, preferred_element_type=jnp.float32)
                  + efc_b).astype(out_ref.dtype)
    # encoder_outputs[:, -1, :] -> first decoder input
    cur0 = jnp.dot(h_last, efc_w, preferred_element_type=jnp.float32) + efc_b

    # ----- decoder weights -----
    dpre_wc = dpre_wc_ref[...]       # (out, out+1)  : weight applied to previous output
    dpre_wp = dpre_wp_ref[...]       # (1,   out+1)  : weight applied to src2 feature
    dpre_b = dpre_b_ref[...]
    d_wih = d_wih_ref[...]
    d_whh = d_whh_ref[...]
    d_b = d_b_ref[...]
    dfc_w = dfc_w_ref[...]
    dfc_b = dfc_b_ref[...]

    def dec_body(t, carry):
        cur, h, c = carry
        p = src2_ref[t]                                          # (B, 1)
        # pre_fc(cat([cur, p], dim=2)) == cur @ W_cur + p @ W_p + b
        x = jnp.maximum(
            jnp.dot(cur, dpre_wc, preferred_element_type=jnp.float32)
            + jnp.dot(p, dpre_wp, preferred_element_type=jnp.float32)
            + dpre_b, 0.0)                                       # (B, out+1)
        h, c = _lstm_step(x, h, c, d_wih, d_whh, d_b, hidden)
        y = jnp.dot(h, dfc_w, preferred_element_type=jnp.float32) + dfc_b
        out_ref[t + 1] = y.astype(out_ref.dtype)
        return (y, h, c)

    lax.fori_loop(0, trg_len, dec_body, (cur0, h_last, c_last))


def general_seq2seq_pallas(src1, src2, params, *, forecast_length, prec_window=0):
    """src1: (B, T_src, input_size); src2: (B, >=forecast_length, 1); params: PyTorch-layout weights."""
    B, T_src, _ = src1.shape
    out_dim = params["efc_w"].shape[0]

    f32 = jnp.float32
    # Time-major layout so the per-step dynamic index hits the leading ref axis.
    src1_t = jnp.transpose(src1, (1, 0, 2)).astype(f32)                       # (T_src, B, Fin)
    src2_t = jnp.transpose(src2[:, :forecast_length, :], (1, 0, 2)).astype(f32)  # (T_trg, B, 1)

    # Encoder params (transposed so kernel matmuls are x @ W, lane-dense outputs).
    epre_w = params["epre_w"].T.astype(f32)
    epre_b = params["epre_b"][None, :].astype(f32)
    e_wih = params["e_wih"].T.astype(f32)              # (Fin, 4H)
    e_whh = params["e_whh"].T.astype(f32)              # (H,   4H)
    e_b = (params["e_bih"] + params["e_bhh"])[None, :].astype(f32)
    efc_w = params["efc_w"].T.astype(f32)              # (H, out)
    efc_b = params["efc_b"][None, :].astype(f32)

    # Decoder params; split pre_fc weight so the kernel never concatenates lanes.
    dpre_w_t = params["dpre_w"].T.astype(f32)          # (out+1, out+1)
    dpre_wc = dpre_w_t[:out_dim, :]
    dpre_wp = dpre_w_t[out_dim:, :]
    dpre_b = params["dpre_b"][None, :].astype(f32)
    d_wih = params["d_wih"].T.astype(f32)              # (out+1, 4H)
    d_whh = params["d_whh"].T.astype(f32)              # (H,     4H)
    d_b = (params["d_bih"] + params["d_bhh"])[None, :].astype(f32)
    dfc_w = params["dfc_w"].T.astype(f32)
    dfc_b = params["dfc_b"][None, :].astype(f32)

    out_t = pl.pallas_call(
        functools.partial(_seq2seq_kernel, prec_window),
        out_shape=jax.ShapeDtypeStruct((forecast_length + 1, B, out_dim), f32),
    )(src1_t, src2_t,
      epre_w, epre_b, e_wih, e_whh, e_b, efc_w, efc_b,
      dpre_wc, dpre_wp, dpre_b, d_wih, d_whh, d_b, dfc_w, dfc_b)

    return jnp.transpose(out_t, (1, 0, 2))             # (B, forecast_length+1, out)


# ----------------------------- pure-JAX reference -----------------------------

def _lstm_cell_ref(x, h, c, w_ih, w_hh, b_ih, b_hh):
    gates = x @ w_ih.T + b_ih + h @ w_hh.T + b_hh
    i, f, g, o = jnp.split(gates, 4, axis=-1)
    c = jax.nn.sigmoid(f) * c + jax.nn.sigmoid(i) * jnp.tanh(g)
    h = jax.nn.sigmoid(o) * jnp.tanh(c)
    return h, c


def general_seq2seq_ref(src1, src2, params, *, forecast_length, prec_window=0):
    B, T, _ = src1.shape
    H = params["e_whh"].shape[1]
    x = jax.nn.relu(src1 @ params["epre_w"].T + params["epre_b"])
    h = jnp.zeros((B, H), jnp.float32)
    c = jnp.zeros((B, H), jnp.float32)
    enc_h = []
    for t in range(T):
        h, c = _lstm_cell_ref(x[:, t, :], h, c, params["e_wih"], params["e_whh"],
                              params["e_bih"], params["e_bhh"])
        enc_h.append(h)
    enc_h = jnp.stack(enc_h, axis=1)                                   # (B, T, H)
    enc_y = enc_h @ params["efc_w"].T + params["efc_b"]                # (B, T, out)

    outs = []
    cur = enc_y[:, -1, :]
    for t in range(forecast_length):
        p = src2[:, t, :]
        xin = jnp.concatenate([cur, p], axis=1)
        xd = jax.nn.relu(xin @ params["dpre_w"].T + params["dpre_b"])
        h, c = _lstm_cell_ref(xd, h, c, params["d_wih"], params["d_whh"],
                              params["d_bih"], params["d_bhh"])
        y = h @ params["dfc_w"].T + params["dfc_b"]
        outs.append(y)
        cur = y
    outs = jnp.stack(outs, axis=1)                                     # (B, trg_len, out)
    prec = enc_y[:, -prec_window, :][:, None, :]                       # -0 == index 0
    return jnp.concatenate([prec, outs], axis=1)


if __name__ == "__main__":
    B = 2
    T_src = 8
    input_size = 4
    hidden_size = 32           # 4*H = 128 -> gate projections exactly fill the 128-lane axis
    output_size = 1
    forecast_length = 8
    prec_window = 0
    dec_in = output_size + 1

    key = jax.random.PRNGKey(0)
    keys = jax.random.split(key, 18)

    def unif(k, shape, fan_in):
        bound = 1.0 / float(fan_in) ** 0.5
        return jax.random.uniform(k, shape, jnp.float32, -bound, bound)

    params = {
        "epre_w": unif(keys[0], (input_size, input_size), input_size),
        "epre_b": unif(keys[1], (input_size,), input_size),
        "e_wih": unif(keys[2], (4 * hidden_size, input_size), hidden_size),
        "e_whh": unif(keys[3], (4 * hidden_size, hidden_size), hidden_size),
        "e_bih": unif(keys[4], (4 * hidden_size,), hidden_size),
        "e_bhh": unif(keys[5], (4 * hidden_size,), hidden_size),
        "efc_w": unif(keys[6], (output_size, hidden_size), hidden_size),
        "efc_b": unif(keys[7], (output_size,), hidden_size),
        "dpre_w": unif(keys[8], (dec_in, dec_in), dec_in),
        "dpre_b": unif(keys[9], (dec_in,), dec_in),
        "d_wih": unif(keys[10], (4 * hidden_size, dec_in), hidden_size),
        "d_whh": unif(keys[11], (4 * hidden_size, hidden_size), hidden_size),
        "d_bih": unif(keys[12], (4 * hidden_size,), hidden_size),
        "d_bhh": unif(keys[13], (4 * hidden_size,), hidden_size),
        "dfc_w": unif(keys[14], (output_size, hidden_size), hidden_size),
        "dfc_b": unif(keys[15], (output_size,), hidden_size),
    }

    src1 = jax.random.normal(keys[16], (B, T_src, input_size), jnp.float32)
    src2 = jax.random.normal(keys[17], (B, forecast_length, 1), jnp.float32)

    out = general_seq2seq_pallas(src1, src2, params,
                                 forecast_length=forecast_length,
                                 prec_window=prec_window)
    out = jax.block_until_ready(out)

    ref = general_seq2seq_ref(src1, src2, params,
                              forecast_length=forecast_length,
                              prec_window=prec_window)

    assert out.shape == (B, forecast_length + 1, output_size)
    max_diff = float(jnp.max(jnp.abs(out - ref)))
    assert bool(jnp.allclose(out, ref, atol=2e-3, rtol=2e-3)), f"max abs diff {max_diff}"

    print("KERNEL_OK")
</pallas_src>

<mosaic_0001>
module attributes {stable_mosaic.version = 11 : i64} {
  func.func @_seq2seq_kernel(%arg0: memref<8x2x4xf32, #tpu.memory_space<vmem>>, %arg1: memref<8x2x1xf32, #tpu.memory_space<vmem>>, %arg2: memref<4x4xf32, #tpu.memory_space<vmem>>, %arg3: memref<1x4xf32, #tpu.memory_space<vmem>>, %arg4: memref<4x128xf32, #tpu.memory_space<vmem>>, %arg5: memref<32x128xf32, #tpu.memory_space<vmem>>, %arg6: memref<1x128xf32, #tpu.memory_space<vmem>>, %arg7: memref<32x1xf32, #tpu.memory_space<vmem>>, %arg8: memref<1x1xf32, #tpu.memory_space<vmem>>, %arg9: memref<1x2xf32, #tpu.memory_space<vmem>>, %arg10: memref<1x2xf32, #tpu.memory_space<vmem>>, %arg11: memref<1x2xf32, #tpu.memory_space<vmem>>, %arg12: memref<2x128xf32, #tpu.memory_space<vmem>>, %arg13: memref<32x128xf32, #tpu.memory_space<vmem>>, %arg14: memref<1x128xf32, #tpu.memory_space<vmem>>, %arg15: memref<32x1xf32, #tpu.memory_space<vmem>>, %arg16: memref<1x1xf32, #tpu.memory_space<vmem>>, %arg17: memref<9x2x1xf32, #tpu.memory_space<vmem>>) attributes {dimension_semantics = [], scalar_prefetch = 0 : i64, scratch_operands = 0 : i64, tpu.core_type = #tpu.core_type<tc>} {
    %c0 = arith.constant 0 : index
    %c0_0 = arith.constant 0 : index
    %0 = vector.load %arg2[%c0, %c0_0] : memref<4x4xf32, #tpu.memory_space<vmem>>, vector<4x4xf32>
    %c0_1 = arith.constant 0 : index
    %c0_2 = arith.constant 0 : index
    %1 = vector.load %arg3[%c0_1, %c0_2] : memref<1x4xf32, #tpu.memory_space<vmem>>, vector<1x4xf32>
    %c0_3 = arith.constant 0 : index
    %c0_4 = arith.constant 0 : index
    %2 = vector.load %arg4[%c0_3, %c0_4] : memref<4x128xf32, #tpu.memory_space<vmem>>, vector<4x128xf32>
    %c0_5 = arith.constant 0 : index
    %c0_6 = arith.constant 0 : index
    %3 = vector.load %arg5[%c0_5, %c0_6] : memref<32x128xf32, #tpu.memory_space<vmem>>, vector<32x128xf32>
    %c0_7 = arith.constant 0 : index
    %c0_8 = arith.constant 0 : index
    %4 = vector.load %arg6[%c0_7, %c0_8] : memref<1x128xf32, #tpu.memory_space<vmem>>, vector<1x128xf32>
    %c0_9 = arith.constant 0 : index
    %c0_10 = arith.constant 0 : index
    %5 = vector.load %arg7[%c0_9, %c0_10] : memref<32x1xf32, #tpu.memory_space<vmem>>, vector<32x1xf32>
    %c0_11 = arith.constant 0 : index
    %c0_12 = arith.constant 0 : index
    %6 = vector.load %arg8[%c0_11, %c0_12] : memref<1x1xf32, #tpu.memory_space<vmem>>, vector<1x1xf32>
    %cst = arith.constant 0.000000e+00 : f32
    %7 = vector.broadcast %cst : f32 to vector<2x32xf32>
    %cst_13 = arith.constant 0.000000e+00 : f32
    %8 = vector.broadcast %cst_13 : f32 to vector<2x32xf32>
    %c0_i32 = arith.constant 0 : i32
    %9 = arith.index_cast %c0_i32 : i32 to index
    %c0_14 = arith.constant 0 : index
    %c0_15 = arith.constant 0 : index
    %10 = vector.load %arg0[%9, %c0_14, %c0_15] : memref<8x2x4xf32, #tpu.memory_space<vmem>>, vector<1x2x4xf32>
    %11 = vector.shape_cast %10 : vector<1x2x4xf32> to vector<2x4xf32>
    %cst_16 = arith.constant dense<0.000000e+00> : vector<2x4xf32>
    %12 = tpu.matmul %11, %0, %cst_16 {dimension_numbers = #tpu.dot_dimension_numbers<[1], [0], [0], [1], [0, 0, 1, 1], [], []>, precision = #tpu.contract_precision<fp32>} : vector<2x4xf32>, vector<4x4xf32>, vector<2x4xf32> -> vector<2x4xf32>
    %13 = vector.broadcast %1 : vector<1x4xf32> to vector<2x4xf32>
    %14 = arith.addf %12, %13 : vector<2x4xf32>
    %cst_17 = arith.constant 0.000000e+00 : f32
    %15 = vector.broadcast %cst_17 : f32 to vector<2x4xf32>
    %16 = arith.maximumf %14, %15 : vector<2x4xf32>
    %cst_18 = arith.constant dense<0.000000e+00> : vector<2x128xf32>
    %17 = tpu.matmul %16, %2, %cst_18 {dimension_numbers = #tpu.dot_dimension_numbers<[1], [0], [0], [1], [0, 0, 1, 1], [], []>, precision = #tpu.contract_precision<fp32>} : vector<2x4xf32>, vector<4x128xf32>, vector<2x128xf32> -> vector<2x128xf32>
    %cst_19 = arith.constant dense<0.000000e+00> : vector<2x128xf32>
    %18 = tpu.matmul %7, %3, %cst_19 {dimension_numbers = #tpu.dot_dimension_numbers<[1], [0], [0], [1], [0, 0, 1, 1], [], []>, precision = #tpu.contract_precision<fp32>} : vector<2x32xf32>, vector<32x128xf32>, vector<2x128xf32> -> vector<2x128xf32>
    %19 = arith.addf %17, %18 : vector<2x128xf32>
    %20 = vector.broadcast %4 : vector<1x128xf32> to vector<2x128xf32>
    %21 = arith.addf %19, %20 : vector<2x128xf32>
    %22 = vector.extract_strided_slice %21 {offsets = [0, 0], sizes = [2, 32], strides = [1, 1]} : vector<2x128xf32> to vector<2x32xf32>
    %23 = arith.negf %22 : vector<2x32xf32>
    %24 = math.exp %23 : vector<2x32xf32>
    %cst_20 = arith.constant 1.000000e+00 : f32
    %25 = vector.broadcast %cst_20 : f32 to vector<2x32xf32>
    %26 = arith.addf %25, %24 : vector<2x32xf32>
    %27 = arith.divf %25, %26 : vector<2x32xf32>
    %28 = vector.extract_strided_slice %21 {offsets = [0, 32], sizes = [2, 32], strides = [1, 1]} : vector<2x128xf32> to vector<2x32xf32>
    %29 = arith.negf %28 : vector<2x32xf32>
    %30 = math.exp %29 : vector<2x32xf32>
    %cst_21 = arith.constant 1.000000e+00 : f32
    %31 = vector.broadcast %cst_21 : f32 to vector<2x32xf32>
    %32 = arith.addf %31, %30 : vector<2x32xf32>
    %33 = arith.divf %31, %32 : vector<2x32xf32>
    %34 = vector.extract_strided_slice %21 {offsets = [0, 64], sizes = [2, 32], strides = [1, 1]} : vector<2x128xf32> to vector<2x32xf32>
    %35 = math.tanh %34 : vector<2x32xf32>
    %36 = vector.extract_strided_slice %21 {offsets = [0, 96], sizes = [2, 32], strides = [1, 1]} : vector<2x128xf32> to vector<2x32xf32>
    %37 = arith.negf %36 : vector<2x32xf32>
    %38 = math.exp %37 : vector<2x32xf32>
    %cst_22 = arith.constant 1.000000e+00 : f32
    %39 = vector.broadcast %cst_22 : f32 to vector<2x32xf32>
    %40 = arith.addf %39, %38 : vector<2x32xf32>
    %41 = arith.divf %39, %40 : vector<2x32xf32>
    %42 = arith.mulf %33, %8 : vector<2x32xf32>
    %43 = arith.mulf %27, %35 : vector<2x32xf32>
    %44 = arith.addf %42, %43 : vector<2x32xf32>
    %45 = math.tanh %44 : vector<2x32xf32>
    %46 = arith.mulf %41, %45 : vector<2x32xf32>
    %c1_i32 = arith.constant 1 : i32
    %c1_i32_23 = arith.constant 1 : i32
    %c7_i32 = arith.constant 7 : i32
    %47 = arith.addi %c1_i32_23, %c7_i32 : i32
    %c1_i32_24 = arith.constant 1 : i32
    %48:2 = scf.for %arg18 = %c1_i32_23 to %47 step %c1_i32_24 iter_args(%arg19 = %46, %arg20 = %44) -> (vector<2x32xf32>, vector<2x32xf32>)  : i32 {
      %68 = arith.index_cast %arg18 : i32 to index
      %c0_50 = arith.constant 0 : index
      %c0_51 = arith.constant 0 : index
      %69 = vector.load %arg0[%68, %c0_50, %c0_51] : memref<8x2x4xf32, #tpu.memory_space<vmem>>, vector<1x2x4xf32>
      %70 = vector.shape_cast %69 : vector<1x2x4xf32> to vector<2x4xf32>
      %cst_52 = arith.constant dense<0.000000e+00> : vector<2x4xf32>
      %71 = tpu.matmul %70, %0, %cst_52 {dimension_numbers = #tpu.dot_dimension_numbers<[1], [0], [0], [1], [0, 0, 1, 1], [], []>, precision = #tpu.contract_precision<fp32>} : vector<2x4xf32>, vector<4x4xf32>, vector<2x4xf32> -> vector<2x4xf32>
      %72 = vector.broadcast %1 : vector<1x4xf32> to vector<2x4xf32>
      %73 = arith.addf %71, %72 : vector<2x4xf32>
      %cst_53 = arith.constant 0.000000e+00 : f32
      %74 = vector.broadcast %cst_53 : f32 to vector<2x4xf32>
      %75 = arith.maximumf %73, %74 : vector<2x4xf32>
      %cst_54 = arith.constant dense<0.000000e+00> : vector<2x128xf32>
      %76 = tpu.matmul %75, %2, %cst_54 {dimension_numbers = #tpu.dot_dimension_numbers<[1], [0], [0], [1], [0, 0, 1, 1], [], []>, precision = #tpu.contract_precision<fp32>} : vector<2x4xf32>, vector<4x128xf32>, vector<2x128xf32> -> vector<2x128xf32>
      %cst_55 = arith.constant dense<0.000000e+00> : vector<2x128xf32>
      %77 = tpu.matmul %arg19, %3, %cst_55 {dimension_numbers = #tpu.dot_dimension_numbers<[1], [0], [0], [1], [0, 0, 1, 1], [], []>, precision = #tpu.contract_precision<fp32>} : vector<2x32xf32>, vector<32x128xf32>, vector<2x128xf32> -> vector<2x128xf32>
      %78 = arith.addf %76, %77 : vector<2x128xf32>
      %79 = vector.broadcast %4 : vector<1x128xf32> to vector<2x128xf32>
      %80 = arith.addf %78, %79 : vector<2x128xf32>
      %81 = vector.extract_strided_slice %80 {offsets = [0, 0], sizes = [2, 32], strides = [1, 1]} : vector<2x128xf32> to vector<2x32xf32>
      %82 = arith.negf %81 : vector<2x32xf32>
      %83 = math.exp %82 : vector<2x32xf32>
      %cst_56 = arith.constant 1.000000e+00 : f32
      %84 = vector.broadcast %cst_56 : f32 to vector<2x32xf32>
      %85 = arith.addf %84, %83 : vector<2x32xf32>
      %86 = arith.divf %84, %85 : vector<2x32xf32>
      %87 = vector.extract_strided_slice %80 {offsets = [0, 32], sizes = [2, 32], strides = [1, 1]} : vector<2x128xf32> to vector<2x32xf32>
      %88 = arith.negf %87 : vector<2x32xf32>
      %89 = math.exp %88 : vector<2x32xf32>
      %cst_57 = arith.constant 1.000000e+00 : f32
      %90 = vector.broadcast %cst_57 : f32 to vector<2x32xf32>
      %91 = arith.addf %90, %89 : vector<2x32xf32>
      %92 = arith.divf %90, %91 : vector<2x32xf32>
      %93 = vector.extract_strided_slice %80 {offsets = [0, 64], sizes = [2, 32], strides = [1, 1]} : vector<2x128xf32> to vector<2x32xf32>
      %94 = math.tanh %93 : vector<2x32xf32>
      %95 = vector.extract_strided_slice %80 {offsets = [0, 96], sizes = [2, 32], strides = [1, 1]} : vector<2x128xf32> to vector<2x32xf32>
      %96 = arith.negf %95 : vector<2x32xf32>
      %97 = math.exp %96 : vector<2x32xf32>
      %cst_58 = arith.constant 1.000000e+00 : f32
      %98 = vector.broadcast %cst_58 : f32 to vector<2x32xf32>
      %99 = arith.addf %98, %97 : vector<2x32xf32>
      %100 = arith.divf %98, %99 : vector<2x32xf32>
      %101 = arith.mulf %92, %arg20 : vector<2x32xf32>
      %102 = arith.mulf %86, %94 : vector<2x32xf32>
      %103 = arith.addf %101, %102 : vector<2x32xf32>
      %104 = math.tanh %103 : vector<2x32xf32>
      %105 = arith.mulf %100, %104 : vector<2x32xf32>
      scf.yield %105, %103 : vector<2x32xf32>, vector<2x32xf32>
    }
    %c7_i32_25 = arith.constant 7 : i32
    %cst_26 = arith.constant dense<0.000000e+00> : vector<2x1xf32>
    %49 = tpu.matmul %46, %5, %cst_26 {dimension_numbers = #tpu.dot_dimension_numbers<[1], [0], [0], [1], [0, 0, 1, 1], [], []>, precision = #tpu.contract_precision<fp32>} : vector<2x32xf32>, vector<32x1xf32>, vector<2x1xf32> -> vector<2x1xf32>
    %50 = vector.broadcast %6 : vector<1x1xf32> to vector<2x1xf32>
    %51 = arith.addf %49, %50 : vector<2x1xf32>
    %c0_27 = arith.constant 0 : index
    %c0_28 = arith.constant 0 : index
    %c0_29 = arith.constant 0 : index
    %52 = vector.load %arg17[%c0_27, %c0_28, %c0_29] : memref<9x2x1xf32, #tpu.memory_space<vmem>>, vector<1x2x1xf32>
    %53 = vector.shape_cast %52 : vector<1x2x1xf32> to vector<2x1xf32>
    %54 = vector.shape_cast %51 : vector<2x1xf32> to vector<1x2x1xf32>
    tpu.vector_store %arg17[%c0_27, %c0_28, %c0_29], %54 {strides = array<i32>} : memref<9x2x1xf32, #tpu.memory_space<vmem>>, vector<1x2x1xf32>,
    %cst_30 = arith.constant dense<0.000000e+00> : vector<2x1xf32>
    %55 = tpu.matmul %48#0, %5, %cst_30 {dimension_numbers = #tpu.dot_dimension_numbers<[1], [0], [0], [1], [0, 0, 1, 1], [], []>, precision = #tpu.contract_precision<fp32>} : vector<2x32xf32>, vector<32x1xf32>, vector<2x1xf32> -> vector<2x1xf32>
    %56 = vector.broadcast %6 : vector<1x1xf32> to vector<2x1xf32>
    %57 = arith.addf %55, %56 : vector<2x1xf32>
    %c0_31 = arith.constant 0 : index
    %c0_32 = arith.constant 0 : index
    %58 = vector.load %arg9[%c0_31, %c0_32] : memref<1x2xf32, #tpu.memory_space<vmem>>, vector<1x2xf32>
    %c0_33 = arith.constant 0 : index
    %c0_34 = arith.constant 0 : index
    %59 = vector.load %arg10[%c0_33, %c0_34] : memref<1x2xf32, #tpu.memory_space<vmem>>, vector<1x2xf32>
    %c0_35 = arith.constant 0 : index
    %c0_36 = arith.constant 0 : index
    %60 = vector.load %arg11[%c0_35, %c0_36] : memref<1x2xf32, #tpu.memory_space<vmem>>, vector<1x2xf32>
    %c0_37 = arith.constant 0 : index
    %c0_38 = arith.constant 0 : index
    %61 = vector.load %arg12[%c0_37, %c0_38] : memref<2x128xf32, #tpu.memory_space<vmem>>, vector<2x128xf32>
    %c0_39 = arith.constant 0 : index
    %c0_40 = arith.constant 0 : index
    %62 = vector.load %arg13[%c0_39, %c0_40] : memref<32x128xf32, #tpu.memory_space<vmem>>, vector<32x128xf32>
    %c0_41 = arith.constant 0 : index
    %c0_42 = arith.constant 0 : index
    %63 = vector.load %arg14[%c0_41, %c0_42] : memref<1x128xf32, #tpu.memory_space<vmem>>, vector<1x128xf32>
    %c0_43 = arith.constant 0 : index
    %c0_44 = arith.constant 0 : index
    %64 = vector.load %arg15[%c0_43, %c0_44] : memref<32x1xf32, #tpu.memory_space<vmem>>, vector<32x1xf32>
    %c0_45 = arith.constant 0 : index
    %c0_46 = arith.constant 0 : index
    %65 = vector.load %arg16[%c0_45, %c0_46] : memref<1x1xf32, #tpu.memory_space<vmem>>, vector<1x1xf32>
    %c0_i32_47 = arith.constant 0 : i32
    %c8_i32 = arith.constant 8 : i32
    %66 = arith.addi %c0_i32_47, %c8_i32 : i32
    %c1_i32_48 = arith.constant 1 : i32
    %67:3 = scf.for %arg18 = %c0_i32_47 to %66 step %c1_i32_48 iter_args(%arg19 = %57, %arg20 = %48#0, %arg21 = %48#1) -> (vector<2x1xf32>, vector<2x32xf32>, vector<2x32xf32>)  : i32 {
      %68 = arith.index_cast %arg18 : i32 to index
      %c0_50 = arith.constant 0 : index
      %c0_51 = arith.constant 0 : index
      %69 = vector.load %arg1[%68, %c0_50, %c0_51] : memref<8x2x1xf32, #tpu.memory_space<vmem>>, vector<1x2x1xf32>
      %70 = vector.shape_cast %69 : vector<1x2x1xf32> to vector<2x1xf32>
      %cst_52 = arith.constant dense<0.000000e+00> : vector<2x2xf32>
      %71 = tpu.matmul %arg19, %58, %cst_52 {dimension_numbers = #tpu.dot_dimension_numbers<[1], [0], [0], [1], [0, 0, 1, 1], [], []>, precision = #tpu.contract_precision<fp32>} : vector<2x1xf32>, vector<1x2xf32>, vector<2x2xf32> -> vector<2x2xf32>
      %cst_53 = arith.constant dense<0.000000e+00> : vector<2x2xf32>
      %72 = tpu.matmul %70, %59, %cst_53 {dimension_numbers = #tpu.dot_dimension_numbers<[1], [0], [0], [1], [0, 0, 1, 1], [], []>, precision = #tpu.contract_precision<fp32>} : vector<2x1xf32>, vector<1x2xf32>, vector<2x2xf32> -> vector<2x2xf32>
      %73 = arith.addf %71, %72 : vector<2x2xf32>
      %74 = vector.broadcast %60 : vector<1x2xf32> to vector<2x2xf32>
      %75 = arith.addf %73, %74 : vector<2x2xf32>
      %cst_54 = arith.constant 0.000000e+00 : f32
      %76 = vector.broadcast %cst_54 : f32 to vector<2x2xf32>
      %77 = arith.maximumf %75, %76 : vector<2x2xf32>
      %cst_55 = arith.constant dense<0.000000e+00> : vector<2x128xf32>
      %78 = tpu.matmul %77, %61, %cst_55 {dimension_numbers = #tpu.dot_dimension_numbers<[1], [0], [0], [1], [0, 0, 1, 1], [], []>, precision = #tpu.contract_precision<fp32>} : vector<2x2xf32>, vector<2x128xf32>, vector<2x128xf32> -> vector<2x128xf32>
      %cst_56 = arith.constant dense<0.000000e+00> : vector<2x128xf32>
      %79 = tpu.matmul %arg20, %62, %cst_56 {dimension_numbers = #tpu.dot_dimension_numbers<[1], [0], [0], [1], [0, 0, 1, 1], [], []>, precision = #tpu.contract_precision<fp32>} : vector<2x32xf32>, vector<32x128xf32>, vector<2x128xf32> -> vector<2x128xf32>
      %80 = arith.addf %78, %79 : vector<2x128xf32>
      %81 = vector.broadcast %63 : vector<1x128xf32> to vector<2x128xf32>
      %82 = arith.addf %80, %81 : vector<2x128xf32>
      %83 = vector.extract_strided_slice %82 {offsets = [0, 0], sizes = [2, 32], strides = [1, 1]} : vector<2x128xf32> to vector<2x32xf32>
      %84 = arith.negf %83 : vector<2x32xf32>
      %85 = math.exp %84 : vector<2x32xf32>
      %cst_57 = arith.constant 1.000000e+00 : f32
      %86 = vector.broadcast %cst_57 : f32 to vector<2x32xf32>
      %87 = arith.addf %86, %85 : vector<2x32xf32>
      %88 = arith.divf %86, %87 : vector<2x32xf32>
      %89 = vector.extract_strided_slice %82 {offsets = [0, 32], sizes = [2, 32], strides = [1, 1]} : vector<2x128xf32> to vector<2x32xf32>
      %90 = arith.negf %89 : vector<2x32xf32>
      %91 = math.exp %90 : vector<2x32xf32>
      %cst_58 = arith.constant 1.000000e+00 : f32
      %92 = vector.broadcast %cst_58 : f32 to vector<2x32xf32>
      %93 = arith.addf %92, %91 : vector<2x32xf32>
      %94 = arith.divf %92, %93 : vector<2x32xf32>
      %95 = vector.extract_strided_slice %82 {offsets = [0, 64], sizes = [2, 32], strides = [1, 1]} : vector<2x128xf32> to vector<2x32xf32>
      %96 = math.tanh %95 : vector<2x32xf32>
      %97 = vector.extract_strided_slice %82 {offsets = [0, 96], sizes = [2, 32], strides = [1, 1]} : vector<2x128xf32> to vector<2x32xf32>
      %98 = arith.negf %97 : vector<2x32xf32>
      %99 = math.exp %98 : vector<2x32xf32>
      %cst_59 = arith.constant 1.000000e+00 : f32
      %100 = vector.broadcast %cst_59 : f32 to vector<2x32xf32>
      %101 = arith.addf %100, %99 : vector<2x32xf32>
      %102 = arith.divf %100, %101 : vector<2x32xf32>
      %103 = arith.mulf %94, %arg21 : vector<2x32xf32>
      %104 = arith.mulf %88, %96 : vector<2x32xf32>
      %105 = arith.addf %103, %104 : vector<2x32xf32>
      %106 = math.tanh %105 : vector<2x32xf32>
      %107 = arith.mulf %102, %106 : vector<2x32xf32>
      %cst_60 = arith.constant dense<0.000000e+00> : vector<2x1xf32>
      %108 = tpu.matmul %107, %64, %cst_60 {dimension_numbers = #tpu.dot_dimension_numbers<[1], [0], [0], [1], [0, 0, 1, 1], [], []>, precision = #tpu.contract_precision<fp32>} : vector<2x32xf32>, vector<32x1xf32>, vector<2x1xf32> -> vector<2x1xf32>
      %109 = vector.broadcast %65 : vector<1x1xf32> to vector<2x1xf32>
      %110 = arith.addf %108, %109 : vector<2x1xf32>
      %c1_i32_61 = arith.constant 1 : i32
      %111 = arith.addi %arg18, %c1_i32_61 : i32
      %112 = arith.index_cast %111 : i32 to index
      %c0_62 = arith.constant 0 : index
      %c0_63 = arith.constant 0 : index
      %113 = vector.load %arg17[%112, %c0_62, %c0_63] : memref<9x2x1xf32, #tpu.memory_space<vmem>>, vector<1x2x1xf32>
      %114 = vector.shape_cast %113 : vector<1x2x1xf32> to vector<2x1xf32>
      %115 = vector.shape_cast %110 : vector<2x1xf32> to vector<1x2x1xf32>
      tpu.vector_store %arg17[%112, %c0_62, %c0_63], %115 {strides = array<i32>} : memref<9x2x1xf32, #tpu.memory_space<vmem>>, vector<1x2x1xf32>,
      scf.yield %110, %107, %105 : vector<2x1xf32>, vector<2x32xf32>, vector<2x32xf32>
    }
    %c8_i32_49 = arith.constant 8 : i32
    return
  }
}

</mosaic_0001>

<llo_original>
// kernel: tpu_custom_call.1
$region0: #{tpu_custom_call.1}
  #allocation0 [shape = 'u32[]', space=smem, size = 0x4, offset = 0x4, fixed_abs, tag = 'smem constant byte address 0x4 - core index']
  #allocation1 [shape = 'u32[144,128]{1,0:T(1,128)}', space=vmem, size = 0x12000, scoped, tag = 'internal scratch']
  #allocation2 [shape = 'f32[1,1]{1,0:T(1,128)S(1)}', space=vmem, size = 0x200, scoped, tag = 'scoped memory for tpu_custom_call.1']
  #allocation3 [shape = 'f32[1,1]{1,0:T(1,128)S(1)}', space=vmem, size = 0x200, scoped, tag = 'scoped memory for tpu_custom_call.1']
  %s0 = inlined_call_operand.vmem [shape: f32[8,2,4], index: 0, kind: input, shape index: {}]
  %s1 = inlined_call_operand.vmem [shape: f32[8,2,1], index: 1, kind: input, shape index: {}]
  %s2 = inlined_call_operand.vmem [shape: f32[4,4], index: 2, kind: input, shape index: {}]
  %s3 = inlined_call_operand.vmem [shape: f32[1,4], index: 3, kind: input, shape index: {}]
  %s4 = inlined_call_operand.vmem [shape: f32[4,128], index: 4, kind: input, shape index: {}]
  %s5 = inlined_call_operand.vmem [shape: f32[32,128], index: 5, kind: input, shape index: {}]
  %s6 = inlined_call_operand.vmem [shape: f32[1,128], index: 6, kind: input, shape index: {}]
  %s7 = inlined_call_operand.vmem [shape: f32[32,1], index: 7, kind: input, shape index: {}]
  %s8 = inlined_call_operand.<no memory space> [shape: f32[1,1], index: 8, kind: input, shape index: {}]
  %s9 = inlined_call_operand.vmem [shape: f32[1,2], index: 9, kind: input, shape index: {}]
  %s10 = inlined_call_operand.vmem [shape: f32[1,2], index: 10, kind: input, shape index: {}]
  %s11 = inlined_call_operand.vmem [shape: f32[1,2], index: 11, kind: input, shape index: {}]
  %s12 = inlined_call_operand.vmem [shape: f32[2,128], index: 12, kind: input, shape index: {}]
  %s13 = inlined_call_operand.vmem [shape: f32[32,128], index: 13, kind: input, shape index: {}]
  %s14 = inlined_call_operand.vmem [shape: f32[1,128], index: 14, kind: input, shape index: {}]
  %s15 = inlined_call_operand.vmem [shape: f32[32,1], index: 15, kind: input, shape index: {}]
  %s16 = inlined_call_operand.<no memory space> [shape: f32[1,1], index: 16, kind: input, shape index: {}]
  %s17 = inlined_call_operand.vmem [shape: f32[9,2,1], index: 17, kind: output, shape index: {}]
  %s18 = sld [smem:[#allocation0]]
  $region92: #{tpu_custom_call.1} parent=0
    _
  %s20 = ssub.s32 1, %s18
  %s21 = scalar_select 0, %s20, %s18
  %v22 = vstv %s8
  %23 = vst [vmem:[#allocation2] sm:$0x1] %v22
  %v24 = vstv %s16
  %25 = vst [vmem:[#allocation3] sm:$0x1] %v24
  // Predicated region
  $region2: #{tpu_custom_call.1} parent=0 // pred_check
    _
  $region3: #{tpu_custom_call.1} parent=0 // pred_check_branch
    %27 = sbr.rel (0) target = $region5
  $region4: #{tpu_custom_call.1} parent=0 // pred_region
    _
  $region5: #{tpu_custom_call.1} parent=0 // pred_fallthru
    _
  // Predicated region
  $region6: #{tpu_custom_call.1} parent=0 // pred_check
    _
  $region7: #{tpu_custom_call.1} parent=0 // pred_check_branch
    %29 = sbr.rel (0) target = $region9
  $region8: #{tpu_custom_call.1} parent=0 // pred_region
    _
  $region9: #{tpu_custom_call.1} parent=0 // pred_fallthru
    _
  // Predicated region
  $region10: #{tpu_custom_call.1} parent=0 // pred_check
    _
  $region11: #{tpu_custom_call.1} parent=0 // pred_check_branch
    %31 = sbr.rel (0) target = $region13
  $region12: #{tpu_custom_call.1} parent=0 // pred_region
    _
  $region13: #{tpu_custom_call.1} parent=0 // pred_fallthru
    _
  // Predicated region
  $region14: #{tpu_custom_call.1} parent=0 // pred_check
    _
  $region15: #{tpu_custom_call.1} parent=0 // pred_check_branch
    %33 = sbr.rel (0) target = $region17
  $region16: #{tpu_custom_call.1} parent=0 // pred_region
    _
  $region17: #{tpu_custom_call.1} parent=0 // pred_fallthru
    _
  // Predicated region
  $region18: #{tpu_custom_call.1} parent=0 // pred_check
    _
  $region19: #{tpu_custom_call.1} parent=0 // pred_check_branch
    %35 = sbr.rel (0) target = $region21
  $region20: #{tpu_custom_call.1} parent=0 // pred_region
    _
  $region21: #{tpu_custom_call.1} parent=0 // pred_fallthru
    _
  // Predicated region
  $region22: #{tpu_custom_call.1} parent=0 // pred_check
    _
  $region23: #{tpu_custom_call.1} parent=0 // pred_check_branch
    %37 = sbr.rel (0) target = $region25
  $region24: #{tpu_custom_call.1} parent=0 // pred_region
    _
  $region25: #{tpu_custom_call.1} parent=0 // pred_fallthru
    _
  // Predicated region
  $region26: #{tpu_custom_call.1} parent=0 // pred_check
    _
  $region27: #{tpu_custom_call.1} parent=0 // pred_check_branch
    %39 = sbr.rel (0) target = $region29
  $region28: #{tpu_custom_call.1} parent=0 // pred_region
    _
  $region29: #{tpu_custom_call.1} parent=0 // pred_fallthru
    _
  // Predicated region
  $region30: #{tpu_custom_call.1} parent=0 // pred_check
    _
  $region31: #{tpu_custom_call.1} parent=0 // pred_check_branch
    %41 = sbr.rel (0) target = $region33
  $region32: #{tpu_custom_call.1} parent=0 // pred_region
    _
  $region33: #{tpu_custom_call.1} parent=0 // pred_fallthru
    _
  // Predicated region
  $region34: #{tpu_custom_call.1} parent=0 // pred_check
    _
  $region35: #{tpu_custom_call.1} parent=0 // pred_check_branch
    %43 = sbr.rel (0) target = $region37
  $region36: #{tpu_custom_call.1} parent=0 // pred_region
    _
  $region37: #{tpu_custom_call.1} parent=0 // pred_fallthru
    _
  // Predicated region
  $region38: #{tpu_custom_call.1} parent=0 // pred_check
    _
  $region39: #{tpu_custom_call.1} parent=0 // pred_check_branch
    %45 = sbr.rel (0) target = $region41
  $region40: #{tpu_custom_call.1} parent=0 // pred_region
    _
  $region41: #{tpu_custom_call.1} parent=0 // pred_fallthru
    _
  // Predicated region
  $region42: #{tpu_custom_call.1} parent=0 // pred_check
    _
  $region43: #{tpu_custom_call.1} parent=0 // pred_check_branch
    %47 = sbr.rel (0) target = $region45
  $region44: #{tpu_custom_call.1} parent=0 // pred_region
    _
  $region45: #{tpu_custom_call.1} parent=0 // pred_fallthru
    _
  // Predicated region
  $region46: #{tpu_custom_call.1} parent=0 // pred_check
    _
  $region47: #{tpu_custom_call.1} parent=0 // pred_check_branch
    %49 = sbr.rel (0) target = $region49
  $region48: #{tpu_custom_call.1} parent=0 // pred_region
    _
  $region49: #{tpu_custom_call.1} parent=0 // pred_fallthru
    _
  // Predicated region
  $region50: #{tpu_custom_call.1} parent=0 // pred_check
    _
  $region51: #{tpu_custom_call.1} parent=0 // pred_check_branch
    %51 = sbr.rel (0) target = $region53
  $region52: #{tpu_custom_call.1} parent=0 // pred_region
    _
  $region53: #{tpu_custom_call.1} parent=0 // pred_fallthru
    _
  // Predicated region
  $region54: #{tpu_custom_call.1} parent=0 // pred_check
    _
  $region55: #{tpu_custom_call.1} parent=0 // pred_check_branch
    %53 = sbr.rel (0) target = $region57
  $region56: #{tpu_custom_call.1} parent=0 // pred_region
    _
  $region57: #{tpu_custom_call.1} parent=0 // pred_fallthru
    _
  // Predicated region
  $region58: #{tpu_custom_call.1} parent=0 // pred_check
    _
  $region59: #{tpu_custom_call.1} parent=0 // pred_check_branch
    %55 = sbr.rel (0) target = $region61
  $region60: #{tpu_custom_call.1} parent=0 // pred_region
    _
  $region61: #{tpu_custom_call.1} parent=0 // pred_fallthru
    _
  // Predicated region
  $region62: #{tpu_custom_call.1} parent=0 // pred_check
    _
  $region63: #{tpu_custom_call.1} parent=0 // pred_check_branch
    %57 = sbr.rel (0) target = $region65
  $region64: #{tpu_custom_call.1} parent=0 // pred_region
    _
  $region65: #{tpu_custom_call.1} parent=0 // pred_fallthru
    _
  // Predicated region
  $region66: #{tpu_custom_call.1} parent=0 // pred_check
    _
  $region67: #{tpu_custom_call.1} parent=0 // pred_check_branch
    %59 = sbr.rel (0) target = $region69
  $region68: #{tpu_custom_call.1} parent=0 // pred_region
    _
  $region69: #{tpu_custom_call.1} parent=0 // pred_fallthru
    _
  %v60 = vld [vmem:[%s2] sm:$0xf]
  %v61 = vld [vmem:[%s3] sm:$0x1]
  %v62 = vld [vmem:[%s4] sm:$0xf]
  %v63 = vld [vmem:[%s5] sm:$0xff]
  %v64 = vld [vmem:[%s5 + $0x8] sm:$0xff]
  %v65 = vld [vmem:[%s5 + $0x10] sm:$0xff]
  %v66 = vld [vmem:[%s5 + $0x18] sm:$0xff]
  %v67 = vld [vmem:[%s6] sm:$0x1]
  %v68 = vld [vmem:[%s7] sm:$0xff]
  %v69 = vld [vmem:[%s7 + $0x8] sm:$0xff]
  %v70 = vld [vmem:[%s7 + $0x10] sm:$0xff]
  %v71 = vld [vmem:[%s7 + $0x18] sm:$0xff]
  %v72 = vld [vmem:[#allocation2] sm:$0x1]
  %v73 = vld [vmem:[%s0] sm:$0x3]
  %v75 = vlaneseq
  %v76 = vshrl.u32 %v75, 7
  %v77 = vsub.s32 0, %v76
  %v78 = vrot.slane %v61, %v77
  %vm80 = vcmask 31744
  %v82 = vsel %vm80, %v73, 0
  %vm84 = vcmask 1043456
  %v86 = vsel %vm84, %v60, 0
  %88 = vmatprep.subr.mxu0 0.0
  %v89 = vand.u32 %v86, 4294901760
  %90 = vmatpush1.msra.mxu0 %v89
  %91 = vmatprep.subr.mxu0 0.0
  %92 = vmatpush1.msra.mxu0 0.0
  %93 = vmatprep.subr.mxu0 0.0
  %94 = vmatpush1.msra.mxu0 0.0
  %95 = vmatprep.subr.mxu0 0.0
  %96 = vmatpush1.msra.mxu0 0.0
  %97 = vmatprep.subr.mxu0 0.0
  %98 = vmatpush1.msra.mxu0 0.0
  %99 = vmatprep.subr.mxu0 0.0
  %100 = vmatpush1.msra.mxu0 0.0
  %101 = vmatprep.subr.mxu0 0.0
  %102 = vmatpush1.msra.mxu0 0.0
  %103 = vmatprep.subr.mxu0 0.0
  %104 = vmatpush1.msra.mxu0 0.0
  %105 = vmatprep.subr.mxu0 0.0
  %106 = vmatpush1.msra.mxu0 0.0
  %107 = vmatprep.subr.mxu0 0.0
  %108 = vmatpush1.msra.mxu0 0.0
  %109 = vmatprep.subr.mxu0 0.0
  %110 = vmatpush1.msra.mxu0 0.0
  %111 = vmatprep.subr.mxu0 0.0
  %112 = vmatpush1.msra.mxu0 0.0
  %113 = vmatprep.subr.mxu0 0.0
  %114 = vmatpush1.msra.mxu0 0.0
  %115 = vmatprep.subr.mxu0 0.0
  %116 = vmatpush1.msra.mxu0 0.0
  %117 = vmatprep.subr.mxu0 0.0
  %118 = vmatpush1.msra.mxu0 0.0
  %119 = vmatprep.subr.mxu0 0.0
  %120 = vmatpush1.msra.mxu0 0.0
  %121 = vmatprep.subr.mxu0 0.0
  %122 = vmatpush1.msra.mxu0 0.0
  %123 = vmatprep.subr.mxu0 0.0
  %124 = vmatpush1.msra.mxu0 0.0
  %125 = vmatprep.subr.mxu0 0.0
  %126 = vmatpush1.msra.mxu0 0.0
  %127 = vmatprep.subr.mxu0 0.0
  %128 = vmatpush1.msra.mxu0 0.0
  %129 = vmatprep.subr.mxu0 0.0
  %130 = vmatpush1.msra.mxu0 0.0
  %131 = vmatprep.subr.mxu0 0.0
  %132 = vmatpush1.msra.mxu0 0.0
  %133 = vmatprep.subr.mxu0 0.0
  %134 = vmatpush1.msra.mxu0 0.0
  %135 = vmatprep.subr.mxu0 0.0
  %136 = vmatpush1.msra.mxu0 0.0
  %137 = vmatprep.subr.mxu0 0.0
  %138 = vmatpush1.msra.mxu0 0.0
  %139 = vmatprep.subr.mxu0 0.0
  %140 = vmatpush1.msra.mxu0 0.0
  %141 = vmatprep.subr.mxu0 0.0
  %142 = vmatpush1.msra.mxu0 0.0
  %143 = vmatprep.subr.mxu0 0.0
  %144 = vmatpush1.msra.mxu0 0.0
  %145 = vmatprep.subr.mxu0 0.0
  %146 = vmatpush1.msra.mxu0 0.0
  %147 = vmatprep.subr.mxu0 0.0
  %148 = vmatpush1.msra.mxu0 0.0
  %149 = vmatprep.subr.mxu0 0.0
  %150 = vmatpush1.msra.mxu0 0.0
  %151 = vmatprep.subr.mxu0 0.0
  %152 = vmatpush1.msra.mxu0 0.0
  %153 = vmatprep.mubr.f32.mxu0 0.0
  %v154 = vand.u32 %v82, 4294901760
  %v155 = vsub.f32 %v82, %v154
  %v156 = vand.u32 %v155, 4294901760
  %v157 = vsub.f32 %v155, %v156
  %v158 = vand.u32 %v157, 4294901760
  %159 = vmatmul.mubr.f32.gmra.mrb[0].mxu0 %v158
  %v160 = vpop.f32.mrb[0].mxu0
  %v161 = vadd.f32 %v78, %v160
  %v162 = vpop.f32.mrb[0].mxu0
  %163 = vdwg.mxu0
  %164 = vmatprep.subr.mxu0 0.0
  %v165 = vand.u32 %v86, 4294901760
  %v166 = vsub.f32 %v86, %v165
  %v167 = vand.u32 %v166, 4294901760
  %v168 = vsub.f32 %v166, %v167
  %v169 = vand.u32 %v168, 4294901760
  %170 = vmatpush1.msra.mxu0 %v169
  %171 = vmatprep.subr.mxu0 0.0
  %172 = vmatpush1.msra.mxu0 0.0
  %173 = vmatprep.subr.mxu0 0.0
  %174 = vmatpush1.msra.mxu0 0.0
  %175 = vmatprep.subr.mxu0 0.0
  %176 = vmatpush1.msra.mxu0 0.0
  %177 = vmatprep.subr.mxu0 0.0
  %178 = vmatpush1.msra.mxu0 0.0
  %179 = vmatprep.subr.mxu0 0.0
  %180 = vmatpush1.msra.mxu0 0.0
  %181 = vmatprep.subr.mxu0 0.0
  %182 = vmatpush1.msra.mxu0 0.0
  %183 = vmatprep.subr.mxu0 0.0
  %184 = vmatpush1.msra.mxu0 0.0
  %185 = vmatprep.subr.mxu0 0.0
  %186 = vmatpush1.msra.mxu0 0.0
  %187 = vmatprep.subr.mxu0 0.0
  %188 = vmatpush1.msra.mxu0 0.0
  %189 = vmatprep.subr.mxu0 0.0
  %190 = vmatpush1.msra.mxu0 0.0
  %191 = vmatprep.subr.mxu0 0.0
  %192 = vmatpush1.msra.mxu0 0.0
  %193 = vmatprep.subr.mxu0 0.0
  %194 = vmatpush1.msra.mxu0 0.0
  %195 = vmatprep.subr.mxu0 0.0
  %196 = vmatpush1.msra.mxu0 0.0
  %197 = vmatprep.subr.mxu0 0.0
  %198 = vmatpush1.msra.mxu0 0.0
  %199 = vmatprep.subr.mxu0 0.0
  %200 = vmatpush1.msra.mxu0 0.0
  %201 = vmatprep.subr.mxu0 0.0
  %202 = vmatpush1.msra.mxu0 0.0
  %203 = vmatprep.subr.mxu0 0.0
  %204 = vmatpush1.msra.mxu0 0.0
  %205 = vmatprep.subr.mxu0 0.0
  %206 = vmatpush1.msra.mxu0 0.0
  %207 = vmatprep.subr.mxu0 0.0
  %208 = vmatpush1.msra.mxu0 0.0
  %209 = vmatprep.subr.mxu0 0.0
  %210 = vmatpush1.msra.mxu0 0.0
  %211 = vmatprep.subr.mxu0 0.0
  %212 = vmatpush1.msra.mxu0 0.0
  %213 = vmatprep.subr.mxu0 0.0
  %214 = vmatpush1.msra.mxu0 0.0
  %215 = vmatprep.subr.mxu0 0.0
  %216 = vmatpush1.msra.mxu0 0.0
  %217 = vmatprep.subr.mxu0 0.0
  %218 = vmatpush1.msra.mxu0 0.0
  %219 = vmatprep.subr.mxu0 0.0
  %220 = vmatpush1.msra.mxu0 0.0
  %221 = vmatprep.subr.mxu0 0.0
  %222 = vmatpush1.msra.mxu0 0.0
  %223 = vmatprep.subr.mxu0 0.0
  %224 = vmatpush1.msra.mxu0 0.0
  %225 = vmatprep.subr.mxu0 0.0
  %226 = vmatpush1.msra.mxu0 0.0
  %227 = vmatprep.subr.mxu0 0.0
  %228 = vmatpush1.msra.mxu0 0.0
  %229 = vmatprep.subr.mxu0 0.0
  %230 = vmatpush1.msra.mxu0 0.0
  %231 = vmatprep.subr.mxu0 0.0
  %232 = vmatpush1.msra.mxu0 0.0
  %233 = vmatprep.mubr.f32.mxu0 0.0
  %v234 = vand.u32 %v82, 4294901760
  %235 = vmatmul.mubr.f32.gmra.mrb[0].mxu0 %v234
  %v236 = vpop.f32.mrb[0].mxu0
  %v237 = vadd.f32 %v161, %v236
  %v238 = vpop.f32.mrb[0].mxu0
  %239 = vdwg.mxu0
  %240 = vmatprep.subr.mxu0 0.0
  %v241 = vand.u32 %v86, 4294901760
  %v242 = vsub.f32 %v86, %v241
  %243 = vmatpush1.msra.mxu0 %v242
  %244 = vmatprep.subr.mxu0 0.0
  %245 = vmatpush1.msra.mxu0 0.0
  %246 = vmatprep.subr.mxu0 0.0
  %247 = vmatpush1.msra.mxu0 0.0
  %248 = vmatprep.subr.mxu0 0.0
  %249 = vmatpush1.msra.mxu0 0.0
  %250 = vmatprep.subr.mxu0 0.0
  %251 = vmatpush1.msra.mxu0 0.0
  %252 = vmatprep.subr.mxu0 0.0
  %253 = vmatpush1.msra.mxu0 0.0
  %254 = vmatprep.subr.mxu0 0.0
  %255 = vmatpush1.msra.mxu0 0.0
  %256 = vmatprep.subr.mxu0 0.0
  %257 = vmatpush1.msra.mxu0 0.0
  %258 = vmatprep.subr.mxu0 0.0
  %259 = vmatpush1.msra.mxu0 0.0
  %260 = vmatprep.subr.mxu0 0.0
  %261 = vmatpush1.msra.mxu0 0.0
  %262 = vmatprep.subr.mxu0 0.0
  %263 = vmatpush1.msra.mxu0 0.0
  %264 = vmatprep.subr.mxu0 0.0
  %265 = vmatpush1.msra.mxu0 0.0
  %266 = vmatprep.subr.mxu0 0.0
  %267 = vmatpush1.msra.mxu0 0.0
  %268 = vmatprep.subr.mxu0 0.0
  %269 = vmatpush1.msra.mxu0 0.0
  %270 = vmatprep.subr.mxu0 0.0
  %271 = vmatpush1.msra.mxu0 0.0
  %272 = vmatprep.subr.mxu0 0.0
  %273 = vmatpush1.msra.mxu0 0.0
  %274 = vmatprep.subr.mxu0 0.0
  %275 = vmatpush1.msra.mxu0 0.0
  %276 = vmatprep.subr.mxu0 0.0
  %277 = vmatpush1.msra.mxu0 0.0
  %278 = vmatprep.subr.mxu0 0.0
  %279 = vmatpush1.msra.mxu0 0.0
  %280 = vmatprep.subr.mxu0 0.0
  %281 = vmatpush1.msra.mxu0 0.0
  %282 = vmatprep.subr.mxu0 0.0
  %283 = vmatpush1.msra.mxu0 0.0
  %284 = vmatprep.subr.mxu0 0.0
  %285 = vmatpush1.msra.mxu0 0.0
  %286 = vmatprep.subr.mxu0 0.0
  %287 = vmatpush1.msra.mxu0 0.0
  %288 = vmatprep.subr.mxu0 0.0
  %289 = vmatpush1.msra.mxu0 0.0
  %290 = vmatprep.subr.mxu0 0.0
  %291 = vmatpush1.msra.mxu0 0.0
  %292 = vmatprep.subr.mxu0 0.0
  %293 = vmatpush1.msra.mxu0 0.0
  %294 = vmatprep.subr.mxu0 0.0
  %295 = vmatpush1.msra.mxu0 0.0
  %296 = vmatprep.subr.mxu0 0.0
  %297 = vmatpush1.msra.mxu0 0.0
  %298 = vmatprep.subr.mxu0 0.0
  %299 = vmatpush1.msra.mxu0 0.0
  %300 = vmatprep.subr.mxu0 0.0
  %301 = vmatpush1.msra.mxu0 0.0
  %302 = vmatprep.subr.mxu0 0.0
  %303 = vmatpush1.msra.mxu0 0.0
  %304 = vmatprep.subr.mxu0 0.0
  %305 = vmatpush1.msra.mxu0 0.0
  %306 = vmatprep.mubr.f32.mxu0 0.0
  %v307 = vand.u32 %v82, 4294901760
  %v308 = vsub.f32 %v82, %v307
  %309 = vmatmul.mubr.f32.gmra.mrb[0].mxu0 %v308
  %v310 = vpop.f32.mrb[0].mxu0
  %v311 = vadd.f32 %v237, %v310
  %v312 = vpop.f32.mrb[0].mxu0
  %313 = vdwg.mxu0
  %314 = vmatprep.subr.mxu0 0.0
  %v315 = vand.u32 %v86, 4294901760
  %316 = vmatpush1.msra.mxu0 %v315
  %317 = vmatprep.subr.mxu0 0.0
  %318 = vmatpush1.msra.mxu0 0.0
  %319 = vmatprep.subr.mxu0 0.0
  %320 = vmatpush1.msra.mxu0 0.0
  %321 = vmatprep.subr.mxu0 0.0
  %322 = vmatpush1.msra.mxu0 0.0
  %323 = vmatprep.subr.mxu0 0.0
  %324 = vmatpush1.msra.mxu0 0.0
  %325 = vmatprep.subr.mxu0 0.0
  %326 = vmatpush1.msra.mxu0 0.0
  %327 = vmatprep.subr.mxu0 0.0
  %328 = vmatpush1.msra.mxu0 0.0
  %329 = vmatprep.subr.mxu0 0.0
  %330 = vmatpush1.msra.mxu0 0.0
  %331 = vmatprep.subr.mxu0 0.0
  %332 = vmatpush1.msra.mxu0 0.0
  %333 = vmatprep.subr.mxu0 0.0
  %334 = vmatpush1.msra.mxu0 0.0
  %335 = vmatprep.subr.mxu0 0.0
  %336 = vmatpush1.msra.mxu0 0.0
  %337 = vmatprep.subr.mxu0 0.0
  %338 = vmatpush1.msra.mxu0 0.0
  %339 = vmatprep.subr.mxu0 0.0
  %340 = vmatpush1.msra.mxu0 0.0
  %341 = vmatprep.subr.mxu0 0.0
  %342 = vmatpush1.msra.mxu0 0.0
  %343 = vmatprep.subr.mxu0 0.0
  %344 = vmatpush1.msra.mxu0 0.0
  %345 = vmatprep.subr.mxu0 0.0
  %346 = vmatpush1.msra.mxu0 0.0
  %347 = vmatprep.subr.mxu0 0.0
  %348 = vmatpush1.msra.mxu0 0.0
  %349 = vmatprep.subr.mxu0 0.0
  %350 = vmatpush1.msra.mxu0 0.0
  %351 = vmatprep.subr.mxu0 0.0
  %352 = vmatpush1.msra.mxu0 0.0
  %353 = vmatprep.subr.mxu0 0.0
  %354 = vmatpush1.msra.mxu0 0.0
  %355 = vmatprep.subr.mxu0 0.0
  %356 = vmatpush1.msra.mxu0 0.0
  %357 = vmatprep.subr.mxu0 0.0
  %358 = vmatpush1.msra.mxu0 0.0
  %359 = vmatprep.subr.mxu0 0.0
  %360 = vmatpush1.msra.mxu0 0.0
  %361 = vmatprep.subr.mxu0 0.0
  %362 = vmatpush1.msra.mxu0 0.0
  %363 = vmatprep.subr.mxu0 0.0
  %364 = vmatpush1.msra.mxu0 0.0
  %365 = vmatprep.subr.mxu0 0.0
  %366 = vmatpush1.msra.mxu0 0.0
  %367 = vmatprep.subr.mxu0 0.0
  %368 = vmatpush1.msra.mxu0 0.0
  %369 = vmatprep.subr.mxu0 0.0
  %370 = vmatpush1.msra.mxu0 0.0
  %371 = vmatprep.subr.mxu0 0.0
  %372 = vmatpush1.msra.mxu0 0.0
  %373 = vmatprep.subr.mxu0 0.0
  %374 = vmatpush1.msra.mxu0 0.0
  %375 = vmatprep.subr.mxu0 0.0
  %376 = vmatpush1.msra.mxu0 0.0
  %377 = vmatprep.subr.mxu0 0.0
  %378 = vmatpush1.msra.mxu0 0.0
  %379 = vmatprep.mubr.f32.mxu0 0.0
  %v380 = vand.u32 %v82, 4294901760
  %v381 = vsub.f32 %v82, %v380
  %v382 = vand.u32 %v381, 4294901760
  %383 = vmatmul.mubr.f32.gmra.mrb[0].mxu0 %v382
  %v384 = vpop.f32.mrb[0].mxu0
  %v385 = vadd.f32 %v311, %v384
  %v386 = vpop.f32.mrb[0].mxu0
  %387 = vdwg.mxu0
  %388 = vmatprep.subr.mxu0 0.0
  %v389 = vand.u32 %v86, 4294901760
  %v390 = vsub.f32 %v86, %v389
  %v391 = vand.u32 %v390, 4294901760
  %392 = vmatpush1.msra.mxu0 %v391
  %393 = vmatprep.subr.mxu0 0.0
  %394 = vmatpush1.msra.mxu0 0.0
  %395 = vmatprep.subr.mxu0 0.0
  %396 = vmatpush1.msra.mxu0 0.0
  %397 = vmatprep.subr.mxu0 0.0
  %398 = vmatpush1.msra.mxu0 0.0
  %399 = vmatprep.subr.mxu0 0.0
  %400 = vmatpush1.msra.mxu0 0.0
  %401 = vmatprep.subr.mxu0 0.0
  %402 = vmatpush1.msra.mxu0 0.0
  %403 = vmatprep.subr.mxu0 0.0
  %404 = vmatpush1.msra.mxu0 0.0
  %405 = vmatprep.subr.mxu0 0.0
  %406 = vmatpush1.msra.mxu0 0.0
  %407 = vmatprep.subr.mxu0 0.0
  %408 = vmatpush1.msra.mxu0 0.0
  %409 = vmatprep.subr.mxu0 0.0
  %410 = vmatpush1.msra.mxu0 0.0
  %411 = vmatprep.subr.mxu0 0.0
  %412 = vmatpush1.msra.mxu0 0.0
  %413 = vmatprep.subr.mxu0 0.0
  %414 = vmatpush1.msra.mxu0 0.0
  %415 = vmatprep.subr.mxu0 0.0
  %416 = vmatpush1.msra.mxu0 0.0
  %417 = vmatprep.subr.mxu0 0.0
  %418 = vmatpush1.msra.mxu0 0.0
  %419 = vmatprep.subr.mxu0 0.0
  %420 = vmatpush1.msra.mxu0 0.0
  %421 = vmatprep.subr.mxu0 0.0
  %422 = vmatpush1.msra.mxu0 0.0
  %423 = vmatprep.subr.mxu0 0.0
  %424 = vmatpush1.msra.mxu0 0.0
  %425 = vmatprep.subr.mxu0 0.0
  %426 = vmatpush1.msra.mxu0 0.0
  %427 = vmatprep.subr.mxu0 0.0
  %428 = vmatpush1.msra.mxu0 0.0
  %429 = vmatprep.subr.mxu0 0.0
  %430 = vmatpush1.msra.mxu0 0.0
  %431 = vmatprep.subr.mxu0 0.0
  %432 = vmatpush1.msra.mxu0 0.0
  %433 = vmatprep.subr.mxu0 0.0
  %434 = vmatpush1.msra.mxu0 0.0
  %435 = vmatprep.subr.mxu0 0.0
  %436 = vmatpush1.msra.mxu0 0.0
  %437 = vmatprep.subr.mxu0 0.0
  %438 = vmatpush1.msra.mxu0 0.0
  %439 = vmatprep.subr.mxu0 0.0
  %440 = vmatpush1.msra.mxu0 0.0
  %441 = vmatprep.subr.mxu0 0.0
  %442 = vmatpush1.msra.mxu0 0.0
  %443 = vmatprep.subr.mxu0 0.0
  %444 = vmatpush1.msra.mxu0 0.0
  %445 = vmatprep.subr.mxu0 0.0
  %446 = vmatpush1.msra.mxu0 0.0
  %447 = vmatprep.subr.mxu0 0.0
  %448 = vmatpush1.msra.mxu0 0.0
  %449 = vmatprep.subr.mxu0 0.0
  %450 = vmatpush1.msra.mxu0 0.0
  %451 = vmatprep.subr.mxu0 0.0
  %452 = vmatpush1.msra.mxu0 0.0
  %453 = vmatprep.subr.mxu0 0.0
  %454 = vmatpush1.msra.mxu0 0.0
  %455 = vmatprep.mubr.f32.mxu0 0.0
  %v456 = vand.u32 %v82, 4294901760
  %457 = vmatmul.mubr.f32.gmra.mrb[0].mxu0 %v456
  %v458 = vpop.f32.mrb[0].mxu0
  %v459 = vadd.f32 %v385, %v458
  %v460 = vpop.f32.mrb[0].mxu0
  %461 = vdwg.mxu0
  %462 = vmatprep.subr.mxu0 0.0
  %v463 = vand.u32 %v86, 4294901760
  %464 = vmatpush1.msra.mxu0 %v463
  %465 = vmatprep.subr.mxu0 0.0
  %466 = vmatpush1.msra.mxu0 0.0
  %467 = vmatprep.subr.mxu0 0.0
  %468 = vmatpush1.msra.mxu0 0.0
  %469 = vmatprep.subr.mxu0 0.0
  %470 = vmatpush1.msra.mxu0 0.0
  %471 = vmatprep.subr.mxu0 0.0
  %472 = vmatpush1.msra.mxu0 0.0
  %473 = vmatprep.subr.mxu0 0.0
  %474 = vmatpush1.msra.mxu0 0.0
  %475 = vmatprep.subr.mxu0 0.0
  %476 = vmatpush1.msra.mxu0 0.0
  %477 = vmatprep.subr.mxu0 0.0
  %478 = vmatpush1.msra.mxu0 0.0
  %479 = vmatprep.subr.mxu0 0.0
  %480 = vmatpush1.msra.mxu0 0.0
  %481 = vmatprep.subr.mxu0 0.0
  %482 = vmatpush1.msra.mxu0 0.0
  %483 = vmatprep.subr.mxu0 0.0
  %484 = vmatpush1.msra.mxu0 0.0
  %485 = vmatprep.subr.mxu0 0.0
  %486 = vmatpush1.msra.mxu0 0.0
  %487 = vmatprep.subr.mxu0 0.0
  %488 = vmatpush1.msra.mxu0 0.0
  %489 = vmatprep.subr.mxu0 0.0
  %490 = vmatpush1.msra.mxu0 0.0
  %491 = vmatprep.subr.mxu0 0.0
  %492 = vmatpush1.msra.mxu0 0.0
  %493 = vmatprep.subr.mxu0 0.0
  %494 = vmatpush1.msra.mxu0 0.0
  %495 = vmatprep.subr.mxu0 0.0
  %496 = vmatpush1.msra.mxu0 0.0
  %497 = vmatprep.subr.mxu0 0.0
  %498 = vmatpush1.msra.mxu0 0.0
  %499 = vmatprep.subr.mxu0 0.0
  %500 = vmatpush1.msra.mxu0 0.0
  %501 = vmatprep.subr.mxu0 0.0
  %502 = vmatpush1.msra.mxu0 0.0
  %503 = vmatprep.subr.mxu0 0.0
  %504 = vmatpush1.msra.mxu0 0.0
  %505 = vmatprep.subr.mxu0 0.0
  %506 = vmatpush1.msra.mxu0 0.0
  %507 = vmatprep.subr.mxu0 0.0
  %508 = vmatpush1.msra.mxu0 0.0
  %509 = vmatprep.subr.mxu0 0.0
  %510 = vmatpush1.msra.mxu0 0.0
  %511 = vmatprep.subr.mxu0 0.0
  %512 = vmatpush1.msra.mxu0 0.0
  %513 = vmatprep.subr.mxu0 0.0
  %514 = vmatpush1.msra.mxu0 0.0
  %515 = vmatprep.subr.mxu0 0.0
  %516 = vmatpush1.msra.mxu0 0.0
  %517 = vmatprep.subr.mxu0 0.0
  %518 = vmatpush1.msra.mxu0 0.0
  %519 = vmatprep.subr.mxu0 0.0
  %520 = vmatpush1.msra.mxu0 0.0
  %521 = vmatprep.subr.mxu0 0.0
  %522 = vmatpush1.msra.mxu0 0.0
  %523 = vmatprep.subr.mxu0 0.0
  %524 = vmatpush1.msra.mxu0 0.0
  %525 = vmatprep.subr.mxu0 0.0
  %526 = vmatpush1.msra.mxu0 0.0
  %527 = vmatprep.mubr.f32.mxu0 0.0
  %v528 = vand.u32 %v82, 4294901760
  %529 = vmatmul.mubr.f32.gmra.mrb[0].mxu0 %v528
  %v530 = vpop.f32.mrb[0].mxu0
  %v531 = vadd.f32 %v459, %v530
  %v532 = vpop.f32.mrb[0].mxu0
  %533 = vdwg.mxu0
  %v534 = vmax.f32 %v531, 0.0
  %vm535 = vcmask 261120
  %v537 = vsel %vm535, 0.0, 0
  %539 = vmatprep.subr.mxu0 0.0
  %v540 = vand.u32 %v63, 4294901760
  %541 = vmatpush1.msra.mxu0 %v540
  %542 = vmatprep.subr.mxu0 0.0
  %v543 = vand.u32 %v64, 4294901760
  %544 = vmatpush1.msra.mxu0 %v543
  %545 = vmatprep.subr.mxu0 0.0
  %v546 = vand.u32 %v65, 4294901760
  %547 = vmatpush1.msra.mxu0 %v546
  %548 = vmatprep.subr.mxu0 0.0
  %v549 = vand.u32 %v66, 4294901760
  %550 = vmatpush1.msra.mxu0 %v549
  %551 = vmatprep.subr.mxu0 0.0
  %552 = vmatpush1.msra.mxu0 0.0
  %553 = vmatprep.subr.mxu0 0.0
  %554 = vmatpush1.msra.mxu0 0.0
  %555 = vmatprep.subr.mxu0 0.0
  %556 = vmatpush1.msra.mxu0 0.0
  %557 = vmatprep.subr.mxu0 0.0
  %558 = vmatpush1.msra.mxu0 0.0
  %559 = vmatprep.subr.mxu0 0.0
  %560 = vmatpush1.msra.mxu0 0.0
  %561 = vmatprep.subr.mxu0 0.0
  %562 = vmatpush1.msra.mxu0 0.0
  %563 = vmatprep.subr.mxu0 0.0
  %564 = vmatpush1.msra.mxu0 0.0
  %565 = vmatprep.subr.mxu0 0.0
  %566 = vmatpush1.msra.mxu0 0.0
  %567 = vmatprep.subr.mxu0 0.0
  %568 = vmatpush1.msra.mxu0 0.0
  %569 = vmatprep.subr.mxu0 0.0
  %570 = vmatpush1.msra.mxu0 0.0
  %571 = vmatprep.subr.mxu0 0.0
  %572 = vmatpush1.msra.mxu0 0.0
  %573 = vmatprep.subr.mxu0 0.0
  %574 = vmatpush1.msra.mxu0 0.0
  %575 = vmatprep.subr.mxu0 0.0
  %576 = vmatpush1.msra.mxu0 0.0
  %577 = vmatprep.subr.mxu0 0.0
  %578 = vmatpush1.msra.mxu0 0.0
  %579 = vmatprep.subr.mxu0 0.0
  %580 = vmatpush1.msra.mxu0 0.0
  %581 = vmatprep.subr.mxu0 0.0
  %582 = vmatpush1.msra.mxu0 0.0
  %583 = vmatprep.subr.mxu0 0.0
  %584 = vmatpush1.msra.mxu0 0.0
  %585 = vmatprep.subr.mxu0 0.0
  %586 = vmatpush1.msra.mxu0 0.0
  %587 = vmatprep.subr.mxu0 0.0
  %588 = vmatpush1.msra.mxu0 0.0
  %589 = vmatprep.subr.mxu0 0.0
  %590 = vmatpush1.msra.mxu0 0.0
  %591 = vmatprep.subr.mxu0 0.0
  %592 = vmatpush1.msra.mxu0 0.0
  %593 = vmatprep.subr.mxu0 0.0
  %594 = vmatpush1.msra.mxu0 0.0
  %595 = vmatprep.subr.mxu0 0.0
  %596 = vmatpush1.msra.mxu0 0.0
  %597 = vmatprep.subr.mxu0 0.0
  %598 = vmatpush1.msra.mxu0 0.0
  %599 = vmatprep.subr.mxu0 0.0
  %600 = vmatpush1.msra.mxu0 0.0
  %601 = vmatprep.subr.mxu0 0.0
  %602 = vmatpush1.msra.mxu0 0.0
  %603 = vmatprep.subr.mxu0 0.0
  %604 = vmatpush1.msra.mxu0 0.0
  %605 = vmatprep.subr.mxu0 0.0
  %606 = vmatpush1.msra.mxu0 0.0
  %607 = vmatprep.mubr.f32.mxu0 0.0
  %v608 = vand.u32 %v537, 4294901760
  %v609 = vsub.f32 %v537, %v608
  %v610 = vand.u32 %v609, 4294901760
  %v611 = vsub.f32 %v609, %v610
  %v612 = vand.u32 %v611, 4294901760
  %613 = vmatmul.mubr.f32.gmra.mrb[0].mxu0 %v612
  %v614 = vpop.f32.mrb[0].mxu0
  %v615 = vadd.f32 0.0, %v614
  %v616 = vpop.f32.mrb[0].mxu0
  %617 = vdwg.mxu0
  %618 = vmatprep.subr.mxu0 0.0
  %v619 = vand.u32 %v63, 4294901760
  %v620 = vsub.f32 %v63, %v619
  %v621 = vand.u32 %v620, 4294901760
  %v622 = vsub.f32 %v620, %v621
  %v623 = vand.u32 %v622, 4294901760
  %624 = vmatpush1.msra.mxu0 %v623
  %625 = vmatprep.subr.mxu0 0.0
  %v626 = vand.u32 %v64, 4294901760
  %v627 = vsub.f32 %v64, %v626
  %v628 = vand.u32 %v627, 4294901760
  %v629 = vsub.f32 %v627, %v628
  %v630 = vand.u32 %v629, 4294901760
  %631 = vmatpush1.msra.mxu0 %v630
  %632 = vmatprep.subr.mxu0 0.0
  %v633 = vand.u32 %v65, 4294901760
  %v634 = vsub.f32 %v65, %v633
  %v635 = vand.u32 %v634, 4294901760
  %v636 = vsub.f32 %v634, %v635
  %v637 = vand.u32 %v636, 4294901760
  %638 = vmatpush1.msra.mxu0 %v637
  %639 = vmatprep.subr.mxu0 0.0
  %v640 = vand.u32 %v66, 4294901760
  %v641 = vsub.f32 %v66, %v640
  %v642 = vand.u32 %v641, 4294901760
  %v643 = vsub.f32 %v641, %v642
  %v644 = vand.u32 %v643, 4294901760
  %645 = vmatpush1.msra.mxu0 %v644
  %646 = vmatprep.subr.mxu0 0.0
  %647 = vmatpush1.msra.mxu0 0.0
  %648 = vmatprep.subr.mxu0 0.0
  %649 = vmatpush1.msra.mxu0 0.0
  %650 = vmatprep.subr.mxu0 0.0
  %651 = vmatpush1.msra.mxu0 0.0
  %652 = vmatprep.subr.mxu0 0.0
  %653 = vmatpush1.msra.mxu0 0.0
  %654 = vmatprep.subr.mxu0 0.0
  %655 = vmatpush1.msra.mxu0 0.0
  %656 = vmatprep.subr.mxu0 0.0
  %657 = vmatpush1.msra.mxu0 0.0
  %658 = vmatprep.subr.mxu0 0.0
  %659 = vmatpush1.msra.mxu0 0.0
  %660 = vmatprep.subr.mxu0 0.0
  %661 = vmatpush1.msra.mxu0 0.0
  %662 = vmatprep.subr.mxu0 0.0
  %663 = vmatpush1.msra.mxu0 0.0
  %664 = vmatprep.subr.mxu0 0.0
  %665 = vmatpush1.msra.mxu0 0.0
  %666 = vmatprep.subr.mxu0 0.0
  %667 = vmatpush1.msra.mxu0 0.0
  %668 = vmatprep.subr.mxu0 0.0
  %669 = vmatpush1.msra.mxu0 0.0
  %670 = vmatprep.subr.mxu0 0.0
  %671 = vmatpush1.msra.mxu0 0.0
  %672 = vmatprep.subr.mxu0 0.0
  %673 = vmatpush1.msra.mxu0 0.0
  %674 = vmatprep.subr.mxu0 0.0
  %675 = vmatpush1.msra.mxu0 0.0
  %676 = vmatprep.subr.mxu0 0.0
  %677 = vmatpush1.msra.mxu0 0.0
  %678 = vmatprep.subr.mxu0 0.0
  %679 = vmatpush1.msra.mxu0 0.0
  %680 = vmatprep.subr.mxu0 0.0
  %681 = vmatpush1.msra.mxu0 0.0
  %682 = vmatprep.subr.mxu0 0.0
  %683 = vmatpush1.msra.mxu0 0.0
  %684 = vmatprep.subr.mxu0 0.0
  %685 = vmatpush1.msra.mxu0 0.0
  %686 = vmatprep.subr.mxu0 0.0
  %687 = vmatpush1.msra.mxu0 0.0
  %688 = vmatprep.subr.mxu0 0.0
  %689 = vmatpush1.msra.mxu0 0.0
  %690 = vmatprep.subr.mxu0 0.0
  %691 = vmatpush1.msra.mxu0 0.0
  %692 = vmatprep.subr.mxu0 0.0
  %693 = vmatpush1.msra.mxu0 0.0
  %694 = vmatprep.subr.mxu0 0.0
  %695 = vmatpush1.msra.mxu0 0.0
  %696 = vmatprep.subr.mxu0 0.0
  %697 = vmatpush1.msra.mxu0 0.0
  %698 = vmatprep.subr.mxu0 0.0
  %699 = vmatpush1.msra.mxu0 0.0
  %700 = vmatprep.subr.mxu0 0.0
  %701 = vmatpush1.msra.mxu0 0.0
  %702 = vmatprep.mubr.f32.mxu0 0.0
  %v703 = vand.u32 %v537, 4294901760
  %704 = vmatmul.mubr.f32.gmra.mrb[0].mxu0 %v703
  %v705 = vpop.f32.mrb[0].mxu0
  %v706 = vadd.f32 %v615, %v705
  %v707 = vpop.f32.mrb[0].mxu0
  %708 = vdwg.mxu0
  %709 = vmatprep.subr.mxu0 0.0
  %v710 = vand.u32 %v63, 4294901760
  %v711 = vsub.f32 %v63, %v710
  %712 = vmatpush1.msra.mxu0 %v711
  %713 = vmatprep.subr.mxu0 0.0
  %v714 = vand.u32 %v64, 4294901760
  %v715 = vsub.f32 %v64, %v714
  %716 = vmatpush1.msra.mxu0 %v715
  %717 = vmatprep.subr.mxu0 0.0
  %v718 = vand.u32 %v65, 4294901760
  %v719 = vsub.f32 %v65, %v718
  %720 = vmatpush1.msra.mxu0 %v719
  %721 = vmatprep.subr.mxu0 0.0
  %v722 = vand.u32 %v66, 4294901760
  %v723 = vsub.f32 %v66, %v722
  %724 = vmatpush1.msra.mxu0 %v723
  %725 = vmatprep.subr.mxu0 0.0
  %726 = vmatpush1.msra.mxu0 0.0
  %727 = vmatprep.subr.mxu0 0.0
  %728 = vmatpush1.msra.mxu0 0.0
  %729 = vmatprep.subr.mxu0 0.0
  %730 = vmatpush1.msra.mxu0 0.0
  %731 = vmatprep.subr.mxu0 0.0
  %732 = vmatpush1.msra.mxu0 0.0
  %733 = vmatprep.subr.mxu0 0.0
  %734 = vmatpush1.msra.mxu0 0.0
  %735 = vmatprep.subr.mxu0 0.0
  %736 = vmatpush1.msra.mxu0 0.0
  %737 = vmatprep.subr.mxu0 0.0
  %738 = vmatpush1.msra.mxu0 0.0
  %739 = vmatprep.subr.mxu0 0.0
  %740 = vmatpush1.msra.mxu0 0.0
  %741 = vmatprep.subr.mxu0 0.0
  %742 = vmatpush1.msra.mxu0 0.0
  %743 = vmatprep.subr.mxu0 0.0
  %744 = vmatpush1.msra.mxu0 0.0
  %745 = vmatprep.subr.mxu0 0.0
  %746 = vmatpush1.msra.mxu0 0.0
  %747 = vmatprep.subr.mxu0 0.0
  %748 = vmatpush1.msra.mxu0 0.0
  %749 = vmatprep.subr.mxu0 0.0
  %750 = vmatpush1.msra.mxu0 0.0
  %751 = vmatprep.subr.mxu0 0.0
  %752 = vmatpush1.msra.mxu0 0.0
  %753 = vmatprep.subr.mxu0 0.0
  %754 = vmatpush1.msra.mxu0 0.0
  %755 = vmatprep.subr.mxu0 0.0
  %756 = vmatpush1.msra.mxu0 0.0
  %757 = vmatprep.subr.mxu0 0.0
  %758 = vmatpush1.msra.mxu0 0.0
  %759 = vmatprep.subr.mxu0 0.0
  %760 = vmatpush1.msra.mxu0 0.0
  %761 = vmatprep.subr.mxu0 0.0
  %762 = vmatpush1.msra.mxu0 0.0
  %763 = vmatprep.subr.mxu0 0.0
  %764 = vmatpush1.msra.mxu0 0.0
  %765 = vmatprep.subr.mxu0 0.0
  %766 = vmatpush1.msra.mxu0 0.0
  %767 = vmatprep.subr.mxu0 0.0
  %768 = vmatpush1.msra.mxu0 0.0
  %769 = vmatprep.subr.mxu0 0.0
  %770 = vmatpush1.msra.mxu0 0.0
  %771 = vmatprep.subr.mxu0 0.0
  %772 = vmatpush1.msra.mxu0 0.0
  %773 = vmatprep.subr.mxu0 0.0
  %774 = vmatpush1.msra.mxu0 0.0
  %775 = vmatprep.subr.mxu0 0.0
  %776 = vmatpush1.msra.mxu0 0.0
  %777 = vmatprep.subr.mxu0 0.0
  %778 = vmatpush1.msra.mxu0 0.0
  %779 = vmatprep.subr.mxu0 0.0
  %780 = vmatpush1.msra.mxu0 0.0
  %781 = vmatprep.mubr.f32.mxu0 0.0
  %v782 = vand.u32 %v537, 4294901760
  %v783 = vsub.f32 %v537, %v782
  %784 = vmatmul.mubr.f32.gmra.mrb[0].mxu0 %v783
  %v785 = vpop.f32.mrb[0].mxu0
  %v786 = vadd.f32 %v706, %v785
  %v787 = vpop.f32.mrb[0].mxu0
  %788 = vdwg.mxu0
  %789 = vmatprep.subr.mxu0 0.0
  %v790 = vand.u32 %v63, 4294901760
  %791 = vmatpush1.msra.mxu0 %v790
  %792 = vmatprep.subr.mxu0 0.0
  %v793 = vand.u32 %v64, 4294901760
  %794 = vmatpush1.msra.mxu0 %v793
  %795 = vmatprep.subr.mxu0 0.0
  %v796 = vand.u32 %v65, 4294901760
  %797 = vmatpush1.msra.mxu0 %v796
  %798 = vmatprep.subr.mxu0 0.0
  %v799 = vand.u32 %v66, 4294901760
  %800 = vmatpush1.msra.mxu0 %v799
  %801 = vmatprep.subr.mxu0 0.0
  %802 = vmatpush1.msra.mxu0 0.0
  %803 = vmatprep.subr.mxu0 0.0
  %804 = vmatpush1.msra.mxu0 0.0
  %805 = vmatprep.subr.mxu0 0.0
  %806 = vmatpush1.msra.mxu0 0.0
  %807 = vmatprep.subr.mxu0 0.0
  %808 = vmatpush1.msra.mxu0 0.0
  %809 = vmatprep.subr.mxu0 0.0
  %810 = vmatpush1.msra.mxu0 0.0
  %811 = vmatprep.subr.mxu0 0.0
  %812 = vmatpush1.msra.mxu0 0.0
  %813 = vmatprep.subr.mxu0 0.0
  %814 = vmatpush1.msra.mxu0 0.0
  %815 = vmatprep.subr.mxu0 0.0
  %816 = vmatpush1.msra.mxu0 0.0
  %817 = vmatprep.subr.mxu0 0.0
  %818 = vmatpush1.msra.mxu0 0.0
  %819 = vmatprep.subr.mxu0 0.0
  %820 = vmatpush1.msra.mxu0 0.0
  %821 = vmatprep.subr.mxu0 0.0
  %822 = vmatpush1.msra.mxu0 0.0
  %823 = vmatprep.subr.mxu0 0.0
  %824 = vmatpush1.msra.mxu0 0.0
  %825 = vmatprep.subr.mxu0 0.0
  %826 = vmatpush1.msra.mxu0 0.0
  %827 = vmatprep.subr.mxu0 0.0
  %828 = vmatpush1.msra.mxu0 0.0
  %829 = vmatprep.subr.mxu0 0.0
  %830 = vmatpush1.msra.mxu0 0.0
  %831 = vmatprep.subr.mxu0 0.0
  %832 = vmatpush1.msra.mxu0 0.0
  %833 = vmatprep.subr.mxu0 0.0
  %834 = vmatpush1.msra.mxu0 0.0
  %835 = vmatprep.subr.mxu0 0.0
  %836 = vmatpush1.msra.mxu0 0.0
  %837 = vmatprep.subr.mxu0 0.0
  %838 = vmatpush1.msra.mxu0 0.0
  %839 = vmatprep.subr.mxu0 0.0
  %840 = vmatpush1.msra.mxu0 0.0
  %841 = vmatprep.subr.mxu0 0.0
  %842 = vmatpush1.msra.mxu0 0.0
  %843 = vmatprep.subr.mxu0 0.0
  %844 = vmatpush1.msra.mxu0 0.0
  %845 = vmatprep.subr.mxu0 0.0
  %846 = vmatpush1.msra.mxu0 0.0
  %847 = vmatprep.subr.mxu0 0.0
  %848 = vmatpush1.msra.mxu0 0.0
  %849 = vmatprep.subr.mxu0 0.0
  %850 = vmatpush1.msra.mxu0 0.0
  %851 = vmatprep.subr.mxu0 0.0
  %852 = vmatpush1.msra.mxu0 0.0
  %853 = vmatprep.subr.mxu0 0.0
  %854 = vmatpush1.msra.mxu0 0.0
  %855 = vmatprep.subr.mxu0 0.0
  %856 = vmatpush1.msra.mxu0 0.0
  %857 = vmatprep.mubr.f32.mxu0 0.0
  %v858 = vand.u32 %v537, 4294901760
  %v859 = vsub.f32 %v537, %v858
  %v860 = vand.u32 %v859, 4294901760
  %861 = vmatmul.mubr.f32.gmra.mrb[0].mxu0 %v860
  %v862 = vpop.f32.mrb[0].mxu0
  %v863 = vadd.f32 %v786, %v862
  %v864 = vpop.f32.mrb[0].mxu0
  %865 = vdwg.mxu0
  %866 = vmatprep.subr.mxu0 0.0
  %v867 = vand.u32 %v63, 4294901760
  %v868 = vsub.f32 %v63, %v867
  %v869 = vand.u32 %v868, 4294901760
  %870 = vmatpush1.msra.mxu0 %v869
  %871 = vmatprep.subr.mxu0 0.0
  %v872 = vand.u32 %v64, 4294901760
  %v873 = vsub.f32 %v64, %v872
  %v874 = vand.u32 %v873, 4294901760
  %875 = vmatpush1.msra.mxu0 %v874
  %876 = vmatprep.subr.mxu0 0.0
  %v877 = vand.u32 %v65, 4294901760
  %v878 = vsub.f32 %v65, %v877
  %v879 = vand.u32 %v878, 4294901760
  %880 = vmatpush1.msra.mxu0 %v879
  %881 = vmatprep.subr.mxu0 0.0
  %v882 = vand.u32 %v66, 4294901760
  %v883 = vsub.f32 %v66, %v882
  %v884 = vand.u32 %v883, 4294901760
  %885 = vmatpush1.msra.mxu0 %v884
  %886 = vmatprep.subr.mxu0 0.0
  %887 = vmatpush1.msra.mxu0 0.0
  %888 = vmatprep.subr.mxu0 0.0
  %889 = vmatpush1.msra.mxu0 0.0
  %890 = vmatprep.subr.mxu0 0.0
  %891 = vmatpush1.msra.mxu0 0.0
  %892 = vmatprep.subr.mxu0 0.0
  %893 = vmatpush1.msra.mxu0 0.0
  %894 = vmatprep.subr.mxu0 0.0
  %895 = vmatpush1.msra.mxu0 0.0
  %896 = vmatprep.subr.mxu0 0.0
  %897 = vmatpush1.msra.mxu0 0.0
  %898 = vmatprep.subr.mxu0 0.0
  %899 = vmatpush1.msra.mxu0 0.0
  %900 = vmatprep.subr.mxu0 0.0
  %901 = vmatpush1.msra.mxu0 0.0
  %902 = vmatprep.subr.mxu0 0.0
  %903 = vmatpush1.msra.mxu0 0.0
  %904 = vmatprep.subr.mxu0 0.0
  %905 = vmatpush1.msra.mxu0 0.0
  %906 = vmatprep.subr.mxu0 0.0
  %907 = vmatpush1.msra.mxu0 0.0
  %908 = vmatprep.subr.mxu0 0.0
  %909 = vmatpush1.msra.mxu0 0.0
  %910 = vmatprep.subr.mxu0 0.0
  %911 = vmatpush1.msra.mxu0 0.0
  %912 = vmatprep.subr.mxu0 0.0
  %913 = vmatpush1.msra.mxu0 0.0
  %914 = vmatprep.subr.mxu0 0.0
  %915 = vmatpush1.msra.mxu0 0.0
  %916 = vmatprep.subr.mxu0 0.0
  %917 = vmatpush1.msra.mxu0 0.0
  %918 = vmatprep.subr.mxu0 0.0
  %919 = vmatpush1.msra.mxu0 0.0
  %920 = vmatprep.subr.mxu0 0.0
  %921 = vmatpush1.msra.mxu0 0.0
  %922 = vmatprep.subr.mxu0 0.0
  %923 = vmatpush1.msra.mxu0 0.0
  %924 = vmatprep.subr.mxu0 0.0
  %925 = vmatpush1.msra.mxu0 0.0
  %926 = vmatprep.subr.mxu0 0.0
  %927 = vmatpush1.msra.mxu0 0.0
  %928 = vmatprep.subr.mxu0 0.0
  %929 = vmatpush1.msra.mxu0 0.0
  %930 = vmatprep.subr.mxu0 0.0
  %931 = vmatpush1.msra.mxu0 0.0
  %932 = vmatprep.subr.mxu0 0.0
  %933 = vmatpush1.msra.mxu0 0.0
  %934 = vmatprep.subr.mxu0 0.0
  %935 = vmatpush1.msra.mxu0 0.0
  %936 = vmatprep.subr.mxu0 0.0
  %937 = vmatpush1.msra.mxu0 0.0
  %938 = vmatprep.subr.mxu0 0.0
  %939 = vmatpush1.msra.mxu0 0.0
  %940 = vmatprep.subr.mxu0 0.0
  %941 = vmatpush1.msra.mxu0 0.0
  %942 = vmatprep.mubr.f32.mxu0 0.0
  %v943 = vand.u32 %v537, 4294901760
  %944 = vmatmul.mubr.f32.gmra.mrb[0].mxu0 %v943
  %v945 = vpop.f32.mrb[0].mxu0
  %v946 = vadd.f32 %v863, %v945
  %v947 = vpop.f32.mrb[0].mxu0
  %948 = vdwg.mxu0
  %949 = vmatprep.subr.mxu0 0.0
  %v950 = vand.u32 %v63, 4294901760
  %951 = vmatpush1.msra.mxu0 %v950
  %952 = vmatprep.subr.mxu0 0.0
  %v953 = vand.u32 %v64, 4294901760
  %954 = vmatpush1.msra.mxu0 %v953
  %955 = vmatprep.subr.mxu0 0.0
  %v956 = vand.u32 %v65, 4294901760
  %957 = vmatpush1.msra.mxu0 %v956
  %958 = vmatprep.subr.mxu0 0.0
  %v959 = vand.u32 %v66, 4294901760
  %960 = vmatpush1.msra.mxu0 %v959
  %961 = vmatprep.subr.mxu0 0.0
  %962 = vmatpush1.msra.mxu0 0.0
  %963 = vmatprep.subr.mxu0 0.0
  %964 = vmatpush1.msra.mxu0 0.0
  %965 = vmatprep.subr.mxu0 0.0
  %966 = vmatpush1.msra.mxu0 0.0
  %967 = vmatprep.subr.mxu0 0.0
  %968 = vmatpush1.msra.mxu0 0.0
  %969 = vmatprep.subr.mxu0 0.0
  %970 = vmatpush1.msra.mxu0 0.0
  %971 = vmatprep.subr.mxu0 0.0
  %972 = vmatpush1.msra.mxu0 0.0
  %973 = vmatprep.subr.mxu0 0.0
  %974 = vmatpush1.msra.mxu0 0.0
  %975 = vmatprep.subr.mxu0 0.0
  %976 = vmatpush1.msra.mxu0 0.0
  %977 = vmatprep.subr.mxu0 0.0
  %978 = vmatpush1.msra.mxu0 0.0
  %979 = vmatprep.subr.mxu0 0.0
  %980 = vmatpush1.msra.mxu0 0.0
  %981 = vmatprep.subr.mxu0 0.0
  %982 = vmatpush1.msra.mxu0 0.0
  %983 = vmatprep.subr.mxu0 0.0
  %984 = vmatpush1.msra.mxu0 0.0
  %985 = vmatprep.subr.mxu0 0.0
  %986 = vmatpush1.msra.mxu0 0.0
  %987 = vmatprep.subr.mxu0 0.0
  %988 = vmatpush1.msra.mxu0 0.0
  %989 = vmatprep.subr.mxu0 0.0
  %990 = vmatpush1.msra.mxu0 0.0
  %991 = vmatprep.subr.mxu0 0.0
  %992 = vmatpush1.msra.mxu0 0.0
  %993 = vmatprep.subr.mxu0 0.0
  %994 = vmatpush1.msra.mxu0 0.0
  %995 = vmatprep.subr.mxu0 0.0
  %996 = vmatpush1.msra.mxu0 0.0
  %997 = vmatprep.subr.mxu0 0.0
  %998 = vmatpush1.msra.mxu0 0.0
  %999 = vmatprep.subr.mxu0 0.0
  %1000 = vmatpush1.msra.mxu0 0.0
  %1001 = vmatprep.subr.mxu0 0.0
  %1002 = vmatpush1.msra.mxu0 0.0
  %1003 = vmatprep.subr.mxu0 0.0
  %1004 = vmatpush1.msra.mxu0 0.0
  %1005 = vmatprep.subr.mxu0 0.0
  %1006 = vmatpush1.msra.mxu0 0.0
  %1007 = vmatprep.subr.mxu0 0.0
  %1008 = vmatpush1.msra.mxu0 0.0
  %1009 = vmatprep.subr.mxu0 0.0
  %1010 = vmatpush1.msra.mxu0 0.0
  %1011 = vmatprep.subr.mxu0 0.0
  %1012 = vmatpush1.msra.mxu0 0.0
  %1013 = vmatprep.subr.mxu0 0.0
  %1014 = vmatpush1.msra.mxu0 0.0
  %1015 = vmatprep.subr.mxu0 0.0
  %1016 = vmatpush1.msra.mxu0 0.0
  %1017 = vmatprep.mubr.f32.mxu0 0.0
  %v1018 = vand.u32 %v537, 4294901760
  %1019 = vmatmul.mubr.f32.gmra.mrb[0].mxu0 %v1018
  %v1020 = vpop.f32.mrb[0].mxu0
  %v1021 = vadd.f32 %v946, %v1020
  %v1022 = vpop.f32.mrb[0].mxu0
  %1023 = vdwg.mxu0
  %v1025 = vsel %vm80, %v534, 0
  %v1028 = vsel %vm84, %v62, 0
  %1030 = vmatprep.subr.mxu0 0.0
  %v1031 = vand.u32 %v1028, 4294901760
  %1032 = vmatpush1.msra.mxu0 %v1031
  %1033 = vmatprep.subr.mxu0 0.0
  %1034 = vmatpush1.msra.mxu0 0.0
  %1035 = vmatprep.subr.mxu0 0.0
  %1036 = vmatpush1.msra.mxu0 0.0
  %1037 = vmatprep.subr.mxu0 0.0
  %1038 = vmatpush1.msra.mxu0 0.0
  %1039 = vmatprep.subr.mxu0 0.0
  %1040 = vmatpush1.msra.mxu0 0.0
  %1041 = vmatprep.subr.mxu0 0.0
  %1042 = vmatpush1.msra.mxu0 0.0
  %1043 = vmatprep.subr.mxu0 0.0
  %1044 = vmatpush1.msra.mxu0 0.0
  %1045 = vmatprep.subr.mxu0 0.0
  %1046 = vmatpush1.msra.mxu0 0.0
  %1047 = vmatprep.subr.mxu0 0.0
  %1048 = vmatpush1.msra.mxu0 0.0
  %1049 = vmatprep.subr.mxu0 0.0
  %1050 = vmatpush1.msra.mxu0 0.0
  %1051 = vmatprep.subr.mxu0 0.0
  %1052 = vmatpush1.msra.mxu0 0.0
  %1053 = vmatprep.subr.mxu0 0.0
  %1054 = vmatpush1.msra.mxu0 0.0
  %1055 = vmatprep.subr.mxu0 0.0
  %1056 = vmatpush1.msra.mxu0 0.0
  %1057 = vmatprep.subr.mxu0 0.0
  %1058 = vmatpush1.msra.mxu0 0.0
  %1059 = vmatprep.subr.mxu0 0.0
  %1060 = vmatpush1.msra.mxu0 0.0
  %1061 = vmatprep.subr.mxu0 0.0
  %1062 = vmatpush1.msra.mxu0 0.0
  %1063 = vmatprep.subr.mxu0 0.0
  %1064 = vmatpush1.msra.mxu0 0.0
  %1065 = vmatprep.subr.mxu0 0.0
  %1066 = vmatpush1.msra.mxu0 0.0
  %1067 = vmatprep.subr.mxu0 0.0
  %1068 = vmatpush1.msra.mxu0 0.0
  %1069 = vmatprep.subr.mxu0 0.0
  %1070 = vmatpush1.msra.mxu0 0.0
  %1071 = vmatprep.subr.mxu0 0.0
  %1072 = vmatpush1.msra.mxu0 0.0
  %1073 = vmatprep.subr.mxu0 0.0
  %1074 = vmatpush1.msra.mxu0 0.0
  %1075 = vmatprep.subr.mxu0 0.0
  %1076 = vmatpush1.msra.mxu0 0.0
  %1077 = vmatprep.subr.mxu0 0.0
  %1078 = vmatpush1.msra.mxu0 0.0
  %1079 = vmatprep.subr.mxu0 0.0
  %1080 = vmatpush1.msra.mxu0 0.0
  %1081 = vmatprep.subr.mxu0 0.0
  %1082 = vmatpush1.msra.mxu0 0.0
  %1083 = vmatprep.subr.mxu0 0.0
  %1084 = vmatpush1.msra.mxu0 0.0
  %1085 = vmatprep.subr.mxu0 0.0
  %1086 = vmatpush1.msra.mxu0 0.0
  %1087 = vmatprep.subr.mxu0 0.0
  %1088 = vmatpush1.msra.mxu0 0.0
  %1089 = vmatprep.subr.mxu0 0.0
  %1090 = vmatpush1.msra.mxu0 0.0
  %1091 = vmatprep.subr.mxu0 0.0
  %1092 = vmatpush1.msra.mxu0 0.0
  %1093 = vmatprep.subr.mxu0 0.0
  %1094 = vmatpush1.msra.mxu0 0.0
  %1095 = vmatprep.mubr.f32.mxu0 0.0
  %v1096 = vand.u32 %v1025, 4294901760
  %v1097 = vsub.f32 %v1025, %v1096
  %v1098 = vand.u32 %v1097, 4294901760
  %v1099 = vsub.f32 %v1097, %v1098
  %v1100 = vand.u32 %v1099, 4294901760
  %1101 = vmatmul.mubr.f32.gmra.mrb[0].mxu0 %v1100
  %v1102 = vpop.f32.mrb[0].mxu0
  %v1103 = vadd.f32 %v1021, %v1102
  %v1104 = vpop.f32.mrb[0].mxu0
  %1105 = vdwg.mxu0
  %1106 = vmatprep.subr.mxu0 0.0
  %v1107 = vand.u32 %v1028, 4294901760
  %v1108 = vsub.f32 %v1028, %v1107
  %v1109 = vand.u32 %v1108, 4294901760
  %v1110 = vsub.f32 %v1108, %v1109
  %v1111 = vand.u32 %v1110, 4294901760
  %1112 = vmatpush1.msra.mxu0 %v1111
  %1113 = vmatprep.subr.mxu0 0.0
  %1114 = vmatpush1.msra.mxu0 0.0
  %1115 = vmatprep.subr.mxu0 0.0
  %1116 = vmatpush1.msra.mxu0 0.0
  %1117 = vmatprep.subr.mxu0 0.0
  %1118 = vmatpush1.msra.mxu0 0.0
  %1119 = vmatprep.subr.mxu0 0.0
  %1120 = vmatpush1.msra.mxu0 0.0
  %1121 = vmatprep.subr.mxu0 0.0
  %1122 = vmatpush1.msra.mxu0 0.0
  %1123 = vmatprep.subr.mxu0 0.0
  %1124 = vmatpush1.msra.mxu0 0.0
  %1125 = vmatprep.subr.mxu0 0.0
  %1126 = vmatpush1.msra.mxu0 0.0
  %1127 = vmatprep.subr.mxu0 0.0
  %1128 = vmatpush1.msra.mxu0 0.0
  %1129 = vmatprep.subr.mxu0 0.0
  %1130 = vmatpush1.msra.mxu0 0.0
  %1131 = vmatprep.subr.mxu0 0.0
  %1132 = vmatpush1.msra.mxu0 0.0
  %1133 = vmatprep.subr.mxu0 0.0
  %1134 = vmatpush1.msra.mxu0 0.0
  %1135 = vmatprep.subr.mxu0 0.0
  %1136 = vmatpush1.msra.mxu0 0.0
  %1137 = vmatprep.subr.mxu0 0.0
  %1138 = vmatpush1.msra.mxu0 0.0
  %1139 = vmatprep.subr.mxu0 0.0
  %1140 = vmatpush1.msra.mxu0 0.0
  %1141 = vmatprep.subr.mxu0 0.0
  %1142 = vmatpush1.msra.mxu0 0.0
  %1143 = vmatprep.subr.mxu0 0.0
  %1144 = vmatpush1.msra.mxu0 0.0
  %1145 = vmatprep.subr.mxu0 0.0
  %1146 = vmatpush1.msra.mxu0 0.0
  %1147 = vmatprep.subr.mxu0 0.0
  %1148 = vmatpush1.msra.mxu0 0.0
  %1149 = vmatprep.subr.mxu0 0.0
  %1150 = vmatpush1.msra.mxu0 0.0
  %1151 = vmatprep.subr.mxu0 0.0
  %1152 = vmatpush1.msra.mxu0 0.0
  %1153 = vmatprep.subr.mxu0 0.0
  %1154 = vmatpush1.msra.mxu0 0.0
  %1155 = vmatprep.subr.mxu0 0.0
  %1156 = vmatpush1.msra.mxu0 0.0
  %1157 = vmatprep.subr.mxu0 0.0
  %1158 = vmatpush1.msra.mxu0 0.0
  %1159 = vmatprep.subr.mxu0 0.0
  %1160 = vmatpush1.msra.mxu0 0.0
  %1161 = vmatprep.subr.mxu0 0.0
  %1162 = vmatpush1.msra.mxu0 0.0
  %1163 = vmatprep.subr.mxu0 0.0
  %1164 = vmatpush1.msra.mxu0 0.0
  %1165 = vmatprep.subr.mxu0 0.0
  %1166 = vmatpush1.msra.mxu0 0.0
  %1167 = vmatprep.subr.mxu0 0.0
  %1168 = vmatpush1.msra.mxu0 0.0
  %1169 = vmatprep.subr.mxu0 0.0
  %1170 = vmatpush1.msra.mxu0 0.0
  %1171 = vmatprep.subr.mxu0 0.0
  %1172 = vmatpush1.msra.mxu0 0.0
  %1173 = vmatprep.subr.mxu0 0.0
  %1174 = vmatpush1.msra.mxu0 0.0
  %1175 = vmatprep.mubr.f32.mxu0 0.0
  %v1176 = vand.u32 %v1025, 4294901760
  %1177 = vmatmul.mubr.f32.gmra.mrb[0].mxu0 %v1176
  %v1178 = vpop.f32.mrb[0].mxu0
  %v1179 = vadd.f32 %v1103, %v1178
  %v1180 = vpop.f32.mrb[0].mxu0
  %1181 = vdwg.mxu0
  %1182 = vmatprep.subr.mxu0 0.0
  %v1183 = vand.u32 %v1028, 4294901760
  %v1184 = vsub.f32 %v1028, %v1183
  %1185 = vmatpush1.msra.mxu0 %v1184
  %1186 = vmatprep.subr.mxu0 0.0
  %1187 = vmatpush1.msra.mxu0 0.0
  %1188 = vmatprep.subr.mxu0 0.0
  %1189 = vmatpush1.msra.mxu0 0.0
  %1190 = vmatprep.subr.mxu0 0.0
  %1191 = vmatpush1.msra.mxu0 0.0
  %1192 = vmatprep.subr.mxu0 0.0
  %1193 = vmatpush1.msra.mxu0 0.0
  %1194 = vmatprep.subr.mxu0 0.0
  %1195 = vmatpush1.msra.mxu0 0.0
  %1196 = vmatprep.subr.mxu0 0.0
  %1197 = vmatpush1.msra.mxu0 0.0
  %1198 = vmatprep.subr.mxu0 0.0
  %1199 = vmatpush1.msra.mxu0 0.0
  %1200 = vmatprep.subr.mxu0 0.0
  %1201 = vmatpush1.msra.mxu0 0.0
  %1202 = vmatprep.subr.mxu0 0.0
  %1203 = vmatpush1.msra.mxu0 0.0
  %1204 = vmatprep.subr.mxu0 0.0
  %1205 = vmatpush1.msra.mxu0 0.0
  %1206 = vmatprep.subr.mxu0 0.0
  %1207 = vmatpush1.msra.mxu0 0.0
  %1208 = vmatprep.subr.mxu0 0.0
  %1209 = vmatpush1.msra.mxu0 0.0
  %1210 = vmatprep.subr.mxu0 0.0
  %1211 = vmatpush1.msra.mxu0 0.0
  %1212 = vmatprep.subr.mxu0 0.0
  %1213 = vmatpush1.msra.mxu0 0.0
  %1214 = vmatprep.subr.mxu0 0.0
  %1215 = vmatpush1.msra.mxu0 0.0
  %1216 = vmatprep.subr.mxu0 0.0
  %1217 = vmatpush1.msra.mxu0 0.0
  %1218 = vmatprep.subr.mxu0 0.0
  %1219 = vmatpush1.msra.mxu0 0.0
  %1220 = vmatprep.subr.mxu0 0.0
  %1221 = vmatpush1.msra.mxu0 0.0
  %1222 = vmatprep.subr.mxu0 0.0
  %1223 = vmatpush1.msra.mxu0 0.0
  %1224 = vmatprep.subr.mxu0 0.0
  %1225 = vmatpush1.msra.mxu0 0.0
  %1226 = vmatprep.subr.mxu0 0.0
  %1227 = vmatpush1.msra.mxu0 0.0
  %1228 = vmatprep.subr.mxu0 0.0
  %1229 = vmatpush1.msra.mxu0 0.0
  %1230 = vmatprep.subr.mxu0 0.0
  %1231 = vmatpush1.msra.mxu0 0.0
  %1232 = vmatprep.subr.mxu0 0.0
  %1233 = vmatpush1.msra.mxu0 0.0
  %1234 = vmatprep.subr.mxu0 0.0
  %1235 = vmatpush1.msra.mxu0 0.0
  %1236 = vmatprep.subr.mxu0 0.0
  %1237 = vmatpush1.msra.mxu0 0.0
  %1238 = vmatprep.subr.mxu0 0.0
  %1239 = vmatpush1.msra.mxu0 0.0
  %1240 = vmatprep.subr.mxu0 0.0
  %1241 = vmatpush1.msra.mxu0 0.0
  %1242 = vmatprep.subr.mxu0 0.0
  %1243 = vmatpush1.msra.mxu0 0.0
  %1244 = vmatprep.subr.mxu0 0.0
  %1245 = vmatpush1.msra.mxu0 0.0
  %1246 = vmatprep.subr.mxu0 0.0
  %1247 = vmatpush1.msra.mxu0 0.0
  %1248 = vmatprep.mubr.f32.mxu0 0.0
  %v1249 = vand.u32 %v1025, 4294901760
  %v1250 = vsub.f32 %v1025, %v1249
  %1251 = vmatmul.mubr.f32.gmra.mrb[0].mxu0 %v1250
  %v1252 = vpop.f32.mrb[0].mxu0
  %v1253 = vadd.f32 %v1179, %v1252
  %v1254 = vpop.f32.mrb[0].mxu0
  %1255 = vdwg.mxu0
  %1256 = vmatprep.subr.mxu0 0.0
  %v1257 = vand.u32 %v1028, 4294901760
  %1258 = vmatpush1.msra.mxu0 %v1257
  %1259 = vmatprep.subr.mxu0 0.0
  %1260 = vmatpush1.msra.mxu0 0.0
  %1261 = vmatprep.subr.mxu0 0.0
  %1262 = vmatpush1.msra.mxu0 0.0
  %1263 = vmatprep.subr.mxu0 0.0
  %1264 = vmatpush1.msra.mxu0 0.0
  %1265 = vmatprep.subr.mxu0 0.0
  %1266 = vmatpush1.msra.mxu0 0.0
  %1267 = vmatprep.subr.mxu0 0.0
  %1268 = vmatpush1.msra.mxu0 0.0
  %1269 = vmatprep.subr.mxu0 0.0
  %1270 = vmatpush1.msra.mxu0 0.0
  %1271 = vmatprep.subr.mxu0 0.0
  %1272 = vmatpush1.msra.mxu0 0.0
  %1273 = vmatprep.subr.mxu0 0.0
  %1274 = vmatpush1.msra.mxu0 0.0
  %1275 = vmatprep.subr.mxu0 0.0
  %1276 = vmatpush1.msra.mxu0 0.0
  %1277 = vmatprep.subr.mxu0 0.0
  %1278 = vmatpush1.msra.mxu0 0.0
  %1279 = vmatprep.subr.mxu0 0.0
  %1280 = vmatpush1.msra.mxu0 0.0
  %1281 = vmatprep.subr.mxu0 0.0
  %1282 = vmatpush1.msra.mxu0 0.0
  %1283 = vmatprep.subr.mxu0 0.0
  %1284 = vmatpush1.msra.mxu0 0.0
  %1285 = vmatprep.subr.mxu0 0.0
  %1286 = vmatpush1.msra.mxu0 0.0
  %1287 = vmatprep.subr.mxu0 0.0
  %1288 = vmatpush1.msra.mxu0 0.0
  %1289 = vmatprep.subr.mxu0 0.0
  %1290 = vmatpush1.msra.mxu0 0.0
  %1291 = vmatprep.subr.mxu0 0.0
  %1292 = vmatpush1.msra.mxu0 0.0
  %1293 = vmatprep.subr.mxu0 0.0
  %1294 = vmatpush1.msra.mxu0 0.0
  %1295 = vmatprep.subr.mxu0 0.0
  %1296 = vmatpush1.msra.mxu0 0.0
  %1297 = vmatprep.subr.mxu0 0.0
  %1298 = vmatpush1.msra.mxu0 0.0
  %1299 = vmatprep.subr.mxu0 0.0
  %1300 = vmatpush1.msra.mxu0 0.0
  %1301 = vmatprep.subr.mxu0 0.0
  %1302 = vmatpush1.msra.mxu0 0.0
  %1303 = vmatprep.subr.mxu0 0.0
  %1304 = vmatpush1.msra.mxu0 0.0
  %1305 = vmatprep.subr.mxu0 0.0
  %1306 = vmatpush1.msra.mxu0 0.0
  %1307 = vmatprep.subr.mxu0 0.0
  %1308 = vmatpush1.msra.mxu0 0.0
  %1309 = vmatprep.subr.mxu0 0.0
  %1310 = vmatpush1.msra.mxu0 0.0
  %1311 = vmatprep.subr.mxu0 0.0
  %1312 = vmatpush1.msra.mxu0 0.0
  %1313 = vmatprep.subr.mxu0 0.0
  %1314 = vmatpush1.msra.mxu0 0.0
  %1315 = vmatprep.subr.mxu0 0.0
  %1316 = vmatpush1.msra.mxu0 0.0
  %1317 = vmatprep.subr.mxu0 0.0
  %1318 = vmatpush1.msra.mxu0 0.0
  %1319 = vmatprep.subr.mxu0 0.0
  %1320 = vmatpush1.msra.mxu0 0.0
  %1321 = vmatprep.mubr.f32.mxu0 0.0
  %v1322 = vand.u32 %v1025, 4294901760
  %v1323 = vsub.f32 %v1025, %v1322
  %v1324 = vand.u32 %v1323, 4294901760
  %1325 = vmatmul.mubr.f32.gmra.mrb[0].mxu0 %v1324
  %v1326 = vpop.f32.mrb[0].mxu0
  %v1327 = vadd.f32 %v1253, %v1326
  %v1328 = vpop.f32.mrb[0].mxu0
  %1329 = vdwg.mxu0
  %1330 = vmatprep.subr.mxu0 0.0
  %v1331 = vand.u32 %v1028, 4294901760
  %v1332 = vsub.f32 %v1028, %v1331
  %v1333 = vand.u32 %v1332, 4294901760
  %1334 = vmatpush1.msra.mxu0 %v1333
  %1335 = vmatprep.subr.mxu0 0.0
  %1336 = vmatpush1.msra.mxu0 0.0
  %1337 = vmatprep.subr.mxu0 0.0
  %1338 = vmatpush1.msra.mxu0 0.0
  %1339 = vmatprep.subr.mxu0 0.0
  %1340 = vmatpush1.msra.mxu0 0.0
  %1341 = vmatprep.subr.mxu0 0.0
  %1342 = vmatpush1.msra.mxu0 0.0
  %1343 = vmatprep.subr.mxu0 0.0
  %1344 = vmatpush1.msra.mxu0 0.0
  %1345 = vmatprep.subr.mxu0 0.0
  %1346 = vmatpush1.msra.mxu0 0.0
  %1347 = vmatprep.subr.mxu0 0.0
  %1348 = vmatpush1.msra.mxu0 0.0
  %1349 = vmatprep.subr.mxu0 0.0
  %1350 = vmatpush1.msra.mxu0 0.0
  %1351 = vmatprep.subr.mxu0 0.0
  %1352 = vmatpush1.msra.mxu0 0.0
  %1353 = vmatprep.subr.mxu0 0.0
  %1354 = vmatpush1.msra.mxu0 0.0
  %1355 = vmatprep.subr.mxu0 0.0
  %1356 = vmatpush1.msra.mxu0 0.0
  %1357 = vmatprep.subr.mxu0 0.0
  %1358 = vmatpush1.msra.mxu0 0.0
  %1359 = vmatprep.subr.mxu0 0.0
  %1360 = vmatpush1.msra.mxu0 0.0
  %1361 = vmatprep.subr.mxu0 0.0
  %1362 = vmatpush1.msra.mxu0 0.0
  %1363 = vmatprep.subr.mxu0 0.0
  %1364 = vmatpush1.msra.mxu0 0.0
  %1365 = vmatprep.subr.mxu0 0.0
  %1366 = vmatpush1.msra.mxu0 0.0
  %1367 = vmatprep.subr.mxu0 0.0
  %1368 = vmatpush1.msra.mxu0 0.0
  %1369 = vmatprep.subr.mxu0 0.0
  %1370 = vmatpush1.msra.mxu0 0.0
  %1371 = vmatprep.subr.mxu0 0.0
  %1372 = vmatpush1.msra.mxu0 0.0
  %1373 = vmatprep.subr.mxu0 0.0
  %1374 = vmatpush1.msra.mxu0 0.0
  %1375 = vmatprep.subr.mxu0 0.0
  %1376 = vmatpush1.msra.mxu0 0.0
  %1377 = vmatprep.subr.mxu0 0.0
  %1378 = vmatpush1.msra.mxu0 0.0
  %1379 = vmatprep.subr.mxu0 0.0
  %1380 = vmatpush1.msra.mxu0 0.0
  %1381 = vmatprep.subr.mxu0 0.0
  %1382 = vmatpush1.msra.mxu0 0.0
  %1383 = vmatprep.subr.mxu0 0.0
  %1384 = vmatpush1.msra.mxu0 0.0
  %1385 = vmatprep.subr.mxu0 0.0
  %1386 = vmatpush1.msra.mxu0 0.0
  %1387 = vmatprep.subr.mxu0 0.0
  %1388 = vmatpush1.msra.mxu0 0.0
  %1389 = vmatprep.subr.mxu0 0.0
  %1390 = vmatpush1.msra.mxu0 0.0
  %1391 = vmatprep.subr.mxu0 0.0
  %1392 = vmatpush1.msra.mxu0 0.0
  %1393 = vmatprep.subr.mxu0 0.0
  %1394 = vmatpush1.msra.mxu0 0.0
  %1395 = vmatprep.subr.mxu0 0.0
  %1396 = vmatpush1.msra.mxu0 0.0
  %1397 = vmatprep.mubr.f32.mxu0 0.0
  %v1398 = vand.u32 %v1025, 4294901760
  %1399 = vmatmul.mubr.f32.gmra.mrb[0].mxu0 %v1398
  %v1400 = vpop.f32.mrb[0].mxu0
  %v1401 = vadd.f32 %v1327, %v1400
  %v1402 = vpop.f32.mrb[0].mxu0
  %1403 = vdwg.mxu0
  %1404 = vmatprep.subr.mxu0 0.0
  %v1405 = vand.u32 %v1028, 4294901760
  %1406 = vmatpush1.msra.mxu0 %v1405
  %1407 = vmatprep.subr.mxu0 0.0
  %1408 = vmatpush1.msra.mxu0 0.0
  %1409 = vmatprep.subr.mxu0 0.0
  %1410 = vmatpush1.msra.mxu0 0.0
  %1411 = vmatprep.subr.mxu0 0.0
  %1412 = vmatpush1.msra.mxu0 0.0
  %1413 = vmatprep.subr.mxu0 0.0
  %1414 = vmatpush1.msra.mxu0 0.0
  %1415 = vmatprep.subr.mxu0 0.0
  %1416 = vmatpush1.msra.mxu0 0.0
  %1417 = vmatprep.subr.mxu0 0.0
  %1418 = vmatpush1.msra.mxu0 0.0
  %1419 = vmatprep.subr.mxu0 0.0
  %1420 = vmatpush1.msra.mxu0 0.0
  %1421 = vmatprep.subr.mxu0 0.0
  %1422 = vmatpush1.msra.mxu0 0.0
  %1423 = vmatprep.subr.mxu0 0.0
  %1424 = vmatpush1.msra.mxu0 0.0
  %1425 = vmatprep.subr.mxu0 0.0
  %1426 = vmatpush1.msra.mxu0 0.0
  %1427 = vmatprep.subr.mxu0 0.0
  %1428 = vmatpush1.msra.mxu0 0.0
  %1429 = vmatprep.subr.mxu0 0.0
  %1430 = vmatpush1.msra.mxu0 0.0
  %1431 = vmatprep.subr.mxu0 0.0
  %1432 = vmatpush1.msra.mxu0 0.0
  %1433 = vmatprep.subr.mxu0 0.0
  %1434 = vmatpush1.msra.mxu0 0.0
  %1435 = vmatprep.subr.mxu0 0.0
  %1436 = vmatpush1.msra.mxu0 0.0
  %1437 = vmatprep.subr.mxu0 0.0
  %1438 = vmatpush1.msra.mxu0 0.0
  %1439 = vmatprep.subr.mxu0 0.0
  %1440 = vmatpush1.msra.mxu0 0.0
  %1441 = vmatprep.subr.mxu0 0.0
  %1442 = vmatpush1.msra.mxu0 0.0
  %1443 = vmatprep.subr.mxu0 0.0
  %1444 = vmatpush1.msra.mxu0 0.0
  %1445 = vmatprep.subr.mxu0 0.0
  %1446 = vmatpush1.msra.mxu0 0.0
  %1447 = vmatprep.subr.mxu0 0.0
  %1448 = vmatpush1.msra.mxu0 0.0
  %1449 = vmatprep.subr.mxu0 0.0
  %1450 = vmatpush1.msra.mxu0 0.0
  %1451 = vmatprep.subr.mxu0 0.0
  %1452 = vmatpush1.msra.mxu0 0.0
  %1453 = vmatprep.subr.mxu0 0.0
  %1454 = vmatpush1.msra.mxu0 0.0
  %1455 = vmatprep.subr.mxu0 0.0
  %1456 = vmatpush1.msra.mxu0 0.0
  %1457 = vmatprep.subr.mxu0 0.0
  %1458 = vmatpush1.msra.mxu0 0.0
  %1459 = vmatprep.subr.mxu0 0.0
  %1460 = vmatpush1.msra.mxu0 0.0
  %1461 = vmatprep.subr.mxu0 0.0
  %1462 = vmatpush1.msra.mxu0 0.0
  %1463 = vmatprep.subr.mxu0 0.0
  %1464 = vmatpush1.msra.mxu0 0.0
  %1465 = vmatprep.subr.mxu0 0.0
  %1466 = vmatpush1.msra.mxu0 0.0
  %1467 = vmatprep.subr.mxu0 0.0
  %1468 = vmatpush1.msra.mxu0 0.0
  %1469 = vmatprep.mubr.f32.mxu0 0.0
  %v1470 = vand.u32 %v1025, 4294901760
  %1471 = vmatmul.mubr.f32.gmra.mrb[0].mxu0 %v1470
  %v1472 = vpop.f32.mrb[0].mxu0
  %v1473 = vadd.f32 %v1401, %v1472
  %v1474 = vpop.f32.mrb[0].mxu0
  %1475 = vdwg.mxu0
  %v1477 = vlaneseq
  %v1478 = vshrl.u32 %v1477, 7
  %v1479 = vsub.s32 0, %v1478
  %v1480 = vrot.slane %v67, %v1479
  %v1482 = vadd.f32 %v1473, %v1480
  %v1483 = vxor.u32 %v1482, 2147483648
  %v1484 = vmul.f32 %v1483, 1.442695
  %v1485 = vpow.pop %v1484
  %v1486 = vadd.f32 %v1485, 1.0
  %v1487 = vrcp.pop %v1486
  %v1488 = vmul.f32 1.0, %v1487
  %v1489 = vtanh.pop %v1482
  %v1490 = vmul.f32 %v1488, 0.0
  %1492 = vrot.lane.b32.xlu0 %v1489, 64
  %v1493 = vpop.permute.xlu0 %1492
  %v1495 = vmul.f32 %v1488, %v1493
  %1497 = vrot.lane.b32.xlu0 %v1495, 32
  %v1498 = vpop.permute.xlu0 %1497
  %v1500 = vadd.f32 %v1490, %v1498
  %v1501 = vtanh.pop %v1500
  %1503 = vrot.lane.b32.xlu0 %v1501, 64
  %v1504 = vpop.permute.xlu0 %1503
  %v1506 = vmul.f32 %v1488, %v1504
  loop: start=1, step=1, limit=8
  $region70: #{tpu_custom_call.1} parent=0 // loop_pre_header
    _
  $region71: #{tpu_custom_call.1} parent=0 // loop_header
    %s1508 = sphi 1, %s1512
    %p1509 = scmp.ge.s32.totalorder %s1508, 8
    %v1513 = vphi %v1506, %v2931
    %v1514 = vphi %v1500, %v2925
  $region72: #{tpu_custom_call.1} parent=0 // loop_header_branch
    %1511 = sbr.rel (%p1509) target = $region76
  $region73: #{tpu_custom_call.1} parent=0 // loop_body
    %s1515 = smul.u32 %s1508, 2
    %s1516 = scalar_lea.vmem %s0, %s1515
    %v1517 = vld [vmem:[%s1516] sm:$0x3]
    %v1519 = vsel %vm80, %v1517, 0
    %1521 = vmatprep.subr.mxu0 0.0
    %v1522 = vand.u32 %v86, 4294901760
    %1523 = vmatpush1.msra.mxu0 %v1522
    %1524 = vmatprep.subr.mxu0 0.0
    %1525 = vmatpush1.msra.mxu0 0.0
    %1526 = vmatprep.subr.mxu0 0.0
    %1527 = vmatpush1.msra.mxu0 0.0
    %1528 = vmatprep.subr.mxu0 0.0
    %1529 = vmatpush1.msra.mxu0 0.0
    %1530 = vmatprep.subr.mxu0 0.0
    %1531 = vmatpush1.msra.mxu0 0.0
    %1532 = vmatprep.subr.mxu0 0.0
    %1533 = vmatpush1.msra.mxu0 0.0
    %1534 = vmatprep.subr.mxu0 0.0
    %1535 = vmatpush1.msra.mxu0 0.0
    %1536 = vmatprep.subr.mxu0 0.0
    %1537 = vmatpush1.msra.mxu0 0.0
    %1538 = vmatprep.subr.mxu0 0.0
    %1539 = vmatpush1.msra.mxu0 0.0
    %1540 = vmatprep.subr.mxu0 0.0
    %1541 = vmatpush1.msra.mxu0 0.0
    %1542 = vmatprep.subr.mxu0 0.0
    %1543 = vmatpush1.msra.mxu0 0.0
    %1544 = vmatprep.subr.mxu0 0.0
    %1545 = vmatpush1.msra.mxu0 0.0
    %1546 = vmatprep.subr.mxu0 0.0
    %1547 = vmatpush1.msra.mxu0 0.0
    %1548 = vmatprep.subr.mxu0 0.0
    %1549 = vmatpush1.msra.mxu0 0.0
    %1550 = vmatprep.subr.mxu0 0.0
    %1551 = vmatpush1.msra.mxu0 0.0
    %1552 = vmatprep.subr.mxu0 0.0
    %1553 = vmatpush1.msra.mxu0 0.0
    %1554 = vmatprep.subr.mxu0 0.0
    %1555 = vmatpush1.msra.mxu0 0.0
    %1556 = vmatprep.subr.mxu0 0.0
    %1557 = vmatpush1.msra.mxu0 0.0
    %1558 = vmatprep.subr.mxu0 0.0
    %1559 = vmatpush1.msra.mxu0 0.0
    %1560 = vmatprep.subr.mxu0 0.0
    %1561 = vmatpush1.msra.mxu0 0.0
    %1562 = vmatprep.subr.mxu0 0.0
    %1563 = vmatpush1.msra.mxu0 0.0
    %1564 = vmatprep.subr.mxu0 0.0
    %1565 = vmatpush1.msra.mxu0 0.0
    %1566 = vmatprep.subr.mxu0 0.0
    %1567 = vmatpush1.msra.mxu0 0.0
    %1568 = vmatprep.subr.mxu0 0.0
    %1569 = vmatpush1.msra.mxu0 0.0
    %1570 = vmatprep.subr.mxu0 0.0
    %1571 = vmatpush1.msra.mxu0 0.0
    %1572 = vmatprep.subr.mxu0 0.0
    %1573 = vmatpush1.msra.mxu0 0.0
    %1574 = vmatprep.subr.mxu0 0.0
    %1575 = vmatpush1.msra.mxu0 0.0
    %1576 = vmatprep.subr.mxu0 0.0
    %1577 = vmatpush1.msra.mxu0 0.0
    %1578 = vmatprep.subr.mxu0 0.0
    %1579 = vmatpush1.msra.mxu0 0.0
    %1580 = vmatprep.subr.mxu0 0.0
    %1581 = vmatpush1.msra.mxu0 0.0
    %1582 = vmatprep.subr.mxu0 0.0
    %1583 = vmatpush1.msra.mxu0 0.0
    %1584 = vmatprep.subr.mxu0 0.0
    %1585 = vmatpush1.msra.mxu0 0.0
    %1586 = vmatprep.mubr.f32.mxu0 0.0
    %v1587 = vand.u32 %v1519, 4294901760
    %v1588 = vsub.f32 %v1519, %v1587
    %v1589 = vand.u32 %v1588, 4294901760
    %v1590 = vsub.f32 %v1588, %v1589
    %v1591 = vand.u32 %v1590, 4294901760
    %1592 = vmatmul.mubr.f32.gmra.mrb[0].mxu0 %v1591
    %v1593 = vpop.f32.mrb[0].mxu0
    %v1594 = vadd.f32 %v78, %v1593
    %v1595 = vpop.f32.mrb[0].mxu0
    %1596 = vdwg.mxu0
    %1597 = vmatprep.subr.mxu0 0.0
    %v1598 = vand.u32 %v86, 4294901760
    %v1599 = vsub.f32 %v86, %v1598
    %v1600 = vand.u32 %v1599, 4294901760
    %v1601 = vsub.f32 %v1599, %v1600
    %v1602 = vand.u32 %v1601, 4294901760
    %1603 = vmatpush1.msra.mxu0 %v1602
    %1604 = vmatprep.subr.mxu0 0.0
    %1605 = vmatpush1.msra.mxu0 0.0
    %1606 = vmatprep.subr.mxu0 0.0
    %1607 = vmatpush1.msra.mxu0 0.0
    %1608 = vmatprep.subr.mxu0 0.0
    %1609 = vmatpush1.msra.mxu0 0.0
    %1610 = vmatprep.subr.mxu0 0.0
    %1611 = vmatpush1.msra.mxu0 0.0
    %1612 = vmatprep.subr.mxu0 0.0
    %1613 = vmatpush1.msra.mxu0 0.0
    %1614 = vmatprep.subr.mxu0 0.0
    %1615 = vmatpush1.msra.mxu0 0.0
    %1616 = vmatprep.subr.mxu0 0.0
    %1617 = vmatpush1.msra.mxu0 0.0
    %1618 = vmatprep.subr.mxu0 0.0
    %1619 = vmatpush1.msra.mxu0 0.0
    %1620 = vmatprep.subr.mxu0 0.0
    %1621 = vmatpush1.msra.mxu0 0.0
    %1622 = vmatprep.subr.mxu0 0.0
    %1623 = vmatpush1.msra.mxu0 0.0
    %1624 = vmatprep.subr.mxu0 0.0
    %1625 = vmatpush1.msra.mxu0 0.0
    %1626 = vmatprep.subr.mxu0 0.0
    %1627 = vmatpush1.msra.mxu0 0.0
    %1628 = vmatprep.subr.mxu0 0.0
    %1629 = vmatpush1.msra.mxu0 0.0
    %1630 = vmatprep.subr.mxu0 0.0
    %1631 = vmatpush1.msra.mxu0 0.0
    %1632 = vmatprep.subr.mxu0 0.0
    %1633 = vmatpush1.msra.mxu0 0.0
    %1634 = vmatprep.subr.mxu0 0.0
    %1635 = vmatpush1.msra.mxu0 0.0
    %1636 = vmatprep.subr.mxu0 0.0
    %1637 = vmatpush1.msra.mxu0 0.0
    %1638 = vmatprep.subr.mxu0 0.0
    %1639 = vmatpush1.msra.mxu0 0.0
    %1640 = vmatprep.subr.mxu0 0.0
    %1641 = vmatpush1.msra.mxu0 0.0
    %1642 = vmatprep.subr.mxu0 0.0
    %1643 = vmatpush1.msra.mxu0 0.0
    %1644 = vmatprep.subr.mxu0 0.0
    %1645 = vmatpush1.msra.mxu0 0.0
    %1646 = vmatprep.subr.mxu0 0.0
    %1647 = vmatpush1.msra.mxu0 0.0
    %1648 = vmatprep.subr.mxu0 0.0
    %1649 = vmatpush1.msra.mxu0 0.0
    %1650 = vmatprep.subr.mxu0 0.0
    %1651 = vmatpush1.msra.mxu0 0.0
    %1652 = vmatprep.subr.mxu0 0.0
    %1653 = vmatpush1.msra.mxu0 0.0
    %1654 = vmatprep.subr.mxu0 0.0
    %1655 = vmatpush1.msra.mxu0 0.0
    %1656 = vmatprep.subr.mxu0 0.0
    %1657 = vmatpush1.msra.mxu0 0.0
    %1658 = vmatprep.subr.mxu0 0.0
    %1659 = vmatpush1.msra.mxu0 0.0
    %1660 = vmatprep.subr.mxu0 0.0
    %1661 = vmatpush1.msra.mxu0 0.0
    %1662 = vmatprep.subr.mxu0 0.0
    %1663 = vmatpush1.msra.mxu0 0.0
    %1664 = vmatprep.subr.mxu0 0.0
    %1665 = vmatpush1.msra.mxu0 0.0
    %1666 = vmatprep.mubr.f32.mxu0 0.0
    %v1667 = vand.u32 %v1519, 4294901760
    %1668 = vmatmul.mubr.f32.gmra.mrb[0].mxu0 %v1667
    %v1669 = vpop.f32.mrb[0].mxu0
    %v1670 = vadd.f32 %v1594, %v1669
    %v1671 = vpop.f32.mrb[0].mxu0
    %1672 = vdwg.mxu0
    %1673 = vmatprep.subr.mxu0 0.0
    %v1674 = vand.u32 %v86, 4294901760
    %v1675 = vsub.f32 %v86, %v1674
    %1676 = vmatpush1.msra.mxu0 %v1675
    %1677 = vmatprep.subr.mxu0 0.0
    %1678 = vmatpush1.msra.mxu0 0.0
    %1679 = vmatprep.subr.mxu0 0.0
    %1680 = vmatpush1.msra.mxu0 0.0
    %1681 = vmatprep.subr.mxu0 0.0
    %1682 = vmatpush1.msra.mxu0 0.0
    %1683 = vmatprep.subr.mxu0 0.0
    %1684 = vmatpush1.msra.mxu0 0.0
    %1685 = vmatprep.subr.mxu0 0.0
    %1686 = vmatpush1.msra.mxu0 0.0
    %1687 = vmatprep.subr.mxu0 0.0
    %1688 = vmatpush1.msra.mxu0 0.0
    %1689 = vmatprep.subr.mxu0 0.0
    %1690 = vmatpush1.msra.mxu0 0.0
    %1691 = vmatprep.subr.mxu0 0.0
    %1692 = vmatpush1.msra.mxu0 0.0
    %1693 = vmatprep.subr.mxu0 0.0
    %1694 = vmatpush1.msra.mxu0 0.0
    %1695 = vmatprep.subr.mxu0 0.0
    %1696 = vmatpush1.msra.mxu0 0.0
    %1697 = vmatprep.subr.mxu0 0.0
    %1698 = vmatpush1.msra.mxu0 0.0
    %1699 = vmatprep.subr.mxu0 0.0
    %1700 = vmatpush1.msra.mxu0 0.0
    %1701 = vmatprep.subr.mxu0 0.0
    %1702 = vmatpush1.msra.mxu0 0.0
    %1703 = vmatprep.subr.mxu0 0.0
    %1704 = vmatpush1.msra.mxu0 0.0
    %1705 = vmatprep.subr.mxu0 0.0
    %1706 = vmatpush1.msra.mxu0 0.0
    %1707 = vmatprep.subr.mxu0 0.0
    %1708 = vmatpush1.msra.mxu0 0.0
    %1709 = vmatprep.subr.mxu0 0.0
    %1710 = vmatpush1.msra.mxu0 0.0
    %1711 = vmatprep.subr.mxu0 0.0
    %1712 = vmatpush1.msra.mxu0 0.0
    %1713 = vmatprep.subr.mxu0 0.0
    %1714 = vmatpush1.msra.mxu0 0.0
    %1715 = vmatprep.subr.mxu0 0.0
    %1716 = vmatpush1.msra.mxu0 0.0
    %1717 = vmatprep.subr.mxu0 0.0
    %1718 = vmatpush1.msra.mxu0 0.0
    %1719 = vmatprep.subr.mxu0 0.0
    %1720 = vmatpush1.msra.mxu0 0.0
    %1721 = vmatprep.subr.mxu0 0.0
    %1722 = vmatpush1.msra.mxu0 0.0
    %1723 = vmatprep.subr.mxu0 0.0
    %1724 = vmatpush1.msra.mxu0 0.0
    %1725 = vmatprep.subr.mxu0 0.0
    %1726 = vmatpush1.msra.mxu0 0.0
    %1727 = vmatprep.subr.mxu0 0.0
    %1728 = vmatpush1.msra.mxu0 0.0
    %1729 = vmatprep.subr.mxu0 0.0
    %1730 = vmatpush1.msra.mxu0 0.0
    %1731 = vmatprep.subr.mxu0 0.0
    %1732 = vmatpush1.msra.mxu0 0.0
    %1733 = vmatprep.subr.mxu0 0.0
    %1734 = vmatpush1.msra.mxu0 0.0
    %1735 = vmatprep.subr.mxu0 0.0
    %1736 = vmatpush1.msra.mxu0 0.0
    %1737 = vmatprep.subr.mxu0 0.0
    %1738 = vmatpush1.msra.mxu0 0.0
    %1739 = vmatprep.mubr.f32.mxu0 0.0
    %v1740 = vand.u32 %v1519, 4294901760
    %v1741 = vsub.f32 %v1519, %v1740
    %1742 = vmatmul.mubr.f32.gmra.mrb[0].mxu0 %v1741
    %v1743 = vpop.f32.mrb[0].mxu0
    %v1744 = vadd.f32 %v1670, %v1743
    %v1745 = vpop.f32.mrb[0].mxu0
    %1746 = vdwg.mxu0
    %1747 = vmatprep.subr.mxu0 0.0
    %v1748 = vand.u32 %v86, 4294901760
    %1749 = vmatpush1.msra.mxu0 %v1748
    %1750 = vmatprep.subr.mxu0 0.0
    %1751 = vmatpush1.msra.mxu0 0.0
    %1752 = vmatprep.subr.mxu0 0.0
    %1753 = vmatpush1.msra.mxu0 0.0
    %1754 = vmatprep.subr.mxu0 0.0
    %1755 = vmatpush1.msra.mxu0 0.0
    %1756 = vmatprep.subr.mxu0 0.0
    %1757 = vmatpush1.msra.mxu0 0.0
    %1758 = vmatprep.subr.mxu0 0.0
    %1759 = vmatpush1.msra.mxu0 0.0
    %1760 = vmatprep.subr.mxu0 0.0
    %1761 = vmatpush1.msra.mxu0 0.0
    %1762 = vmatprep.subr.mxu0 0.0
    %1763 = vmatpush1.msra.mxu0 0.0
    %1764 = vmatprep.subr.mxu0 0.0
    %1765 = vmatpush1.msra.mxu0 0.0
    %1766 = vmatprep.subr.mxu0 0.0
    %1767 = vmatpush1.msra.mxu0 0.0
    %1768 = vmatprep.subr.mxu0 0.0
    %1769 = vmatpush1.msra.mxu0 0.0
    %1770 = vmatprep.subr.mxu0 0.0
    %1771 = vmatpush1.msra.mxu0 0.0
    %1772 = vmatprep.subr.mxu0 0.0
    %1773 = vmatpush1.msra.mxu0 0.0
    %1774 = vmatprep.subr.mxu0 0.0
    %1775 = vmatpush1.msra.mxu0 0.0
    %1776 = vmatprep.subr.mxu0 0.0
    %1777 = vmatpush1.msra.mxu0 0.0
    %1778 = vmatprep.subr.mxu0 0.0
    %1779 = vmatpush1.msra.mxu0 0.0
    %1780 = vmatprep.subr.mxu0 0.0
    %1781 = vmatpush1.msra.mxu0 0.0
    %1782 = vmatprep.subr.mxu0 0.0
    %1783 = vmatpush1.msra.mxu0 0.0
    %1784 = vmatprep.subr.mxu0 0.0
    %1785 = vmatpush1.msra.mxu0 0.0
    %1786 = vmatprep.subr.mxu0 0.0
    %1787 = vmatpush1.msra.mxu0 0.0
    %1788 = vmatprep.subr.mxu0 0.0
    %1789 = vmatpush1.msra.mxu0 0.0
    %1790 = vmatprep.subr.mxu0 0.0
    %1791 = vmatpush1.msra.mxu0 0.0
    %1792 = vmatprep.subr.mxu0 0.0
    %1793 = vmatpush1.msra.mxu0 0.0
    %1794 = vmatprep.subr.mxu0 0.0
    %1795 = vmatpush1.msra.mxu0 0.0
    %1796 = vmatprep.subr.mxu0 0.0
    %1797 = vmatpush1.msra.mxu0 0.0
    %1798 = vmatprep.subr.mxu0 0.0
    %1799 = vmatpush1.msra.mxu0 0.0
    %1800 = vmatprep.subr.mxu0 0.0
    %1801 = vmatpush1.msra.mxu0 0.0
    %1802 = vmatprep.subr.mxu0 0.0
    %1803 = vmatpush1.msra.mxu0 0.0
    %1804 = vmatprep.subr.mxu0 0.0
    %1805 = vmatpush1.msra.mxu0 0.0
    %1806 = vmatprep.subr.mxu0 0.0
    %1807 = vmatpush1.msra.mxu0 0.0
    %1808 = vmatprep.subr.mxu0 0.0
    %1809 = vmatpush1.msra.mxu0 0.0
    %1810 = vmatprep.subr.mxu0 0.0
    %1811 = vmatpush1.msra.mxu0 0.0
    %1812 = vmatprep.mubr.f32.mxu0 0.0
    %v1813 = vand.u32 %v1519, 4294901760
    %v1814 = vsub.f32 %v1519, %v1813
    %v1815 = vand.u32 %v1814, 4294901760
    %1816 = vmatmul.mubr.f32.gmra.mrb[0].mxu0 %v1815
    %v1817 = vpop.f32.mrb[0].mxu0
    %v1818 = vadd.f32 %v1744, %v1817
    %v1819 = vpop.f32.mrb[0].mxu0
    %1820 = vdwg.mxu0
    %1821 = vmatprep.subr.mxu0 0.0
    %v1822 = vand.u32 %v86, 4294901760
    %v1823 = vsub.f32 %v86, %v1822
    %v1824 = vand.u32 %v1823, 4294901760
    %1825 = vmatpush1.msra.mxu0 %v1824
    %1826 = vmatprep.subr.mxu0 0.0
    %1827 = vmatpush1.msra.mxu0 0.0
    %1828 = vmatprep.subr.mxu0 0.0
    %1829 = vmatpush1.msra.mxu0 0.0
    %1830 = vmatprep.subr.mxu0 0.0
    %1831 = vmatpush1.msra.mxu0 0.0
    %1832 = vmatprep.subr.mxu0 0.0
    %1833 = vmatpush1.msra.mxu0 0.0
    %1834 = vmatprep.subr.mxu0 0.0
    %1835 = vmatpush1.msra.mxu0 0.0
    %1836 = vmatprep.subr.mxu0 0.0
    %1837 = vmatpush1.msra.mxu0 0.0
    %1838 = vmatprep.subr.mxu0 0.0
    %1839 = vmatpush1.msra.mxu0 0.0
    %1840 = vmatprep.subr.mxu0 0.0
    %1841 = vmatpush1.msra.mxu0 0.0
    %1842 = vmatprep.subr.mxu0 0.0
    %1843 = vmatpush1.msra.mxu0 0.0
    %1844 = vmatprep.subr.mxu0 0.0
    %1845 = vmatpush1.msra.mxu0 0.0
    %1846 = vmatprep.subr.mxu0 0.0
    %1847 = vmatpush1.msra.mxu0 0.0
    %1848 = vmatprep.subr.mxu0 0.0
    %1849 = vmatpush1.msra.mxu0 0.0
    %1850 = vmatprep.subr.mxu0 0.0
    %1851 = vmatpush1.msra.mxu0 0.0
    %1852 = vmatprep.subr.mxu0 0.0
    %1853 = vmatpush1.msra.mxu0 0.0
    %1854 = vmatprep.subr.mxu0 0.0
    %1855 = vmatpush1.msra.mxu0 0.0
    %1856 = vmatprep.subr.mxu0 0.0
    %1857 = vmatpush1.msra.mxu0 0.0
    %1858 = vmatprep.subr.mxu0 0.0
    %1859 = vmatpush1.msra.mxu0 0.0
    %1860 = vmatprep.subr.mxu0 0.0
    %1861 = vmatpush1.msra.mxu0 0.0
    %1862 = vmatprep.subr.mxu0 0.0
    %1863 = vmatpush1.msra.mxu0 0.0
    %1864 = vmatprep.subr.mxu0 0.0
    %1865 = vmatpush1.msra.mxu0 0.0
    %1866 = vmatprep.subr.mxu0 0.0
    %1867 = vmatpush1.msra.mxu0 0.0
    %1868 = vmatprep.subr.mxu0 0.0
    %1869 = vmatpush1.msra.mxu0 0.0
    %1870 = vmatprep.subr.mxu0 0.0
    %1871 = vmatpush1.msra.mxu0 0.0
    %1872 = vmatprep.subr.mxu0 0.0
    %1873 = vmatpush1.msra.mxu0 0.0
    %1874 = vmatprep.subr.mxu0 0.0
    %1875 = vmatpush1.msra.mxu0 0.0
    %1876 = vmatprep.subr.mxu0 0.0
    %1877 = vmatpush1.msra.mxu0 0.0
    %1878 = vmatprep.subr.mxu0 0.0
    %1879 = vmatpush1.msra.mxu0 0.0
    %1880 = vmatprep.subr.mxu0 0.0
    %1881 = vmatpush1.msra.mxu0 0.0
    %1882 = vmatprep.subr.mxu0 0.0
    %1883 = vmatpush1.msra.mxu0 0.0
    %1884 = vmatprep.subr.mxu0 0.0
    %1885 = vmatpush1.msra.mxu0 0.0
    %1886 = vmatprep.subr.mxu0 0.0
    %1887 = vmatpush1.msra.mxu0 0.0
    %1888 = vmatprep.mubr.f32.mxu0 0.0
    %v1889 = vand.u32 %v1519, 4294901760
    %1890 = vmatmul.mubr.f32.gmra.mrb[0].mxu0 %v1889
    %v1891 = vpop.f32.mrb[0].mxu0
    %v1892 = vadd.f32 %v1818, %v1891
    %v1893 = vpop.f32.mrb[0].mxu0
    %1894 = vdwg.mxu0
    %1895 = vmatprep.subr.mxu0 0.0
    %v1896 = vand.u32 %v86, 4294901760
    %1897 = vmatpush1.msra.mxu0 %v1896
    %1898 = vmatprep.subr.mxu0 0.0
    %1899 = vmatpush1.msra.mxu0 0.0
    %1900 = vmatprep.subr.mxu0 0.0
    %1901 = vmatpush1.msra.mxu0 0.0
    %1902 = vmatprep.subr.mxu0 0.0
    %1903 = vmatpush1.msra.mxu0 0.0
    %1904 = vmatprep.subr.mxu0 0.0
    %1905 = vmatpush1.msra.mxu0 0.0
    %1906 = vmatprep.subr.mxu0 0.0
    %1907 = vmatpush1.msra.mxu0 0.0
    %1908 = vmatprep.subr.mxu0 0.0
    %1909 = vmatpush1.msra.mxu0 0.0
    %1910 = vmatprep.subr.mxu0 0.0
    %1911 = vmatpush1.msra.mxu0 0.0
    %1912 = vmatprep.subr.mxu0 0.0
    %1913 = vmatpush1.msra.mxu0 0.0
    %1914 = vmatprep.subr.mxu0 0.0
    %1915 = vmatpush1.msra.mxu0 0.0
    %1916 = vmatprep.subr.mxu0 0.0
    %1917 = vmatpush1.msra.mxu0 0.0
    %1918 = vmatprep.subr.mxu0 0.0
    %1919 = vmatpush1.msra.mxu0 0.0
    %1920 = vmatprep.subr.mxu0 0.0
    %1921 = vmatpush1.msra.mxu0 0.0
    %1922 = vmatprep.subr.mxu0 0.0
    %1923 = vmatpush1.msra.mxu0 0.0
    %1924 = vmatprep.subr.mxu0 0.0
    %1925 = vmatpush1.msra.mxu0 0.0
    %1926 = vmatprep.subr.mxu0 0.0
    %1927 = vmatpush1.msra.mxu0 0.0
    %1928 = vmatprep.subr.mxu0 0.0
    %1929 = vmatpush1.msra.mxu0 0.0
    %1930 = vmatprep.subr.mxu0 0.0
    %1931 = vmatpush1.msra.mxu0 0.0
    %1932 = vmatprep.subr.mxu0 0.0
    %1933 = vmatpush1.msra.mxu0 0.0
    %1934 = vmatprep.subr.mxu0 0.0
    %1935 = vmatpush1.msra.mxu0 0.0
    %1936 = vmatprep.subr.mxu0 0.0
    %1937 = vmatpush1.msra.mxu0 0.0
    %1938 = vmatprep.subr.mxu0 0.0
    %1939 = vmatpush1.msra.mxu0 0.0
    %1940 = vmatprep.subr.mxu0 0.0
    %1941 = vmatpush1.msra.mxu0 0.0
    %1942 = vmatprep.subr.mxu0 0.0
    %1943 = vmatpush1.msra.mxu0 0.0
    %1944 = vmatprep.subr.mxu0 0.0
    %1945 = vmatpush1.msra.mxu0 0.0
    %1946 = vmatprep.subr.mxu0 0.0
    %1947 = vmatpush1.msra.mxu0 0.0
    %1948 = vmatprep.subr.mxu0 0.0
    %1949 = vmatpush1.msra.mxu0 0.0
    %1950 = vmatprep.subr.mxu0 0.0
    %1951 = vmatpush1.msra.mxu0 0.0
    %1952 = vmatprep.subr.mxu0 0.0
    %1953 = vmatpush1.msra.mxu0 0.0
    %1954 = vmatprep.subr.mxu0 0.0
    %1955 = vmatpush1.msra.mxu0 0.0
    %1956 = vmatprep.subr.mxu0 0.0
    %1957 = vmatpush1.msra.mxu0 0.0
    %1958 = vmatprep.subr.mxu0 0.0
    %1959 = vmatpush1.msra.mxu0 0.0
    %1960 = vmatprep.mubr.f32.mxu0 0.0
    %v1961 = vand.u32 %v1519, 4294901760
    %1962 = vmatmul.mubr.f32.gmra.mrb[0].mxu0 %v1961
    %v1963 = vpop.f32.mrb[0].mxu0
    %v1964 = vadd.f32 %v1892, %v1963
    %v1965 = vpop.f32.mrb[0].mxu0
    %1966 = vdwg.mxu0
    %v1967 = vmax.f32 %v1964, 0.0
    %1969 = vrot.lane.b32.xlu0 %v1513, 32
    %v1970 = vpop.permute.xlu0 %1969
    %v1971 = vsel %vm535, %v1970, 0
    %1973 = vmatprep.subr.mxu0 0.0
    %v1974 = vand.u32 %v63, 4294901760
    %1975 = vmatpush1.msra.mxu0 %v1974
    %1976 = vmatprep.subr.mxu0 0.0
    %v1977 = vand.u32 %v64, 4294901760
    %1978 = vmatpush1.msra.mxu0 %v1977
    %1979 = vmatprep.subr.mxu0 0.0
    %v1980 = vand.u32 %v65, 4294901760
    %1981 = vmatpush1.msra.mxu0 %v1980
    %1982 = vmatprep.subr.mxu0 0.0
    %v1983 = vand.u32 %v66, 4294901760
    %1984 = vmatpush1.msra.mxu0 %v1983
    %1985 = vmatprep.subr.mxu0 0.0
    %1986 = vmatpush1.msra.mxu0 0.0
    %1987 = vmatprep.subr.mxu0 0.0
    %1988 = vmatpush1.msra.mxu0 0.0
    %1989 = vmatprep.subr.mxu0 0.0
    %1990 = vmatpush1.msra.mxu0 0.0
    %1991 = vmatprep.subr.mxu0 0.0
    %1992 = vmatpush1.msra.mxu0 0.0
    %1993 = vmatprep.subr.mxu0 0.0
    %1994 = vmatpush1.msra.mxu0 0.0
    %1995 = vmatprep.subr.mxu0 0.0
    %1996 = vmatpush1.msra.mxu0 0.0
    %1997 = vmatprep.subr.mxu0 0.0
    %1998 = vmatpush1.msra.mxu0 0.0
    %1999 = vmatprep.subr.mxu0 0.0
    %2000 = vmatpush1.msra.mxu0 0.0
    %2001 = vmatprep.subr.mxu0 0.0
    %2002 = vmatpush1.msra.mxu0 0.0
    %2003 = vmatprep.subr.mxu0 0.0
    %2004 = vmatpush1.msra.mxu0 0.0
    %2005 = vmatprep.subr.mxu0 0.0
    %2006 = vmatpush1.msra.mxu0 0.0
    %2007 = vmatprep.subr.mxu0 0.0
    %2008 = vmatpush1.msra.mxu0 0.0
    %2009 = vmatprep.subr.mxu0 0.0
    %2010 = vmatpush1.msra.mxu0 0.0
    %2011 = vmatprep.subr.mxu0 0.0
    %2012 = vmatpush1.msra.mxu0 0.0
    %2013 = vmatprep.subr.mxu0 0.0
    %2014 = vmatpush1.msra.mxu0 0.0
    %2015 = vmatprep.subr.mxu0 0.0
    %2016 = vmatpush1.msra.mxu0 0.0
    %2017 = vmatprep.subr.mxu0 0.0
    %2018 = vmatpush1.msra.mxu0 0.0
    %2019 = vmatprep.subr.mxu0 0.0
    %2020 = vmatpush1.msra.mxu0 0.0
    %2021 = vmatprep.subr.mxu0 0.0
    %2022 = vmatpush1.msra.mxu0 0.0
    %2023 = vmatprep.subr.mxu0 0.0
    %2024 = vmatpush1.msra.mxu0 0.0
    %2025 = vmatprep.subr.mxu0 0.0
    %2026 = vmatpush1.msra.mxu0 0.0
    %2027 = vmatprep.subr.mxu0 0.0
    %2028 = vmatpush1.msra.mxu0 0.0
    %2029 = vmatprep.subr.mxu0 0.0
    %2030 = vmatpush1.msra.mxu0 0.0
    %2031 = vmatprep.subr.mxu0 0.0
    %2032 = vmatpush1.msra.mxu0 0.0
    %2033 = vmatprep.subr.mxu0 0.0
    %2034 = vmatpush1.msra.mxu0 0.0
    %2035 = vmatprep.subr.mxu0 0.0
    %2036 = vmatpush1.msra.mxu0 0.0
    %2037 = vmatprep.subr.mxu0 0.0
    %2038 = vmatpush1.msra.mxu0 0.0
    %2039 = vmatprep.subr.mxu0 0.0
    %2040 = vmatpush1.msra.mxu0 0.0
    %2041 = vmatprep.mubr.f32.mxu0 0.0
    %v2042 = vand.u32 %v1971, 4294901760
    %v2043 = vsub.f32 %v1971, %v2042
    %v2044 = vand.u32 %v2043, 4294901760
    %v2045 = vsub.f32 %v2043, %v2044
    %v2046 = vand.u32 %v2045, 4294901760
    %2047 = vmatmul.mubr.f32.gmra.mrb[0].mxu0 %v2046
    %v2048 = vpop.f32.mrb[0].mxu0
    %v2049 = vadd.f32 0.0, %v2048
    %v2050 = vpop.f32.mrb[0].mxu0
    %2051 = vdwg.mxu0
    %2052 = vmatprep.subr.mxu0 0.0
    %v2053 = vand.u32 %v63, 4294901760
    %v2054 = vsub.f32 %v63, %v2053
    %v2055 = vand.u32 %v2054, 4294901760
    %v2056 = vsub.f32 %v2054, %v2055
    %v2057 = vand.u32 %v2056, 4294901760
    %2058 = vmatpush1.msra.mxu0 %v2057
    %2059 = vmatprep.subr.mxu0 0.0
    %v2060 = vand.u32 %v64, 4294901760
    %v2061 = vsub.f32 %v64, %v2060
    %v2062 = vand.u32 %v2061, 4294901760
    %v2063 = vsub.f32 %v2061, %v2062
    %v2064 = vand.u32 %v2063, 4294901760
    %2065 = vmatpush1.msra.mxu0 %v2064
    %2066 = vmatprep.subr.mxu0 0.0
    %v2067 = vand.u32 %v65, 4294901760
    %v2068 = vsub.f32 %v65, %v2067
    %v2069 = vand.u32 %v2068, 4294901760
    %v2070 = vsub.f32 %v2068, %v2069
    %v2071 = vand.u32 %v2070, 4294901760
    %2072 = vmatpush1.msra.mxu0 %v2071
    %2073 = vmatprep.subr.mxu0 0.0
    %v2074 = vand.u32 %v66, 4294901760
    %v2075 = vsub.f32 %v66, %v2074
    %v2076 = vand.u32 %v2075, 4294901760
    %v2077 = vsub.f32 %v2075, %v2076
    %v2078 = vand.u32 %v2077, 4294901760
    %2079 = vmatpush1.msra.mxu0 %v2078
    %2080 = vmatprep.subr.mxu0 0.0
    %2081 = vmatpush1.msra.mxu0 0.0
    %2082 = vmatprep.subr.mxu0 0.0
    %2083 = vmatpush1.msra.mxu0 0.0
    %2084 = vmatprep.subr.mxu0 0.0
    %2085 = vmatpush1.msra.mxu0 0.0
    %2086 = vmatprep.subr.mxu0 0.0
    %2087 = vmatpush1.msra.mxu0 0.0
    %2088 = vmatprep.subr.mxu0 0.0
    %2089 = vmatpush1.msra.mxu0 0.0
    %2090 = vmatprep.subr.mxu0 0.0
    %2091 = vmatpush1.msra.mxu0 0.0
    %2092 = vmatprep.subr.mxu0 0.0
    %2093 = vmatpush1.msra.mxu0 0.0
    %2094 = vmatprep.subr.mxu0 0.0
    %2095 = vmatpush1.msra.mxu0 0.0
    %2096 = vmatprep.subr.mxu0 0.0
    %2097 = vmatpush1.msra.mxu0 0.0
    %2098 = vmatprep.subr.mxu0 0.0
    %2099 = vmatpush1.msra.mxu0 0.0
    %2100 = vmatprep.subr.mxu0 0.0
    %2101 = vmatpush1.msra.mxu0 0.0
    %2102 = vmatprep.subr.mxu0 0.0
    %2103 = vmatpush1.msra.mxu0 0.0
    %2104 = vmatprep.subr.mxu0 0.0
    %2105 = vmatpush1.msra.mxu0 0.0
    %2106 = vmatprep.subr.mxu0 0.0
    %2107 = vmatpush1.msra.mxu0 0.0
    %2108 = vmatprep.subr.mxu0 0.0
    %2109 = vmatpush1.msra.mxu0 0.0
    %2110 = vmatprep.subr.mxu0 0.0
    %2111 = vmatpush1.msra.mxu0 0.0
    %2112 = vmatprep.subr.mxu0 0.0
    %2113 = vmatpush1.msra.mxu0 0.0
    %2114 = vmatprep.subr.mxu0 0.0
    %2115 = vmatpush1.msra.mxu0 0.0
    %2116 = vmatprep.subr.mxu0 0.0
    %2117 = vmatpush1.msra.mxu0 0.0
    %2118 = vmatprep.subr.mxu0 0.0
    %2119 = vmatpush1.msra.mxu0 0.0
    %2120 = vmatprep.subr.mxu0 0.0
    %2121 = vmatpush1.msra.mxu0 0.0
    %2122 = vmatprep.subr.mxu0 0.0
    %2123 = vmatpush1.msra.mxu0 0.0
    %2124 = vmatprep.subr.mxu0 0.0
    %2125 = vmatpush1.msra.mxu0 0.0
    %2126 = vmatprep.subr.mxu0 0.0
    %2127 = vmatpush1.msra.mxu0 0.0
    %2128 = vmatprep.subr.mxu0 0.0
    %2129 = vmatpush1.msra.mxu0 0.0
    %2130 = vmatprep.subr.mxu0 0.0
    %2131 = vmatpush1.msra.mxu0 0.0
    %2132 = vmatprep.subr.mxu0 0.0
    %2133 = vmatpush1.msra.mxu0 0.0
    %2134 = vmatprep.subr.mxu0 0.0
    %2135 = vmatpush1.msra.mxu0 0.0
    %2136 = vmatprep.mubr.f32.mxu0 0.0
    %v2137 = vand.u32 %v1971, 4294901760
    %2138 = vmatmul.mubr.f32.gmra.mrb[0].mxu0 %v2137
    %v2139 = vpop.f32.mrb[0].mxu0
    %v2140 = vadd.f32 %v2049, %v2139
    %v2141 = vpop.f32.mrb[0].mxu0
    %2142 = vdwg.mxu0
    %2143 = vmatprep.subr.mxu0 0.0
    %v2144 = vand.u32 %v63, 4294901760
    %v2145 = vsub.f32 %v63, %v2144
    %2146 = vmatpush1.msra.mxu0 %v2145
    %2147 = vmatprep.subr.mxu0 0.0
    %v2148 = vand.u32 %v64, 4294901760
    %v2149 = vsub.f32 %v64, %v2148
    %2150 = vmatpush1.msra.mxu0 %v2149
    %2151 = vmatprep.subr.mxu0 0.0
    %v2152 = vand.u32 %v65, 4294901760
    %v2153 = vsub.f32 %v65, %v2152
    %2154 = vmatpush1.msra.mxu0 %v2153
    %2155 = vmatprep.subr.mxu0 0.0
    %v2156 = vand.u32 %v66, 4294901760
    %v2157 = vsub.f32 %v66, %v2156
    %2158 = vmatpush1.msra.mxu0 %v2157
    %2159 = vmatprep.subr.mxu0 0.0
    %2160 = vmatpush1.msra.mxu0 0.0
    %2161 = vmatprep.subr.mxu0 0.0
    %2162 = vmatpush1.msra.mxu0 0.0
    %2163 = vmatprep.subr.mxu0 0.0
    %2164 = vmatpush1.msra.mxu0 0.0
    %2165 = vmatprep.subr.mxu0 0.0
    %2166 = vmatpush1.msra.mxu0 0.0
    %2167 = vmatprep.subr.mxu0 0.0
    %2168 = vmatpush1.msra.mxu0 0.0
    %2169 = vmatprep.subr.mxu0 0.0
    %2170 = vmatpush1.msra.mxu0 0.0
    %2171 = vmatprep.subr.mxu0 0.0
    %2172 = vmatpush1.msra.mxu0 0.0
    %2173 = vmatprep.subr.mxu0 0.0
    %2174 = vmatpush1.msra.mxu0 0.0
    %2175 = vmatprep.subr.mxu0 0.0
    %2176 = vmatpush1.msra.mxu0 0.0
    %2177 = vmatprep.subr.mxu0 0.0
    %2178 = vmatpush1.msra.mxu0 0.0
    %2179 = vmatprep.subr.mxu0 0.0
    %2180 = vmatpush1.msra.mxu0 0.0
    %2181 = vmatprep.subr.mxu0 0.0
    %2182 = vmatpush1.msra.mxu0 0.0
    %2183 = vmatprep.subr.mxu0 0.0
    %2184 = vmatpush1.msra.mxu0 0.0
    %2185 = vmatprep.subr.mxu0 0.0
    %2186 = vmatpush1.msra.mxu0 0.0
    %2187 = vmatprep.subr.mxu0 0.0
    %2188 = vmatpush1.msra.mxu0 0.0
    %2189 = vmatprep.subr.mxu0 0.0
    %2190 = vmatpush1.msra.mxu0 0.0
    %2191 = vmatprep.subr.mxu0 0.0
    %2192 = vmatpush1.msra.mxu0 0.0
    %2193 = vmatprep.subr.mxu0 0.0
    %2194 = vmatpush1.msra.mxu0 0.0
    %2195 = vmatprep.subr.mxu0 0.0
    %2196 = vmatpush1.msra.mxu0 0.0
    %2197 = vmatprep.subr.mxu0 0.0
    %2198 = vmatpush1.msra.mxu0 0.0
    %2199 = vmatprep.subr.mxu0 0.0
    %2200 = vmatpush1.msra.mxu0 0.0
    %2201 = vmatprep.subr.mxu0 0.0
    %2202 = vmatpush1.msra.mxu0 0.0
    %2203 = vmatprep.subr.mxu0 0.0
    %2204 = vmatpush1.msra.mxu0 0.0
    %2205 = vmatprep.subr.mxu0 0.0
    %2206 = vmatpush1.msra.mxu0 0.0
    %2207 = vmatprep.subr.mxu0 0.0
    %2208 = vmatpush1.msra.mxu0 0.0
    %2209 = vmatprep.subr.mxu0 0.0
    %2210 = vmatpush1.msra.mxu0 0.0
    %2211 = vmatprep.subr.mxu0 0.0
    %2212 = vmatpush1.msra.mxu0 0.0
    %2213 = vmatprep.subr.mxu0 0.0
    %2214 = vmatpush1.msra.mxu0 0.0
    %2215 = vmatprep.mubr.f32.mxu0 0.0
    %v2216 = vand.u32 %v1971, 4294901760
    %v2217 = vsub.f32 %v1971, %v2216
    %2218 = vmatmul.mubr.f32.gmra.mrb[0].mxu0 %v2217
    %v2219 = vpop.f32.mrb[0].mxu0
    %v2220 = vadd.f32 %v2140, %v2219
    %v2221 = vpop.f32.mrb[0].mxu0
    %2222 = vdwg.mxu0
    %2223 = vmatprep.subr.mxu0 0.0
    %v2224 = vand.u32 %v63, 4294901760
    %2225 = vmatpush1.msra.mxu0 %v2224
    %2226 = vmatprep.subr.mxu0 0.0
    %v2227 = vand.u32 %v64, 4294901760
    %2228 = vmatpush1.msra.mxu0 %v2227
    %2229 = vmatprep.subr.mxu0 0.0
    %v2230 = vand.u32 %v65, 4294901760
    %2231 = vmatpush1.msra.mxu0 %v2230
    %2232 = vmatprep.subr.mxu0 0.0
    %v2233 = vand.u32 %v66, 4294901760
    %2234 = vmatpush1.msra.mxu0 %v2233
    %2235 = vmatprep.subr.mxu0 0.0
    %2236 = vmatpush1.msra.mxu0 0.0
    %2237 = vmatprep.subr.mxu0 0.0
    %2238 = vmatpush1.msra.mxu0 0.0
    %2239 = vmatprep.subr.mxu0 0.0
    %2240 = vmatpush1.msra.mxu0 0.0
    %2241 = vmatprep.subr.mxu0 0.0
    %2242 = vmatpush1.msra.mxu0 0.0
    %2243 = vmatprep.subr.mxu0 0.0
    %2244 = vmatpush1.msra.mxu0 0.0
    %2245 = vmatprep.subr.mxu0 0.0
    %2246 = vmatpush1.msra.mxu0 0.0
    %2247 = vmatprep.subr.mxu0 0.0
    %2248 = vmatpush1.msra.mxu0 0.0
    %2249 = vmatprep.subr.mxu0 0.0
    %2250 = vmatpush1.msra.mxu0 0.0
    %2251 = vmatprep.subr.mxu0 0.0
    %2252 = vmatpush1.msra.mxu0 0.0
    %2253 = vmatprep.subr.mxu0 0.0
    %2254 = vmatpush1.msra.mxu0 0.0
    %2255 = vmatprep.subr.mxu0 0.0
    %2256 = vmatpush1.msra.mxu0 0.0
    %2257 = vmatprep.subr.mxu0 0.0
    %2258 = vmatpush1.msra.mxu0 0.0
    %2259 = vmatprep.subr.mxu0 0.0
    %2260 = vmatpush1.msra.mxu0 0.0
    %2261 = vmatprep.subr.mxu0 0.0
    %2262 = vmatpush1.msra.mxu0 0.0
    %2263 = vmatprep.subr.mxu0 0.0
    %2264 = vmatpush1.msra.mxu0 0.0
    %2265 = vmatprep.subr.mxu0 0.0
    %2266 = vmatpush1.msra.mxu0 0.0
    %2267 = vmatprep.subr.mxu0 0.0
    %2268 = vmatpush1.msra.mxu0 0.0
    %2269 = vmatprep.subr.mxu0 0.0
    %2270 = vmatpush1.msra.mxu0 0.0
    %2271 = vmatprep.subr.mxu0 0.0
    %2272 = vmatpush1.msra.mxu0 0.0
    %2273 = vmatprep.subr.mxu0 0.0
    %2274 = vmatpush1.msra.mxu0 0.0
    %2275 = vmatprep.subr.mxu0 0.0
    %2276 = vmatpush1.msra.mxu0 0.0
    %2277 = vmatprep.subr.mxu0 0.0
    %2278 = vmatpush1.msra.mxu0 0.0
    %2279 = vmatprep.subr.mxu0 0.0
    %2280 = vmatpush1.msra.mxu0 0.0
    %2281 = vmatprep.subr.mxu0 0.0
    %2282 = vmatpush1.msra.mxu0 0.0
    %2283 = vmatprep.subr.mxu0 0.0
    %2284 = vmatpush1.msra.mxu0 0.0
    %2285 = vmatprep.subr.mxu0 0.0
    %2286 = vmatpush1.msra.mxu0 0.0
    %2287 = vmatprep.subr.mxu0 0.0
    %2288 = vmatpush1.msra.mxu0 0.0
    %2289 = vmatprep.subr.mxu0 0.0
    %2290 = vmatpush1.msra.mxu0 0.0
    %2291 = vmatprep.mubr.f32.mxu0 0.0
    %v2292 = vand.u32 %v1971, 4294901760
    %v2293 = vsub.f32 %v1971, %v2292
    %v2294 = vand.u32 %v2293, 4294901760
    %2295 = vmatmul.mubr.f32.gmra.mrb[0].mxu0 %v2294
    %v2296 = vpop.f32.mrb[0].mxu0
    %v2297 = vadd.f32 %v2220, %v2296
    %v2298 = vpop.f32.mrb[0].mxu0
    %2299 = vdwg.mxu0
    %2300 = vmatprep.subr.mxu0 0.0
    %v2301 = vand.u32 %v63, 4294901760
    %v2302 = vsub.f32 %v63, %v2301
    %v2303 = vand.u32 %v2302, 4294901760
    %2304 = vmatpush1.msra.mxu0 %v2303
    %2305 = vmatprep.subr.mxu0 0.0
    %v2306 = vand.u32 %v64, 4294901760
    %v2307 = vsub.f32 %v64, %v2306
    %v2308 = vand.u32 %v2307, 4294901760
    %2309 = vmatpush1.msra.mxu0 %v2308
    %2310 = vmatprep.subr.mxu0 0.0
    %v2311 = vand.u32 %v65, 4294901760
    %v2312 = vsub.f32 %v65, %v2311
    %v2313 = vand.u32 %v2312, 4294901760
    %2314 = vmatpush1.msra.mxu0 %v2313
    %2315 = vmatprep.subr.mxu0 0.0
    %v2316 = vand.u32 %v66, 4294901760
    %v2317 = vsub.f32 %v66, %v2316
    %v2318 = vand.u32 %v2317, 4294901760
    %2319 = vmatpush1.msra.mxu0 %v2318
    %2320 = vmatprep.subr.mxu0 0.0
    %2321 = vmatpush1.msra.mxu0 0.0
    %2322 = vmatprep.subr.mxu0 0.0
    %2323 = vmatpush1.msra.mxu0 0.0
    %2324 = vmatprep.subr.mxu0 0.0
    %2325 = vmatpush1.msra.mxu0 0.0
    %2326 = vmatprep.subr.mxu0 0.0
    %2327 = vmatpush1.msra.mxu0 0.0
    %2328 = vmatprep.subr.mxu0 0.0
    %2329 = vmatpush1.msra.mxu0 0.0
    %2330 = vmatprep.subr.mxu0 0.0
    %2331 = vmatpush1.msra.mxu0 0.0
    %2332 = vmatprep.subr.mxu0 0.0
    %2333 = vmatpush1.msra.mxu0 0.0
    %2334 = vmatprep.subr.mxu0 0.0
    %2335 = vmatpush1.msra.mxu0 0.0
    %2336 = vmatprep.subr.mxu0 0.0
    %2337 = vmatpush1.msra.mxu0 0.0
    %2338 = vmatprep.subr.mxu0 0.0
    %2339 = vmatpush1.msra.mxu0 0.0
    %2340 = vmatprep.subr.mxu0 0.0
    %2341 = vmatpush1.msra.mxu0 0.0
    %2342 = vmatprep.subr.mxu0 0.0
    %2343 = vmatpush1.msra.mxu0 0.0
    %2344 = vmatprep.subr.mxu0 0.0
    %2345 = vmatpush1.msra.mxu0 0.0
    %2346 = vmatprep.subr.mxu0 0.0
    %2347 = vmatpush1.msra.mxu0 0.0
    %2348 = vmatprep.subr.mxu0 0.0
    %2349 = vmatpush1.msra.mxu0 0.0
    %2350 = vmatprep.subr.mxu0 0.0
    %2351 = vmatpush1.msra.mxu0 0.0
    %2352 = vmatprep.subr.mxu0 0.0
    %2353 = vmatpush1.msra.mxu0 0.0
    %2354 = vmatprep.subr.mxu0 0.0
    %2355 = vmatpush1.msra.mxu0 0.0
    %2356 = vmatprep.subr.mxu0 0.0
    %2357 = vmatpush1.msra.mxu0 0.0
    %2358 = vmatprep.subr.mxu0 0.0
    %2359 = vmatpush1.msra.mxu0 0.0
    %2360 = vmatprep.subr.mxu0 0.0
    %2361 = vmatpush1.msra.mxu0 0.0
    %2362 = vmatprep.subr.mxu0 0.0
    %2363 = vmatpush1.msra.mxu0 0.0
    %2364 = vmatprep.subr.mxu0 0.0
    %2365 = vmatpush1.msra.mxu0 0.0
    %2366 = vmatprep.subr.mxu0 0.0
    %2367 = vmatpush1.msra.mxu0 0.0
    %2368 = vmatprep.subr.mxu0 0.0
    %2369 = vmatpush1.msra.mxu0 0.0
    %2370 = vmatprep.subr.mxu0 0.0
    %2371 = vmatpush1.msra.mxu0 0.0
    %2372 = vmatprep.subr.mxu0 0.0
    %2373 = vmatpush1.msra.mxu0 0.0
    %2374 = vmatprep.subr.mxu0 0.0
    %2375 = vmatpush1.msra.mxu0 0.0
    %2376 = vmatprep.mubr.f32.mxu0 0.0
    %v2377 = vand.u32 %v1971, 4294901760
    %2378 = vmatmul.mubr.f32.gmra.mrb[0].mxu0 %v2377
    %v2379 = vpop.f32.mrb[0].mxu0
    %v2380 = vadd.f32 %v2297, %v2379
    %v2381 = vpop.f32.mrb[0].mxu0
    %2382 = vdwg.mxu0
    %2383 = vmatprep.subr.mxu0 0.0
    %v2384 = vand.u32 %v63, 4294901760
    %2385 = vmatpush1.msra.mxu0 %v2384
    %2386 = vmatprep.subr.mxu0 0.0
    %v2387 = vand.u32 %v64, 4294901760
    %2388 = vmatpush1.msra.mxu0 %v2387
    %2389 = vmatprep.subr.mxu0 0.0
    %v2390 = vand.u32 %v65, 4294901760
    %2391 = vmatpush1.msra.mxu0 %v2390
    %2392 = vmatprep.subr.mxu0 0.0
    %v2393 = vand.u32 %v66, 4294901760
    %2394 = vmatpush1.msra.mxu0 %v2393
    %2395 = vmatprep.subr.mxu0 0.0
    %2396 = vmatpush1.msra.mxu0 0.0
    %2397 = vmatprep.subr.mxu0 0.0
    %2398 = vmatpush1.msra.mxu0 0.0
    %2399 = vmatprep.subr.mxu0 0.0
    %2400 = vmatpush1.msra.mxu0 0.0
    %2401 = vmatprep.subr.mxu0 0.0
    %2402 = vmatpush1.msra.mxu0 0.0
    %2403 = vmatprep.subr.mxu0 0.0
    %2404 = vmatpush1.msra.mxu0 0.0
    %2405 = vmatprep.subr.mxu0 0.0
    %2406 = vmatpush1.msra.mxu0 0.0
    %2407 = vmatprep.subr.mxu0 0.0
    %2408 = vmatpush1.msra.mxu0 0.0
    %2409 = vmatprep.subr.mxu0 0.0
    %2410 = vmatpush1.msra.mxu0 0.0
    %2411 = vmatprep.subr.mxu0 0.0
    %2412 = vmatpush1.msra.mxu0 0.0
    %2413 = vmatprep.subr.mxu0 0.0
    %2414 = vmatpush1.msra.mxu0 0.0
    %2415 = vmatprep.subr.mxu0 0.0
    %2416 = vmatpush1.msra.mxu0 0.0
    %2417 = vmatprep.subr.mxu0 0.0
    %2418 = vmatpush1.msra.mxu0 0.0
    %2419 = vmatprep.subr.mxu0 0.0
    %2420 = vmatpush1.msra.mxu0 0.0
    %2421 = vmatprep.subr.mxu0 0.0
    %2422 = vmatpush1.msra.mxu0 0.0
    %2423 = vmatprep.subr.mxu0 0.0
    %2424 = vmatpush1.msra.mxu0 0.0
    %2425 = vmatprep.subr.mxu0 0.0
    %2426 = vmatpush1.msra.mxu0 0.0
    %2427 = vmatprep.subr.mxu0 0.0
    %2428 = vmatpush1.msra.mxu0 0.0
    %2429 = vmatprep.subr.mxu0 0.0
    %2430 = vmatpush1.msra.mxu0 0.0
    %2431 = vmatprep.subr.mxu0 0.0
    %2432 = vmatpush1.msra.mxu0 0.0
    %2433 = vmatprep.subr.mxu0 0.0
    %2434 = vmatpush1.msra.mxu0 0.0
    %2435 = vmatprep.subr.mxu0 0.0
    %2436 = vmatpush1.msra.mxu0 0.0
    %2437 = vmatprep.subr.mxu0 0.0
    %2438 = vmatpush1.msra.mxu0 0.0
    %2439 = vmatprep.subr.mxu0 0.0
    %2440 = vmatpush1.msra.mxu0 0.0
    %2441 = vmatprep.subr.mxu0 0.0
    %2442 = vmatpush1.msra.mxu0 0.0
    %2443 = vmatprep.subr.mxu0 0.0
    %2444 = vmatpush1.msra.mxu0 0.0
    %2445 = vmatprep.subr.mxu0 0.0
    %2446 = vmatpush1.msra.mxu0 0.0
    %2447 = vmatprep.subr.mxu0 0.0
    %2448 = vmatpush1.msra.mxu0 0.0
    %2449 = vmatprep.subr.mxu0 0.0
    %2450 = vmatpush1.msra.mxu0 0.0
    %2451 = vmatprep.mubr.f32.mxu0 0.0
    %v2452 = vand.u32 %v1971, 4294901760
    %2453 = vmatmul.mubr.f32.gmra.mrb[0].mxu0 %v2452
    %v2454 = vpop.f32.mrb[0].mxu0
    %v2455 = vadd.f32 %v2380, %v2454
    %v2456 = vpop.f32.mrb[0].mxu0
    %2457 = vdwg.mxu0
    %v2459 = vsel %vm80, %v1967, 0
    %2461 = vmatprep.subr.mxu0 0.0
    %v2462 = vand.u32 %v1028, 4294901760
    %2463 = vmatpush1.msra.mxu0 %v2462
    %2464 = vmatprep.subr.mxu0 0.0
    %2465 = vmatpush1.msra.mxu0 0.0
    %2466 = vmatprep.subr.mxu0 0.0
    %2467 = vmatpush1.msra.mxu0 0.0
    %2468 = vmatprep.subr.mxu0 0.0
    %2469 = vmatpush1.msra.mxu0 0.0
    %2470 = vmatprep.subr.mxu0 0.0
    %2471 = vmatpush1.msra.mxu0 0.0
    %2472 = vmatprep.subr.mxu0 0.0
    %2473 = vmatpush1.msra.mxu0 0.0
    %2474 = vmatprep.subr.mxu0 0.0
    %2475 = vmatpush1.msra.mxu0 0.0
    %2476 = vmatprep.subr.mxu0 0.0
    %2477 = vmatpush1.msra.mxu0 0.0
    %2478 = vmatprep.subr.mxu0 0.0
    %2479 = vmatpush1.msra.mxu0 0.0
    %2480 = vmatprep.subr.mxu0 0.0
    %2481 = vmatpush1.msra.mxu0 0.0
    %2482 = vmatprep.subr.mxu0 0.0
    %2483 = vmatpush1.msra.mxu0 0.0
    %2484 = vmatprep.subr.mxu0 0.0
    %2485 = vmatpush1.msra.mxu0 0.0
    %2486 = vmatprep.subr.mxu0 0.0
    %2487 = vmatpush1.msra.mxu0 0.0
    %2488 = vmatprep.subr.mxu0 0.0
    %2489 = vmatpush1.msra.mxu0 0.0
    %2490 = vmatprep.subr.mxu0 0.0
    %2491 = vmatpush1.msra.mxu0 0.0
    %2492 = vmatprep.subr.mxu0 0.0
    %2493 = vmatpush1.msra.mxu0 0.0
    %2494 = vmatprep.subr.mxu0 0.0
    %2495 = vmatpush1.msra.mxu0 0.0
    %2496 = vmatprep.subr.mxu0 0.0
    %2497 = vmatpush1.msra.mxu0 0.0
    %2498 = vmatprep.subr.mxu0 0.0
    %2499 = vmatpush1.msra.mxu0 0.0
    %2500 = vmatprep.subr.mxu0 0.0
    %2501 = vmatpush1.msra.mxu0 0.0
    %2502 = vmatprep.subr.mxu0 0.0
    %2503 = vmatpush1.msra.mxu0 0.0
    %2504 = vmatprep.subr.mxu0 0.0
    %2505 = vmatpush1.msra.mxu0 0.0
    %2506 = vmatprep.subr.mxu0 0.0
    %2507 = vmatpush1.msra.mxu0 0.0
    %2508 = vmatprep.subr.mxu0 0.0
    %2509 = vmatpush1.msra.mxu0 0.0
    %2510 = vmatprep.subr.mxu0 0.0
    %2511 = vmatpush1.msra.mxu0 0.0
    %2512 = vmatprep.subr.mxu0 0.0
    %2513 = vmatpush1.msra.mxu0 0.0
    %2514 = vmatprep.subr.mxu0 0.0
    %2515 = vmatpush1.msra.mxu0 0.0
    %2516 = vmatprep.subr.mxu0 0.0
    %2517 = vmatpush1.msra.mxu0 0.0
    %2518 = vmatprep.subr.mxu0 0.0
    %2519 = vmatpush1.msra.mxu0 0.0
    %2520 = vmatprep.subr.mxu0 0.0
    %2521 = vmatpush1.msra.mxu0 0.0
    %2522 = vmatprep.subr.mxu0 0.0
    %2523 = vmatpush1.msra.mxu0 0.0
    %2524 = vmatprep.subr.mxu0 0.0
    %2525 = vmatpush1.msra.mxu0 0.0
    %2526 = vmatprep.mubr.f32.mxu0 0.0
    %v2527 = vand.u32 %v2459, 4294901760
    %v2528 = vsub.f32 %v2459, %v2527
    %v2529 = vand.u32 %v2528, 4294901760
    %v2530 = vsub.f32 %v2528, %v2529
    %v2531 = vand.u32 %v2530, 4294901760
    %2532 = vmatmul.mubr.f32.gmra.mrb[0].mxu0 %v2531
    %v2533 = vpop.f32.mrb[0].mxu0
    %v2534 = vadd.f32 %v2455, %v2533
    %v2535 = vpop.f32.mrb[0].mxu0
    %2536 = vdwg.mxu0
    %2537 = vmatprep.subr.mxu0 0.0
    %v2538 = vand.u32 %v1028, 4294901760
    %v2539 = vsub.f32 %v1028, %v2538
    %v2540 = vand.u32 %v2539, 4294901760
    %v2541 = vsub.f32 %v2539, %v2540
    %v2542 = vand.u32 %v2541, 4294901760
    %2543 = vmatpush1.msra.mxu0 %v2542
    %2544 = vmatprep.subr.mxu0 0.0
    %2545 = vmatpush1.msra.mxu0 0.0
    %2546 = vmatprep.subr.mxu0 0.0
    %2547 = vmatpush1.msra.mxu0 0.0
    %2548 = vmatprep.subr.mxu0 0.0
    %2549 = vmatpush1.msra.mxu0 0.0
    %2550 = vmatprep.subr.mxu0 0.0
    %2551 = vmatpush1.msra.mxu0 0.0
    %2552 = vmatprep.subr.mxu0 0.0
    %2553 = vmatpush1.msra.mxu0 0.0
    %2554 = vmatprep.subr.mxu0 0.0
    %2555 = vmatpush1.msra.mxu0 0.0
    %2556 = vmatprep.subr.mxu0 0.0
    %2557 = vmatpush1.msra.mxu0 0.0
    %2558 = vmatprep.subr.mxu0 0.0
    %2559 = vmatpush1.msra.mxu0 0.0
    %2560 = vmatprep.subr.mxu0 0.0
    %2561 = vmatpush1.msra.mxu0 0.0
    %2562 = vmatprep.subr.mxu0 0.0
    %2563 = vmatpush1.msra.mxu0 0.0
    %2564 = vmatprep.subr.mxu0 0.0
    %2565 = vmatpush1.msra.mxu0 0.0
    %2566 = vmatprep.subr.mxu0 0.0
    %2567 = vmatpush1.msra.mxu0 0.0
    %2568 = vmatprep.subr.mxu0 0.0
    %2569 = vmatpush1.msra.mxu0 0.0
    %2570 = vmatprep.subr.mxu0 0.0
    %2571 = vmatpush1.msra.mxu0 0.0
    %2572 = vmatprep.subr.mxu0 0.0
    %2573 = vmatpush1.msra.mxu0 0.0
    %2574 = vmatprep.subr.mxu0 0.0
    %2575 = vmatpush1.msra.mxu0 0.0
    %2576 = vmatprep.subr.mxu0 0.0
    %2577 = vmatpush1.msra.mxu0 0.0
    %2578 = vmatprep.subr.mxu0 0.0
    %2579 = vmatpush1.msra.mxu0 0.0
    %2580 = vmatprep.subr.mxu0 0.0
    %2581 = vmatpush1.msra.mxu0 0.0
    %2582 = vmatprep.subr.mxu0 0.0
    %2583 = vmatpush1.msra.mxu0 0.0
    %2584 = vmatprep.subr.mxu0 0.0
    %2585 = vmatpush1.msra.mxu0 0.0
    %2586 = vmatprep.subr.mxu0 0.0
    %2587 = vmatpush1.msra.mxu0 0.0
    %2588 = vmatprep.subr.mxu0 0.0
    %2589 = vmatpush1.msra.mxu0 0.0
    %2590 = vmatprep.subr.mxu0 0.0
    %2591 = vmatpush1.msra.mxu0 0.0
    %2592 = vmatprep.subr.mxu0 0.0
    %2593 = vmatpush1.msra.mxu0 0.0
    %2594 = vmatprep.subr.mxu0 0.0
    %2595 = vmatpush1.msra.mxu0 0.0
    %2596 = vmatprep.subr.mxu0 0.0
    %2597 = vmatpush1.msra.mxu0 0.0
    %2598 = vmatprep.subr.mxu0 0.0
    %2599 = vmatpush1.msra.mxu0 0.0
    %2600 = vmatprep.subr.mxu0 0.0
    %2601 = vmatpush1.msra.mxu0 0.0
    %2602 = vmatprep.subr.mxu0 0.0
    %2603 = vmatpush1.msra.mxu0 0.0
    %2604 = vmatprep.subr.mxu0 0.0
    %2605 = vmatpush1.msra.mxu0 0.0
    %2606 = vmatprep.mubr.f32.mxu0 0.0
    %v2607 = vand.u32 %v2459, 4294901760
    %2608 = vmatmul.mubr.f32.gmra.mrb[0].mxu0 %v2607
    %v2609 = vpop.f32.mrb[0].mxu0
    %v2610 = vadd.f32 %v2534, %v2609
    %v2611 = vpop.f32.mrb[0].mxu0
    %2612 = vdwg.mxu0
    %2613 = vmatprep.subr.mxu0 0.0
    %v2614 = vand.u32 %v1028, 4294901760
    %v2615 = vsub.f32 %v1028, %v2614
    %2616 = vmatpush1.msra.mxu0 %v2615
    %2617 = vmatprep.subr.mxu0 0.0
    %2618 = vmatpush1.msra.mxu0 0.0
    %2619 = vmatprep.subr.mxu0 0.0
    %2620 = vmatpush1.msra.mxu0 0.0
    %2621 = vmatprep.subr.mxu0 0.0
    %2622 = vmatpush1.msra.mxu0 0.0
    %2623 = vmatprep.subr.mxu0 0.0
    %2624 = vmatpush1.msra.mxu0 0.0
    %2625 = vmatprep.subr.mxu0 0.0
    %2626 = vmatpush1.msra.mxu0 0.0
    %2627 = vmatprep.subr.mxu0 0.0
    %2628 = vmatpush1.msra.mxu0 0.0
    %2629 = vmatprep.subr.mxu0 0.0
    %2630 = vmatpush1.msra.mxu0 0.0
    %2631 = vmatprep.subr.mxu0 0.0
    %2632 = vmatpush1.msra.mxu0 0.0
    %2633 = vmatprep.subr.mxu0 0.0
    %2634 = vmatpush1.msra.mxu0 0.0
    %2635 = vmatprep.subr.mxu0 0.0
    %2636 = vmatpush1.msra.mxu0 0.0
    %2637 = vmatprep.subr.mxu0 0.0
    %2638 = vmatpush1.msra.mxu0 0.0
    %2639 = vmatprep.subr.mxu0 0.0
    %2640 = vmatpush1.msra.mxu0 0.0
    %2641 = vmatprep.subr.mxu0 0.0
    %2642 = vmatpush1.msra.mxu0 0.0
    %2643 = vmatprep.subr.mxu0 0.0
    %2644 = vmatpush1.msra.mxu0 0.0
    %2645 = vmatprep.subr.mxu0 0.0
    %2646 = vmatpush1.msra.mxu0 0.0
    %2647 = vmatprep.subr.mxu0 0.0
    %2648 = vmatpush1.msra.mxu0 0.0
    %2649 = vmatprep.subr.mxu0 0.0
    %2650 = vmatpush1.msra.mxu0 0.0
    %2651 = vmatprep.subr.mxu0 0.0
    %2652 = vmatpush1.msra.mxu0 0.0
    %2653 = vmatprep.subr.mxu0 0.0
    %2654 = vmatpush1.msra.mxu0 0.0
    %2655 = vmatprep.subr.mxu0 0.0
    %2656 = vmatpush1.msra.mxu0 0.0
    %2657 = vmatprep.subr.mxu0 0.0
    %2658 = vmatpush1.msra.mxu0 0.0
    %2659 = vmatprep.subr.mxu0 0.0
    %2660 = vmatpush1.msra.mxu0 0.0
    %2661 = vmatprep.subr.mxu0 0.0
    %2662 = vmatpush1.msra.mxu0 0.0
    %2663 = vmatprep.subr.mxu0 0.0
    %2664 = vmatpush1.msra.mxu0 0.0
    %2665 = vmatprep.subr.mxu0 0.0
    %2666 = vmatpush1.msra.mxu0 0.0
    %2667 = vmatprep.subr.mxu0 0.0
    %2668 = vmatpush1.msra.mxu0 0.0
    %2669 = vmatprep.subr.mxu0 0.0
    %2670 = vmatpush1.msra.mxu0 0.0
    %2671 = vmatprep.subr.mxu0 0.0
    %2672 = vmatpush1.msra.mxu0 0.0
    %2673 = vmatprep.subr.mxu0 0.0
    %2674 = vmatpush1.msra.mxu0 0.0
    %2675 = vmatprep.subr.mxu0 0.0
    %2676 = vmatpush1.msra.mxu0 0.0
    %2677 = vmatprep.subr.mxu0 0.0
    %2678 = vmatpush1.msra.mxu0 0.0
    %2679 = vmatprep.mubr.f32.mxu0 0.0
    %v2680 = vand.u32 %v2459, 4294901760
    %v2681 = vsub.f32 %v2459, %v2680
    %2682 = vmatmul.mubr.f32.gmra.mrb[0].mxu0 %v2681
    %v2683 = vpop.f32.mrb[0].mxu0
    %v2684 = vadd.f32 %v2610, %v2683
    %v2685 = vpop.f32.mrb[0].mxu0
    %2686 = vdwg.mxu0
    %2687 = vmatprep.subr.mxu0 0.0
    %v2688 = vand.u32 %v1028, 4294901760
    %2689 = vmatpush1.msra.mxu0 %v2688
    %2690 = vmatprep.subr.mxu0 0.0
    %2691 = vmatpush1.msra.mxu0 0.0
    %2692 = vmatprep.subr.mxu0 0.0
    %2693 = vmatpush1.msra.mxu0 0.0
    %2694 = vmatprep.subr.mxu0 0.0
    %2695 = vmatpush1.msra.mxu0 0.0
    %2696 = vmatprep.subr.mxu0 0.0
    %2697 = vmatpush1.msra.mxu0 0.0
    %2698 = vmatprep.subr.mxu0 0.0
    %2699 = vmatpush1.msra.mxu0 0.0
    %2700 = vmatprep.subr.mxu0 0.0
    %2701 = vmatpush1.msra.mxu0 0.0
    %2702 = vmatprep.subr.mxu0 0.0
    %2703 = vmatpush1.msra.mxu0 0.0
    %2704 = vmatprep.subr.mxu0 0.0
    %2705 = vmatpush1.msra.mxu0 0.0
    %2706 = vmatprep.subr.mxu0 0.0
    %2707 = vmatpush1.msra.mxu0 0.0
    %2708 = vmatprep.subr.mxu0 0.0
    %2709 = vmatpush1.msra.mxu0 0.0
    %2710 = vmatprep.subr.mxu0 0.0
    %2711 = vmatpush1.msra.mxu0 0.0
    %2712 = vmatprep.subr.mxu0 0.0
    %2713 = vmatpush1.msra.mxu0 0.0
    %2714 = vmatprep.subr.mxu0 0.0
    %2715 = vmatpush1.msra.mxu0 0.0
    %2716 = vmatprep.subr.mxu0 0.0
    %2717 = vmatpush1.msra.mxu0 0.0
    %2718 = vmatprep.subr.mxu0 0.0
    %2719 = vmatpush1.msra.mxu0 0.0
    %2720 = vmatprep.subr.mxu0 0.0
    %2721 = vmatpush1.msra.mxu0 0.0
    %2722 = vmatprep.subr.mxu0 0.0
    %2723 = vmatpush1.msra.mxu0 0.0
    %2724 = vmatprep.subr.mxu0 0.0
    %2725 = vmatpush1.msra.mxu0 0.0
    %2726 = vmatprep.subr.mxu0 0.0
    %2727 = vmatpush1.msra.mxu0 0.0
    %2728 = vmatprep.subr.mxu0 0.0
    %2729 = vmatpush1.msra.mxu0 0.0
    %2730 = vmatprep.subr.mxu0 0.0
    %2731 = vmatpush1.msra.mxu0 0.0
    %2732 = vmatprep.subr.mxu0 0.0
    %2733 = vmatpush1.msra.mxu0 0.0
    %2734 = vmatprep.subr.mxu0 0.0
    %2735 = vmatpush1.msra.mxu0 0.0
    %2736 = vmatprep.subr.mxu0 0.0
    %2737 = vmatpush1.msra.mxu0 0.0
    %2738 = vmatprep.subr.mxu0 0.0
    %2739 = vmatpush1.msra.mxu0 0.0
    %2740 = vmatprep.subr.mxu0 0.0
    %2741 = vmatpush1.msra.mxu0 0.0
    %2742 = vmatprep.subr.mxu0 0.0
    %2743 = vmatpush1.msra.mxu0 0.0
    %2744 = vmatprep.subr.mxu0 0.0
    %2745 = vmatpush1.msra.mxu0 0.0
    %2746 = vmatprep.subr.mxu0 0.0
    %2747 = vmatpush1.msra.mxu0 0.0
    %2748 = vmatprep.subr.mxu0 0.0
    %2749 = vmatpush1.msra.mxu0 0.0
    %2750 = vmatprep.subr.mxu0 0.0
    %2751 = vmatpush1.msra.mxu0 0.0
    %2752 = vmatprep.mubr.f32.mxu0 0.0
    %v2753 = vand.u32 %v2459, 4294901760
    %v2754 = vsub.f32 %v2459, %v2753
    %v2755 = vand.u32 %v2754, 4294901760
    %2756 = vmatmul.mubr.f32.gmra.mrb[0].mxu0 %v2755
    %v2757 = vpop.f32.mrb[0].mxu0
    %v2758 = vadd.f32 %v2684, %v2757
    %v2759 = vpop.f32.mrb[0].mxu0
    %2760 = vdwg.mxu0
    %2761 = vmatprep.subr.mxu0 0.0
    %v2762 = vand.u32 %v1028, 4294901760
    %v2763 = vsub.f32 %v1028, %v2762
    %v2764 = vand.u32 %v2763, 4294901760
    %2765 = vmatpush1.msra.mxu0 %v2764
    %2766 = vmatprep.subr.mxu0 0.0
    %2767 = vmatpush1.msra.mxu0 0.0
    %2768 = vmatprep.subr.mxu0 0.0
    %2769 = vmatpush1.msra.mxu0 0.0
    %2770 = vmatprep.subr.mxu0 0.0
    %2771 = vmatpush1.msra.mxu0 0.0
    %2772 = vmatprep.subr.mxu0 0.0
    %2773 = vmatpush1.msra.mxu0 0.0
    %2774 = vmatprep.subr.mxu0 0.0
    %2775 = vmatpush1.msra.mxu0 0.0
    %2776 = vmatprep.subr.mxu0 0.0
    %2777 = vmatpush1.msra.mxu0 0.0
    %2778 = vmatprep.subr.mxu0 0.0
    %2779 = vmatpush1.msra.mxu0 0.0
    %2780 = vmatprep.subr.mxu0 0.0
    %2781 = vmatpush1.msra.mxu0 0.0
    %2782 = vmatprep.subr.mxu0 0.0
    %2783 = vmatpush1.msra.mxu0 0.0
    %2784 = vmatprep.subr.mxu0 0.0
    %2785 = vmatpush1.msra.mxu0 0.0
    %2786 = vmatprep.subr.mxu0 0.0
    %2787 = vmatpush1.msra.mxu0 0.0
    %2788 = vmatprep.subr.mxu0 0.0
    %2789 = vmatpush1.msra.mxu0 0.0
    %2790 = vmatprep.subr.mxu0 0.0
    %2791 = vmatpush1.msra.mxu0 0.0
    %2792 = vmatprep.subr.mxu0 0.0
    %2793 = vmatpush1.msra.mxu0 0.0
    %2794 = vmatprep.subr.mxu0 0.0
    %2795 = vmatpush1.msra.mxu0 0.0
    %2796 = vmatprep.subr.mxu0 0.0
    %2797 = vmatpush1.msra.mxu0 0.0
    %2798 = vmatprep.subr.mxu0 0.0
    %2799 = vmatpush1.msra.mxu0 0.0
    %2800 = vmatprep.subr.mxu0 0.0
    %2801 = vmatpush1.msra.mxu0 0.0
    %2802 = vmatprep.subr.mxu0 0.0
    %2803 = vmatpush1.msra.mxu0 0.0
    %2804 = vmatprep.subr.mxu0 0.0
    %2805 = vmatpush1.msra.mxu0 0.0
    %2806 = vmatprep.subr.mxu0 0.0
    %2807 = vmatpush1.msra.mxu0 0.0
    %2808 = vmatprep.subr.mxu0 0.0
    %2809 = vmatpush1.msra.mxu0 0.0
    %2810 = vmatprep.subr.mxu0 0.0
    %2811 = vmatpush1.msra.mxu0 0.0
    %2812 = vmatprep.subr.mxu0 0.0
    %2813 = vmatpush1.msra.mxu0 0.0
    %2814 = vmatprep.subr.mxu0 0.0
    %2815 = vmatpush1.msra.mxu0 0.0
    %2816 = vmatprep.subr.mxu0 0.0
    %2817 = vmatpush1.msra.mxu0 0.0
    %2818 = vmatprep.subr.mxu0 0.0
    %2819 = vmatpush1.msra.mxu0 0.0
    %2820 = vmatprep.subr.mxu0 0.0
    %2821 = vmatpush1.msra.mxu0 0.0
    %2822 = vmatprep.subr.mxu0 0.0
    %2823 = vmatpush1.msra.mxu0 0.0
    %2824 = vmatprep.subr.mxu0 0.0
    %2825 = vmatpush1.msra.mxu0 0.0
    %2826 = vmatprep.subr.mxu0 0.0
    %2827 = vmatpush1.msra.mxu0 0.0
    %2828 = vmatprep.mubr.f32.mxu0 0.0
    %v2829 = vand.u32 %v2459, 4294901760
    %2830 = vmatmul.mubr.f32.gmra.mrb[0].mxu0 %v2829
    %v2831 = vpop.f32.mrb[0].mxu0
    %v2832 = vadd.f32 %v2758, %v2831
    %v2833 = vpop.f32.mrb[0].mxu0
    %2834 = vdwg.mxu0
    %2835 = vmatprep.subr.mxu0 0.0
    %v2836 = vand.u32 %v1028, 4294901760
    %2837 = vmatpush1.msra.mxu0 %v2836
    %2838 = vmatprep.subr.mxu0 0.0
    %2839 = vmatpush1.msra.mxu0 0.0
    %2840 = vmatprep.subr.mxu0 0.0
    %2841 = vmatpush1.msra.mxu0 0.0
    %2842 = vmatprep.subr.mxu0 0.0
    %2843 = vmatpush1.msra.mxu0 0.0
    %2844 = vmatprep.subr.mxu0 0.0
    %2845 = vmatpush1.msra.mxu0 0.0
    %2846 = vmatprep.subr.mxu0 0.0
    %2847 = vmatpush1.msra.mxu0 0.0
    %2848 = vmatprep.subr.mxu0 0.0
    %2849 = vmatpush1.msra.mxu0 0.0
    %2850 = vmatprep.subr.mxu0 0.0
    %2851 = vmatpush1.msra.mxu0 0.0
    %2852 = vmatprep.subr.mxu0 0.0
    %2853 = vmatpush1.msra.mxu0 0.0
    %2854 = vmatprep.subr.mxu0 0.0
    %2855 = vmatpush1.msra.mxu0 0.0
    %2856 = vmatprep.subr.mxu0 0.0
    %2857 = vmatpush1.msra.mxu0 0.0
    %2858 = vmatprep.subr.mxu0 0.0
    %2859 = vmatpush1.msra.mxu0 0.0
    %2860 = vmatprep.subr.mxu0 0.0
    %2861 = vmatpush1.msra.mxu0 0.0
    %2862 = vmatprep.subr.mxu0 0.0
    %2863 = vmatpush1.msra.mxu0 0.0
    %2864 = vmatprep.subr.mxu0 0.0
    %2865 = vmatpush1.msra.mxu0 0.0
    %2866 = vmatprep.subr.mxu0 0.0
    %2867 = vmatpush1.msra.mxu0 0.0
    %2868 = vmatprep.subr.mxu0 0.0
    %2869 = vmatpush1.msra.mxu0 0.0
    %2870 = vmatprep.subr.mxu0 0.0
    %2871 = vmatpush1.msra.mxu0 0.0
    %2872 = vmatprep.subr.mxu0 0.0
    %2873 = vmatpush1.msra.mxu0 0.0
    %2874 = vmatprep.subr.mxu0 0.0
    %2875 = vmatpush1.msra.mxu0 0.0
    %2876 = vmatprep.subr.mxu0 0.0
    %2877 = vmatpush1.msra.mxu0 0.0
    %2878 = vmatprep.subr.mxu0 0.0
    %2879 = vmatpush1.msra.mxu0 0.0
    %2880 = vmatprep.subr.mxu0 0.0
    %2881 = vmatpush1.msra.mxu0 0.0
    %2882 = vmatprep.subr.mxu0 0.0
    %2883 = vmatpush1.msra.mxu0 0.0
    %2884 = vmatprep.subr.mxu0 0.0
    %2885 = vmatpush1.msra.mxu0 0.0
    %2886 = vmatprep.subr.mxu0 0.0
    %2887 = vmatpush1.msra.mxu0 0.0
    %2888 = vmatprep.subr.mxu0 0.0
    %2889 = vmatpush1.msra.mxu0 0.0
    %2890 = vmatprep.subr.mxu0 0.0
    %2891 = vmatpush1.msra.mxu0 0.0
    %2892 = vmatprep.subr.mxu0 0.0
    %2893 = vmatpush1.msra.mxu0 0.0
    %2894 = vmatprep.subr.mxu0 0.0
    %2895 = vmatpush1.msra.mxu0 0.0
    %2896 = vmatprep.subr.mxu0 0.0
    %2897 = vmatpush1.msra.mxu0 0.0
    %2898 = vmatprep.subr.mxu0 0.0
    %2899 = vmatpush1.msra.mxu0 0.0
    %2900 = vmatprep.mubr.f32.mxu0 0.0
    %v2901 = vand.u32 %v2459, 4294901760
    %2902 = vmatmul.mubr.f32.gmra.mrb[0].mxu0 %v2901
    %v2903 = vpop.f32.mrb[0].mxu0
    %v2904 = vadd.f32 %v2832, %v2903
    %v2905 = vpop.f32.mrb[0].mxu0
    %2906 = vdwg.mxu0
    %v2907 = vadd.f32 %v2904, %v1480
    %v2908 = vxor.u32 %v2907, 2147483648
    %v2909 = vmul.f32 %v2908, 1.442695
    %v2910 = vpow.pop %v2909
    %v2911 = vadd.f32 %v2910, 1.0
    %v2912 = vrcp.pop %v2911
    %v2913 = vmul.f32 1.0, %v2912
    %v2914 = vtanh.pop %v2907
    %v2915 = vmul.f32 %v2913, %v1514
    %2917 = vrot.lane.b32.xlu0 %v2914, 64
    %v2918 = vpop.permute.xlu0 %2917
    %v2920 = vmul.f32 %v2913, %v2918
    %2922 = vrot.lane.b32.xlu0 %v2920, 32
    %v2923 = vpop.permute.xlu0 %2922
    %v2925 = vadd.f32 %v2915, %v2923
    %v2926 = vtanh.pop %v2925
    %2928 = vrot.lane.b32.xlu0 %v2926, 64
    %v2929 = vpop.permute.xlu0 %2928
    %v2931 = vmul.f32 %v2913, %v2929
  $region74: #{tpu_custom_call.1} parent=0 // loop_footer
    %s1512 = sadd.s32 1, %s1508
  $region75: #{tpu_custom_call.1} parent=0 // loop_footer_branch
    %1507 = sbr.rel target = $region71
  $region76: #{tpu_custom_call.1} parent=0 // loop_exit
    _
  %v2933 = vlaneseq
  %v2934 = vshrl.u32 %v2933, 7
  %v2935 = vsub.s32 0, %v2934
  %v2936 = vrot.slane %v72, %v2935
  %2939 = vrot.lane.b32.xlu0 %v1506, 32
  %v2940 = vpop.permute.xlu0 %2939
  %v2941 = vsel %vm535, %v2940, 0
  %2943 = vmatprep.subr.mxu0 0.0
  %v2944 = vand.u32 %v68, 4294901760
  %2945 = vmatpush1.msra.mxu0 %v2944
  %2946 = vmatprep.subr.mxu0 0.0
  %v2947 = vand.u32 %v69, 4294901760
  %2948 = vmatpush1.msra.mxu0 %v2947
  %2949 = vmatprep.subr.mxu0 0.0
  %v2950 = vand.u32 %v70, 4294901760
  %2951 = vmatpush1.msra.mxu0 %v2950
  %2952 = vmatprep.subr.mxu0 0.0
  %v2953 = vand.u32 %v71, 4294901760
  %2954 = vmatpush1.msra.mxu0 %v2953
  %2955 = vmatprep.subr.mxu0 0.0
  %2956 = vmatpush1.msra.mxu0 0.0
  %2957 = vmatprep.subr.mxu0 0.0
  %2958 = vmatpush1.msra.mxu0 0.0
  %2959 = vmatprep.subr.mxu0 0.0
  %2960 = vmatpush1.msra.mxu0 0.0
  %2961 = vmatprep.subr.mxu0 0.0
  %2962 = vmatpush1.msra.mxu0 0.0
  %2963 = vmatprep.subr.mxu0 0.0
  %2964 = vmatpush1.msra.mxu0 0.0
  %2965 = vmatprep.subr.mxu0 0.0
  %2966 = vmatpush1.msra.mxu0 0.0
  %2967 = vmatprep.subr.mxu0 0.0
  %2968 = vmatpush1.msra.mxu0 0.0
  %2969 = vmatprep.subr.mxu0 0.0
  %2970 = vmatpush1.msra.mxu0 0.0
  %2971 = vmatprep.subr.mxu0 0.0
  %2972 = vmatpush1.msra.mxu0 0.0
  %2973 = vmatprep.subr.mxu0 0.0
  %2974 = vmatpush1.msra.mxu0 0.0
  %2975 = vmatprep.subr.mxu0 0.0
  %2976 = vmatpush1.msra.mxu0 0.0
  %2977 = vmatprep.subr.mxu0 0.0
  %2978 = vmatpush1.msra.mxu0 0.0
  %2979 = vmatprep.subr.mxu0 0.0
  %2980 = vmatpush1.msra.mxu0 0.0
  %2981 = vmatprep.subr.mxu0 0.0
  %2982 = vmatpush1.msra.mxu0 0.0
  %2983 = vmatprep.subr.mxu0 0.0
  %2984 = vmatpush1.msra.mxu0 0.0
  %2985 = vmatprep.subr.mxu0 0.0
  %2986 = vmatpush1.msra.mxu0 0.0
  %2987 = vmatprep.subr.mxu0 0.0
  %2988 = vmatpush1.msra.mxu0 0.0
  %2989 = vmatprep.subr.mxu0 0.0
  %2990 = vmatpush1.msra.mxu0 0.0
  %2991 = vmatprep.subr.mxu0 0.0
  %2992 = vmatpush1.msra.mxu0 0.0
  %2993 = vmatprep.subr.mxu0 0.0
  %2994 = vmatpush1.msra.mxu0 0.0
  %2995 = vmatprep.subr.mxu0 0.0
  %2996 = vmatpush1.msra.mxu0 0.0
  %2997 = vmatprep.subr.mxu0 0.0
  %2998 = vmatpush1.msra.mxu0 0.0
  %2999 = vmatprep.subr.mxu0 0.0
  %3000 = vmatpush1.msra.mxu0 0.0
  %3001 = vmatprep.subr.mxu0 0.0
  %3002 = vmatpush1.msra.mxu0 0.0
  %3003 = vmatprep.subr.mxu0 0.0
  %3004 = vmatpush1.msra.mxu0 0.0
  %3005 = vmatprep.subr.mxu0 0.0
  %3006 = vmatpush1.msra.mxu0 0.0
  %3007 = vmatprep.subr.mxu0 0.0
  %3008 = vmatpush1.msra.mxu0 0.0
  %3009 = vmatprep.subr.mxu0 0.0
  %3010 = vmatpush1.msra.mxu0 0.0
  %3011 = vmatprep.mubr.f32.mxu0 0.0
  %v3012 = vand.u32 %v2941, 4294901760
  %v3013 = vsub.f32 %v2941, %v3012
  %v3014 = vand.u32 %v3013, 4294901760
  %v3015 = vsub.f32 %v3013, %v3014
  %v3016 = vand.u32 %v3015, 4294901760
  %3017 = vmatmul.mubr.f32.gmra.mrb[0].mxu0 %v3016
  %v3018 = vpop.f32.mrb[0].mxu0
  %v3019 = vadd.f32 %v2936, %v3018
  %v3020 = vpop.f32.mrb[0].mxu0
  %3021 = vdwg.mxu0
  %3022 = vmatprep.subr.mxu0 0.0
  %v3023 = vand.u32 %v68, 4294901760
  %v3024 = vsub.f32 %v68, %v3023
  %v3025 = vand.u32 %v3024, 4294901760
  %v3026 = vsub.f32 %v3024, %v3025
  %v3027 = vand.u32 %v3026, 4294901760
  %3028 = vmatpush1.msra.mxu0 %v3027
  %3029 = vmatprep.subr.mxu0 0.0
  %v3030 = vand.u32 %v69, 4294901760
  %v3031 = vsub.f32 %v69, %v3030
  %v3032 = vand.u32 %v3031, 4294901760
  %v3033 = vsub.f32 %v3031, %v3032
  %v3034 = vand.u32 %v3033, 4294901760
  %3035 = vmatpush1.msra.mxu0 %v3034
  %3036 = vmatprep.subr.mxu0 0.0
  %v3037 = vand.u32 %v70, 4294901760
  %v3038 = vsub.f32 %v70, %v3037
  %v3039 = vand.u32 %v3038, 4294901760
  %v3040 = vsub.f32 %v3038, %v3039
  %v3041 = vand.u32 %v3040, 4294901760
  %3042 = vmatpush1.msra.mxu0 %v3041
  %3043 = vmatprep.subr.mxu0 0.0
  %v3044 = vand.u32 %v71, 4294901760
  %v3045 = vsub.f32 %v71, %v3044
  %v3046 = vand.u32 %v3045, 4294901760
  %v3047 = vsub.f32 %v3045, %v3046
  %v3048 = vand.u32 %v3047, 4294901760
  %3049 = vmatpush1.msra.mxu0 %v3048
  %3050 = vmatprep.subr.mxu0 0.0
  %3051 = vmatpush1.msra.mxu0 0.0
  %3052 = vmatprep.subr.mxu0 0.0
  %3053 = vmatpush1.msra.mxu0 0.0
  %3054 = vmatprep.subr.mxu0 0.0
  %3055 = vmatpush1.msra.mxu0 0.0
  %3056 = vmatprep.subr.mxu0 0.0
  %3057 = vmatpush1.msra.mxu0 0.0
  %3058 = vmatprep.subr.mxu0 0.0
  %3059 = vmatpush1.msra.mxu0 0.0
  %3060 = vmatprep.subr.mxu0 0.0
  %3061 = vmatpush1.msra.mxu0 0.0
  %3062 = vmatprep.subr.mxu0 0.0
  %3063 = vmatpush1.msra.mxu0 0.0
  %3064 = vmatprep.subr.mxu0 0.0
  %3065 = vmatpush1.msra.mxu0 0.0
  %3066 = vmatprep.subr.mxu0 0.0
  %3067 = vmatpush1.msra.mxu0 0.0
  %3068 = vmatprep.subr.mxu0 0.0
  %3069 = vmatpush1.msra.mxu0 0.0
  %3070 = vmatprep.subr.mxu0 0.0
  %3071 = vmatpush1.msra.mxu0 0.0
  %3072 = vmatprep.subr.mxu0 0.0
  %3073 = vmatpush1.msra.mxu0 0.0
  %3074 = vmatprep.subr.mxu0 0.0
  %3075 = vmatpush1.msra.mxu0 0.0
  %3076 = vmatprep.subr.mxu0 0.0
  %3077 = vmatpush1.msra.mxu0 0.0
  %3078 = vmatprep.subr.mxu0 0.0
  %3079 = vmatpush1.msra.mxu0 0.0
  %3080 = vmatprep.subr.mxu0 0.0
  %3081 = vmatpush1.msra.mxu0 0.0
  %3082 = vmatprep.subr.mxu0 0.0
  %3083 = vmatpush1.msra.mxu0 0.0
  %3084 = vmatprep.subr.mxu0 0.0
  %3085 = vmatpush1.msra.mxu0 0.0
  %3086 = vmatprep.subr.mxu0 0.0
  %3087 = vmatpush1.msra.mxu0 0.0
  %3088 = vmatprep.subr.mxu0 0.0
  %3089 = vmatpush1.msra.mxu0 0.0
  %3090 = vmatprep.subr.mxu0 0.0
  %3091 = vmatpush1.msra.mxu0 0.0
  %3092 = vmatprep.subr.mxu0 0.0
  %3093 = vmatpush1.msra.mxu0 0.0
  %3094 = vmatprep.subr.mxu0 0.0
  %3095 = vmatpush1.msra.mxu0 0.0
  %3096 = vmatprep.subr.mxu0 0.0
  %3097 = vmatpush1.msra.mxu0 0.0
  %3098 = vmatprep.subr.mxu0 0.0
  %3099 = vmatpush1.msra.mxu0 0.0
  %3100 = vmatprep.subr.mxu0 0.0
  %3101 = vmatpush1.msra.mxu0 0.0
  %3102 = vmatprep.subr.mxu0 0.0
  %3103 = vmatpush1.msra.mxu0 0.0
  %3104 = vmatprep.subr.mxu0 0.0
  %3105 = vmatpush1.msra.mxu0 0.0
  %3106 = vmatprep.mubr.f32.mxu0 0.0
  %v3107 = vand.u32 %v2941, 4294901760
  %3108 = vmatmul.mubr.f32.gmra.mrb[0].mxu0 %v3107
  %v3109 = vpop.f32.mrb[0].mxu0
  %v3110 = vadd.f32 %v3019, %v3109
  %v3111 = vpop.f32.mrb[0].mxu0
  %3112 = vdwg.mxu0
  %3113 = vmatprep.subr.mxu0 0.0
  %v3114 = vand.u32 %v68, 4294901760
  %v3115 = vsub.f32 %v68, %v3114
  %3116 = vmatpush1.msra.mxu0 %v3115
  %3117 = vmatprep.subr.mxu0 0.0
  %v3118 = vand.u32 %v69, 4294901760
  %v3119 = vsub.f32 %v69, %v3118
  %3120 = vmatpush1.msra.mxu0 %v3119
  %3121 = vmatprep.subr.mxu0 0.0
  %v3122 = vand.u32 %v70, 4294901760
  %v3123 = vsub.f32 %v70, %v3122
  %3124 = vmatpush1.msra.mxu0 %v3123
  %3125 = vmatprep.subr.mxu0 0.0
  %v3126 = vand.u32 %v71, 4294901760
  %v3127 = vsub.f32 %v71, %v3126
  %3128 = vmatpush1.msra.mxu0 %v3127
  %3129 = vmatprep.subr.mxu0 0.0
  %3130 = vmatpush1.msra.mxu0 0.0
  %3131 = vmatprep.subr.mxu0 0.0
  %3132 = vmatpush1.msra.mxu0 0.0
  %3133 = vmatprep.subr.mxu0 0.0
  %3134 = vmatpush1.msra.mxu0 0.0
  %3135 = vmatprep.subr.mxu0 0.0
  %3136 = vmatpush1.msra.mxu0 0.0
  %3137 = vmatprep.subr.mxu0 0.0
  %3138 = vmatpush1.msra.mxu0 0.0
  %3139 = vmatprep.subr.mxu0 0.0
  %3140 = vmatpush1.msra.mxu0 0.0
  %3141 = vmatprep.subr.mxu0 0.0
  %3142 = vmatpush1.msra.mxu0 0.0
  %3143 = vmatprep.subr.mxu0 0.0
  %3144 = vmatpush1.msra.mxu0 0.0
  %3145 = vmatprep.subr.mxu0 0.0
  %3146 = vmatpush1.msra.mxu0 0.0
  %3147 = vmatprep.subr.mxu0 0.0
  %3148 = vmatpush1.msra.mxu0 0.0
  %3149 = vmatprep.subr.mxu0 0.0
  %3150 = vmatpush1.msra.mxu0 0.0
  %3151 = vmatprep.subr.mxu0 0.0
  %3152 = vmatpush1.msra.mxu0 0.0
  %3153 = vmatprep.subr.mxu0 0.0
  %3154 = vmatpush1.msra.mxu0 0.0
  %3155 = vmatprep.subr.mxu0 0.0
  %3156 = vmatpush1.msra.mxu0 0.0
  %3157 = vmatprep.subr.mxu0 0.0
  %3158 = vmatpush1.msra.mxu0 0.0
  %3159 = vmatprep.subr.mxu0 0.0
  %3160 = vmatpush1.msra.mxu0 0.0
  %3161 = vmatprep.subr.mxu0 0.0
  %3162 = vmatpush1.msra.mxu0 0.0
  %3163 = vmatprep.subr.mxu0 0.0
  %3164 = vmatpush1.msra.mxu0 0.0
  %3165 = vmatprep.subr.mxu0 0.0
  %3166 = vmatpush1.msra.mxu0 0.0
  %3167 = vmatprep.subr.mxu0 0.0
  %3168 = vmatpush1.msra.mxu0 0.0
  %3169 = vmatprep.subr.mxu0 0.0
  %3170 = vmatpush1.msra.mxu0 0.0
  %3171 = vmatprep.subr.mxu0 0.0
  %3172 = vmatpush1.msra.mxu0 0.0
  %3173 = vmatprep.subr.mxu0 0.0
  %3174 = vmatpush1.msra.mxu0 0.0
  %3175 = vmatprep.subr.mxu0 0.0
  %3176 = vmatpush1.msra.mxu0 0.0
  %3177 = vmatprep.subr.mxu0 0.0
  %3178 = vmatpush1.msra.mxu0 0.0
  %3179 = vmatprep.subr.mxu0 0.0
  %3180 = vmatpush1.msra.mxu0 0.0
  %3181 = vmatprep.subr.mxu0 0.0
  %3182 = vmatpush1.msra.mxu0 0.0
  %3183 = vmatprep.subr.mxu0 0.0
  %3184 = vmatpush1.msra.mxu0 0.0
  %3185 = vmatprep.mubr.f32.mxu0 0.0
  %v3186 = vand.u32 %v2941, 4294901760
  %v3187 = vsub.f32 %v2941, %v3186
  %3188 = vmatmul.mubr.f32.gmra.mrb[0].mxu0 %v3187
  %v3189 = vpop.f32.mrb[0].mxu0
  %v3190 = vadd.f32 %v3110, %v3189
  %v3191 = vpop.f32.mrb[0].mxu0
  %3192 = vdwg.mxu0
  %3193 = vmatprep.subr.mxu0 0.0
  %v3194 = vand.u32 %v68, 4294901760
  %3195 = vmatpush1.msra.mxu0 %v3194
  %3196 = vmatprep.subr.mxu0 0.0
  %v3197 = vand.u32 %v69, 4294901760
  %3198 = vmatpush1.msra.mxu0 %v3197
  %3199 = vmatprep.subr.mxu0 0.0
  %v3200 = vand.u32 %v70, 4294901760
  %3201 = vmatpush1.msra.mxu0 %v3200
  %3202 = vmatprep.subr.mxu0 0.0
  %v3203 = vand.u32 %v71, 4294901760
  %3204 = vmatpush1.msra.mxu0 %v3203
  %3205 = vmatprep.subr.mxu0 0.0
  %3206 = vmatpush1.msra.mxu0 0.0
  %3207 = vmatprep.subr.mxu0 0.0
  %3208 = vmatpush1.msra.mxu0 0.0
  %3209 = vmatprep.subr.mxu0 0.0
  %3210 = vmatpush1.msra.mxu0 0.0
  %3211 = vmatprep.subr.mxu0 0.0
  %3212 = vmatpush1.msra.mxu0 0.0
  %3213 = vmatprep.subr.mxu0 0.0
  %3214 = vmatpush1.msra.mxu0 0.0
  %3215 = vmatprep.subr.mxu0 0.0
  %3216 = vmatpush1.msra.mxu0 0.0
  %3217 = vmatprep.subr.mxu0 0.0
  %3218 = vmatpush1.msra.mxu0 0.0
  %3219 = vmatprep.subr.mxu0 0.0
  %3220 = vmatpush1.msra.mxu0 0.0
  %3221 = vmatprep.subr.mxu0 0.0
  %3222 = vmatpush1.msra.mxu0 0.0
  %3223 = vmatprep.subr.mxu0 0.0
  %3224 = vmatpush1.msra.mxu0 0.0
  %3225 = vmatprep.subr.mxu0 0.0
  %3226 = vmatpush1.msra.mxu0 0.0
  %3227 = vmatprep.subr.mxu0 0.0
  %3228 = vmatpush1.msra.mxu0 0.0
  %3229 = vmatprep.subr.mxu0 0.0
  %3230 = vmatpush1.msra.mxu0 0.0
  %3231 = vmatprep.subr.mxu0 0.0
  %3232 = vmatpush1.msra.mxu0 0.0
  %3233 = vmatprep.subr.mxu0 0.0
  %3234 = vmatpush1.msra.mxu0 0.0
  %3235 = vmatprep.subr.mxu0 0.0
  %3236 = vmatpush1.msra.mxu0 0.0
  %3237 = vmatprep.subr.mxu0 0.0
  %3238 = vmatpush1.msra.mxu0 0.0
  %3239 = vmatprep.subr.mxu0 0.0
  %3240 = vmatpush1.msra.mxu0 0.0
  %3241 = vmatprep.subr.mxu0 0.0
  %3242 = vmatpush1.msra.mxu0 0.0
  %3243 = vmatprep.subr.mxu0 0.0
  %3244 = vmatpush1.msra.mxu0 0.0
  %3245 = vmatprep.subr.mxu0 0.0
  %3246 = vmatpush1.msra.mxu0 0.0
  %3247 = vmatprep.subr.mxu0 0.0
  %3248 = vmatpush1.msra.mxu0 0.0
  %3249 = vmatprep.subr.mxu0 0.0
  %3250 = vmatpush1.msra.mxu0 0.0
  %3251 = vmatprep.subr.mxu0 0.0
  %3252 = vmatpush1.msra.mxu0 0.0
  %3253 = vmatprep.subr.mxu0 0.0
  %3254 = vmatpush1.msra.mxu0 0.0
  %3255 = vmatprep.subr.mxu0 0.0
  %3256 = vmatpush1.msra.mxu0 0.0
  %3257 = vmatprep.subr.mxu0 0.0
  %3258 = vmatpush1.msra.mxu0 0.0
  %3259 = vmatprep.subr.mxu0 0.0
  %3260 = vmatpush1.msra.mxu0 0.0
  %3261 = vmatprep.mubr.f32.mxu0 0.0
  %v3262 = vand.u32 %v2941, 4294901760
  %v3263 = vsub.f32 %v2941, %v3262
  %v3264 = vand.u32 %v3263, 4294901760
  %3265 = vmatmul.mubr.f32.gmra.mrb[0].mxu0 %v3264
  %v3266 = vpop.f32.mrb[0].mxu0
  %v3267 = vadd.f32 %v3190, %v3266
  %v3268 = vpop.f32.mrb[0].mxu0
  %3269 = vdwg.mxu0
  %3270 = vmatprep.subr.mxu0 0.0
  %v3271 = vand.u32 %v68, 4294901760
  %v3272 = vsub.f32 %v68, %v3271
  %v3273 = vand.u32 %v3272, 4294901760
  %3274 = vmatpush1.msra.mxu0 %v3273
  %3275 = vmatprep.subr.mxu0 0.0
  %v3276 = vand.u32 %v69, 4294901760
  %v3277 = vsub.f32 %v69, %v3276
  %v3278 = vand.u32 %v3277, 4294901760
  %3279 = vmatpush1.msra.mxu0 %v3278
  %3280 = vmatprep.subr.mxu0 0.0
  %v3281 = vand.u32 %v70, 4294901760
  %v3282 = vsub.f32 %v70, %v3281
  %v3283 = vand.u32 %v3282, 4294901760
  %3284 = vmatpush1.msra.mxu0 %v3283
  %3285 = vmatprep.subr.mxu0 0.0
  %v3286 = vand.u32 %v71, 4294901760
  %v3287 = vsub.f32 %v71, %v3286
  %v3288 = vand.u32 %v3287, 4294901760
  %3289 = vmatpush1.msra.mxu0 %v3288
  %3290 = vmatprep.subr.mxu0 0.0
  %3291 = vmatpush1.msra.mxu0 0.0
  %3292 = vmatprep.subr.mxu0 0.0
  %3293 = vmatpush1.msra.mxu0 0.0
  %3294 = vmatprep.subr.mxu0 0.0
  %3295 = vmatpush1.msra.mxu0 0.0
  %3296 = vmatprep.subr.mxu0 0.0
  %3297 = vmatpush1.msra.mxu0 0.0
  %3298 = vmatprep.subr.mxu0 0.0
  %3299 = vmatpush1.msra.mxu0 0.0
  %3300 = vmatprep.subr.mxu0 0.0
  %3301 = vmatpush1.msra.mxu0 0.0
  %3302 = vmatprep.subr.mxu0 0.0
  %3303 = vmatpush1.msra.mxu0 0.0
  %3304 = vmatprep.subr.mxu0 0.0
  %3305 = vmatpush1.msra.mxu0 0.0
  %3306 = vmatprep.subr.mxu0 0.0
  %3307 = vmatpush1.msra.mxu0 0.0
  %3308 = vmatprep.subr.mxu0 0.0
  %3309 = vmatpush1.msra.mxu0 0.0
  %3310 = vmatprep.subr.mxu0 0.0
  %3311 = vmatpush1.msra.mxu0 0.0
  %3312 = vmatprep.subr.mxu0 0.0
  %3313 = vmatpush1.msra.mxu0 0.0
  %3314 = vmatprep.subr.mxu0 0.0
  %3315 = vmatpush1.msra.mxu0 0.0
  %3316 = vmatprep.subr.mxu0 0.0
  %3317 = vmatpush1.msra.mxu0 0.0
  %3318 = vmatprep.subr.mxu0 0.0
  %3319 = vmatpush1.msra.mxu0 0.0
  %3320 = vmatprep.subr.mxu0 0.0
  %3321 = vmatpush1.msra.mxu0 0.0
  %3322 = vmatprep.subr.mxu0 0.0
  %3323 = vmatpush1.msra.mxu0 0.0
  %3324 = vmatprep.subr.mxu0 0.0
  %3325 = vmatpush1.msra.mxu0 0.0
  %3326 = vmatprep.subr.mxu0 0.0
  %3327 = vmatpush1.msra.mxu0 0.0
  %3328 = vmatprep.subr.mxu0 0.0
  %3329 = vmatpush1.msra.mxu0 0.0
  %3330 = vmatprep.subr.mxu0 0.0
  %3331 = vmatpush1.msra.mxu0 0.0
  %3332 = vmatprep.subr.mxu0 0.0
  %3333 = vmatpush1.msra.mxu0 0.0
  %3334 = vmatprep.subr.mxu0 0.0
  %3335 = vmatpush1.msra.mxu0 0.0
  %3336 = vmatprep.subr.mxu0 0.0
  %3337 = vmatpush1.msra.mxu0 0.0
  %3338 = vmatprep.subr.mxu0 0.0
  %3339 = vmatpush1.msra.mxu0 0.0
  %3340 = vmatprep.subr.mxu0 0.0
  %3341 = vmatpush1.msra.mxu0 0.0
  %3342 = vmatprep.subr.mxu0 0.0
  %3343 = vmatpush1.msra.mxu0 0.0
  %3344 = vmatprep.subr.mxu0 0.0
  %3345 = vmatpush1.msra.mxu0 0.0
  %3346 = vmatprep.mubr.f32.mxu0 0.0
  %v3347 = vand.u32 %v2941, 4294901760
  %3348 = vmatmul.mubr.f32.gmra.mrb[0].mxu0 %v3347
  %v3349 = vpop.f32.mrb[0].mxu0
  %v3350 = vadd.f32 %v3267, %v3349
  %v3351 = vpop.f32.mrb[0].mxu0
  %3352 = vdwg.mxu0
  %3353 = vmatprep.subr.mxu0 0.0
  %v3354 = vand.u32 %v68, 4294901760
  %3355 = vmatpush1.msra.mxu0 %v3354
  %3356 = vmatprep.subr.mxu0 0.0
  %v3357 = vand.u32 %v69, 4294901760
  %3358 = vmatpush1.msra.mxu0 %v3357
  %3359 = vmatprep.subr.mxu0 0.0
  %v3360 = vand.u32 %v70, 4294901760
  %3361 = vmatpush1.msra.mxu0 %v3360
  %3362 = vmatprep.subr.mxu0 0.0
  %v3363 = vand.u32 %v71, 4294901760
  %3364 = vmatpush1.msra.mxu0 %v3363
  %3365 = vmatprep.subr.mxu0 0.0
  %3366 = vmatpush1.msra.mxu0 0.0
  %3367 = vmatprep.subr.mxu0 0.0
  %3368 = vmatpush1.msra.mxu0 0.0
  %3369 = vmatprep.subr.mxu0 0.0
  %3370 = vmatpush1.msra.mxu0 0.0
  %3371 = vmatprep.subr.mxu0 0.0
  %3372 = vmatpush1.msra.mxu0 0.0
  %3373 = vmatprep.subr.mxu0 0.0
  %3374 = vmatpush1.msra.mxu0 0.0
  %3375 = vmatprep.subr.mxu0 0.0
  %3376 = vmatpush1.msra.mxu0 0.0
  %3377 = vmatprep.subr.mxu0 0.0
  %3378 = vmatpush1.msra.mxu0 0.0
  %3379 = vmatprep.subr.mxu0 0.0
  %3380 = vmatpush1.msra.mxu0 0.0
  %3381 = vmatprep.subr.mxu0 0.0
  %3382 = vmatpush1.msra.mxu0 0.0
  %3383 = vmatprep.subr.mxu0 0.0
  %3384 = vmatpush1.msra.mxu0 0.0
  %3385 = vmatprep.subr.mxu0 0.0
  %3386 = vmatpush1.msra.mxu0 0.0
  %3387 = vmatprep.subr.mxu0 0.0
  %3388 = vmatpush1.msra.mxu0 0.0
  %3389 = vmatprep.subr.mxu0 0.0
  %3390 = vmatpush1.msra.mxu0 0.0
  %3391 = vmatprep.subr.mxu0 0.0
  %3392 = vmatpush1.msra.mxu0 0.0
  %3393 = vmatprep.subr.mxu0 0.0
  %3394 = vmatpush1.msra.mxu0 0.0
  %3395 = vmatprep.subr.mxu0 0.0
  %3396 = vmatpush1.msra.mxu0 0.0
  %3397 = vmatprep.subr.mxu0 0.0
  %3398 = vmatpush1.msra.mxu0 0.0
  %3399 = vmatprep.subr.mxu0 0.0
  %3400 = vmatpush1.msra.mxu0 0.0
  %3401 = vmatprep.subr.mxu0 0.0
  %3402 = vmatpush1.msra.mxu0 0.0
  %3403 = vmatprep.subr.mxu0 0.0
  %3404 = vmatpush1.msra.mxu0 0.0
  %3405 = vmatprep.subr.mxu0 0.0
  %3406 = vmatpush1.msra.mxu0 0.0
  %3407 = vmatprep.subr.mxu0 0.0
  %3408 = vmatpush1.msra.mxu0 0.0
  %3409 = vmatprep.subr.mxu0 0.0
  %3410 = vmatpush1.msra.mxu0 0.0
  %3411 = vmatprep.subr.mxu0 0.0
  %3412 = vmatpush1.msra.mxu0 0.0
  %3413 = vmatprep.subr.mxu0 0.0
  %3414 = vmatpush1.msra.mxu0 0.0
  %3415 = vmatprep.subr.mxu0 0.0
  %3416 = vmatpush1.msra.mxu0 0.0
  %3417 = vmatprep.subr.mxu0 0.0
  %3418 = vmatpush1.msra.mxu0 0.0
  %3419 = vmatprep.subr.mxu0 0.0
  %3420 = vmatpush1.msra.mxu0 0.0
  %3421 = vmatprep.mubr.f32.mxu0 0.0
  %v3422 = vand.u32 %v2941, 4294901760
  %3423 = vmatmul.mubr.f32.gmra.mrb[0].mxu0 %v3422
  %v3424 = vpop.f32.mrb[0].mxu0
  %v3425 = vadd.f32 %v3350, %v3424
  %v3426 = vpop.f32.mrb[0].mxu0
  %3427 = vdwg.mxu0
  %vm3428 = vcmask 1024
  %3429 = vst.msk [vmem:[%s17] sm:$0x3] %vm3428, %v3425
  %3431 = vrot.lane.b32.xlu0 %v1513, 32
  %v3432 = vpop.permute.xlu0 %3431
  %v3433 = vsel %vm535, %v3432, 0
  %3435 = vmatprep.subr.mxu0 0.0
  %v3436 = vand.u32 %v68, 4294901760
  %3437 = vmatpush1.msra.mxu0 %v3436
  %3438 = vmatprep.subr.mxu0 0.0
  %v3439 = vand.u32 %v69, 4294901760
  %3440 = vmatpush1.msra.mxu0 %v3439
  %3441 = vmatprep.subr.mxu0 0.0
  %v3442 = vand.u32 %v70, 4294901760
  %3443 = vmatpush1.msra.mxu0 %v3442
  %3444 = vmatprep.subr.mxu0 0.0
  %v3445 = vand.u32 %v71, 4294901760
  %3446 = vmatpush1.msra.mxu0 %v3445
  %3447 = vmatprep.subr.mxu0 0.0
  %3448 = vmatpush1.msra.mxu0 0.0
  %3449 = vmatprep.subr.mxu0 0.0
  %3450 = vmatpush1.msra.mxu0 0.0
  %3451 = vmatprep.subr.mxu0 0.0
  %3452 = vmatpush1.msra.mxu0 0.0
  %3453 = vmatprep.subr.mxu0 0.0
  %3454 = vmatpush1.msra.mxu0 0.0
  %3455 = vmatprep.subr.mxu0 0.0
  %3456 = vmatpush1.msra.mxu0 0.0
  %3457 = vmatprep.subr.mxu0 0.0
  %3458 = vmatpush1.msra.mxu0 0.0
  %3459 = vmatprep.subr.mxu0 0.0
  %3460 = vmatpush1.msra.mxu0 0.0
  %3461 = vmatprep.subr.mxu0 0.0
  %3462 = vmatpush1.msra.mxu0 0.0
  %3463 = vmatprep.subr.mxu0 0.0
  %3464 = vmatpush1.msra.mxu0 0.0
  %3465 = vmatprep.subr.mxu0 0.0
  %3466 = vmatpush1.msra.mxu0 0.0
  %3467 = vmatprep.subr.mxu0 0.0
  %3468 = vmatpush1.msra.mxu0 0.0
  %3469 = vmatprep.subr.mxu0 0.0
  %3470 = vmatpush1.msra.mxu0 0.0
  %3471 = vmatprep.subr.mxu0 0.0
  %3472 = vmatpush1.msra.mxu0 0.0
  %3473 = vmatprep.subr.mxu0 0.0
  %3474 = vmatpush1.msra.mxu0 0.0
  %3475 = vmatprep.subr.mxu0 0.0
  %3476 = vmatpush1.msra.mxu0 0.0
  %3477 = vmatprep.subr.mxu0 0.0
  %3478 = vmatpush1.msra.mxu0 0.0
  %3479 = vmatprep.subr.mxu0 0.0
  %3480 = vmatpush1.msra.mxu0 0.0
  %3481 = vmatprep.subr.mxu0 0.0
  %3482 = vmatpush1.msra.mxu0 0.0
  %3483 = vmatprep.subr.mxu0 0.0
  %3484 = vmatpush1.msra.mxu0 0.0
  %3485 = vmatprep.subr.mxu0 0.0
  %3486 = vmatpush1.msra.mxu0 0.0
  %3487 = vmatprep.subr.mxu0 0.0
  %3488 = vmatpush1.msra.mxu0 0.0
  %3489 = vmatprep.subr.mxu0 0.0
  %3490 = vmatpush1.msra.mxu0 0.0
  %3491 = vmatprep.subr.mxu0 0.0
  %3492 = vmatpush1.msra.mxu0 0.0
  %3493 = vmatprep.subr.mxu0 0.0
  %3494 = vmatpush1.msra.mxu0 0.0
  %3495 = vmatprep.subr.mxu0 0.0
  %3496 = vmatpush1.msra.mxu0 0.0
  %3497 = vmatprep.subr.mxu0 0.0
  %3498 = vmatpush1.msra.mxu0 0.0
  %3499 = vmatprep.subr.mxu0 0.0
  %3500 = vmatpush1.msra.mxu0 0.0
  %3501 = vmatprep.subr.mxu0 0.0
  %3502 = vmatpush1.msra.mxu0 0.0
  %3503 = vmatprep.mubr.f32.mxu0 0.0
  %v3504 = vand.u32 %v3433, 4294901760
  %v3505 = vsub.f32 %v3433, %v3504
  %v3506 = vand.u32 %v3505, 4294901760
  %v3507 = vsub.f32 %v3505, %v3506
  %v3508 = vand.u32 %v3507, 4294901760
  %3509 = vmatmul.mubr.f32.gmra.mrb[0].mxu0 %v3508
  %v3510 = vpop.f32.mrb[0].mxu0
  %v3511 = vadd.f32 %v2936, %v3510
  %v3512 = vpop.f32.mrb[0].mxu0
  %3513 = vdwg.mxu0
  %3514 = vmatprep.subr.mxu0 0.0
  %v3515 = vand.u32 %v68, 4294901760
  %v3516 = vsub.f32 %v68, %v3515
  %v3517 = vand.u32 %v3516, 4294901760
  %v3518 = vsub.f32 %v3516, %v3517
  %v3519 = vand.u32 %v3518, 4294901760
  %3520 = vmatpush1.msra.mxu0 %v3519
  %3521 = vmatprep.subr.mxu0 0.0
  %v3522 = vand.u32 %v69, 4294901760
  %v3523 = vsub.f32 %v69, %v3522
  %v3524 = vand.u32 %v3523, 4294901760
  %v3525 = vsub.f32 %v3523, %v3524
  %v3526 = vand.u32 %v3525, 4294901760
  %3527 = vmatpush1.msra.mxu0 %v3526
  %3528 = vmatprep.subr.mxu0 0.0
  %v3529 = vand.u32 %v70, 4294901760
  %v3530 = vsub.f32 %v70, %v3529
  %v3531 = vand.u32 %v3530, 4294901760
  %v3532 = vsub.f32 %v3530, %v3531
  %v3533 = vand.u32 %v3532, 4294901760
  %3534 = vmatpush1.msra.mxu0 %v3533
  %3535 = vmatprep.subr.mxu0 0.0
  %v3536 = vand.u32 %v71, 4294901760
  %v3537 = vsub.f32 %v71, %v3536
  %v3538 = vand.u32 %v3537, 4294901760
  %v3539 = vsub.f32 %v3537, %v3538
  %v3540 = vand.u32 %v3539, 4294901760
  %3541 = vmatpush1.msra.mxu0 %v3540
  %3542 = vmatprep.subr.mxu0 0.0
  %3543 = vmatpush1.msra.mxu0 0.0
  %3544 = vmatprep.subr.mxu0 0.0
  %3545 = vmatpush1.msra.mxu0 0.0
  %3546 = vmatprep.subr.mxu0 0.0
  %3547 = vmatpush1.msra.mxu0 0.0
  %3548 = vmatprep.subr.mxu0 0.0
  %3549 = vmatpush1.msra.mxu0 0.0
  %3550 = vmatprep.subr.mxu0 0.0
  %3551 = vmatpush1.msra.mxu0 0.0
  %3552 = vmatprep.subr.mxu0 0.0
  %3553 = vmatpush1.msra.mxu0 0.0
  %3554 = vmatprep.subr.mxu0 0.0
  %3555 = vmatpush1.msra.mxu0 0.0
  %3556 = vmatprep.subr.mxu0 0.0
  %3557 = vmatpush1.msra.mxu0 0.0
  %3558 = vmatprep.subr.mxu0 0.0
  %3559 = vmatpush1.msra.mxu0 0.0
  %3560 = vmatprep.subr.mxu0 0.0
  %3561 = vmatpush1.msra.mxu0 0.0
  %3562 = vmatprep.subr.mxu0 0.0
  %3563 = vmatpush1.msra.mxu0 0.0
  %3564 = vmatprep.subr.mxu0 0.0
  %3565 = vmatpush1.msra.mxu0 0.0
  %3566 = vmatprep.subr.mxu0 0.0
  %3567 = vmatpush1.msra.mxu0 0.0
  %3568 = vmatprep.subr.mxu0 0.0
  %3569 = vmatpush1.msra.mxu0 0.0
  %3570 = vmatprep.subr.mxu0 0.0
  %3571 = vmatpush1.msra.mxu0 0.0
  %3572 = vmatprep.subr.mxu0 0.0
  %3573 = vmatpush1.msra.mxu0 0.0
  %3574 = vmatprep.subr.mxu0 0.0
  %3575 = vmatpush1.msra.mxu0 0.0
  %3576 = vmatprep.subr.mxu0 0.0
  %3577 = vmatpush1.msra.mxu0 0.0
  %3578 = vmatprep.subr.mxu0 0.0
  %3579 = vmatpush1.msra.mxu0 0.0
  %3580 = vmatprep.subr.mxu0 0.0
  %3581 = vmatpush1.msra.mxu0 0.0
  %3582 = vmatprep.subr.mxu0 0.0
  %3583 = vmatpush1.msra.mxu0 0.0
  %3584 = vmatprep.subr.mxu0 0.0
  %3585 = vmatpush1.msra.mxu0 0.0
  %3586 = vmatprep.subr.mxu0 0.0
  %3587 = vmatpush1.msra.mxu0 0.0
  %3588 = vmatprep.subr.mxu0 0.0
  %3589 = vmatpush1.msra.mxu0 0.0
  %3590 = vmatprep.subr.mxu0 0.0
  %3591 = vmatpush1.msra.mxu0 0.0
  %3592 = vmatprep.subr.mxu0 0.0
  %3593 = vmatpush1.msra.mxu0 0.0
  %3594 = vmatprep.subr.mxu0 0.0
  %3595 = vmatpush1.msra.mxu0 0.0
  %3596 = vmatprep.subr.mxu0 0.0
  %3597 = vmatpush1.msra.mxu0 0.0
  %3598 = vmatprep.mubr.f32.mxu0 0.0
  %v3599 = vand.u32 %v3433, 4294901760
  %3600 = vmatmul.mubr.f32.gmra.mrb[0].mxu0 %v3599
  %v3601 = vpop.f32.mrb[0].mxu0
  %v3602 = vadd.f32 %v3511, %v3601
  %v3603 = vpop.f32.mrb[0].mxu0
  %3604 = vdwg.mxu0
  %3605 = vmatprep.subr.mxu0 0.0
  %v3606 = vand.u32 %v68, 4294901760
  %v3607 = vsub.f32 %v68, %v3606
  %3608 = vmatpush1.msra.mxu0 %v3607
  %3609 = vmatprep.subr.mxu0 0.0
  %v3610 = vand.u32 %v69, 4294901760
  %v3611 = vsub.f32 %v69, %v3610
  %3612 = vmatpush1.msra.mxu0 %v3611
  %3613 = vmatprep.subr.mxu0 0.0
  %v3614 = vand.u32 %v70, 4294901760
  %v3615 = vsub.f32 %v70, %v3614
  %3616 = vmatpush1.msra.mxu0 %v3615
  %3617 = vmatprep.subr.mxu0 0.0
  %v3618 = vand.u32 %v71, 4294901760
  %v3619 = vsub.f32 %v71, %v3618
  %3620 = vmatpush1.msra.mxu0 %v3619
  %3621 = vmatprep.subr.mxu0 0.0
  %3622 = vmatpush1.msra.mxu0 0.0
  %3623 = vmatprep.subr.mxu0 0.0
  %3624 = vmatpush1.msra.mxu0 0.0
  %3625 = vmatprep.subr.mxu0 0.0
  %3626 = vmatpush1.msra.mxu0 0.0
  %3627 = vmatprep.subr.mxu0 0.0
  %3628 = vmatpush1.msra.mxu0 0.0
  %3629 = vmatprep.subr.mxu0 0.0
  %3630 = vmatpush1.msra.mxu0 0.0
  %3631 = vmatprep.subr.mxu0 0.0
  %3632 = vmatpush1.msra.mxu0 0.0
  %3633 = vmatprep.subr.mxu0 0.0
  %3634 = vmatpush1.msra.mxu0 0.0
  %3635 = vmatprep.subr.mxu0 0.0
  %3636 = vmatpush1.msra.mxu0 0.0
  %3637 = vmatprep.subr.mxu0 0.0
  %3638 = vmatpush1.msra.mxu0 0.0
  %3639 = vmatprep.subr.mxu0 0.0
  %3640 = vmatpush1.msra.mxu0 0.0
  %3641 = vmatprep.subr.mxu0 0.0
  %3642 = vmatpush1.msra.mxu0 0.0
  %3643 = vmatprep.subr.mxu0 0.0
  %3644 = vmatpush1.msra.mxu0 0.0
  %3645 = vmatprep.subr.mxu0 0.0
  %3646 = vmatpush1.msra.mxu0 0.0
  %3647 = vmatprep.subr.mxu0 0.0
  %3648 = vmatpush1.msra.mxu0 0.0
  %3649 = vmatprep.subr.mxu0 0.0
  %3650 = vmatpush1.msra.mxu0 0.0
  %3651 = vmatprep.subr.mxu0 0.0
  %3652 = vmatpush1.msra.mxu0 0.0
  %3653 = vmatprep.subr.mxu0 0.0
  %3654 = vmatpush1.msra.mxu0 0.0
  %3655 = vmatprep.subr.mxu0 0.0
  %3656 = vmatpush1.msra.mxu0 0.0
  %3657 = vmatprep.subr.mxu0 0.0
  %3658 = vmatpush1.msra.mxu0 0.0
  %3659 = vmatprep.subr.mxu0 0.0
  %3660 = vmatpush1.msra.mxu0 0.0
  %3661 = vmatprep.subr.mxu0 0.0
  %3662 = vmatpush1.msra.mxu0 0.0
  %3663 = vmatprep.subr.mxu0 0.0
  %3664 = vmatpush1.msra.mxu0 0.0
  %3665 = vmatprep.subr.mxu0 0.0
  %3666 = vmatpush1.msra.mxu0 0.0
  %3667 = vmatprep.subr.mxu0 0.0
  %3668 = vmatpush1.msra.mxu0 0.0
  %3669 = vmatprep.subr.mxu0 0.0
  %3670 = vmatpush1.msra.mxu0 0.0
  %3671 = vmatprep.subr.mxu0 0.0
  %3672 = vmatpush1.msra.mxu0 0.0
  %3673 = vmatprep.subr.mxu0 0.0
  %3674 = vmatpush1.msra.mxu0 0.0
  %3675 = vmatprep.subr.mxu0 0.0
  %3676 = vmatpush1.msra.mxu0 0.0
  %3677 = vmatprep.mubr.f32.mxu0 0.0
  %v3678 = vand.u32 %v3433, 4294901760
  %v3679 = vsub.f32 %v3433, %v3678
  %3680 = vmatmul.mubr.f32.gmra.mrb[0].mxu0 %v3679
  %v3681 = vpop.f32.mrb[0].mxu0
  %v3682 = vadd.f32 %v3602, %v3681
  %v3683 = vpop.f32.mrb[0].mxu0
  %3684 = vdwg.mxu0
  %3685 = vmatprep.subr.mxu0 0.0
  %v3686 = vand.u32 %v68, 4294901760
  %3687 = vmatpush1.msra.mxu0 %v3686
  %3688 = vmatprep.subr.mxu0 0.0
  %v3689 = vand.u32 %v69, 4294901760
  %3690 = vmatpush1.msra.mxu0 %v3689
  %3691 = vmatprep.subr.mxu0 0.0
  %v3692 = vand.u32 %v70, 4294901760
  %3693 = vmatpush1.msra.mxu0 %v3692
  %3694 = vmatprep.subr.mxu0 0.0
  %v3695 = vand.u32 %v71, 4294901760
  %3696 = vmatpush1.msra.mxu0 %v3695
  %3697 = vmatprep.subr.mxu0 0.0
  %3698 = vmatpush1.msra.mxu0 0.0
  %3699 = vmatprep.subr.mxu0 0.0
  %3700 = vmatpush1.msra.mxu0 0.0
  %3701 = vmatprep.subr.mxu0 0.0
  %3702 = vmatpush1.msra.mxu0 0.0
  %3703 = vmatprep.subr.mxu0 0.0
  %3704 = vmatpush1.msra.mxu0 0.0
  %3705 = vmatprep.subr.mxu0 0.0
  %3706 = vmatpush1.msra.mxu0 0.0
  %3707 = vmatprep.subr.mxu0 0.0
  %3708 = vmatpush1.msra.mxu0 0.0
  %3709 = vmatprep.subr.mxu0 0.0
  %3710 = vmatpush1.msra.mxu0 0.0
  %3711 = vmatprep.subr.mxu0 0.0
  %3712 = vmatpush1.msra.mxu0 0.0
  %3713 = vmatprep.subr.mxu0 0.0
  %3714 = vmatpush1.msra.mxu0 0.0
  %3715 = vmatprep.subr.mxu0 0.0
  %3716 = vmatpush1.msra.mxu0 0.0
  %3717 = vmatprep.subr.mxu0 0.0
  %3718 = vmatpush1.msra.mxu0 0.0
  %3719 = vmatprep.subr.mxu0 0.0
  %3720 = vmatpush1.msra.mxu0 0.0
  %3721 = vmatprep.subr.mxu0 0.0
  %3722 = vmatpush1.msra.mxu0 0.0
  %3723 = vmatprep.subr.mxu0 0.0
  %3724 = vmatpush1.msra.mxu0 0.0
  %3725 = vmatprep.subr.mxu0 0.0
  %3726 = vmatpush1.msra.mxu0 0.0
  %3727 = vmatprep.subr.mxu0 0.0
  %3728 = vmatpush1.msra.mxu0 0.0
  %3729 = vmatprep.subr.mxu0 0.0
  %3730 = vmatpush1.msra.mxu0 0.0
  %3731 = vmatprep.subr.mxu0 0.0
  %3732 = vmatpush1.msra.mxu0 0.0
  %3733 = vmatprep.subr.mxu0 0.0
  %3734 = vmatpush1.msra.mxu0 0.0
  %3735 = vmatprep.subr.mxu0 0.0
  %3736 = vmatpush1.msra.mxu0 0.0
  %3737 = vmatprep.subr.mxu0 0.0
  %3738 = vmatpush1.msra.mxu0 0.0
  %3739 = vmatprep.subr.mxu0 0.0
  %3740 = vmatpush1.msra.mxu0 0.0
  %3741 = vmatprep.subr.mxu0 0.0
  %3742 = vmatpush1.msra.mxu0 0.0
  %3743 = vmatprep.subr.mxu0 0.0
  %3744 = vmatpush1.msra.mxu0 0.0
  %3745 = vmatprep.subr.mxu0 0.0
  %3746 = vmatpush1.msra.mxu0 0.0
  %3747 = vmatprep.subr.mxu0 0.0
  %3748 = vmatpush1.msra.mxu0 0.0
  %3749 = vmatprep.subr.mxu0 0.0
  %3750 = vmatpush1.msra.mxu0 0.0
  %3751 = vmatprep.subr.mxu0 0.0
  %3752 = vmatpush1.msra.mxu0 0.0
  %3753 = vmatprep.mubr.f32.mxu0 0.0
  %v3754 = vand.u32 %v3433, 4294901760
  %v3755 = vsub.f32 %v3433, %v3754
  %v3756 = vand.u32 %v3755, 4294901760
  %3757 = vmatmul.mubr.f32.gmra.mrb[0].mxu0 %v3756
  %v3758 = vpop.f32.mrb[0].mxu0
  %v3759 = vadd.f32 %v3682, %v3758
  %v3760 = vpop.f32.mrb[0].mxu0
  %3761 = vdwg.mxu0
  %3762 = vmatprep.subr.mxu0 0.0
  %v3763 = vand.u32 %v68, 4294901760
  %v3764 = vsub.f32 %v68, %v3763
  %v3765 = vand.u32 %v3764, 4294901760
  %3766 = vmatpush1.msra.mxu0 %v3765
  %3767 = vmatprep.subr.mxu0 0.0
  %v3768 = vand.u32 %v69, 4294901760
  %v3769 = vsub.f32 %v69, %v3768
  %v3770 = vand.u32 %v3769, 4294901760
  %3771 = vmatpush1.msra.mxu0 %v3770
  %3772 = vmatprep.subr.mxu0 0.0
  %v3773 = vand.u32 %v70, 4294901760
  %v3774 = vsub.f32 %v70, %v3773
  %v3775 = vand.u32 %v3774, 4294901760
  %3776 = vmatpush1.msra.mxu0 %v3775
  %3777 = vmatprep.subr.mxu0 0.0
  %v3778 = vand.u32 %v71, 4294901760
  %v3779 = vsub.f32 %v71, %v3778
  %v3780 = vand.u32 %v3779, 4294901760
  %3781 = vmatpush1.msra.mxu0 %v3780
  %3782 = vmatprep.subr.mxu0 0.0
  %3783 = vmatpush1.msra.mxu0 0.0
  %3784 = vmatprep.subr.mxu0 0.0
  %3785 = vmatpush1.msra.mxu0 0.0
  %3786 = vmatprep.subr.mxu0 0.0
  %3787 = vmatpush1.msra.mxu0 0.0
  %3788 = vmatprep.subr.mxu0 0.0
  %3789 = vmatpush1.msra.mxu0 0.0
  %3790 = vmatprep.subr.mxu0 0.0
  %3791 = vmatpush1.msra.mxu0 0.0
  %3792 = vmatprep.subr.mxu0 0.0
  %3793 = vmatpush1.msra.mxu0 0.0
  %3794 = vmatprep.subr.mxu0 0.0
  %3795 = vmatpush1.msra.mxu0 0.0
  %3796 = vmatprep.subr.mxu0 0.0
  %3797 = vmatpush1.msra.mxu0 0.0
  %3798 = vmatprep.subr.mxu0 0.0
  %3799 = vmatpush1.msra.mxu0 0.0
  %3800 = vmatprep.subr.mxu0 0.0
  %3801 = vmatpush1.msra.mxu0 0.0
  %3802 = vmatprep.subr.mxu0 0.0
  %3803 = vmatpush1.msra.mxu0 0.0
  %3804 = vmatprep.subr.mxu0 0.0
  %3805 = vmatpush1.msra.mxu0 0.0
  %3806 = vmatprep.subr.mxu0 0.0
  %3807 = vmatpush1.msra.mxu0 0.0
  %3808 = vmatprep.subr.mxu0 0.0
  %3809 = vmatpush1.msra.mxu0 0.0
  %3810 = vmatprep.subr.mxu0 0.0
  %3811 = vmatpush1.msra.mxu0 0.0
  %3812 = vmatprep.subr.mxu0 0.0
  %3813 = vmatpush1.msra.mxu0 0.0
  %3814 = vmatprep.subr.mxu0 0.0
  %3815 = vmatpush1.msra.mxu0 0.0
  %3816 = vmatprep.subr.mxu0 0.0
  %3817 = vmatpush1.msra.mxu0 0.0
  %3818 = vmatprep.subr.mxu0 0.0
  %3819 = vmatpush1.msra.mxu0 0.0
  %3820 = vmatprep.subr.mxu0 0.0
  %3821 = vmatpush1.msra.mxu0 0.0
  %3822 = vmatprep.subr.mxu0 0.0
  %3823 = vmatpush1.msra.mxu0 0.0
  %3824 = vmatprep.subr.mxu0 0.0
  %3825 = vmatpush1.msra.mxu0 0.0
  %3826 = vmatprep.subr.mxu0 0.0
  %3827 = vmatpush1.msra.mxu0 0.0
  %3828 = vmatprep.subr.mxu0 0.0
  %3829 = vmatpush1.msra.mxu0 0.0
  %3830 = vmatprep.subr.mxu0 0.0
  %3831 = vmatpush1.msra.mxu0 0.0
  %3832 = vmatprep.subr.mxu0 0.0
  %3833 = vmatpush1.msra.mxu0 0.0
  %3834 = vmatprep.subr.mxu0 0.0
  %3835 = vmatpush1.msra.mxu0 0.0
  %3836 = vmatprep.subr.mxu0 0.0
  %3837 = vmatpush1.msra.mxu0 0.0
  %3838 = vmatprep.mubr.f32.mxu0 0.0
  %v3839 = vand.u32 %v3433, 4294901760
  %3840 = vmatmul.mubr.f32.gmra.mrb[0].mxu0 %v3839
  %v3841 = vpop.f32.mrb[0].mxu0
  %v3842 = vadd.f32 %v3759, %v3841
  %v3843 = vpop.f32.mrb[0].mxu0
  %3844 = vdwg.mxu0
  %3845 = vmatprep.subr.mxu0 0.0
  %v3846 = vand.u32 %v68, 4294901760
  %3847 = vmatpush1.msra.mxu0 %v3846
  %3848 = vmatprep.subr.mxu0 0.0
  %v3849 = vand.u32 %v69, 4294901760
  %3850 = vmatpush1.msra.mxu0 %v3849
  %3851 = vmatprep.subr.mxu0 0.0
  %v3852 = vand.u32 %v70, 4294901760
  %3853 = vmatpush1.msra.mxu0 %v3852
  %3854 = vmatprep.subr.mxu0 0.0
  %v3855 = vand.u32 %v71, 4294901760
  %3856 = vmatpush1.msra.mxu0 %v3855
  %3857 = vmatprep.subr.mxu0 0.0
  %3858 = vmatpush1.msra.mxu0 0.0
  %3859 = vmatprep.subr.mxu0 0.0
  %3860 = vmatpush1.msra.mxu0 0.0
  %3861 = vmatprep.subr.mxu0 0.0
  %3862 = vmatpush1.msra.mxu0 0.0
  %3863 = vmatprep.subr.mxu0 0.0
  %3864 = vmatpush1.msra.mxu0 0.0
  %3865 = vmatprep.subr.mxu0 0.0
  %3866 = vmatpush1.msra.mxu0 0.0
  %3867 = vmatprep.subr.mxu0 0.0
  %3868 = vmatpush1.msra.mxu0 0.0
  %3869 = vmatprep.subr.mxu0 0.0
  %3870 = vmatpush1.msra.mxu0 0.0
  %3871 = vmatprep.subr.mxu0 0.0
  %3872 = vmatpush1.msra.mxu0 0.0
  %3873 = vmatprep.subr.mxu0 0.0
  %3874 = vmatpush1.msra.mxu0 0.0
  %3875 = vmatprep.subr.mxu0 0.0
  %3876 = vmatpush1.msra.mxu0 0.0
  %3877 = vmatprep.subr.mxu0 0.0
  %3878 = vmatpush1.msra.mxu0 0.0
  %3879 = vmatprep.subr.mxu0 0.0
  %3880 = vmatpush1.msra.mxu0 0.0
  %3881 = vmatprep.subr.mxu0 0.0
  %3882 = vmatpush1.msra.mxu0 0.0
  %3883 = vmatprep.subr.mxu0 0.0
  %3884 = vmatpush1.msra.mxu0 0.0
  %3885 = vmatprep.subr.mxu0 0.0
  %3886 = vmatpush1.msra.mxu0 0.0
  %3887 = vmatprep.subr.mxu0 0.0
  %3888 = vmatpush1.msra.mxu0 0.0
  %3889 = vmatprep.subr.mxu0 0.0
  %3890 = vmatpush1.msra.mxu0 0.0
  %3891 = vmatprep.subr.mxu0 0.0
  %3892 = vmatpush1.msra.mxu0 0.0
  %3893 = vmatprep.subr.mxu0 0.0
  %3894 = vmatpush1.msra.mxu0 0.0
  %3895 = vmatprep.subr.mxu0 0.0
  %3896 = vmatpush1.msra.mxu0 0.0
  %3897 = vmatprep.subr.mxu0 0.0
  %3898 = vmatpush1.msra.mxu0 0.0
  %3899 = vmatprep.subr.mxu0 0.0
  %3900 = vmatpush1.msra.mxu0 0.0
  %3901 = vmatprep.subr.mxu0 0.0
  %3902 = vmatpush1.msra.mxu0 0.0
  %3903 = vmatprep.subr.mxu0 0.0
  %3904 = vmatpush1.msra.mxu0 0.0
  %3905 = vmatprep.subr.mxu0 0.0
  %3906 = vmatpush1.msra.mxu0 0.0
  %3907 = vmatprep.subr.mxu0 0.0
  %3908 = vmatpush1.msra.mxu0 0.0
  %3909 = vmatprep.subr.mxu0 0.0
  %3910 = vmatpush1.msra.mxu0 0.0
  %3911 = vmatprep.subr.mxu0 0.0
  %3912 = vmatpush1.msra.mxu0 0.0
  %3913 = vmatprep.mubr.f32.mxu0 0.0
  %v3914 = vand.u32 %v3433, 4294901760
  %3915 = vmatmul.mubr.f32.gmra.mrb[0].mxu0 %v3914
  %v3916 = vpop.f32.mrb[0].mxu0
  %v3917 = vadd.f32 %v3842, %v3916
  %v3918 = vpop.f32.mrb[0].mxu0
  %3919 = vdwg.mxu0
  %v3920 = vld [vmem:[%s9] sm:$0x1]
  %v3921 = vld [vmem:[%s10] sm:$0x1]
  %v3922 = vld [vmem:[%s11] sm:$0x1]
  %v3923 = vld [vmem:[%s12] sm:$0x3]
  %v3924 = vld [vmem:[%s13] sm:$0xff]
  %v3925 = vld [vmem:[%s13 + $0x8] sm:$0xff]
  %v3926 = vld [vmem:[%s13 + $0x10] sm:$0xff]
  %v3927 = vld [vmem:[%s13 + $0x18] sm:$0xff]
  %v3928 = vld [vmem:[%s14] sm:$0x1]
  %v3929 = vld [vmem:[%s15] sm:$0xff]
  %v3930 = vld [vmem:[%s15 + $0x8] sm:$0xff]
  %v3931 = vld [vmem:[%s15 + $0x10] sm:$0xff]
  %v3932 = vld [vmem:[%s15 + $0x18] sm:$0xff]
  %v3933 = vld [vmem:[#allocation3] sm:$0x1]
  loop: start=0, step=1, limit=8
  $region77: #{tpu_custom_call.1} parent=0 // loop_pre_header
    _
  $region78: #{tpu_custom_call.1} parent=0 // loop_header
    %s3935 = sphi 0, %s3939
    %p3936 = scmp.ge.s32.totalorder %s3935, 8
    %v3940 = vphi %v3917, %v6328
    %v3941 = vphi %v1513, %v5834
    %v3942 = vphi %v1514, %v5828
  $region79: #{tpu_custom_call.1} parent=0 // loop_header_branch
    %3938 = sbr.rel (%p3936) target = $region83
  $region80: #{tpu_custom_call.1} parent=0 // loop_body
    %s3943 = smul.u32 %s3935, 2
    %s3944 = scalar_lea.vmem %s1, %s3943
    %v3945 = vld [vmem:[%s3944] sm:$0x3]
    %vm3946 = vcmask 7168
    %v3948 = vsel %vm3946, %v3945, 0
    %vm3950 = vcmask 1040384
    %v3952 = vsel %vm3950, %v3921, 0
    %3954 = vmatprep.subr.mxu0 0.0
    %v3955 = vand.u32 %v3952, 4294901760
    %3956 = vmatpush1.msra.mxu0 %v3955
    %3957 = vmatprep.subr.mxu0 0.0
    %3958 = vmatpush1.msra.mxu0 0.0
    %3959 = vmatprep.subr.mxu0 0.0
    %3960 = vmatpush1.msra.mxu0 0.0
    %3961 = vmatprep.subr.mxu0 0.0
    %3962 = vmatpush1.msra.mxu0 0.0
    %3963 = vmatprep.subr.mxu0 0.0
    %3964 = vmatpush1.msra.mxu0 0.0
    %3965 = vmatprep.subr.mxu0 0.0
    %3966 = vmatpush1.msra.mxu0 0.0
    %3967 = vmatprep.subr.mxu0 0.0
    %3968 = vmatpush1.msra.mxu0 0.0
    %3969 = vmatprep.subr.mxu0 0.0
    %3970 = vmatpush1.msra.mxu0 0.0
    %3971 = vmatprep.subr.mxu0 0.0
    %3972 = vmatpush1.msra.mxu0 0.0
    %3973 = vmatprep.subr.mxu0 0.0
    %3974 = vmatpush1.msra.mxu0 0.0
    %3975 = vmatprep.subr.mxu0 0.0
    %3976 = vmatpush1.msra.mxu0 0.0
    %3977 = vmatprep.subr.mxu0 0.0
    %3978 = vmatpush1.msra.mxu0 0.0
    %3979 = vmatprep.subr.mxu0 0.0
    %3980 = vmatpush1.msra.mxu0 0.0
    %3981 = vmatprep.subr.mxu0 0.0
    %3982 = vmatpush1.msra.mxu0 0.0
    %3983 = vmatprep.subr.mxu0 0.0
    %3984 = vmatpush1.msra.mxu0 0.0
    %3985 = vmatprep.subr.mxu0 0.0
    %3986 = vmatpush1.msra.mxu0 0.0
    %3987 = vmatprep.subr.mxu0 0.0
    %3988 = vmatpush1.msra.mxu0 0.0
    %3989 = vmatprep.subr.mxu0 0.0
    %3990 = vmatpush1.msra.mxu0 0.0
    %3991 = vmatprep.subr.mxu0 0.0
    %3992 = vmatpush1.msra.mxu0 0.0
    %3993 = vmatprep.subr.mxu0 0.0
    %3994 = vmatpush1.msra.mxu0 0.0
    %3995 = vmatprep.subr.mxu0 0.0
    %3996 = vmatpush1.msra.mxu0 0.0
    %3997 = vmatprep.subr.mxu0 0.0
    %3998 = vmatpush1.msra.mxu0 0.0
    %3999 = vmatprep.subr.mxu0 0.0
    %4000 = vmatpush1.msra.mxu0 0.0
    %4001 = vmatprep.subr.mxu0 0.0
    %4002 = vmatpush1.msra.mxu0 0.0
    %4003 = vmatprep.subr.mxu0 0.0
    %4004 = vmatpush1.msra.mxu0 0.0
    %4005 = vmatprep.subr.mxu0 0.0
    %4006 = vmatpush1.msra.mxu0 0.0
    %4007 = vmatprep.subr.mxu0 0.0
    %4008 = vmatpush1.msra.mxu0 0.0
    %4009 = vmatprep.subr.mxu0 0.0
    %4010 = vmatpush1.msra.mxu0 0.0
    %4011 = vmatprep.subr.mxu0 0.0
    %4012 = vmatpush1.msra.mxu0 0.0
    %4013 = vmatprep.subr.mxu0 0.0
    %4014 = vmatpush1.msra.mxu0 0.0
    %4015 = vmatprep.subr.mxu0 0.0
    %4016 = vmatpush1.msra.mxu0 0.0
    %4017 = vmatprep.subr.mxu0 0.0
    %4018 = vmatpush1.msra.mxu0 0.0
    %4019 = vmatprep.mubr.f32.mxu0 0.0
    %v4020 = vand.u32 %v3948, 4294901760
    %v4021 = vsub.f32 %v3948, %v4020
    %v4022 = vand.u32 %v4021, 4294901760
    %v4023 = vsub.f32 %v4021, %v4022
    %v4024 = vand.u32 %v4023, 4294901760
    %4025 = vmatmul.mubr.f32.gmra.mrb[0].mxu0 %v4024
    %v4026 = vpop.f32.mrb[0].mxu0
    %v4027 = vadd.f32 0.0, %v4026
    %v4028 = vpop.f32.mrb[0].mxu0
    %4029 = vdwg.mxu0
    %4030 = vmatprep.subr.mxu0 0.0
    %v4031 = vand.u32 %v3952, 4294901760
    %v4032 = vsub.f32 %v3952, %v4031
    %v4033 = vand.u32 %v4032, 4294901760
    %v4034 = vsub.f32 %v4032, %v4033
    %v4035 = vand.u32 %v4034, 4294901760
    %4036 = vmatpush1.msra.mxu0 %v4035
    %4037 = vmatprep.subr.mxu0 0.0
    %4038 = vmatpush1.msra.mxu0 0.0
    %4039 = vmatprep.subr.mxu0 0.0
    %4040 = vmatpush1.msra.mxu0 0.0
    %4041 = vmatprep.subr.mxu0 0.0
    %4042 = vmatpush1.msra.mxu0 0.0
    %4043 = vmatprep.subr.mxu0 0.0
    %4044 = vmatpush1.msra.mxu0 0.0
    %4045 = vmatprep.subr.mxu0 0.0
    %4046 = vmatpush1.msra.mxu0 0.0
    %4047 = vmatprep.subr.mxu0 0.0
    %4048 = vmatpush1.msra.mxu0 0.0
    %4049 = vmatprep.subr.mxu0 0.0
    %4050 = vmatpush1.msra.mxu0 0.0
    %4051 = vmatprep.subr.mxu0 0.0
    %4052 = vmatpush1.msra.mxu0 0.0
    %4053 = vmatprep.subr.mxu0 0.0
    %4054 = vmatpush1.msra.mxu0 0.0
    %4055 = vmatprep.subr.mxu0 0.0
    %4056 = vmatpush1.msra.mxu0 0.0
    %4057 = vmatprep.subr.mxu0 0.0
    %4058 = vmatpush1.msra.mxu0 0.0
    %4059 = vmatprep.subr.mxu0 0.0
    %4060 = vmatpush1.msra.mxu0 0.0
    %4061 = vmatprep.subr.mxu0 0.0
    %4062 = vmatpush1.msra.mxu0 0.0
    %4063 = vmatprep.subr.mxu0 0.0
    %4064 = vmatpush1.msra.mxu0 0.0
    %4065 = vmatprep.subr.mxu0 0.0
    %4066 = vmatpush1.msra.mxu0 0.0
    %4067 = vmatprep.subr.mxu0 0.0
    %4068 = vmatpush1.msra.mxu0 0.0
    %4069 = vmatprep.subr.mxu0 0.0
    %4070 = vmatpush1.msra.mxu0 0.0
    %4071 = vmatprep.subr.mxu0 0.0
    %4072 = vmatpush1.msra.mxu0 0.0
    %4073 = vmatprep.subr.mxu0 0.0
    %4074 = vmatpush1.msra.mxu0 0.0
    %4075 = vmatprep.subr.mxu0 0.0
    %4076 = vmatpush1.msra.mxu0 0.0
    %4077 = vmatprep.subr.mxu0 0.0
    %4078 = vmatpush1.msra.mxu0 0.0
    %4079 = vmatprep.subr.mxu0 0.0
    %4080 = vmatpush1.msra.mxu0 0.0
    %4081 = vmatprep.subr.mxu0 0.0
    %4082 = vmatpush1.msra.mxu0 0.0
    %4083 = vmatprep.subr.mxu0 0.0
    %4084 = vmatpush1.msra.mxu0 0.0
    %4085 = vmatprep.subr.mxu0 0.0
    %4086 = vmatpush1.msra.mxu0 0.0
    %4087 = vmatprep.subr.mxu0 0.0
    %4088 = vmatpush1.msra.mxu0 0.0
    %4089 = vmatprep.subr.mxu0 0.0
    %4090 = vmatpush1.msra.mxu0 0.0
    %4091 = vmatprep.subr.mxu0 0.0
    %4092 = vmatpush1.msra.mxu0 0.0
    %4093 = vmatprep.subr.mxu0 0.0
    %4094 = vmatpush1.msra.mxu0 0.0
    %4095 = vmatprep.subr.mxu0 0.0
    %4096 = vmatpush1.msra.mxu0 0.0
    %4097 = vmatprep.subr.mxu0 0.0
    %4098 = vmatpush1.msra.mxu0 0.0
    %4099 = vmatprep.mubr.f32.mxu0 0.0
    %v4100 = vand.u32 %v3948, 4294901760
    %4101 = vmatmul.mubr.f32.gmra.mrb[0].mxu0 %v4100
    %v4102 = vpop.f32.mrb[0].mxu0
    %v4103 = vadd.f32 %v4027, %v4102
    %v4104 = vpop.f32.mrb[0].mxu0
    %4105 = vdwg.mxu0
    %4106 = vmatprep.subr.mxu0 0.0
    %v4107 = vand.u32 %v3952, 4294901760
    %v4108 = vsub.f32 %v3952, %v4107
    %4109 = vmatpush1.msra.mxu0 %v4108
    %4110 = vmatprep.subr.mxu0 0.0
    %4111 = vmatpush1.msra.mxu0 0.0
    %4112 = vmatprep.subr.mxu0 0.0
    %4113 = vmatpush1.msra.mxu0 0.0
    %4114 = vmatprep.subr.mxu0 0.0
    %4115 = vmatpush1.msra.mxu0 0.0
    %4116 = vmatprep.subr.mxu0 0.0
    %4117 = vmatpush1.msra.mxu0 0.0
    %4118 = vmatprep.subr.mxu0 0.0
    %4119 = vmatpush1.msra.mxu0 0.0
    %4120 = vmatprep.subr.mxu0 0.0
    %4121 = vmatpush1.msra.mxu0 0.0
    %4122 = vmatprep.subr.mxu0 0.0
    %4123 = vmatpush1.msra.mxu0 0.0
    %4124 = vmatprep.subr.mxu0 0.0
    %4125 = vmatpush1.msra.mxu0 0.0
    %4126 = vmatprep.subr.mxu0 0.0
    %4127 = vmatpush1.msra.mxu0 0.0
    %4128 = vmatprep.subr.mxu0 0.0
    %4129 = vmatpush1.msra.mxu0 0.0
    %4130 = vmatprep.subr.mxu0 0.0
    %4131 = vmatpush1.msra.mxu0 0.0
    %4132 = vmatprep.subr.mxu0 0.0
    %4133 = vmatpush1.msra.mxu0 0.0
    %4134 = vmatprep.subr.mxu0 0.0
    %4135 = vmatpush1.msra.mxu0 0.0
    %4136 = vmatprep.subr.mxu0 0.0
    %4137 = vmatpush1.msra.mxu0 0.0
    %4138 = vmatprep.subr.mxu0 0.0
    %4139 = vmatpush1.msra.mxu0 0.0
    %4140 = vmatprep.subr.mxu0 0.0
    %4141 = vmatpush1.msra.mxu0 0.0
    %4142 = vmatprep.subr.mxu0 0.0
    %4143 = vmatpush1.msra.mxu0 0.0
    %4144 = vmatprep.subr.mxu0 0.0
    %4145 = vmatpush1.msra.mxu0 0.0
    %4146 = vmatprep.subr.mxu0 0.0
    %4147 = vmatpush1.msra.mxu0 0.0
    %4148 = vmatprep.subr.mxu0 0.0
    %4149 = vmatpush1.msra.mxu0 0.0
    %4150 = vmatprep.subr.mxu0 0.0
    %4151 = vmatpush1.msra.mxu0 0.0
    %4152 = vmatprep.subr.mxu0 0.0
    %4153 = vmatpush1.msra.mxu0 0.0
    %4154 = vmatprep.subr.mxu0 0.0
    %4155 = vmatpush1.msra.mxu0 0.0
    %4156 = vmatprep.subr.mxu0 0.0
    %4157 = vmatpush1.msra.mxu0 0.0
    %4158 = vmatprep.subr.mxu0 0.0
    %4159 = vmatpush1.msra.mxu0 0.0
    %4160 = vmatprep.subr.mxu0 0.0
    %4161 = vmatpush1.msra.mxu0 0.0
    %4162 = vmatprep.subr.mxu0 0.0
    %4163 = vmatpush1.msra.mxu0 0.0
    %4164 = vmatprep.subr.mxu0 0.0
    %4165 = vmatpush1.msra.mxu0 0.0
    %4166 = vmatprep.subr.mxu0 0.0
    %4167 = vmatpush1.msra.mxu0 0.0
    %4168 = vmatprep.subr.mxu0 0.0
    %4169 = vmatpush1.msra.mxu0 0.0
    %4170 = vmatprep.subr.mxu0 0.0
    %4171 = vmatpush1.msra.mxu0 0.0
    %4172 = vmatprep.mubr.f32.mxu0 0.0
    %v4173 = vand.u32 %v3948, 4294901760
    %v4174 = vsub.f32 %v3948, %v4173
    %4175 = vmatmul.mubr.f32.gmra.mrb[0].mxu0 %v4174
    %v4176 = vpop.f32.mrb[0].mxu0
    %v4177 = vadd.f32 %v4103, %v4176
    %v4178 = vpop.f32.mrb[0].mxu0
    %4179 = vdwg.mxu0
    %4180 = vmatprep.subr.mxu0 0.0
    %v4181 = vand.u32 %v3952, 4294901760
    %4182 = vmatpush1.msra.mxu0 %v4181
    %4183 = vmatprep.subr.mxu0 0.0
    %4184 = vmatpush1.msra.mxu0 0.0
    %4185 = vmatprep.subr.mxu0 0.0
    %4186 = vmatpush1.msra.mxu0 0.0
    %4187 = vmatprep.subr.mxu0 0.0
    %4188 = vmatpush1.msra.mxu0 0.0
    %4189 = vmatprep.subr.mxu0 0.0
    %4190 = vmatpush1.msra.mxu0 0.0
    %4191 = vmatprep.subr.mxu0 0.0
    %4192 = vmatpush1.msra.mxu0 0.0
    %4193 = vmatprep.subr.mxu0 0.0
    %4194 = vmatpush1.msra.mxu0 0.0
    %4195 = vmatprep.subr.mxu0 0.0
    %4196 = vmatpush1.msra.mxu0 0.0
    %4197 = vmatprep.subr.mxu0 0.0
    %4198 = vmatpush1.msra.mxu0 0.0
    %4199 = vmatprep.subr.mxu0 0.0
    %4200 = vmatpush1.msra.mxu0 0.0
    %4201 = vmatprep.subr.mxu0 0.0
    %4202 = vmatpush1.msra.mxu0 0.0
    %4203 = vmatprep.subr.mxu0 0.0
    %4204 = vmatpush1.msra.mxu0 0.0
    %4205 = vmatprep.subr.mxu0 0.0
    %4206 = vmatpush1.msra.mxu0 0.0
    %4207 = vmatprep.subr.mxu0 0.0
    %4208 = vmatpush1.msra.mxu0 0.0
    %4209 = vmatprep.subr.mxu0 0.0
    %4210 = vmatpush1.msra.mxu0 0.0
    %4211 = vmatprep.subr.mxu0 0.0
    %4212 = vmatpush1.msra.mxu0 0.0
    %4213 = vmatprep.subr.mxu0 0.0
    %4214 = vmatpush1.msra.mxu0 0.0
    %4215 = vmatprep.subr.mxu0 0.0
    %4216 = vmatpush1.msra.mxu0 0.0
    %4217 = vmatprep.subr.mxu0 0.0
    %4218 = vmatpush1.msra.mxu0 0.0
    %4219 = vmatprep.subr.mxu0 0.0
    %4220 = vmatpush1.msra.mxu0 0.0
    %4221 = vmatprep.subr.mxu0 0.0
    %4222 = vmatpush1.msra.mxu0 0.0
    %4223 = vmatprep.subr.mxu0 0.0
    %4224 = vmatpush1.msra.mxu0 0.0
    %4225 = vmatprep.subr.mxu0 0.0
    %4226 = vmatpush1.msra.mxu0 0.0
    %4227 = vmatprep.subr.mxu0 0.0
    %4228 = vmatpush1.msra.mxu0 0.0
    %4229 = vmatprep.subr.mxu0 0.0
    %4230 = vmatpush1.msra.mxu0 0.0
    %4231 = vmatprep.subr.mxu0 0.0
    %4232 = vmatpush1.msra.mxu0 0.0
    %4233 = vmatprep.subr.mxu0 0.0
    %4234 = vmatpush1.msra.mxu0 0.0
    %4235 = vmatprep.subr.mxu0 0.0
    %4236 = vmatpush1.msra.mxu0 0.0
    %4237 = vmatprep.subr.mxu0 0.0
    %4238 = vmatpush1.msra.mxu0 0.0
    %4239 = vmatprep.subr.mxu0 0.0
    %4240 = vmatpush1.msra.mxu0 0.0
    %4241 = vmatprep.subr.mxu0 0.0
    %4242 = vmatpush1.msra.mxu0 0.0
    %4243 = vmatprep.subr.mxu0 0.0
    %4244 = vmatpush1.msra.mxu0 0.0
    %4245 = vmatprep.mubr.f32.mxu0 0.0
    %v4246 = vand.u32 %v3948, 4294901760
    %v4247 = vsub.f32 %v3948, %v4246
    %v4248 = vand.u32 %v4247, 4294901760
    %4249 = vmatmul.mubr.f32.gmra.mrb[0].mxu0 %v4248
    %v4250 = vpop.f32.mrb[0].mxu0
    %v4251 = vadd.f32 %v4177, %v4250
    %v4252 = vpop.f32.mrb[0].mxu0
    %4253 = vdwg.mxu0
    %4254 = vmatprep.subr.mxu0 0.0
    %v4255 = vand.u32 %v3952, 4294901760
    %v4256 = vsub.f32 %v3952, %v4255
    %v4257 = vand.u32 %v4256, 4294901760
    %4258 = vmatpush1.msra.mxu0 %v4257
    %4259 = vmatprep.subr.mxu0 0.0
    %4260 = vmatpush1.msra.mxu0 0.0
    %4261 = vmatprep.subr.mxu0 0.0
    %4262 = vmatpush1.msra.mxu0 0.0
    %4263 = vmatprep.subr.mxu0 0.0
    %4264 = vmatpush1.msra.mxu0 0.0
    %4265 = vmatprep.subr.mxu0 0.0
    %4266 = vmatpush1.msra.mxu0 0.0
    %4267 = vmatprep.subr.mxu0 0.0
    %4268 = vmatpush1.msra.mxu0 0.0
    %4269 = vmatprep.subr.mxu0 0.0
    %4270 = vmatpush1.msra.mxu0 0.0
    %4271 = vmatprep.subr.mxu0 0.0
    %4272 = vmatpush1.msra.mxu0 0.0
    %4273 = vmatprep.subr.mxu0 0.0
    %4274 = vmatpush1.msra.mxu0 0.0
    %4275 = vmatprep.subr.mxu0 0.0
    %4276 = vmatpush1.msra.mxu0 0.0
    %4277 = vmatprep.subr.mxu0 0.0
    %4278 = vmatpush1.msra.mxu0 0.0
    %4279 = vmatprep.subr.mxu0 0.0
    %4280 = vmatpush1.msra.mxu0 0.0
    %4281 = vmatprep.subr.mxu0 0.0
    %4282 = vmatpush1.msra.mxu0 0.0
    %4283 = vmatprep.subr.mxu0 0.0
    %4284 = vmatpush1.msra.mxu0 0.0
    %4285 = vmatprep.subr.mxu0 0.0
    %4286 = vmatpush1.msra.mxu0 0.0
    %4287 = vmatprep.subr.mxu0 0.0
    %4288 = vmatpush1.msra.mxu0 0.0
    %4289 = vmatprep.subr.mxu0 0.0
    %4290 = vmatpush1.msra.mxu0 0.0
    %4291 = vmatprep.subr.mxu0 0.0
    %4292 = vmatpush1.msra.mxu0 0.0
    %4293 = vmatprep.subr.mxu0 0.0
    %4294 = vmatpush1.msra.mxu0 0.0
    %4295 = vmatprep.subr.mxu0 0.0
    %4296 = vmatpush1.msra.mxu0 0.0
    %4297 = vmatprep.subr.mxu0 0.0
    %4298 = vmatpush1.msra.mxu0 0.0
    %4299 = vmatprep.subr.mxu0 0.0
    %4300 = vmatpush1.msra.mxu0 0.0
    %4301 = vmatprep.subr.mxu0 0.0
    %4302 = vmatpush1.msra.mxu0 0.0
    %4303 = vmatprep.subr.mxu0 0.0
    %4304 = vmatpush1.msra.mxu0 0.0
    %4305 = vmatprep.subr.mxu0 0.0
    %4306 = vmatpush1.msra.mxu0 0.0
    %4307 = vmatprep.subr.mxu0 0.0
    %4308 = vmatpush1.msra.mxu0 0.0
    %4309 = vmatprep.subr.mxu0 0.0
    %4310 = vmatpush1.msra.mxu0 0.0
    %4311 = vmatprep.subr.mxu0 0.0
    %4312 = vmatpush1.msra.mxu0 0.0
    %4313 = vmatprep.subr.mxu0 0.0
    %4314 = vmatpush1.msra.mxu0 0.0
    %4315 = vmatprep.subr.mxu0 0.0
    %4316 = vmatpush1.msra.mxu0 0.0
    %4317 = vmatprep.subr.mxu0 0.0
    %4318 = vmatpush1.msra.mxu0 0.0
    %4319 = vmatprep.subr.mxu0 0.0
    %4320 = vmatpush1.msra.mxu0 0.0
    %4321 = vmatprep.mubr.f32.mxu0 0.0
    %v4322 = vand.u32 %v3948, 4294901760
    %4323 = vmatmul.mubr.f32.gmra.mrb[0].mxu0 %v4322
    %v4324 = vpop.f32.mrb[0].mxu0
    %v4325 = vadd.f32 %v4251, %v4324
    %v4326 = vpop.f32.mrb[0].mxu0
    %4327 = vdwg.mxu0
    %4328 = vmatprep.subr.mxu0 0.0
    %v4329 = vand.u32 %v3952, 4294901760
    %4330 = vmatpush1.msra.mxu0 %v4329
    %4331 = vmatprep.subr.mxu0 0.0
    %4332 = vmatpush1.msra.mxu0 0.0
    %4333 = vmatprep.subr.mxu0 0.0
    %4334 = vmatpush1.msra.mxu0 0.0
    %4335 = vmatprep.subr.mxu0 0.0
    %4336 = vmatpush1.msra.mxu0 0.0
    %4337 = vmatprep.subr.mxu0 0.0
    %4338 = vmatpush1.msra.mxu0 0.0
    %4339 = vmatprep.subr.mxu0 0.0
    %4340 = vmatpush1.msra.mxu0 0.0
    %4341 = vmatprep.subr.mxu0 0.0
    %4342 = vmatpush1.msra.mxu0 0.0
    %4343 = vmatprep.subr.mxu0 0.0
    %4344 = vmatpush1.msra.mxu0 0.0
    %4345 = vmatprep.subr.mxu0 0.0
    %4346 = vmatpush1.msra.mxu0 0.0
    %4347 = vmatprep.subr.mxu0 0.0
    %4348 = vmatpush1.msra.mxu0 0.0
    %4349 = vmatprep.subr.mxu0 0.0
    %4350 = vmatpush1.msra.mxu0 0.0
    %4351 = vmatprep.subr.mxu0 0.0
    %4352 = vmatpush1.msra.mxu0 0.0
    %4353 = vmatprep.subr.mxu0 0.0
    %4354 = vmatpush1.msra.mxu0 0.0
    %4355 = vmatprep.subr.mxu0 0.0
    %4356 = vmatpush1.msra.mxu0 0.0
    %4357 = vmatprep.subr.mxu0 0.0
    %4358 = vmatpush1.msra.mxu0 0.0
    %4359 = vmatprep.subr.mxu0 0.0
    %4360 = vmatpush1.msra.mxu0 0.0
    %4361 = vmatprep.subr.mxu0 0.0
    %4362 = vmatpush1.msra.mxu0 0.0
    %4363 = vmatprep.subr.mxu0 0.0
    %4364 = vmatpush1.msra.mxu0 0.0
    %4365 = vmatprep.subr.mxu0 0.0
    %4366 = vmatpush1.msra.mxu0 0.0
    %4367 = vmatprep.subr.mxu0 0.0
    %4368 = vmatpush1.msra.mxu0 0.0
    %4369 = vmatprep.subr.mxu0 0.0
    %4370 = vmatpush1.msra.mxu0 0.0
    %4371 = vmatprep.subr.mxu0 0.0
    %4372 = vmatpush1.msra.mxu0 0.0
    %4373 = vmatprep.subr.mxu0 0.0
    %4374 = vmatpush1.msra.mxu0 0.0
    %4375 = vmatprep.subr.mxu0 0.0
    %4376 = vmatpush1.msra.mxu0 0.0
    %4377 = vmatprep.subr.mxu0 0.0
    %4378 = vmatpush1.msra.mxu0 0.0
    %4379 = vmatprep.subr.mxu0 0.0
    %4380 = vmatpush1.msra.mxu0 0.0
    %4381 = vmatprep.subr.mxu0 0.0
    %4382 = vmatpush1.msra.mxu0 0.0
    %4383 = vmatprep.subr.mxu0 0.0
    %4384 = vmatpush1.msra.mxu0 0.0
    %4385 = vmatprep.subr.mxu0 0.0
    %4386 = vmatpush1.msra.mxu0 0.0
    %4387 = vmatprep.subr.mxu0 0.0
    %4388 = vmatpush1.msra.mxu0 0.0
    %4389 = vmatprep.subr.mxu0 0.0
    %4390 = vmatpush1.msra.mxu0 0.0
    %4391 = vmatprep.subr.mxu0 0.0
    %4392 = vmatpush1.msra.mxu0 0.0
    %4393 = vmatprep.mubr.f32.mxu0 0.0
    %v4394 = vand.u32 %v3948, 4294901760
    %4395 = vmatmul.mubr.f32.gmra.mrb[0].mxu0 %v4394
    %v4396 = vpop.f32.mrb[0].mxu0
    %v4397 = vadd.f32 %v4325, %v4396
    %v4398 = vpop.f32.mrb[0].mxu0
    %4399 = vdwg.mxu0
    %v4401 = vsel %vm3946, %v3940, 0
    %v4404 = vsel %vm3950, %v3920, 0
    %4406 = vmatprep.subr.mxu0 0.0
    %v4407 = vand.u32 %v4404, 4294901760
    %4408 = vmatpush1.msra.mxu0 %v4407
    %4409 = vmatprep.subr.mxu0 0.0
    %4410 = vmatpush1.msra.mxu0 0.0
    %4411 = vmatprep.subr.mxu0 0.0
    %4412 = vmatpush1.msra.mxu0 0.0
    %4413 = vmatprep.subr.mxu0 0.0
    %4414 = vmatpush1.msra.mxu0 0.0
    %4415 = vmatprep.subr.mxu0 0.0
    %4416 = vmatpush1.msra.mxu0 0.0
    %4417 = vmatprep.subr.mxu0 0.0
    %4418 = vmatpush1.msra.mxu0 0.0
    %4419 = vmatprep.subr.mxu0 0.0
    %4420 = vmatpush1.msra.mxu0 0.0
    %4421 = vmatprep.subr.mxu0 0.0
    %4422 = vmatpush1.msra.mxu0 0.0
    %4423 = vmatprep.subr.mxu0 0.0
    %4424 = vmatpush1.msra.mxu0 0.0
    %4425 = vmatprep.subr.mxu0 0.0
    %4426 = vmatpush1.msra.mxu0 0.0
    %4427 = vmatprep.subr.mxu0 0.0
    %4428 = vmatpush1.msra.mxu0 0.0
    %4429 = vmatprep.subr.mxu0 0.0
    %4430 = vmatpush1.msra.mxu0 0.0
    %4431 = vmatprep.subr.mxu0 0.0
    %4432 = vmatpush1.msra.mxu0 0.0
    %4433 = vmatprep.subr.mxu0 0.0
    %4434 = vmatpush1.msra.mxu0 0.0
    %4435 = vmatprep.subr.mxu0 0.0
    %4436 = vmatpush1.msra.mxu0 0.0
    %4437 = vmatprep.subr.mxu0 0.0
    %4438 = vmatpush1.msra.mxu0 0.0
    %4439 = vmatprep.subr.mxu0 0.0
    %4440 = vmatpush1.msra.mxu0 0.0
    %4441 = vmatprep.subr.mxu0 0.0
    %4442 = vmatpush1.msra.mxu0 0.0
    %4443 = vmatprep.subr.mxu0 0.0
    %4444 = vmatpush1.msra.mxu0 0.0
    %4445 = vmatprep.subr.mxu0 0.0
    %4446 = vmatpush1.msra.mxu0 0.0
    %4447 = vmatprep.subr.mxu0 0.0
    %4448 = vmatpush1.msra.mxu0 0.0
    %4449 = vmatprep.subr.mxu0 0.0
    %4450 = vmatpush1.msra.mxu0 0.0
    %4451 = vmatprep.subr.mxu0 0.0
    %4452 = vmatpush1.msra.mxu0 0.0
    %4453 = vmatprep.subr.mxu0 0.0
    %4454 = vmatpush1.msra.mxu0 0.0
    %4455 = vmatprep.subr.mxu0 0.0
    %4456 = vmatpush1.msra.mxu0 0.0
    %4457 = vmatprep.subr.mxu0 0.0
    %4458 = vmatpush1.msra.mxu0 0.0
    %4459 = vmatprep.subr.mxu0 0.0
    %4460 = vmatpush1.msra.mxu0 0.0
    %4461 = vmatprep.subr.mxu0 0.0
    %4462 = vmatpush1.msra.mxu0 0.0
    %4463 = vmatprep.subr.mxu0 0.0
    %4464 = vmatpush1.msra.mxu0 0.0
    %4465 = vmatprep.subr.mxu0 0.0
    %4466 = vmatpush1.msra.mxu0 0.0
    %4467 = vmatprep.subr.mxu0 0.0
    %4468 = vmatpush1.msra.mxu0 0.0
    %4469 = vmatprep.subr.mxu0 0.0
    %4470 = vmatpush1.msra.mxu0 0.0
    %4471 = vmatprep.mubr.f32.mxu0 0.0
    %v4472 = vand.u32 %v4401, 4294901760
    %v4473 = vsub.f32 %v4401, %v4472
    %v4474 = vand.u32 %v4473, 4294901760
    %v4475 = vsub.f32 %v4473, %v4474
    %v4476 = vand.u32 %v4475, 4294901760
    %4477 = vmatmul.mubr.f32.gmra.mrb[0].mxu0 %v4476
    %v4478 = vpop.f32.mrb[0].mxu0
    %v4479 = vadd.f32 %v4397, %v4478
    %v4480 = vpop.f32.mrb[0].mxu0
    %4481 = vdwg.mxu0
    %4482 = vmatprep.subr.mxu0 0.0
    %v4483 = vand.u32 %v4404, 4294901760
    %v4484 = vsub.f32 %v4404, %v4483
    %v4485 = vand.u32 %v4484, 4294901760
    %v4486 = vsub.f32 %v4484, %v4485
    %v4487 = vand.u32 %v4486, 4294901760
    %4488 = vmatpush1.msra.mxu0 %v4487
    %4489 = vmatprep.subr.mxu0 0.0
    %4490 = vmatpush1.msra.mxu0 0.0
    %4491 = vmatprep.subr.mxu0 0.0
    %4492 = vmatpush1.msra.mxu0 0.0
    %4493 = vmatprep.subr.mxu0 0.0
    %4494 = vmatpush1.msra.mxu0 0.0
    %4495 = vmatprep.subr.mxu0 0.0
    %4496 = vmatpush1.msra.mxu0 0.0
    %4497 = vmatprep.subr.mxu0 0.0
    %4498 = vmatpush1.msra.mxu0 0.0
    %4499 = vmatprep.subr.mxu0 0.0
    %4500 = vmatpush1.msra.mxu0 0.0
    %4501 = vmatprep.subr.mxu0 0.0
    %4502 = vmatpush1.msra.mxu0 0.0
    %4503 = vmatprep.subr.mxu0 0.0
    %4504 = vmatpush1.msra.mxu0 0.0
    %4505 = vmatprep.subr.mxu0 0.0
    %4506 = vmatpush1.msra.mxu0 0.0
    %4507 = vmatprep.subr.mxu0 0.0
    %4508 = vmatpush1.msra.mxu0 0.0
    %4509 = vmatprep.subr.mxu0 0.0
    %4510 = vmatpush1.msra.mxu0 0.0
    %4511 = vmatprep.subr.mxu0 0.0
    %4512 = vmatpush1.msra.mxu0 0.0
    %4513 = vmatprep.subr.mxu0 0.0
    %4514 = vmatpush1.msra.mxu0 0.0
    %4515 = vmatprep.subr.mxu0 0.0
    %4516 = vmatpush1.msra.mxu0 0.0
    %4517 = vmatprep.subr.mxu0 0.0
    %4518 = vmatpush1.msra.mxu0 0.0
    %4519 = vmatprep.subr.mxu0 0.0
    %4520 = vmatpush1.msra.mxu0 0.0
    %4521 = vmatprep.subr.mxu0 0.0
    %4522 = vmatpush1.msra.mxu0 0.0
    %4523 = vmatprep.subr.mxu0 0.0
    %4524 = vmatpush1.msra.mxu0 0.0
    %4525 = vmatprep.subr.mxu0 0.0
    %4526 = vmatpush1.msra.mxu0 0.0
    %4527 = vmatprep.subr.mxu0 0.0
    %4528 = vmatpush1.msra.mxu0 0.0
    %4529 = vmatprep.subr.mxu0 0.0
    %4530 = vmatpush1.msra.mxu0 0.0
    %4531 = vmatprep.subr.mxu0 0.0
    %4532 = vmatpush1.msra.mxu0 0.0
    %4533 = vmatprep.subr.mxu0 0.0
    %4534 = vmatpush1.msra.mxu0 0.0
    %4535 = vmatprep.subr.mxu0 0.0
    %4536 = vmatpush1.msra.mxu0 0.0
    %4537 = vmatprep.subr.mxu0 0.0
    %4538 = vmatpush1.msra.mxu0 0.0
    %4539 = vmatprep.subr.mxu0 0.0
    %4540 = vmatpush1.msra.mxu0 0.0
    %4541 = vmatprep.subr.mxu0 0.0
    %4542 = vmatpush1.msra.mxu0 0.0
    %4543 = vmatprep.subr.mxu0 0.0
    %4544 = vmatpush1.msra.mxu0 0.0
    %4545 = vmatprep.subr.mxu0 0.0
    %4546 = vmatpush1.msra.mxu0 0.0
    %4547 = vmatprep.subr.mxu0 0.0
    %4548 = vmatpush1.msra.mxu0 0.0
    %4549 = vmatprep.subr.mxu0 0.0
    %4550 = vmatpush1.msra.mxu0 0.0
    %4551 = vmatprep.mubr.f32.mxu0 0.0
    %v4552 = vand.u32 %v4401, 4294901760
    %4553 = vmatmul.mubr.f32.gmra.mrb[0].mxu0 %v4552
    %v4554 = vpop.f32.mrb[0].mxu0
    %v4555 = vadd.f32 %v4479, %v4554
    %v4556 = vpop.f32.mrb[0].mxu0
    %4557 = vdwg.mxu0
    %4558 = vmatprep.subr.mxu0 0.0
    %v4559 = vand.u32 %v4404, 4294901760
    %v4560 = vsub.f32 %v4404, %v4559
    %4561 = vmatpush1.msra.mxu0 %v4560
    %4562 = vmatprep.subr.mxu0 0.0
    %4563 = vmatpush1.msra.mxu0 0.0
    %4564 = vmatprep.subr.mxu0 0.0
    %4565 = vmatpush1.msra.mxu0 0.0
    %4566 = vmatprep.subr.mxu0 0.0
    %4567 = vmatpush1.msra.mxu0 0.0
    %4568 = vmatprep.subr.mxu0 0.0
    %4569 = vmatpush1.msra.mxu0 0.0
    %4570 = vmatprep.subr.mxu0 0.0
    %4571 = vmatpush1.msra.mxu0 0.0
    %4572 = vmatprep.subr.mxu0 0.0
    %4573 = vmatpush1.msra.mxu0 0.0
    %4574 = vmatprep.subr.mxu0 0.0
    %4575 = vmatpush1.msra.mxu0 0.0
    %4576 = vmatprep.subr.mxu0 0.0
    %4577 = vmatpush1.msra.mxu0 0.0
    %4578 = vmatprep.subr.mxu0 0.0
    %4579 = vmatpush1.msra.mxu0 0.0
    %4580 = vmatprep.subr.mxu0 0.0
    %4581 = vmatpush1.msra.mxu0 0.0
    %4582 = vmatprep.subr.mxu0 0.0
    %4583 = vmatpush1.msra.mxu0 0.0
    %4584 = vmatprep.subr.mxu0 0.0
    %4585 = vmatpush1.msra.mxu0 0.0
    %4586 = vmatprep.subr.mxu0 0.0
    %4587 = vmatpush1.msra.mxu0 0.0
    %4588 = vmatprep.subr.mxu0 0.0
    %4589 = vmatpush1.msra.mxu0 0.0
    %4590 = vmatprep.subr.mxu0 0.0
    %4591 = vmatpush1.msra.mxu0 0.0
    %4592 = vmatprep.subr.mxu0 0.0
    %4593 = vmatpush1.msra.mxu0 0.0
    %4594 = vmatprep.subr.mxu0 0.0
    %4595 = vmatpush1.msra.mxu0 0.0
    %4596 = vmatprep.subr.mxu0 0.0
    %4597 = vmatpush1.msra.mxu0 0.0
    %4598 = vmatprep.subr.mxu0 0.0
    %4599 = vmatpush1.msra.mxu0 0.0
    %4600 = vmatprep.subr.mxu0 0.0
    %4601 = vmatpush1.msra.mxu0 0.0
    %4602 = vmatprep.subr.mxu0 0.0
    %4603 = vmatpush1.msra.mxu0 0.0
    %4604 = vmatprep.subr.mxu0 0.0
    %4605 = vmatpush1.msra.mxu0 0.0
    %4606 = vmatprep.subr.mxu0 0.0
    %4607 = vmatpush1.msra.mxu0 0.0
    %4608 = vmatprep.subr.mxu0 0.0
    %4609 = vmatpush1.msra.mxu0 0.0
    %4610 = vmatprep.subr.mxu0 0.0
    %4611 = vmatpush1.msra.mxu0 0.0
    %4612 = vmatprep.subr.mxu0 0.0
    %4613 = vmatpush1.msra.mxu0 0.0
    %4614 = vmatprep.subr.mxu0 0.0
    %4615 = vmatpush1.msra.mxu0 0.0
    %4616 = vmatprep.subr.mxu0 0.0
    %4617 = vmatpush1.msra.mxu0 0.0
    %4618 = vmatprep.subr.mxu0 0.0
    %4619 = vmatpush1.msra.mxu0 0.0
    %4620 = vmatprep.subr.mxu0 0.0
    %4621 = vmatpush1.msra.mxu0 0.0
    %4622 = vmatprep.subr.mxu0 0.0
    %4623 = vmatpush1.msra.mxu0 0.0
    %4624 = vmatprep.mubr.f32.mxu0 0.0
    %v4625 = vand.u32 %v4401, 4294901760
    %v4626 = vsub.f32 %v4401, %v4625
    %4627 = vmatmul.mubr.f32.gmra.mrb[0].mxu0 %v4626
    %v4628 = vpop.f32.mrb[0].mxu0
    %v4629 = vadd.f32 %v4555, %v4628
    %v4630 = vpop.f32.mrb[0].mxu0
    %4631 = vdwg.mxu0
    %4632 = vmatprep.subr.mxu0 0.0
    %v4633 = vand.u32 %v4404, 4294901760
    %4634 = vmatpush1.msra.mxu0 %v4633
    %4635 = vmatprep.subr.mxu0 0.0
    %4636 = vmatpush1.msra.mxu0 0.0
    %4637 = vmatprep.subr.mxu0 0.0
    %4638 = vmatpush1.msra.mxu0 0.0
    %4639 = vmatprep.subr.mxu0 0.0
    %4640 = vmatpush1.msra.mxu0 0.0
    %4641 = vmatprep.subr.mxu0 0.0
    %4642 = vmatpush1.msra.mxu0 0.0
    %4643 = vmatprep.subr.mxu0 0.0
    %4644 = vmatpush1.msra.mxu0 0.0
    %4645 = vmatprep.subr.mxu0 0.0
    %4646 = vmatpush1.msra.mxu0 0.0
    %4647 = vmatprep.subr.mxu0 0.0
    %4648 = vmatpush1.msra.mxu0 0.0
    %4649 = vmatprep.subr.mxu0 0.0
    %4650 = vmatpush1.msra.mxu0 0.0
    %4651 = vmatprep.subr.mxu0 0.0
    %4652 = vmatpush1.msra.mxu0 0.0
    %4653 = vmatprep.subr.mxu0 0.0
    %4654 = vmatpush1.msra.mxu0 0.0
    %4655 = vmatprep.subr.mxu0 0.0
    %4656 = vmatpush1.msra.mxu0 0.0
    %4657 = vmatprep.subr.mxu0 0.0
    %4658 = vmatpush1.msra.mxu0 0.0
    %4659 = vmatprep.subr.mxu0 0.0
    %4660 = vmatpush1.msra.mxu0 0.0
    %4661 = vmatprep.subr.mxu0 0.0
    %4662 = vmatpush1.msra.mxu0 0.0
    %4663 = vmatprep.subr.mxu0 0.0
    %4664 = vmatpush1.msra.mxu0 0.0
    %4665 = vmatprep.subr.mxu0 0.0
    %4666 = vmatpush1.msra.mxu0 0.0
    %4667 = vmatprep.subr.mxu0 0.0
    %4668 = vmatpush1.msra.mxu0 0.0
    %4669 = vmatprep.subr.mxu0 0.0
    %4670 = vmatpush1.msra.mxu0 0.0
    %4671 = vmatprep.subr.mxu0 0.0
    %4672 = vmatpush1.msra.mxu0 0.0
    %4673 = vmatprep.subr.mxu0 0.0
    %4674 = vmatpush1.msra.mxu0 0.0
    %4675 = vmatprep.subr.mxu0 0.0
    %4676 = vmatpush1.msra.mxu0 0.0
    %4677 = vmatprep.subr.mxu0 0.0
    %4678 = vmatpush1.msra.mxu0 0.0
    %4679 = vmatprep.subr.mxu0 0.0
    %4680 = vmatpush1.msra.mxu0 0.0
    %4681 = vmatprep.subr.mxu0 0.0
    %4682 = vmatpush1.msra.mxu0 0.0
    %4683 = vmatprep.subr.mxu0 0.0
    %4684 = vmatpush1.msra.mxu0 0.0
    %4685 = vmatprep.subr.mxu0 0.0
    %4686 = vmatpush1.msra.mxu0 0.0
    %4687 = vmatprep.subr.mxu0 0.0
    %4688 = vmatpush1.msra.mxu0 0.0
    %4689 = vmatprep.subr.mxu0 0.0
    %4690 = vmatpush1.msra.mxu0 0.0
    %4691 = vmatprep.subr.mxu0 0.0
    %4692 = vmatpush1.msra.mxu0 0.0
    %4693 = vmatprep.subr.mxu0 0.0
    %4694 = vmatpush1.msra.mxu0 0.0
    %4695 = vmatprep.subr.mxu0 0.0
    %4696 = vmatpush1.msra.mxu0 0.0
    %4697 = vmatprep.mubr.f32.mxu0 0.0
    %v4698 = vand.u32 %v4401, 4294901760
    %v4699 = vsub.f32 %v4401, %v4698
    %v4700 = vand.u32 %v4699, 4294901760
    %4701 = vmatmul.mubr.f32.gmra.mrb[0].mxu0 %v4700
    %v4702 = vpop.f32.mrb[0].mxu0
    %v4703 = vadd.f32 %v4629, %v4702
    %v4704 = vpop.f32.mrb[0].mxu0
    %4705 = vdwg.mxu0
    %4706 = vmatprep.subr.mxu0 0.0
    %v4707 = vand.u32 %v4404, 4294901760
    %v4708 = vsub.f32 %v4404, %v4707
    %v4709 = vand.u32 %v4708, 4294901760
    %4710 = vmatpush1.msra.mxu0 %v4709
    %4711 = vmatprep.subr.mxu0 0.0
    %4712 = vmatpush1.msra.mxu0 0.0
    %4713 = vmatprep.subr.mxu0 0.0
    %4714 = vmatpush1.msra.mxu0 0.0
    %4715 = vmatprep.subr.mxu0 0.0
    %4716 = vmatpush1.msra.mxu0 0.0
    %4717 = vmatprep.subr.mxu0 0.0
    %4718 = vmatpush1.msra.mxu0 0.0
    %4719 = vmatprep.subr.mxu0 0.0
    %4720 = vmatpush1.msra.mxu0 0.0
    %4721 = vmatprep.subr.mxu0 0.0
    %4722 = vmatpush1.msra.mxu0 0.0
    %4723 = vmatprep.subr.mxu0 0.0
    %4724 = vmatpush1.msra.mxu0 0.0
    %4725 = vmatprep.subr.mxu0 0.0
    %4726 = vmatpush1.msra.mxu0 0.0
    %4727 = vmatprep.subr.mxu0 0.0
    %4728 = vmatpush1.msra.mxu0 0.0
    %4729 = vmatprep.subr.mxu0 0.0
    %4730 = vmatpush1.msra.mxu0 0.0
    %4731 = vmatprep.subr.mxu0 0.0
    %4732 = vmatpush1.msra.mxu0 0.0
    %4733 = vmatprep.subr.mxu0 0.0
    %4734 = vmatpush1.msra.mxu0 0.0
    %4735 = vmatprep.subr.mxu0 0.0
    %4736 = vmatpush1.msra.mxu0 0.0
    %4737 = vmatprep.subr.mxu0 0.0
    %4738 = vmatpush1.msra.mxu0 0.0
    %4739 = vmatprep.subr.mxu0 0.0
    %4740 = vmatpush1.msra.mxu0 0.0
    %4741 = vmatprep.subr.mxu0 0.0
    %4742 = vmatpush1.msra.mxu0 0.0
    %4743 = vmatprep.subr.mxu0 0.0
    %4744 = vmatpush1.msra.mxu0 0.0
    %4745 = vmatprep.subr.mxu0 0.0
    %4746 = vmatpush1.msra.mxu0 0.0
    %4747 = vmatprep.subr.mxu0 0.0
    %4748 = vmatpush1.msra.mxu0 0.0
    %4749 = vmatprep.subr.mxu0 0.0
    %4750 = vmatpush1.msra.mxu0 0.0
    %4751 = vmatprep.subr.mxu0 0.0
    %4752 = vmatpush1.msra.mxu0 0.0
    %4753 = vmatprep.subr.mxu0 0.0
    %4754 = vmatpush1.msra.mxu0 0.0
    %4755 = vmatprep.subr.mxu0 0.0
    %4756 = vmatpush1.msra.mxu0 0.0
    %4757 = vmatprep.subr.mxu0 0.0
    %4758 = vmatpush1.msra.mxu0 0.0
    %4759 = vmatprep.subr.mxu0 0.0
    %4760 = vmatpush1.msra.mxu0 0.0
    %4761 = vmatprep.subr.mxu0 0.0
    %4762 = vmatpush1.msra.mxu0 0.0
    %4763 = vmatprep.subr.mxu0 0.0
    %4764 = vmatpush1.msra.mxu0 0.0
    %4765 = vmatprep.subr.mxu0 0.0
    %4766 = vmatpush1.msra.mxu0 0.0
    %4767 = vmatprep.subr.mxu0 0.0
    %4768 = vmatpush1.msra.mxu0 0.0
    %4769 = vmatprep.subr.mxu0 0.0
    %4770 = vmatpush1.msra.mxu0 0.0
    %4771 = vmatprep.subr.mxu0 0.0
    %4772 = vmatpush1.msra.mxu0 0.0
    %4773 = vmatprep.mubr.f32.mxu0 0.0
    %v4774 = vand.u32 %v4401, 4294901760
    %4775 = vmatmul.mubr.f32.gmra.mrb[0].mxu0 %v4774
    %v4776 = vpop.f32.mrb[0].mxu0
    %v4777 = vadd.f32 %v4703, %v4776
    %v4778 = vpop.f32.mrb[0].mxu0
    %4779 = vdwg.mxu0
    %4780 = vmatprep.subr.mxu0 0.0
    %v4781 = vand.u32 %v4404, 4294901760
    %4782 = vmatpush1.msra.mxu0 %v4781
    %4783 = vmatprep.subr.mxu0 0.0
    %4784 = vmatpush1.msra.mxu0 0.0
    %4785 = vmatprep.subr.mxu0 0.0
    %4786 = vmatpush1.msra.mxu0 0.0
    %4787 = vmatprep.subr.mxu0 0.0
    %4788 = vmatpush1.msra.mxu0 0.0
    %4789 = vmatprep.subr.mxu0 0.0
    %4790 = vmatpush1.msra.mxu0 0.0
    %4791 = vmatprep.subr.mxu0 0.0
    %4792 = vmatpush1.msra.mxu0 0.0
    %4793 = vmatprep.subr.mxu0 0.0
    %4794 = vmatpush1.msra.mxu0 0.0
    %4795 = vmatprep.subr.mxu0 0.0
    %4796 = vmatpush1.msra.mxu0 0.0
    %4797 = vmatprep.subr.mxu0 0.0
    %4798 = vmatpush1.msra.mxu0 0.0
    %4799 = vmatprep.subr.mxu0 0.0
    %4800 = vmatpush1.msra.mxu0 0.0
    %4801 = vmatprep.subr.mxu0 0.0
    %4802 = vmatpush1.msra.mxu0 0.0
    %4803 = vmatprep.subr.mxu0 0.0
    %4804 = vmatpush1.msra.mxu0 0.0
    %4805 = vmatprep.subr.mxu0 0.0
    %4806 = vmatpush1.msra.mxu0 0.0
    %4807 = vmatprep.subr.mxu0 0.0
    %4808 = vmatpush1.msra.mxu0 0.0
    %4809 = vmatprep.subr.mxu0 0.0
    %4810 = vmatpush1.msra.mxu0 0.0
    %4811 = vmatprep.subr.mxu0 0.0
    %4812 = vmatpush1.msra.mxu0 0.0
    %4813 = vmatprep.subr.mxu0 0.0
    %4814 = vmatpush1.msra.mxu0 0.0
    %4815 = vmatprep.subr.mxu0 0.0
    %4816 = vmatpush1.msra.mxu0 0.0
    %4817 = vmatprep.subr.mxu0 0.0
    %4818 = vmatpush1.msra.mxu0 0.0
    %4819 = vmatprep.subr.mxu0 0.0
    %4820 = vmatpush1.msra.mxu0 0.0
    %4821 = vmatprep.subr.mxu0 0.0
    %4822 = vmatpush1.msra.mxu0 0.0
    %4823 = vmatprep.subr.mxu0 0.0
    %4824 = vmatpush1.msra.mxu0 0.0
    %4825 = vmatprep.subr.mxu0 0.0
    %4826 = vmatpush1.msra.mxu0 0.0
    %4827 = vmatprep.subr.mxu0 0.0
    %4828 = vmatpush1.msra.mxu0 0.0
    %4829 = vmatprep.subr.mxu0 0.0
    %4830 = vmatpush1.msra.mxu0 0.0
    %4831 = vmatprep.subr.mxu0 0.0
    %4832 = vmatpush1.msra.mxu0 0.0
    %4833 = vmatprep.subr.mxu0 0.0
    %4834 = vmatpush1.msra.mxu0 0.0
    %4835 = vmatprep.subr.mxu0 0.0
    %4836 = vmatpush1.msra.mxu0 0.0
    %4837 = vmatprep.subr.mxu0 0.0
    %4838 = vmatpush1.msra.mxu0 0.0
    %4839 = vmatprep.subr.mxu0 0.0
    %4840 = vmatpush1.msra.mxu0 0.0
    %4841 = vmatprep.subr.mxu0 0.0
    %4842 = vmatpush1.msra.mxu0 0.0
    %4843 = vmatprep.subr.mxu0 0.0
    %4844 = vmatpush1.msra.mxu0 0.0
    %4845 = vmatprep.mubr.f32.mxu0 0.0
    %v4846 = vand.u32 %v4401, 4294901760
    %4847 = vmatmul.mubr.f32.gmra.mrb[0].mxu0 %v4846
    %v4848 = vpop.f32.mrb[0].mxu0
    %v4849 = vadd.f32 %v4777, %v4848
    %v4850 = vpop.f32.mrb[0].mxu0
    %4851 = vdwg.mxu0
    %v4853 = vlaneseq
    %v4854 = vshrl.u32 %v4853, 7
    %v4855 = vsub.s32 0, %v4854
    %v4856 = vrot.slane %v3922, %v4855
    %v4858 = vadd.f32 %v4849, %v4856
    %v4859 = vmax.f32 %v4858, 0.0
    %4861 = vrot.lane.b32.xlu0 %v3941, 32
    %v4862 = vpop.permute.xlu0 %4861
    %v4863 = vsel %vm535, %v4862, 0
    %4865 = vmatprep.subr.mxu0 0.0
    %v4866 = vand.u32 %v3924, 4294901760
    %4867 = vmatpush1.msra.mxu0 %v4866
    %4868 = vmatprep.subr.mxu0 0.0
    %v4869 = vand.u32 %v3925, 4294901760
    %4870 = vmatpush1.msra.mxu0 %v4869
    %4871 = vmatprep.subr.mxu0 0.0
    %v4872 = vand.u32 %v3926, 4294901760
    %4873 = vmatpush1.msra.mxu0 %v4872
    %4874 = vmatprep.subr.mxu0 0.0
    %v4875 = vand.u32 %v3927, 4294901760
    %4876 = vmatpush1.msra.mxu0 %v4875
    %4877 = vmatprep.subr.mxu0 0.0
    %4878 = vmatpush1.msra.mxu0 0.0
    %4879 = vmatprep.subr.mxu0 0.0
    %4880 = vmatpush1.msra.mxu0 0.0
    %4881 = vmatprep.subr.mxu0 0.0
    %4882 = vmatpush1.msra.mxu0 0.0
    %4883 = vmatprep.subr.mxu0 0.0
    %4884 = vmatpush1.msra.mxu0 0.0
    %4885 = vmatprep.subr.mxu0 0.0
    %4886 = vmatpush1.msra.mxu0 0.0
    %4887 = vmatprep.subr.mxu0 0.0
    %4888 = vmatpush1.msra.mxu0 0.0
    %4889 = vmatprep.subr.mxu0 0.0
    %4890 = vmatpush1.msra.mxu0 0.0
    %4891 = vmatprep.subr.mxu0 0.0
    %4892 = vmatpush1.msra.mxu0 0.0
    %4893 = vmatprep.subr.mxu0 0.0
    %4894 = vmatpush1.msra.mxu0 0.0
    %4895 = vmatprep.subr.mxu0 0.0
    %4896 = vmatpush1.msra.mxu0 0.0
    %4897 = vmatprep.subr.mxu0 0.0
    %4898 = vmatpush1.msra.mxu0 0.0
    %4899 = vmatprep.subr.mxu0 0.0
    %4900 = vmatpush1.msra.mxu0 0.0
    %4901 = vmatprep.subr.mxu0 0.0
    %4902 = vmatpush1.msra.mxu0 0.0
    %4903 = vmatprep.subr.mxu0 0.0
    %4904 = vmatpush1.msra.mxu0 0.0
    %4905 = vmatprep.subr.mxu0 0.0
    %4906 = vmatpush1.msra.mxu0 0.0
    %4907 = vmatprep.subr.mxu0 0.0
    %4908 = vmatpush1.msra.mxu0 0.0
    %4909 = vmatprep.subr.mxu0 0.0
    %4910 = vmatpush1.msra.mxu0 0.0
    %4911 = vmatprep.subr.mxu0 0.0
    %4912 = vmatpush1.msra.mxu0 0.0
    %4913 = vmatprep.subr.mxu0 0.0
    %4914 = vmatpush1.msra.mxu0 0.0
    %4915 = vmatprep.subr.mxu0 0.0
    %4916 = vmatpush1.msra.mxu0 0.0
    %4917 = vmatprep.subr.mxu0 0.0
    %4918 = vmatpush1.msra.mxu0 0.0
    %4919 = vmatprep.subr.mxu0 0.0
    %4920 = vmatpush1.msra.mxu0 0.0
    %4921 = vmatprep.subr.mxu0 0.0
    %4922 = vmatpush1.msra.mxu0 0.0
    %4923 = vmatprep.subr.mxu0 0.0
    %4924 = vmatpush1.msra.mxu0 0.0
    %4925 = vmatprep.subr.mxu0 0.0
    %4926 = vmatpush1.msra.mxu0 0.0
    %4927 = vmatprep.subr.mxu0 0.0
    %4928 = vmatpush1.msra.mxu0 0.0
    %4929 = vmatprep.subr.mxu0 0.0
    %4930 = vmatpush1.msra.mxu0 0.0
    %4931 = vmatprep.subr.mxu0 0.0
    %4932 = vmatpush1.msra.mxu0 0.0
    %4933 = vmatprep.mubr.f32.mxu0 0.0
    %v4934 = vand.u32 %v4863, 4294901760
    %v4935 = vsub.f32 %v4863, %v4934
    %v4936 = vand.u32 %v4935, 4294901760
    %v4937 = vsub.f32 %v4935, %v4936
    %v4938 = vand.u32 %v4937, 4294901760
    %4939 = vmatmul.mubr.f32.gmra.mrb[0].mxu0 %v4938
    %v4940 = vpop.f32.mrb[0].mxu0
    %v4941 = vadd.f32 0.0, %v4940
    %v4942 = vpop.f32.mrb[0].mxu0
    %4943 = vdwg.mxu0
    %4944 = vmatprep.subr.mxu0 0.0
    %v4945 = vand.u32 %v3924, 4294901760
    %v4946 = vsub.f32 %v3924, %v4945
    %v4947 = vand.u32 %v4946, 4294901760
    %v4948 = vsub.f32 %v4946, %v4947
    %v4949 = vand.u32 %v4948, 4294901760
    %4950 = vmatpush1.msra.mxu0 %v4949
    %4951 = vmatprep.subr.mxu0 0.0
    %v4952 = vand.u32 %v3925, 4294901760
    %v4953 = vsub.f32 %v3925, %v4952
    %v4954 = vand.u32 %v4953, 4294901760
    %v4955 = vsub.f32 %v4953, %v4954
    %v4956 = vand.u32 %v4955, 4294901760
    %4957 = vmatpush1.msra.mxu0 %v4956
    %4958 = vmatprep.subr.mxu0 0.0
    %v4959 = vand.u32 %v3926, 4294901760
    %v4960 = vsub.f32 %v3926, %v4959
    %v4961 = vand.u32 %v4960, 4294901760
    %v4962 = vsub.f32 %v4960, %v4961
    %v4963 = vand.u32 %v4962, 4294901760
    %4964 = vmatpush1.msra.mxu0 %v4963
    %4965 = vmatprep.subr.mxu0 0.0
    %v4966 = vand.u32 %v3927, 4294901760
    %v4967 = vsub.f32 %v3927, %v4966
    %v4968 = vand.u32 %v4967, 4294901760
    %v4969 = vsub.f32 %v4967, %v4968
    %v4970 = vand.u32 %v4969, 4294901760
    %4971 = vmatpush1.msra.mxu0 %v4970
    %4972 = vmatprep.subr.mxu0 0.0
    %4973 = vmatpush1.msra.mxu0 0.0
    %4974 = vmatprep.subr.mxu0 0.0
    %4975 = vmatpush1.msra.mxu0 0.0
    %4976 = vmatprep.subr.mxu0 0.0
    %4977 = vmatpush1.msra.mxu0 0.0
    %4978 = vmatprep.subr.mxu0 0.0
    %4979 = vmatpush1.msra.mxu0 0.0
    %4980 = vmatprep.subr.mxu0 0.0
    %4981 = vmatpush1.msra.mxu0 0.0
    %4982 = vmatprep.subr.mxu0 0.0
    %4983 = vmatpush1.msra.mxu0 0.0
    %4984 = vmatprep.subr.mxu0 0.0
    %4985 = vmatpush1.msra.mxu0 0.0
    %4986 = vmatprep.subr.mxu0 0.0
    %4987 = vmatpush1.msra.mxu0 0.0
    %4988 = vmatprep.subr.mxu0 0.0
    %4989 = vmatpush1.msra.mxu0 0.0
    %4990 = vmatprep.subr.mxu0 0.0
    %4991 = vmatpush1.msra.mxu0 0.0
    %4992 = vmatprep.subr.mxu0 0.0
    %4993 = vmatpush1.msra.mxu0 0.0
    %4994 = vmatprep.subr.mxu0 0.0
    %4995 = vmatpush1.msra.mxu0 0.0
    %4996 = vmatprep.subr.mxu0 0.0
    %4997 = vmatpush1.msra.mxu0 0.0
    %4998 = vmatprep.subr.mxu0 0.0
    %4999 = vmatpush1.msra.mxu0 0.0
    %5000 = vmatprep.subr.mxu0 0.0
    %5001 = vmatpush1.msra.mxu0 0.0
    %5002 = vmatprep.subr.mxu0 0.0
    %5003 = vmatpush1.msra.mxu0 0.0
    %5004 = vmatprep.subr.mxu0 0.0
    %5005 = vmatpush1.msra.mxu0 0.0
    %5006 = vmatprep.subr.mxu0 0.0
    %5007 = vmatpush1.msra.mxu0 0.0
    %5008 = vmatprep.subr.mxu0 0.0
    %5009 = vmatpush1.msra.mxu0 0.0
    %5010 = vmatprep.subr.mxu0 0.0
    %5011 = vmatpush1.msra.mxu0 0.0
    %5012 = vmatprep.subr.mxu0 0.0
    %5013 = vmatpush1.msra.mxu0 0.0
    %5014 = vmatprep.subr.mxu0 0.0
    %5015 = vmatpush1.msra.mxu0 0.0
    %5016 = vmatprep.subr.mxu0 0.0
    %5017 = vmatpush1.msra.mxu0 0.0
    %5018 = vmatprep.subr.mxu0 0.0
    %5019 = vmatpush1.msra.mxu0 0.0
    %5020 = vmatprep.subr.mxu0 0.0
    %5021 = vmatpush1.msra.mxu0 0.0
    %5022 = vmatprep.subr.mxu0 0.0
    %5023 = vmatpush1.msra.mxu0 0.0
    %5024 = vmatprep.subr.mxu0 0.0
    %5025 = vmatpush1.msra.mxu0 0.0
    %5026 = vmatprep.subr.mxu0 0.0
    %5027 = vmatpush1.msra.mxu0 0.0
    %5028 = vmatprep.mubr.f32.mxu0 0.0
    %v5029 = vand.u32 %v4863, 4294901760
    %5030 = vmatmul.mubr.f32.gmra.mrb[0].mxu0 %v5029
    %v5031 = vpop.f32.mrb[0].mxu0
    %v5032 = vadd.f32 %v4941, %v5031
    %v5033 = vpop.f32.mrb[0].mxu0
    %5034 = vdwg.mxu0
    %5035 = vmatprep.subr.mxu0 0.0
    %v5036 = vand.u32 %v3924, 4294901760
    %v5037 = vsub.f32 %v3924, %v5036
    %5038 = vmatpush1.msra.mxu0 %v5037
    %5039 = vmatprep.subr.mxu0 0.0
    %v5040 = vand.u32 %v3925, 4294901760
    %v5041 = vsub.f32 %v3925, %v5040
    %5042 = vmatpush1.msra.mxu0 %v5041
    %5043 = vmatprep.subr.mxu0 0.0
    %v5044 = vand.u32 %v3926, 4294901760
    %v5045 = vsub.f32 %v3926, %v5044
    %5046 = vmatpush1.msra.mxu0 %v5045
    %5047 = vmatprep.subr.mxu0 0.0
    %v5048 = vand.u32 %v3927, 4294901760
    %v5049 = vsub.f32 %v3927, %v5048
    %5050 = vmatpush1.msra.mxu0 %v5049
    %5051 = vmatprep.subr.mxu0 0.0
    %5052 = vmatpush1.msra.mxu0 0.0
    %5053 = vmatprep.subr.mxu0 0.0
    %5054 = vmatpush1.msra.mxu0 0.0
    %5055 = vmatprep.subr.mxu0 0.0
    %5056 = vmatpush1.msra.mxu0 0.0
    %5057 = vmatprep.subr.mxu0 0.0
    %5058 = vmatpush1.msra.mxu0 0.0
    %5059 = vmatprep.subr.mxu0 0.0
    %5060 = vmatpush1.msra.mxu0 0.0
    %5061 = vmatprep.subr.mxu0 0.0
    %5062 = vmatpush1.msra.mxu0 0.0
    %5063 = vmatprep.subr.mxu0 0.0
    %5064 = vmatpush1.msra.mxu0 0.0
    %5065 = vmatprep.subr.mxu0 0.0
    %5066 = vmatpush1.msra.mxu0 0.0
    %5067 = vmatprep.subr.mxu0 0.0
    %5068 = vmatpush1.msra.mxu0 0.0
    %5069 = vmatprep.subr.mxu0 0.0
    %5070 = vmatpush1.msra.mxu0 0.0
    %5071 = vmatprep.subr.mxu0 0.0
    %5072 = vmatpush1.msra.mxu0 0.0
    %5073 = vmatprep.subr.mxu0 0.0
    %5074 = vmatpush1.msra.mxu0 0.0
    %5075 = vmatprep.subr.mxu0 0.0
    %5076 = vmatpush1.msra.mxu0 0.0
    %5077 = vmatprep.subr.mxu0 0.0
    %5078 = vmatpush1.msra.mxu0 0.0
    %5079 = vmatprep.subr.mxu0 0.0
    %5080 = vmatpush1.msra.mxu0 0.0
    %5081 = vmatprep.subr.mxu0 0.0
    %5082 = vmatpush1.msra.mxu0 0.0
    %5083 = vmatprep.subr.mxu0 0.0
    %5084 = vmatpush1.msra.mxu0 0.0
    %5085 = vmatprep.subr.mxu0 0.0
    %5086 = vmatpush1.msra.mxu0 0.0
    %5087 = vmatprep.subr.mxu0 0.0
    %5088 = vmatpush1.msra.mxu0 0.0
    %5089 = vmatprep.subr.mxu0 0.0
    %5090 = vmatpush1.msra.mxu0 0.0
    %5091 = vmatprep.subr.mxu0 0.0
    %5092 = vmatpush1.msra.mxu0 0.0
    %5093 = vmatprep.subr.mxu0 0.0
    %5094 = vmatpush1.msra.mxu0 0.0
    %5095 = vmatprep.subr.mxu0 0.0
    %5096 = vmatpush1.msra.mxu0 0.0
    %5097 = vmatprep.subr.mxu0 0.0
    %5098 = vmatpush1.msra.mxu0 0.0
    %5099 = vmatprep.subr.mxu0 0.0
    %5100 = vmatpush1.msra.mxu0 0.0
    %5101 = vmatprep.subr.mxu0 0.0
    %5102 = vmatpush1.msra.mxu0 0.0
    %5103 = vmatprep.subr.mxu0 0.0
    %5104 = vmatpush1.msra.mxu0 0.0
    %5105 = vmatprep.subr.mxu0 0.0
    %5106 = vmatpush1.msra.mxu0 0.0
    %5107 = vmatprep.mubr.f32.mxu0 0.0
    %v5108 = vand.u32 %v4863, 4294901760
    %v5109 = vsub.f32 %v4863, %v5108
    %5110 = vmatmul.mubr.f32.gmra.mrb[0].mxu0 %v5109
    %v5111 = vpop.f32.mrb[0].mxu0
    %v5112 = vadd.f32 %v5032, %v5111
    %v5113 = vpop.f32.mrb[0].mxu0
    %5114 = vdwg.mxu0
    %5115 = vmatprep.subr.mxu0 0.0
    %v5116 = vand.u32 %v3924, 4294901760
    %5117 = vmatpush1.msra.mxu0 %v5116
    %5118 = vmatprep.subr.mxu0 0.0
    %v5119 = vand.u32 %v3925, 4294901760
    %5120 = vmatpush1.msra.mxu0 %v5119
    %5121 = vmatprep.subr.mxu0 0.0
    %v5122 = vand.u32 %v3926, 4294901760
    %5123 = vmatpush1.msra.mxu0 %v5122
    %5124 = vmatprep.subr.mxu0 0.0
    %v5125 = vand.u32 %v3927, 4294901760
    %5126 = vmatpush1.msra.mxu0 %v5125
    %5127 = vmatprep.subr.mxu0 0.0
    %5128 = vmatpush1.msra.mxu0 0.0
    %5129 = vmatprep.subr.mxu0 0.0
    %5130 = vmatpush1.msra.mxu0 0.0
    %5131 = vmatprep.subr.mxu0 0.0
    %5132 = vmatpush1.msra.mxu0 0.0
    %5133 = vmatprep.subr.mxu0 0.0
    %5134 = vmatpush1.msra.mxu0 0.0
    %5135 = vmatprep.subr.mxu0 0.0
    %5136 = vmatpush1.msra.mxu0 0.0
    %5137 = vmatprep.subr.mxu0 0.0
    %5138 = vmatpush1.msra.mxu0 0.0
    %5139 = vmatprep.subr.mxu0 0.0
    %5140 = vmatpush1.msra.mxu0 0.0
    %5141 = vmatprep.subr.mxu0 0.0
    %5142 = vmatpush1.msra.mxu0 0.0
    %5143 = vmatprep.subr.mxu0 0.0
    %5144 = vmatpush1.msra.mxu0 0.0
    %5145 = vmatprep.subr.mxu0 0.0
    %5146 = vmatpush1.msra.mxu0 0.0
    %5147 = vmatprep.subr.mxu0 0.0
    %5148 = vmatpush1.msra.mxu0 0.0
    %5149 = vmatprep.subr.mxu0 0.0
    %5150 = vmatpush1.msra.mxu0 0.0
    %5151 = vmatprep.subr.mxu0 0.0
    %5152 = vmatpush1.msra.mxu0 0.0
    %5153 = vmatprep.subr.mxu0 0.0
    %5154 = vmatpush1.msra.mxu0 0.0
    %5155 = vmatprep.subr.mxu0 0.0
    %5156 = vmatpush1.msra.mxu0 0.0
    %5157 = vmatprep.subr.mxu0 0.0
    %5158 = vmatpush1.msra.mxu0 0.0
    %5159 = vmatprep.subr.mxu0 0.0
    %5160 = vmatpush1.msra.mxu0 0.0
    %5161 = vmatprep.subr.mxu0 0.0
    %5162 = vmatpush1.msra.mxu0 0.0
    %5163 = vmatprep.subr.mxu0 0.0
    %5164 = vmatpush1.msra.mxu0 0.0
    %5165 = vmatprep.subr.mxu0 0.0
    %5166 = vmatpush1.msra.mxu0 0.0
    %5167 = vmatprep.subr.mxu0 0.0
    %5168 = vmatpush1.msra.mxu0 0.0
    %5169 = vmatprep.subr.mxu0 0.0
    %5170 = vmatpush1.msra.mxu0 0.0
    %5171 = vmatprep.subr.mxu0 0.0
    %5172 = vmatpush1.msra.mxu0 0.0
    %5173 = vmatprep.subr.mxu0 0.0
    %5174 = vmatpush1.msra.mxu0 0.0
    %5175 = vmatprep.subr.mxu0 0.0
    %5176 = vmatpush1.msra.mxu0 0.0
    %5177 = vmatprep.subr.mxu0 0.0
    %5178 = vmatpush1.msra.mxu0 0.0
    %5179 = vmatprep.subr.mxu0 0.0
    %5180 = vmatpush1.msra.mxu0 0.0
    %5181 = vmatprep.subr.mxu0 0.0
    %5182 = vmatpush1.msra.mxu0 0.0
    %5183 = vmatprep.mubr.f32.mxu0 0.0
    %v5184 = vand.u32 %v4863, 4294901760
    %v5185 = vsub.f32 %v4863, %v5184
    %v5186 = vand.u32 %v5185, 4294901760
    %5187 = vmatmul.mubr.f32.gmra.mrb[0].mxu0 %v5186
    %v5188 = vpop.f32.mrb[0].mxu0
    %v5189 = vadd.f32 %v5112, %v5188
    %v5190 = vpop.f32.mrb[0].mxu0
    %5191 = vdwg.mxu0
    %5192 = vmatprep.subr.mxu0 0.0
    %v5193 = vand.u32 %v3924, 4294901760
    %v5194 = vsub.f32 %v3924, %v5193
    %v5195 = vand.u32 %v5194, 4294901760
    %5196 = vmatpush1.msra.mxu0 %v5195
    %5197 = vmatprep.subr.mxu0 0.0
    %v5198 = vand.u32 %v3925, 4294901760
    %v5199 = vsub.f32 %v3925, %v5198
    %v5200 = vand.u32 %v5199, 4294901760
    %5201 = vmatpush1.msra.mxu0 %v5200
    %5202 = vmatprep.subr.mxu0 0.0
    %v5203 = vand.u32 %v3926, 4294901760
    %v5204 = vsub.f32 %v3926, %v5203
    %v5205 = vand.u32 %v5204, 4294901760
    %5206 = vmatpush1.msra.mxu0 %v5205
    %5207 = vmatprep.subr.mxu0 0.0
    %v5208 = vand.u32 %v3927, 4294901760
    %v5209 = vsub.f32 %v3927, %v5208
    %v5210 = vand.u32 %v5209, 4294901760
    %5211 = vmatpush1.msra.mxu0 %v5210
    %5212 = vmatprep.subr.mxu0 0.0
    %5213 = vmatpush1.msra.mxu0 0.0
    %5214 = vmatprep.subr.mxu0 0.0
    %5215 = vmatpush1.msra.mxu0 0.0
    %5216 = vmatprep.subr.mxu0 0.0
    %5217 = vmatpush1.msra.mxu0 0.0
    %5218 = vmatprep.subr.mxu0 0.0
    %5219 = vmatpush1.msra.mxu0 0.0
    %5220 = vmatprep.subr.mxu0 0.0
    %5221 = vmatpush1.msra.mxu0 0.0
    %5222 = vmatprep.subr.mxu0 0.0
    %5223 = vmatpush1.msra.mxu0 0.0
    %5224 = vmatprep.subr.mxu0 0.0
    %5225 = vmatpush1.msra.mxu0 0.0
    %5226 = vmatprep.subr.mxu0 0.0
    %5227 = vmatpush1.msra.mxu0 0.0
    %5228 = vmatprep.subr.mxu0 0.0
    %5229 = vmatpush1.msra.mxu0 0.0
    %5230 = vmatprep.subr.mxu0 0.0
    %5231 = vmatpush1.msra.mxu0 0.0
    %5232 = vmatprep.subr.mxu0 0.0
    %5233 = vmatpush1.msra.mxu0 0.0
    %5234 = vmatprep.subr.mxu0 0.0
    %5235 = vmatpush1.msra.mxu0 0.0
    %5236 = vmatprep.subr.mxu0 0.0
    %5237 = vmatpush1.msra.mxu0 0.0
    %5238 = vmatprep.subr.mxu0 0.0
    %5239 = vmatpush1.msra.mxu0 0.0
    %5240 = vmatprep.subr.mxu0 0.0
    %5241 = vmatpush1.msra.mxu0 0.0
    %5242 = vmatprep.subr.mxu0 0.0
    %5243 = vmatpush1.msra.mxu0 0.0
    %5244 = vmatprep.subr.mxu0 0.0
    %5245 = vmatpush1.msra.mxu0 0.0
    %5246 = vmatprep.subr.mxu0 0.0
    %5247 = vmatpush1.msra.mxu0 0.0
    %5248 = vmatprep.subr.mxu0 0.0
    %5249 = vmatpush1.msra.mxu0 0.0
    %5250 = vmatprep.subr.mxu0 0.0
    %5251 = vmatpush1.msra.mxu0 0.0
    %5252 = vmatprep.subr.mxu0 0.0
    %5253 = vmatpush1.msra.mxu0 0.0
    %5254 = vmatprep.subr.mxu0 0.0
    %5255 = vmatpush1.msra.mxu0 0.0
    %5256 = vmatprep.subr.mxu0 0.0
    %5257 = vmatpush1.msra.mxu0 0.0
    %5258 = vmatprep.subr.mxu0 0.0
    %5259 = vmatpush1.msra.mxu0 0.0
    %5260 = vmatprep.subr.mxu0 0.0
    %5261 = vmatpush1.msra.mxu0 0.0
    %5262 = vmatprep.subr.mxu0 0.0
    %5263 = vmatpush1.msra.mxu0 0.0
    %5264 = vmatprep.subr.mxu0 0.0
    %5265 = vmatpush1.msra.mxu0 0.0
    %5266 = vmatprep.subr.mxu0 0.0
    %5267 = vmatpush1.msra.mxu0 0.0
    %5268 = vmatprep.mubr.f32.mxu0 0.0
    %v5269 = vand.u32 %v4863, 4294901760
    %5270 = vmatmul.mubr.f32.gmra.mrb[0].mxu0 %v5269
    %v5271 = vpop.f32.mrb[0].mxu0
    %v5272 = vadd.f32 %v5189, %v5271
    %v5273 = vpop.f32.mrb[0].mxu0
    %5274 = vdwg.mxu0
    %5275 = vmatprep.subr.mxu0 0.0
    %v5276 = vand.u32 %v3924, 4294901760
    %5277 = vmatpush1.msra.mxu0 %v5276
    %5278 = vmatprep.subr.mxu0 0.0
    %v5279 = vand.u32 %v3925, 4294901760
    %5280 = vmatpush1.msra.mxu0 %v5279
    %5281 = vmatprep.subr.mxu0 0.0
    %v5282 = vand.u32 %v3926, 4294901760
    %5283 = vmatpush1.msra.mxu0 %v5282
    %5284 = vmatprep.subr.mxu0 0.0
    %v5285 = vand.u32 %v3927, 4294901760
    %5286 = vmatpush1.msra.mxu0 %v5285
    %5287 = vmatprep.subr.mxu0 0.0
    %5288 = vmatpush1.msra.mxu0 0.0
    %5289 = vmatprep.subr.mxu0 0.0
    %5290 = vmatpush1.msra.mxu0 0.0
    %5291 = vmatprep.subr.mxu0 0.0
    %5292 = vmatpush1.msra.mxu0 0.0
    %5293 = vmatprep.subr.mxu0 0.0
    %5294 = vmatpush1.msra.mxu0 0.0
    %5295 = vmatprep.subr.mxu0 0.0
    %5296 = vmatpush1.msra.mxu0 0.0
    %5297 = vmatprep.subr.mxu0 0.0
    %5298 = vmatpush1.msra.mxu0 0.0
    %5299 = vmatprep.subr.mxu0 0.0
    %5300 = vmatpush1.msra.mxu0 0.0
    %5301 = vmatprep.subr.mxu0 0.0
    %5302 = vmatpush1.msra.mxu0 0.0
    %5303 = vmatprep.subr.mxu0 0.0
    %5304 = vmatpush1.msra.mxu0 0.0
    %5305 = vmatprep.subr.mxu0 0.0
    %5306 = vmatpush1.msra.mxu0 0.0
    %5307 = vmatprep.subr.mxu0 0.0
    %5308 = vmatpush1.msra.mxu0 0.0
    %5309 = vmatprep.subr.mxu0 0.0
    %5310 = vmatpush1.msra.mxu0 0.0
    %5311 = vmatprep.subr.mxu0 0.0
    %5312 = vmatpush1.msra.mxu0 0.0
    %5313 = vmatprep.subr.mxu0 0.0
    %5314 = vmatpush1.msra.mxu0 0.0
    %5315 = vmatprep.subr.mxu0 0.0
    %5316 = vmatpush1.msra.mxu0 0.0
    %5317 = vmatprep.subr.mxu0 0.0
    %5318 = vmatpush1.msra.mxu0 0.0
    %5319 = vmatprep.subr.mxu0 0.0
    %5320 = vmatpush1.msra.mxu0 0.0
    %5321 = vmatprep.subr.mxu0 0.0
    %5322 = vmatpush1.msra.mxu0 0.0
    %5323 = vmatprep.subr.mxu0 0.0
    %5324 = vmatpush1.msra.mxu0 0.0
    %5325 = vmatprep.subr.mxu0 0.0
    %5326 = vmatpush1.msra.mxu0 0.0
    %5327 = vmatprep.subr.mxu0 0.0
    %5328 = vmatpush1.msra.mxu0 0.0
    %5329 = vmatprep.subr.mxu0 0.0
    %5330 = vmatpush1.msra.mxu0 0.0
    %5331 = vmatprep.subr.mxu0 0.0
    %5332 = vmatpush1.msra.mxu0 0.0
    %5333 = vmatprep.subr.mxu0 0.0
    %5334 = vmatpush1.msra.mxu0 0.0
    %5335 = vmatprep.subr.mxu0 0.0
    %5336 = vmatpush1.msra.mxu0 0.0
    %5337 = vmatprep.subr.mxu0 0.0
    %5338 = vmatpush1.msra.mxu0 0.0
    %5339 = vmatprep.subr.mxu0 0.0
    %5340 = vmatpush1.msra.mxu0 0.0
    %5341 = vmatprep.subr.mxu0 0.0
    %5342 = vmatpush1.msra.mxu0 0.0
    %5343 = vmatprep.mubr.f32.mxu0 0.0
    %v5344 = vand.u32 %v4863, 4294901760
    %5345 = vmatmul.mubr.f32.gmra.mrb[0].mxu0 %v5344
    %v5346 = vpop.f32.mrb[0].mxu0
    %v5347 = vadd.f32 %v5272, %v5346
    %v5348 = vpop.f32.mrb[0].mxu0
    %5349 = vdwg.mxu0
    %vm5350 = vcmask 15360
    %v5352 = vsel %vm5350, %v4859, 0
    %vm5354 = vcmask 1041408
    %v5356 = vsel %vm5354, %v3923, 0
    %5358 = vmatprep.subr.mxu0 0.0
    %v5359 = vand.u32 %v5356, 4294901760
    %5360 = vmatpush1.msra.mxu0 %v5359
    %5361 = vmatprep.subr.mxu0 0.0
    %5362 = vmatpush1.msra.mxu0 0.0
    %5363 = vmatprep.subr.mxu0 0.0
    %5364 = vmatpush1.msra.mxu0 0.0
    %5365 = vmatprep.subr.mxu0 0.0
    %5366 = vmatpush1.msra.mxu0 0.0
    %5367 = vmatprep.subr.mxu0 0.0
    %5368 = vmatpush1.msra.mxu0 0.0
    %5369 = vmatprep.subr.mxu0 0.0
    %5370 = vmatpush1.msra.mxu0 0.0
    %5371 = vmatprep.subr.mxu0 0.0
    %5372 = vmatpush1.msra.mxu0 0.0
    %5373 = vmatprep.subr.mxu0 0.0
    %5374 = vmatpush1.msra.mxu0 0.0
    %5375 = vmatprep.subr.mxu0 0.0
    %5376 = vmatpush1.msra.mxu0 0.0
    %5377 = vmatprep.subr.mxu0 0.0
    %5378 = vmatpush1.msra.mxu0 0.0
    %5379 = vmatprep.subr.mxu0 0.0
    %5380 = vmatpush1.msra.mxu0 0.0
    %5381 = vmatprep.subr.mxu0 0.0
    %5382 = vmatpush1.msra.mxu0 0.0
    %5383 = vmatprep.subr.mxu0 0.0
    %5384 = vmatpush1.msra.mxu0 0.0
    %5385 = vmatprep.subr.mxu0 0.0
    %5386 = vmatpush1.msra.mxu0 0.0
    %5387 = vmatprep.subr.mxu0 0.0
    %5388 = vmatpush1.msra.mxu0 0.0
    %5389 = vmatprep.subr.mxu0 0.0
    %5390 = vmatpush1.msra.mxu0 0.0
    %5391 = vmatprep.subr.mxu0 0.0
    %5392 = vmatpush1.msra.mxu0 0.0
    %5393 = vmatprep.subr.mxu0 0.0
    %5394 = vmatpush1.msra.mxu0 0.0
    %5395 = vmatprep.subr.mxu0 0.0
    %5396 = vmatpush1.msra.mxu0 0.0
    %5397 = vmatprep.subr.mxu0 0.0
    %5398 = vmatpush1.msra.mxu0 0.0
    %5399 = vmatprep.subr.mxu0 0.0
    %5400 = vmatpush1.msra.mxu0 0.0
    %5401 = vmatprep.subr.mxu0 0.0
    %5402 = vmatpush1.msra.mxu0 0.0
    %5403 = vmatprep.subr.mxu0 0.0
    %5404 = vmatpush1.msra.mxu0 0.0
    %5405 = vmatprep.subr.mxu0 0.0
    %5406 = vmatpush1.msra.mxu0 0.0
    %5407 = vmatprep.subr.mxu0 0.0
    %5408 = vmatpush1.msra.mxu0 0.0
    %5409 = vmatprep.subr.mxu0 0.0
    %5410 = vmatpush1.msra.mxu0 0.0
    %5411 = vmatprep.subr.mxu0 0.0
    %5412 = vmatpush1.msra.mxu0 0.0
    %5413 = vmatprep.subr.mxu0 0.0
    %5414 = vmatpush1.msra.mxu0 0.0
    %5415 = vmatprep.subr.mxu0 0.0
    %5416 = vmatpush1.msra.mxu0 0.0
    %5417 = vmatprep.subr.mxu0 0.0
    %5418 = vmatpush1.msra.mxu0 0.0
    %5419 = vmatprep.subr.mxu0 0.0
    %5420 = vmatpush1.msra.mxu0 0.0
    %5421 = vmatprep.subr.mxu0 0.0
    %5422 = vmatpush1.msra.mxu0 0.0
    %5423 = vmatprep.mubr.f32.mxu0 0.0
    %v5424 = vand.u32 %v5352, 4294901760
    %v5425 = vsub.f32 %v5352, %v5424
    %v5426 = vand.u32 %v5425, 4294901760
    %v5427 = vsub.f32 %v5425, %v5426
    %v5428 = vand.u32 %v5427, 4294901760
    %5429 = vmatmul.mubr.f32.gmra.mrb[0].mxu0 %v5428
    %v5430 = vpop.f32.mrb[0].mxu0
    %v5431 = vadd.f32 %v5347, %v5430
    %v5432 = vpop.f32.mrb[0].mxu0
    %5433 = vdwg.mxu0
    %5434 = vmatprep.subr.mxu0 0.0
    %v5435 = vand.u32 %v5356, 4294901760
    %v5436 = vsub.f32 %v5356, %v5435
    %v5437 = vand.u32 %v5436, 4294901760
    %v5438 = vsub.f32 %v5436, %v5437
    %v5439 = vand.u32 %v5438, 4294901760
    %5440 = vmatpush1.msra.mxu0 %v5439
    %5441 = vmatprep.subr.mxu0 0.0
    %5442 = vmatpush1.msra.mxu0 0.0
    %5443 = vmatprep.subr.mxu0 0.0
    %5444 = vmatpush1.msra.mxu0 0.0
    %5445 = vmatprep.subr.mxu0 0.0
    %5446 = vmatpush1.msra.mxu0 0.0
    %5447 = vmatprep.subr.mxu0 0.0
    %5448 = vmatpush1.msra.mxu0 0.0
    %5449 = vmatprep.subr.mxu0 0.0
    %5450 = vmatpush1.msra.mxu0 0.0
    %5451 = vmatprep.subr.mxu0 0.0
    %5452 = vmatpush1.msra.mxu0 0.0
    %5453 = vmatprep.subr.mxu0 0.0
    %5454 = vmatpush1.msra.mxu0 0.0
    %5455 = vmatprep.subr.mxu0 0.0
    %5456 = vmatpush1.msra.mxu0 0.0
    %5457 = vmatprep.subr.mxu0 0.0
    %5458 = vmatpush1.msra.mxu0 0.0
    %5459 = vmatprep.subr.mxu0 0.0
    %5460 = vmatpush1.msra.mxu0 0.0
    %5461 = vmatprep.subr.mxu0 0.0
    %5462 = vmatpush1.msra.mxu0 0.0
    %5463 = vmatprep.subr.mxu0 0.0
    %5464 = vmatpush1.msra.mxu0 0.0
    %5465 = vmatprep.subr.mxu0 0.0
    %5466 = vmatpush1.msra.mxu0 0.0
    %5467 = vmatprep.subr.mxu0 0.0
    %5468 = vmatpush1.msra.mxu0 0.0
    %5469 = vmatprep.subr.mxu0 0.0
    %5470 = vmatpush1.msra.mxu0 0.0
    %5471 = vmatprep.subr.mxu0 0.0
    %5472 = vmatpush1.msra.mxu0 0.0
    %5473 = vmatprep.subr.mxu0 0.0
    %5474 = vmatpush1.msra.mxu0 0.0
    %5475 = vmatprep.subr.mxu0 0.0
    %5476 = vmatpush1.msra.mxu0 0.0
    %5477 = vmatprep.subr.mxu0 0.0
    %5478 = vmatpush1.msra.mxu0 0.0
    %5479 = vmatprep.subr.mxu0 0.0
    %5480 = vmatpush1.msra.mxu0 0.0
    %5481 = vmatprep.subr.mxu0 0.0
    %5482 = vmatpush1.msra.mxu0 0.0
    %5483 = vmatprep.subr.mxu0 0.0
    %5484 = vmatpush1.msra.mxu0 0.0
    %5485 = vmatprep.subr.mxu0 0.0
    %5486 = vmatpush1.msra.mxu0 0.0
    %5487 = vmatprep.subr.mxu0 0.0
    %5488 = vmatpush1.msra.mxu0 0.0
    %5489 = vmatprep.subr.mxu0 0.0
    %5490 = vmatpush1.msra.mxu0 0.0
    %5491 = vmatprep.subr.mxu0 0.0
    %5492 = vmatpush1.msra.mxu0 0.0
    %5493 = vmatprep.subr.mxu0 0.0
    %5494 = vmatpush1.msra.mxu0 0.0
    %5495 = vmatprep.subr.mxu0 0.0
    %5496 = vmatpush1.msra.mxu0 0.0
    %5497 = vmatprep.subr.mxu0 0.0
    %5498 = vmatpush1.msra.mxu0 0.0
    %5499 = vmatprep.subr.mxu0 0.0
    %5500 = vmatpush1.msra.mxu0 0.0
    %5501 = vmatprep.subr.mxu0 0.0
    %5502 = vmatpush1.msra.mxu0 0.0
    %5503 = vmatprep.mubr.f32.mxu0 0.0
    %v5504 = vand.u32 %v5352, 4294901760
    %5505 = vmatmul.mubr.f32.gmra.mrb[0].mxu0 %v5504
    %v5506 = vpop.f32.mrb[0].mxu0
    %v5507 = vadd.f32 %v5431, %v5506
    %v5508 = vpop.f32.mrb[0].mxu0
    %5509 = vdwg.mxu0
    %5510 = vmatprep.subr.mxu0 0.0
    %v5511 = vand.u32 %v5356, 4294901760
    %v5512 = vsub.f32 %v5356, %v5511
    %5513 = vmatpush1.msra.mxu0 %v5512
    %5514 = vmatprep.subr.mxu0 0.0
    %5515 = vmatpush1.msra.mxu0 0.0
    %5516 = vmatprep.subr.mxu0 0.0
    %5517 = vmatpush1.msra.mxu0 0.0
    %5518 = vmatprep.subr.mxu0 0.0
    %5519 = vmatpush1.msra.mxu0 0.0
    %5520 = vmatprep.subr.mxu0 0.0
    %5521 = vmatpush1.msra.mxu0 0.0
    %5522 = vmatprep.subr.mxu0 0.0
    %5523 = vmatpush1.msra.mxu0 0.0
    %5524 = vmatprep.subr.mxu0 0.0
    %5525 = vmatpush1.msra.mxu0 0.0
    %5526 = vmatprep.subr.mxu0 0.0
    %5527 = vmatpush1.msra.mxu0 0.0
    %5528 = vmatprep.subr.mxu0 0.0
    %5529 = vmatpush1.msra.mxu0 0.0
    %5530 = vmatprep.subr.mxu0 0.0
    %5531 = vmatpush1.msra.mxu0 0.0
    %5532 = vmatprep.subr.mxu0 0.0
    %5533 = vmatpush1.msra.mxu0 0.0
    %5534 = vmatprep.subr.mxu0 0.0
    %5535 = vmatpush1.msra.mxu0 0.0
    %5536 = vmatprep.subr.mxu0 0.0
    %5537 = vmatpush1.msra.mxu0 0.0
    %5538 = vmatprep.subr.mxu0 0.0
    %5539 = vmatpush1.msra.mxu0 0.0
    %5540 = vmatprep.subr.mxu0 0.0
    %5541 = vmatpush1.msra.mxu0 0.0
    %5542 = vmatprep.subr.mxu0 0.0
    %5543 = vmatpush1.msra.mxu0 0.0
    %5544 = vmatprep.subr.mxu0 0.0
    %5545 = vmatpush1.msra.mxu0 0.0
    %5546 = vmatprep.subr.mxu0 0.0
    %5547 = vmatpush1.msra.mxu0 0.0
    %5548 = vmatprep.subr.mxu0 0.0
    %5549 = vmatpush1.msra.mxu0 0.0
    %5550 = vmatprep.subr.mxu0 0.0
    %5551 = vmatpush1.msra.mxu0 0.0
    %5552 = vmatprep.subr.mxu0 0.0
    %5553 = vmatpush1.msra.mxu0 0.0
    %5554 = vmatprep.subr.mxu0 0.0
    %5555 = vmatpush1.msra.mxu0 0.0
    %5556 = vmatprep.subr.mxu0 0.0
    %5557 = vmatpush1.msra.mxu0 0.0
    %5558 = vmatprep.subr.mxu0 0.0
    %5559 = vmatpush1.msra.mxu0 0.0
    %5560 = vmatprep.subr.mxu0 0.0
    %5561 = vmatpush1.msra.mxu0 0.0
    %5562 = vmatprep.subr.mxu0 0.0
    %5563 = vmatpush1.msra.mxu0 0.0
    %5564 = vmatprep.subr.mxu0 0.0
    %5565 = vmatpush1.msra.mxu0 0.0
    %5566 = vmatprep.subr.mxu0 0.0
    %5567 = vmatpush1.msra.mxu0 0.0
    %5568 = vmatprep.subr.mxu0 0.0
    %5569 = vmatpush1.msra.mxu0 0.0
    %5570 = vmatprep.subr.mxu0 0.0
    %5571 = vmatpush1.msra.mxu0 0.0
    %5572 = vmatprep.subr.mxu0 0.0
    %5573 = vmatpush1.msra.mxu0 0.0
    %5574 = vmatprep.subr.mxu0 0.0
    %5575 = vmatpush1.msra.mxu0 0.0
    %5576 = vmatprep.mubr.f32.mxu0 0.0
    %v5577 = vand.u32 %v5352, 4294901760
    %v5578 = vsub.f32 %v5352, %v5577
    %5579 = vmatmul.mubr.f32.gmra.mrb[0].mxu0 %v5578
    %v5580 = vpop.f32.mrb[0].mxu0
    %v5581 = vadd.f32 %v5507, %v5580
    %v5582 = vpop.f32.mrb[0].mxu0
    %5583 = vdwg.mxu0
    %5584 = vmatprep.subr.mxu0 0.0
    %v5585 = vand.u32 %v5356, 4294901760
    %5586 = vmatpush1.msra.mxu0 %v5585
    %5587 = vmatprep.subr.mxu0 0.0
    %5588 = vmatpush1.msra.mxu0 0.0
    %5589 = vmatprep.subr.mxu0 0.0
    %5590 = vmatpush1.msra.mxu0 0.0
    %5591 = vmatprep.subr.mxu0 0.0
    %5592 = vmatpush1.msra.mxu0 0.0
    %5593 = vmatprep.subr.mxu0 0.0
    %5594 = vmatpush1.msra.mxu0 0.0
    %5595 = vmatprep.subr.mxu0 0.0
    %5596 = vmatpush1.msra.mxu0 0.0
    %5597 = vmatprep.subr.mxu0 0.0
    %5598 = vmatpush1.msra.mxu0 0.0
    %5599 = vmatprep.subr.mxu0 0.0
    %5600 = vmatpush1.msra.mxu0 0.0
    %5601 = vmatprep.subr.mxu0 0.0
    %5602 = vmatpush1.msra.mxu0 0.0
    %5603 = vmatprep.subr.mxu0 0.0
    %5604 = vmatpush1.msra.mxu0 0.0
    %5605 = vmatprep.subr.mxu0 0.0
    %5606 = vmatpush1.msra.mxu0 0.0
    %5607 = vmatprep.subr.mxu0 0.0
    %5608 = vmatpush1.msra.mxu0 0.0
    %5609 = vmatprep.subr.mxu0 0.0
    %5610 = vmatpush1.msra.mxu0 0.0
    %5611 = vmatprep.subr.mxu0 0.0
    %5612 = vmatpush1.msra.mxu0 0.0
    %5613 = vmatprep.subr.mxu0 0.0
    %5614 = vmatpush1.msra.mxu0 0.0
    %5615 = vmatprep.subr.mxu0 0.0
    %5616 = vmatpush1.msra.mxu0 0.0
    %5617 = vmatprep.subr.mxu0 0.0
    %5618 = vmatpush1.msra.mxu0 0.0
    %5619 = vmatprep.subr.mxu0 0.0
    %5620 = vmatpush1.msra.mxu0 0.0
    %5621 = vmatprep.subr.mxu0 0.0
    %5622 = vmatpush1.msra.mxu0 0.0
    %5623 = vmatprep.subr.mxu0 0.0
    %5624 = vmatpush1.msra.mxu0 0.0
    %5625 = vmatprep.subr.mxu0 0.0
    %5626 = vmatpush1.msra.mxu0 0.0
    %5627 = vmatprep.subr.mxu0 0.0
    %5628 = vmatpush1.msra.mxu0 0.0
    %5629 = vmatprep.subr.mxu0 0.0
    %5630 = vmatpush1.msra.mxu0 0.0
    %5631 = vmatprep.subr.mxu0 0.0
    %5632 = vmatpush1.msra.mxu0 0.0
    %5633 = vmatprep.subr.mxu0 0.0
    %5634 = vmatpush1.msra.mxu0 0.0
    %5635 = vmatprep.subr.mxu0 0.0
    %5636 = vmatpush1.msra.mxu0 0.0
    %5637 = vmatprep.subr.mxu0 0.0
    %5638 = vmatpush1.msra.mxu0 0.0
    %5639 = vmatprep.subr.mxu0 0.0
    %5640 = vmatpush1.msra.mxu0 0.0
    %5641 = vmatprep.subr.mxu0 0.0
    %5642 = vmatpush1.msra.mxu0 0.0
    %5643 = vmatprep.subr.mxu0 0.0
    %5644 = vmatpush1.msra.mxu0 0.0
    %5645 = vmatprep.subr.mxu0 0.0
    %5646 = vmatpush1.msra.mxu0 0.0
    %5647 = vmatprep.subr.mxu0 0.0
    %5648 = vmatpush1.msra.mxu0 0.0
    %5649 = vmatprep.mubr.f32.mxu0 0.0
    %v5650 = vand.u32 %v5352, 4294901760
    %v5651 = vsub.f32 %v5352, %v5650
    %v5652 = vand.u32 %v5651, 4294901760
    %5653 = vmatmul.mubr.f32.gmra.mrb[0].mxu0 %v5652
    %v5654 = vpop.f32.mrb[0].mxu0
    %v5655 = vadd.f32 %v5581, %v5654
    %v5656 = vpop.f32.mrb[0].mxu0
    %5657 = vdwg.mxu0
    %5658 = vmatprep.subr.mxu0 0.0
    %v5659 = vand.u32 %v5356, 4294901760
    %v5660 = vsub.f32 %v5356, %v5659
    %v5661 = vand.u32 %v5660, 4294901760
    %5662 = vmatpush1.msra.mxu0 %v5661
    %5663 = vmatprep.subr.mxu0 0.0
    %5664 = vmatpush1.msra.mxu0 0.0
    %5665 = vmatprep.subr.mxu0 0.0
    %5666 = vmatpush1.msra.mxu0 0.0
    %5667 = vmatprep.subr.mxu0 0.0
    %5668 = vmatpush1.msra.mxu0 0.0
    %5669 = vmatprep.subr.mxu0 0.0
    %5670 = vmatpush1.msra.mxu0 0.0
    %5671 = vmatprep.subr.mxu0 0.0
    %5672 = vmatpush1.msra.mxu0 0.0
    %5673 = vmatprep.subr.mxu0 0.0
    %5674 = vmatpush1.msra.mxu0 0.0
    %5675 = vmatprep.subr.mxu0 0.0
    %5676 = vmatpush1.msra.mxu0 0.0
    %5677 = vmatprep.subr.mxu0 0.0
    %5678 = vmatpush1.msra.mxu0 0.0
    %5679 = vmatprep.subr.mxu0 0.0
    %5680 = vmatpush1.msra.mxu0 0.0
    %5681 = vmatprep.subr.mxu0 0.0
    %5682 = vmatpush1.msra.mxu0 0.0
    %5683 = vmatprep.subr.mxu0 0.0
    %5684 = vmatpush1.msra.mxu0 0.0
    %5685 = vmatprep.subr.mxu0 0.0
    %5686 = vmatpush1.msra.mxu0 0.0
    %5687 = vmatprep.subr.mxu0 0.0
    %5688 = vmatpush1.msra.mxu0 0.0
    %5689 = vmatprep.subr.mxu0 0.0
    %5690 = vmatpush1.msra.mxu0 0.0
    %5691 = vmatprep.subr.mxu0 0.0
    %5692 = vmatpush1.msra.mxu0 0.0
    %5693 = vmatprep.subr.mxu0 0.0
    %5694 = vmatpush1.msra.mxu0 0.0
    %5695 = vmatprep.subr.mxu0 0.0
    %5696 = vmatpush1.msra.mxu0 0.0
    %5697 = vmatprep.subr.mxu0 0.0
    %5698 = vmatpush1.msra.mxu0 0.0
    %5699 = vmatprep.subr.mxu0 0.0
    %5700 = vmatpush1.msra.mxu0 0.0
    %5701 = vmatprep.subr.mxu0 0.0
    %5702 = vmatpush1.msra.mxu0 0.0
    %5703 = vmatprep.subr.mxu0 0.0
    %5704 = vmatpush1.msra.mxu0 0.0
    %5705 = vmatprep.subr.mxu0 0.0
    %5706 = vmatpush1.msra.mxu0 0.0
    %5707 = vmatprep.subr.mxu0 0.0
    %5708 = vmatpush1.msra.mxu0 0.0
    %5709 = vmatprep.subr.mxu0 0.0
    %5710 = vmatpush1.msra.mxu0 0.0
    %5711 = vmatprep.subr.mxu0 0.0
    %5712 = vmatpush1.msra.mxu0 0.0
    %5713 = vmatprep.subr.mxu0 0.0
    %5714 = vmatpush1.msra.mxu0 0.0
    %5715 = vmatprep.subr.mxu0 0.0
    %5716 = vmatpush1.msra.mxu0 0.0
    %5717 = vmatprep.subr.mxu0 0.0
    %5718 = vmatpush1.msra.mxu0 0.0
    %5719 = vmatprep.subr.mxu0 0.0
    %5720 = vmatpush1.msra.mxu0 0.0
    %5721 = vmatprep.subr.mxu0 0.0
    %5722 = vmatpush1.msra.mxu0 0.0
    %5723 = vmatprep.subr.mxu0 0.0
    %5724 = vmatpush1.msra.mxu0 0.0
    %5725 = vmatprep.mubr.f32.mxu0 0.0
    %v5726 = vand.u32 %v5352, 4294901760
    %5727 = vmatmul.mubr.f32.gmra.mrb[0].mxu0 %v5726
    %v5728 = vpop.f32.mrb[0].mxu0
    %v5729 = vadd.f32 %v5655, %v5728
    %v5730 = vpop.f32.mrb[0].mxu0
    %5731 = vdwg.mxu0
    %5732 = vmatprep.subr.mxu0 0.0
    %v5733 = vand.u32 %v5356, 4294901760
    %5734 = vmatpush1.msra.mxu0 %v5733
    %5735 = vmatprep.subr.mxu0 0.0
    %5736 = vmatpush1.msra.mxu0 0.0
    %5737 = vmatprep.subr.mxu0 0.0
    %5738 = vmatpush1.msra.mxu0 0.0
    %5739 = vmatprep.subr.mxu0 0.0
    %5740 = vmatpush1.msra.mxu0 0.0
    %5741 = vmatprep.subr.mxu0 0.0
    %5742 = vmatpush1.msra.mxu0 0.0
    %5743 = vmatprep.subr.mxu0 0.0
    %5744 = vmatpush1.msra.mxu0 0.0
    %5745 = vmatprep.subr.mxu0 0.0
    %5746 = vmatpush1.msra.mxu0 0.0
    %5747 = vmatprep.subr.mxu0 0.0
    %5748 = vmatpush1.msra.mxu0 0.0
    %5749 = vmatprep.subr.mxu0 0.0
    %5750 = vmatpush1.msra.mxu0 0.0
    %5751 = vmatprep.subr.mxu0 0.0
    %5752 = vmatpush1.msra.mxu0 0.0
    %5753 = vmatprep.subr.mxu0 0.0
    %5754 = vmatpush1.msra.mxu0 0.0
    %5755 = vmatprep.subr.mxu0 0.0
    %5756 = vmatpush1.msra.mxu0 0.0
    %5757 = vmatprep.subr.mxu0 0.0
    %5758 = vmatpush1.msra.mxu0 0.0
    %5759 = vmatprep.subr.mxu0 0.0
    %5760 = vmatpush1.msra.mxu0 0.0
    %5761 = vmatprep.subr.mxu0 0.0
    %5762 = vmatpush1.msra.mxu0 0.0
    %5763 = vmatprep.subr.mxu0 0.0
    %5764 = vmatpush1.msra.mxu0 0.0
    %5765 = vmatprep.subr.mxu0 0.0
    %5766 = vmatpush1.msra.mxu0 0.0
    %5767 = vmatprep.subr.mxu0 0.0
    %5768 = vmatpush1.msra.mxu0 0.0
    %5769 = vmatprep.subr.mxu0 0.0
    %5770 = vmatpush1.msra.mxu0 0.0
    %5771 = vmatprep.subr.mxu0 0.0
    %5772 = vmatpush1.msra.mxu0 0.0
    %5773 = vmatprep.subr.mxu0 0.0
    %5774 = vmatpush1.msra.mxu0 0.0
    %5775 = vmatprep.subr.mxu0 0.0
    %5776 = vmatpush1.msra.mxu0 0.0
    %5777 = vmatprep.subr.mxu0 0.0
    %5778 = vmatpush1.msra.mxu0 0.0
    %5779 = vmatprep.subr.mxu0 0.0
    %5780 = vmatpush1.msra.mxu0 0.0
    %5781 = vmatprep.subr.mxu0 0.0
    %5782 = vmatpush1.msra.mxu0 0.0
    %5783 = vmatprep.subr.mxu0 0.0
    %5784 = vmatpush1.msra.mxu0 0.0
    %5785 = vmatprep.subr.mxu0 0.0
    %5786 = vmatpush1.msra.mxu0 0.0
    %5787 = vmatprep.subr.mxu0 0.0
    %5788 = vmatpush1.msra.mxu0 0.0
    %5789 = vmatprep.subr.mxu0 0.0
    %5790 = vmatpush1.msra.mxu0 0.0
    %5791 = vmatprep.subr.mxu0 0.0
    %5792 = vmatpush1.msra.mxu0 0.0
    %5793 = vmatprep.subr.mxu0 0.0
    %5794 = vmatpush1.msra.mxu0 0.0
    %5795 = vmatprep.subr.mxu0 0.0
    %5796 = vmatpush1.msra.mxu0 0.0
    %5797 = vmatprep.mubr.f32.mxu0 0.0
    %v5798 = vand.u32 %v5352, 4294901760
    %5799 = vmatmul.mubr.f32.gmra.mrb[0].mxu0 %v5798
    %v5800 = vpop.f32.mrb[0].mxu0
    %v5801 = vadd.f32 %v5729, %v5800
    %v5802 = vpop.f32.mrb[0].mxu0
    %5803 = vdwg.mxu0
    %v5805 = vlaneseq
    %v5806 = vshrl.u32 %v5805, 7
    %v5807 = vsub.s32 0, %v5806
    %v5808 = vrot.slane %v3928, %v5807
    %v5810 = vadd.f32 %v5801, %v5808
    %v5811 = vxor.u32 %v5810, 2147483648
    %v5812 = vmul.f32 %v5811, 1.442695
    %v5813 = vpow.pop %v5812
    %v5814 = vadd.f32 %v5813, 1.0
    %v5815 = vrcp.pop %v5814
    %v5816 = vmul.f32 1.0, %v5815
    %v5817 = vtanh.pop %v5810
    %v5818 = vmul.f32 %v5816, %v3942
    %5820 = vrot.lane.b32.xlu0 %v5817, 64
    %v5821 = vpop.permute.xlu0 %5820
    %v5823 = vmul.f32 %v5816, %v5821
    %5825 = vrot.lane.b32.xlu0 %v5823, 32
    %v5826 = vpop.permute.xlu0 %5825
    %v5828 = vadd.f32 %v5818, %v5826
    %v5829 = vtanh.pop %v5828
    %5831 = vrot.lane.b32.xlu0 %v5829, 64
    %v5832 = vpop.permute.xlu0 %5831
    %v5834 = vmul.f32 %v5816, %v5832
    %v5836 = vlaneseq
    %v5837 = vshrl.u32 %v5836, 7
    %v5838 = vsub.s32 0, %v5837
    %v5839 = vrot.slane %v3933, %v5838
    %5842 = vrot.lane.b32.xlu0 %v5834, 32
    %v5843 = vpop.permute.xlu0 %5842
    %v5844 = vsel %vm535, %v5843, 0
    %5846 = vmatprep.subr.mxu0 0.0
    %v5847 = vand.u32 %v3929, 4294901760
    %5848 = vmatpush1.msra.mxu0 %v5847
    %5849 = vmatprep.subr.mxu0 0.0
    %v5850 = vand.u32 %v3930, 4294901760
    %5851 = vmatpush1.msra.mxu0 %v5850
    %5852 = vmatprep.subr.mxu0 0.0
    %v5853 = vand.u32 %v3931, 4294901760
    %5854 = vmatpush1.msra.mxu0 %v5853
    %5855 = vmatprep.subr.mxu0 0.0
    %v5856 = vand.u32 %v3932, 4294901760
    %5857 = vmatpush1.msra.mxu0 %v5856
    %5858 = vmatprep.subr.mxu0 0.0
    %5859 = vmatpush1.msra.mxu0 0.0
    %5860 = vmatprep.subr.mxu0 0.0
    %5861 = vmatpush1.msra.mxu0 0.0
    %5862 = vmatprep.subr.mxu0 0.0
    %5863 = vmatpush1.msra.mxu0 0.0
    %5864 = vmatprep.subr.mxu0 0.0
    %5865 = vmatpush1.msra.mxu0 0.0
    %5866 = vmatprep.subr.mxu0 0.0
    %5867 = vmatpush1.msra.mxu0 0.0
    %5868 = vmatprep.subr.mxu0 0.0
    %5869 = vmatpush1.msra.mxu0 0.0
    %5870 = vmatprep.subr.mxu0 0.0
    %5871 = vmatpush1.msra.mxu0 0.0
    %5872 = vmatprep.subr.mxu0 0.0
    %5873 = vmatpush1.msra.mxu0 0.0
    %5874 = vmatprep.subr.mxu0 0.0
    %5875 = vmatpush1.msra.mxu0 0.0
    %5876 = vmatprep.subr.mxu0 0.0
    %5877 = vmatpush1.msra.mxu0 0.0
    %5878 = vmatprep.subr.mxu0 0.0
    %5879 = vmatpush1.msra.mxu0 0.0
    %5880 = vmatprep.subr.mxu0 0.0
    %5881 = vmatpush1.msra.mxu0 0.0
    %5882 = vmatprep.subr.mxu0 0.0
    %5883 = vmatpush1.msra.mxu0 0.0
    %5884 = vmatprep.subr.mxu0 0.0
    %5885 = vmatpush1.msra.mxu0 0.0
    %5886 = vmatprep.subr.mxu0 0.0
    %5887 = vmatpush1.msra.mxu0 0.0
    %5888 = vmatprep.subr.mxu0 0.0
    %5889 = vmatpush1.msra.mxu0 0.0
    %5890 = vmatprep.subr.mxu0 0.0
    %5891 = vmatpush1.msra.mxu0 0.0
    %5892 = vmatprep.subr.mxu0 0.0
    %5893 = vmatpush1.msra.mxu0 0.0
    %5894 = vmatprep.subr.mxu0 0.0
    %5895 = vmatpush1.msra.mxu0 0.0
    %5896 = vmatprep.subr.mxu0 0.0
    %5897 = vmatpush1.msra.mxu0 0.0
    %5898 = vmatprep.subr.mxu0 0.0
    %5899 = vmatpush1.msra.mxu0 0.0
    %5900 = vmatprep.subr.mxu0 0.0
    %5901 = vmatpush1.msra.mxu0 0.0
    %5902 = vmatprep.subr.mxu0 0.0
    %5903 = vmatpush1.msra.mxu0 0.0
    %5904 = vmatprep.subr.mxu0 0.0
    %5905 = vmatpush1.msra.mxu0 0.0
    %5906 = vmatprep.subr.mxu0 0.0
    %5907 = vmatpush1.msra.mxu0 0.0
    %5908 = vmatprep.subr.mxu0 0.0
    %5909 = vmatpush1.msra.mxu0 0.0
    %5910 = vmatprep.subr.mxu0 0.0
    %5911 = vmatpush1.msra.mxu0 0.0
    %5912 = vmatprep.subr.mxu0 0.0
    %5913 = vmatpush1.msra.mxu0 0.0
    %5914 = vmatprep.mubr.f32.mxu0 0.0
    %v5915 = vand.u32 %v5844, 4294901760
    %v5916 = vsub.f32 %v5844, %v5915
    %v5917 = vand.u32 %v5916, 4294901760
    %v5918 = vsub.f32 %v5916, %v5917
    %v5919 = vand.u32 %v5918, 4294901760
    %5920 = vmatmul.mubr.f32.gmra.mrb[0].mxu0 %v5919
    %v5921 = vpop.f32.mrb[0].mxu0
    %v5922 = vadd.f32 %v5839, %v5921
    %v5923 = vpop.f32.mrb[0].mxu0
    %5924 = vdwg.mxu0
    %5925 = vmatprep.subr.mxu0 0.0
    %v5926 = vand.u32 %v3929, 4294901760
    %v5927 = vsub.f32 %v3929, %v5926
    %v5928 = vand.u32 %v5927, 4294901760
    %v5929 = vsub.f32 %v5927, %v5928
    %v5930 = vand.u32 %v5929, 4294901760
    %5931 = vmatpush1.msra.mxu0 %v5930
    %5932 = vmatprep.subr.mxu0 0.0
    %v5933 = vand.u32 %v3930, 4294901760
    %v5934 = vsub.f32 %v3930, %v5933
    %v5935 = vand.u32 %v5934, 4294901760
    %v5936 = vsub.f32 %v5934, %v5935
    %v5937 = vand.u32 %v5936, 4294901760
    %5938 = vmatpush1.msra.mxu0 %v5937
    %5939 = vmatprep.subr.mxu0 0.0
    %v5940 = vand.u32 %v3931, 4294901760
    %v5941 = vsub.f32 %v3931, %v5940
    %v5942 = vand.u32 %v5941, 4294901760
    %v5943 = vsub.f32 %v5941, %v5942
    %v5944 = vand.u32 %v5943, 4294901760
    %5945 = vmatpush1.msra.mxu0 %v5944
    %5946 = vmatprep.subr.mxu0 0.0
    %v5947 = vand.u32 %v3932, 4294901760
    %v5948 = vsub.f32 %v3932, %v5947
    %v5949 = vand.u32 %v5948, 4294901760
    %v5950 = vsub.f32 %v5948, %v5949
    %v5951 = vand.u32 %v5950, 4294901760
    %5952 = vmatpush1.msra.mxu0 %v5951
    %5953 = vmatprep.subr.mxu0 0.0
    %5954 = vmatpush1.msra.mxu0 0.0
    %5955 = vmatprep.subr.mxu0 0.0
    %5956 = vmatpush1.msra.mxu0 0.0
    %5957 = vmatprep.subr.mxu0 0.0
    %5958 = vmatpush1.msra.mxu0 0.0
    %5959 = vmatprep.subr.mxu0 0.0
    %5960 = vmatpush1.msra.mxu0 0.0
    %5961 = vmatprep.subr.mxu0 0.0
    %5962 = vmatpush1.msra.mxu0 0.0
    %5963 = vmatprep.subr.mxu0 0.0
    %5964 = vmatpush1.msra.mxu0 0.0
    %5965 = vmatprep.subr.mxu0 0.0
    %5966 = vmatpush1.msra.mxu0 0.0
    %5967 = vmatprep.subr.mxu0 0.0
    %5968 = vmatpush1.msra.mxu0 0.0
    %5969 = vmatprep.subr.mxu0 0.0
    %5970 = vmatpush1.msra.mxu0 0.0
    %5971 = vmatprep.subr.mxu0 0.0
    %5972 = vmatpush1.msra.mxu0 0.0
    %5973 = vmatprep.subr.mxu0 0.0
    %5974 = vmatpush1.msra.mxu0 0.0
    %5975 = vmatprep.subr.mxu0 0.0
    %5976 = vmatpush1.msra.mxu0 0.0
    %5977 = vmatprep.subr.mxu0 0.0
    %5978 = vmatpush1.msra.mxu0 0.0
    %5979 = vmatprep.subr.mxu0 0.0
    %5980 = vmatpush1.msra.mxu0 0.0
    %5981 = vmatprep.subr.mxu0 0.0
    %5982 = vmatpush1.msra.mxu0 0.0
    %5983 = vmatprep.subr.mxu0 0.0
    %5984 = vmatpush1.msra.mxu0 0.0
    %5985 = vmatprep.subr.mxu0 0.0
    %5986 = vmatpush1.msra.mxu0 0.0
    %5987 = vmatprep.subr.mxu0 0.0
    %5988 = vmatpush1.msra.mxu0 0.0
    %5989 = vmatprep.subr.mxu0 0.0
    %5990 = vmatpush1.msra.mxu0 0.0
    %5991 = vmatprep.subr.mxu0 0.0
    %5992 = vmatpush1.msra.mxu0 0.0
    %5993 = vmatprep.subr.mxu0 0.0
    %5994 = vmatpush1.msra.mxu0 0.0
    %5995 = vmatprep.subr.mxu0 0.0
    %5996 = vmatpush1.msra.mxu0 0.0
    %5997 = vmatprep.subr.mxu0 0.0
    %5998 = vmatpush1.msra.mxu0 0.0
    %5999 = vmatprep.subr.mxu0 0.0
    %6000 = vmatpush1.msra.mxu0 0.0
    %6001 = vmatprep.subr.mxu0 0.0
    %6002 = vmatpush1.msra.mxu0 0.0
    %6003 = vmatprep.subr.mxu0 0.0
    %6004 = vmatpush1.msra.mxu0 0.0
    %6005 = vmatprep.subr.mxu0 0.0
    %6006 = vmatpush1.msra.mxu0 0.0
    %6007 = vmatprep.subr.mxu0 0.0
    %6008 = vmatpush1.msra.mxu0 0.0
    %6009 = vmatprep.mubr.f32.mxu0 0.0
    %v6010 = vand.u32 %v5844, 4294901760
    %6011 = vmatmul.mubr.f32.gmra.mrb[0].mxu0 %v6010
    %v6012 = vpop.f32.mrb[0].mxu0
    %v6013 = vadd.f32 %v5922, %v6012
    %v6014 = vpop.f32.mrb[0].mxu0
    %6015 = vdwg.mxu0
    %6016 = vmatprep.subr.mxu0 0.0
    %v6017 = vand.u32 %v3929, 4294901760
    %v6018 = vsub.f32 %v3929, %v6017
    %6019 = vmatpush1.msra.mxu0 %v6018
    %6020 = vmatprep.subr.mxu0 0.0
    %v6021 = vand.u32 %v3930, 4294901760
    %v6022 = vsub.f32 %v3930, %v6021
    %6023 = vmatpush1.msra.mxu0 %v6022
    %6024 = vmatprep.subr.mxu0 0.0
    %v6025 = vand.u32 %v3931, 4294901760
    %v6026 = vsub.f32 %v3931, %v6025
    %6027 = vmatpush1.msra.mxu0 %v6026
    %6028 = vmatprep.subr.mxu0 0.0
    %v6029 = vand.u32 %v3932, 4294901760
    %v6030 = vsub.f32 %v3932, %v6029
    %6031 = vmatpush1.msra.mxu0 %v6030
    %6032 = vmatprep.subr.mxu0 0.0
    %6033 = vmatpush1.msra.mxu0 0.0
    %6034 = vmatprep.subr.mxu0 0.0
    %6035 = vmatpush1.msra.mxu0 0.0
    %6036 = vmatprep.subr.mxu0 0.0
    %6037 = vmatpush1.msra.mxu0 0.0
    %6038 = vmatprep.subr.mxu0 0.0
    %6039 = vmatpush1.msra.mxu0 0.0
    %6040 = vmatprep.subr.mxu0 0.0
    %6041 = vmatpush1.msra.mxu0 0.0
    %6042 = vmatprep.subr.mxu0 0.0
    %6043 = vmatpush1.msra.mxu0 0.0
    %6044 = vmatprep.subr.mxu0 0.0
    %6045 = vmatpush1.msra.mxu0 0.0
    %6046 = vmatprep.subr.mxu0 0.0
    %6047 = vmatpush1.msra.mxu0 0.0
    %6048 = vmatprep.subr.mxu0 0.0
    %6049 = vmatpush1.msra.mxu0 0.0
    %6050 = vmatprep.subr.mxu0 0.0
    %6051 = vmatpush1.msra.mxu0 0.0
    %6052 = vmatprep.subr.mxu0 0.0
    %6053 = vmatpush1.msra.mxu0 0.0
    %6054 = vmatprep.subr.mxu0 0.0
    %6055 = vmatpush1.msra.mxu0 0.0
    %6056 = vmatprep.subr.mxu0 0.0
    %6057 = vmatpush1.msra.mxu0 0.0
    %6058 = vmatprep.subr.mxu0 0.0
    %6059 = vmatpush1.msra.mxu0 0.0
    %6060 = vmatprep.subr.mxu0 0.0
    %6061 = vmatpush1.msra.mxu0 0.0
    %6062 = vmatprep.subr.mxu0 0.0
    %6063 = vmatpush1.msra.mxu0 0.0
    %6064 = vmatprep.subr.mxu0 0.0
    %6065 = vmatpush1.msra.mxu0 0.0
    %6066 = vmatprep.subr.mxu0 0.0
    %6067 = vmatpush1.msra.mxu0 0.0
    %6068 = vmatprep.subr.mxu0 0.0
    %6069 = vmatpush1.msra.mxu0 0.0
    %6070 = vmatprep.subr.mxu0 0.0
    %6071 = vmatpush1.msra.mxu0 0.0
    %6072 = vmatprep.subr.mxu0 0.0
    %6073 = vmatpush1.msra.mxu0 0.0
    %6074 = vmatprep.subr.mxu0 0.0
    %6075 = vmatpush1.msra.mxu0 0.0
    %6076 = vmatprep.subr.mxu0 0.0
    %6077 = vmatpush1.msra.mxu0 0.0
    %6078 = vmatprep.subr.mxu0 0.0
    %6079 = vmatpush1.msra.mxu0 0.0
    %6080 = vmatprep.subr.mxu0 0.0
    %6081 = vmatpush1.msra.mxu0 0.0
    %6082 = vmatprep.subr.mxu0 0.0
    %6083 = vmatpush1.msra.mxu0 0.0
    %6084 = vmatprep.subr.mxu0 0.0
    %6085 = vmatpush1.msra.mxu0 0.0
    %6086 = vmatprep.subr.mxu0 0.0
    %6087 = vmatpush1.msra.mxu0 0.0
    %6088 = vmatprep.mubr.f32.mxu0 0.0
    %v6089 = vand.u32 %v5844, 4294901760
    %v6090 = vsub.f32 %v5844, %v6089
    %6091 = vmatmul.mubr.f32.gmra.mrb[0].mxu0 %v6090
    %v6092 = vpop.f32.mrb[0].mxu0
    %v6093 = vadd.f32 %v6013, %v6092
    %v6094 = vpop.f32.mrb[0].mxu0
    %6095 = vdwg.mxu0
    %6096 = vmatprep.subr.mxu0 0.0
    %v6097 = vand.u32 %v3929, 4294901760
    %6098 = vmatpush1.msra.mxu0 %v6097
    %6099 = vmatprep.subr.mxu0 0.0
    %v6100 = vand.u32 %v3930, 4294901760
    %6101 = vmatpush1.msra.mxu0 %v6100
    %6102 = vmatprep.subr.mxu0 0.0
    %v6103 = vand.u32 %v3931, 4294901760
    %6104 = vmatpush1.msra.mxu0 %v6103
    %6105 = vmatprep.subr.mxu0 0.0
    %v6106 = vand.u32 %v3932, 4294901760
    %6107 = vmatpush1.msra.mxu0 %v6106
    %6108 = vmatprep.subr.mxu0 0.0
    %6109 = vmatpush1.msra.mxu0 0.0
    %6110 = vmatprep.subr.mxu0 0.0
    %6111 = vmatpush1.msra.mxu0 0.0
    %6112 = vmatprep.subr.mxu0 0.0
    %6113 = vmatpush1.msra.mxu0 0.0
    %6114 = vmatprep.subr.mxu0 0.0
    %6115 = vmatpush1.msra.mxu0 0.0
    %6116 = vmatprep.subr.mxu0 0.0
    %6117 = vmatpush1.msra.mxu0 0.0
    %6118 = vmatprep.subr.mxu0 0.0
    %6119 = vmatpush1.msra.mxu0 0.0
    %6120 = vmatprep.subr.mxu0 0.0
    %6121 = vmatpush1.msra.mxu0 0.0
    %6122 = vmatprep.subr.mxu0 0.0
    %6123 = vmatpush1.msra.mxu0 0.0
    %6124 = vmatprep.subr.mxu0 0.0
    %6125 = vmatpush1.msra.mxu0 0.0
    %6126 = vmatprep.subr.mxu0 0.0
    %6127 = vmatpush1.msra.mxu0 0.0
    %6128 = vmatprep.subr.mxu0 0.0
    %6129 = vmatpush1.msra.mxu0 0.0
    %6130 = vmatprep.subr.mxu0 0.0
    %6131 = vmatpush1.msra.mxu0 0.0
    %6132 = vmatprep.subr.mxu0 0.0
    %6133 = vmatpush1.msra.mxu0 0.0
    %6134 = vmatprep.subr.mxu0 0.0
    %6135 = vmatpush1.msra.mxu0 0.0
    %6136 = vmatprep.subr.mxu0 0.0
    %6137 = vmatpush1.msra.mxu0 0.0
    %6138 = vmatprep.subr.mxu0 0.0
    %6139 = vmatpush1.msra.mxu0 0.0
    %6140 = vmatprep.subr.mxu0 0.0
    %6141 = vmatpush1.msra.mxu0 0.0
    %6142 = vmatprep.subr.mxu0 0.0
    %6143 = vmatpush1.msra.mxu0 0.0
    %6144 = vmatprep.subr.mxu0 0.0
    %6145 = vmatpush1.msra.mxu0 0.0
    %6146 = vmatprep.subr.mxu0 0.0
    %6147 = vmatpush1.msra.mxu0 0.0
    %6148 = vmatprep.subr.mxu0 0.0
    %6149 = vmatpush1.msra.mxu0 0.0
    %6150 = vmatprep.subr.mxu0 0.0
    %6151 = vmatpush1.msra.mxu0 0.0
    %6152 = vmatprep.subr.mxu0 0.0
    %6153 = vmatpush1.msra.mxu0 0.0
    %6154 = vmatprep.subr.mxu0 0.0
    %6155 = vmatpush1.msra.mxu0 0.0
    %6156 = vmatprep.subr.mxu0 0.0
    %6157 = vmatpush1.msra.mxu0 0.0
    %6158 = vmatprep.subr.mxu0 0.0
    %6159 = vmatpush1.msra.mxu0 0.0
    %6160 = vmatprep.subr.mxu0 0.0
    %6161 = vmatpush1.msra.mxu0 0.0
    %6162 = vmatprep.subr.mxu0 0.0
    %6163 = vmatpush1.msra.mxu0 0.0
    %6164 = vmatprep.mubr.f32.mxu0 0.0
    %v6165 = vand.u32 %v5844, 4294901760
    %v6166 = vsub.f32 %v5844, %v6165
    %v6167 = vand.u32 %v6166, 4294901760
    %6168 = vmatmul.mubr.f32.gmra.mrb[0].mxu0 %v6167
    %v6169 = vpop.f32.mrb[0].mxu0
    %v6170 = vadd.f32 %v6093, %v6169
    %v6171 = vpop.f32.mrb[0].mxu0
    %6172 = vdwg.mxu0
    %6173 = vmatprep.subr.mxu0 0.0
    %v6174 = vand.u32 %v3929, 4294901760
    %v6175 = vsub.f32 %v3929, %v6174
    %v6176 = vand.u32 %v6175, 4294901760
    %6177 = vmatpush1.msra.mxu0 %v6176
    %6178 = vmatprep.subr.mxu0 0.0
    %v6179 = vand.u32 %v3930, 4294901760
    %v6180 = vsub.f32 %v3930, %v6179
    %v6181 = vand.u32 %v6180, 4294901760
    %6182 = vmatpush1.msra.mxu0 %v6181
    %6183 = vmatprep.subr.mxu0 0.0
    %v6184 = vand.u32 %v3931, 4294901760
    %v6185 = vsub.f32 %v3931, %v6184
    %v6186 = vand.u32 %v6185, 4294901760
    %6187 = vmatpush1.msra.mxu0 %v6186
    %6188 = vmatprep.subr.mxu0 0.0
    %v6189 = vand.u32 %v3932, 4294901760
    %v6190 = vsub.f32 %v3932, %v6189
    %v6191 = vand.u32 %v6190, 4294901760
    %6192 = vmatpush1.msra.mxu0 %v6191
    %6193 = vmatprep.subr.mxu0 0.0
    %6194 = vmatpush1.msra.mxu0 0.0
    %6195 = vmatprep.subr.mxu0 0.0
    %6196 = vmatpush1.msra.mxu0 0.0
    %6197 = vmatprep.subr.mxu0 0.0
    %6198 = vmatpush1.msra.mxu0 0.0
    %6199 = vmatprep.subr.mxu0 0.0
    %6200 = vmatpush1.msra.mxu0 0.0
    %6201 = vmatprep.subr.mxu0 0.0
    %6202 = vmatpush1.msra.mxu0 0.0
    %6203 = vmatprep.subr.mxu0 0.0
    %6204 = vmatpush1.msra.mxu0 0.0
    %6205 = vmatprep.subr.mxu0 0.0
    %6206 = vmatpush1.msra.mxu0 0.0
    %6207 = vmatprep.subr.mxu0 0.0
    %6208 = vmatpush1.msra.mxu0 0.0
    %6209 = vmatprep.subr.mxu0 0.0
    %6210 = vmatpush1.msra.mxu0 0.0
    %6211 = vmatprep.subr.mxu0 0.0
    %6212 = vmatpush1.msra.mxu0 0.0
    %6213 = vmatprep.subr.mxu0 0.0
    %6214 = vmatpush1.msra.mxu0 0.0
    %6215 = vmatprep.subr.mxu0 0.0
    %6216 = vmatpush1.msra.mxu0 0.0
    %6217 = vmatprep.subr.mxu0 0.0
    %6218 = vmatpush1.msra.mxu0 0.0
    %6219 = vmatprep.subr.mxu0 0.0
    %6220 = vmatpush1.msra.mxu0 0.0
    %6221 = vmatprep.subr.mxu0 0.0
    %6222 = vmatpush1.msra.mxu0 0.0
    %6223 = vmatprep.subr.mxu0 0.0
    %6224 = vmatpush1.msra.mxu0 0.0
    %6225 = vmatprep.subr.mxu0 0.0
    %6226 = vmatpush1.msra.mxu0 0.0
    %6227 = vmatprep.subr.mxu0 0.0
    %6228 = vmatpush1.msra.mxu0 0.0
    %6229 = vmatprep.subr.mxu0 0.0
    %6230 = vmatpush1.msra.mxu0 0.0
    %6231 = vmatprep.subr.mxu0 0.0
    %6232 = vmatpush1.msra.mxu0 0.0
    %6233 = vmatprep.subr.mxu0 0.0
    %6234 = vmatpush1.msra.mxu0 0.0
    %6235 = vmatprep.subr.mxu0 0.0
    %6236 = vmatpush1.msra.mxu0 0.0
    %6237 = vmatprep.subr.mxu0 0.0
    %6238 = vmatpush1.msra.mxu0 0.0
    %6239 = vmatprep.subr.mxu0 0.0
    %6240 = vmatpush1.msra.mxu0 0.0
    %6241 = vmatprep.subr.mxu0 0.0
    %6242 = vmatpush1.msra.mxu0 0.0
    %6243 = vmatprep.subr.mxu0 0.0
    %6244 = vmatpush1.msra.mxu0 0.0
    %6245 = vmatprep.subr.mxu0 0.0
    %6246 = vmatpush1.msra.mxu0 0.0
    %6247 = vmatprep.subr.mxu0 0.0
    %6248 = vmatpush1.msra.mxu0 0.0
    %6249 = vmatprep.mubr.f32.mxu0 0.0
    %v6250 = vand.u32 %v5844, 4294901760
    %6251 = vmatmul.mubr.f32.gmra.mrb[0].mxu0 %v6250
    %v6252 = vpop.f32.mrb[0].mxu0
    %v6253 = vadd.f32 %v6170, %v6252
    %v6254 = vpop.f32.mrb[0].mxu0
    %6255 = vdwg.mxu0
    %6256 = vmatprep.subr.mxu0 0.0
    %v6257 = vand.u32 %v3929, 4294901760
    %6258 = vmatpush1.msra.mxu0 %v6257
    %6259 = vmatprep.subr.mxu0 0.0
    %v6260 = vand.u32 %v3930, 4294901760
    %6261 = vmatpush1.msra.mxu0 %v6260
    %6262 = vmatprep.subr.mxu0 0.0
    %v6263 = vand.u32 %v3931, 4294901760
    %6264 = vmatpush1.msra.mxu0 %v6263
    %6265 = vmatprep.subr.mxu0 0.0
    %v6266 = vand.u32 %v3932, 4294901760
    %6267 = vmatpush1.msra.mxu0 %v6266
    %6268 = vmatprep.subr.mxu0 0.0
    %6269 = vmatpush1.msra.mxu0 0.0
    %6270 = vmatprep.subr.mxu0 0.0
    %6271 = vmatpush1.msra.mxu0 0.0
    %6272 = vmatprep.subr.mxu0 0.0
    %6273 = vmatpush1.msra.mxu0 0.0
    %6274 = vmatprep.subr.mxu0 0.0
    %6275 = vmatpush1.msra.mxu0 0.0
    %6276 = vmatprep.subr.mxu0 0.0
    %6277 = vmatpush1.msra.mxu0 0.0
    %6278 = vmatprep.subr.mxu0 0.0
    %6279 = vmatpush1.msra.mxu0 0.0
    %6280 = vmatprep.subr.mxu0 0.0
    %6281 = vmatpush1.msra.mxu0 0.0
    %6282 = vmatprep.subr.mxu0 0.0
    %6283 = vmatpush1.msra.mxu0 0.0
    %6284 = vmatprep.subr.mxu0 0.0
    %6285 = vmatpush1.msra.mxu0 0.0
    %6286 = vmatprep.subr.mxu0 0.0
    %6287 = vmatpush1.msra.mxu0 0.0
    %6288 = vmatprep.subr.mxu0 0.0
    %6289 = vmatpush1.msra.mxu0 0.0
    %6290 = vmatprep.subr.mxu0 0.0
    %6291 = vmatpush1.msra.mxu0 0.0
    %6292 = vmatprep.subr.mxu0 0.0
    %6293 = vmatpush1.msra.mxu0 0.0
    %6294 = vmatprep.subr.mxu0 0.0
    %6295 = vmatpush1.msra.mxu0 0.0
    %6296 = vmatprep.subr.mxu0 0.0
    %6297 = vmatpush1.msra.mxu0 0.0
    %6298 = vmatprep.subr.mxu0 0.0
    %6299 = vmatpush1.msra.mxu0 0.0
    %6300 = vmatprep.subr.mxu0 0.0
    %6301 = vmatpush1.msra.mxu0 0.0
    %6302 = vmatprep.subr.mxu0 0.0
    %6303 = vmatpush1.msra.mxu0 0.0
    %6304 = vmatprep.subr.mxu0 0.0
    %6305 = vmatpush1.msra.mxu0 0.0
    %6306 = vmatprep.subr.mxu0 0.0
    %6307 = vmatpush1.msra.mxu0 0.0
    %6308 = vmatprep.subr.mxu0 0.0
    %6309 = vmatpush1.msra.mxu0 0.0
    %6310 = vmatprep.subr.mxu0 0.0
    %6311 = vmatpush1.msra.mxu0 0.0
    %6312 = vmatprep.subr.mxu0 0.0
    %6313 = vmatpush1.msra.mxu0 0.0
    %6314 = vmatprep.subr.mxu0 0.0
    %6315 = vmatpush1.msra.mxu0 0.0
    %6316 = vmatprep.subr.mxu0 0.0
    %6317 = vmatpush1.msra.mxu0 0.0
    %6318 = vmatprep.subr.mxu0 0.0
    %6319 = vmatpush1.msra.mxu0 0.0
    %6320 = vmatprep.subr.mxu0 0.0
    %6321 = vmatpush1.msra.mxu0 0.0
    %6322 = vmatprep.subr.mxu0 0.0
    %6323 = vmatpush1.msra.mxu0 0.0
    %6324 = vmatprep.mubr.f32.mxu0 0.0
    %v6325 = vand.u32 %v5844, 4294901760
    %6326 = vmatmul.mubr.f32.gmra.mrb[0].mxu0 %v6325
    %v6327 = vpop.f32.mrb[0].mxu0
    %v6328 = vadd.f32 %v6253, %v6327
    %v6329 = vpop.f32.mrb[0].mxu0
    %6330 = vdwg.mxu0
    %s6331 = sadd.s32 %s3935, 1
    %s6332 = smul.u32 %s6331, 2
    %s6333 = scalar_lea.vmem %s17, %s6332
    %6334 = vst.msk [vmem:[%s6333] sm:$0x3] %vm3428, %v6328
  $region81: #{tpu_custom_call.1} parent=0 // loop_footer
    %s3939 = sadd.s32 1, %s3935
  $region82: #{tpu_custom_call.1} parent=0 // loop_footer_branch
    %3934 = sbr.rel target = $region78
  $region83: #{tpu_custom_call.1} parent=0 // loop_exit
    _
  // Predicated region
  $region84: #{tpu_custom_call.1} parent=0 // pred_check
    _
  $region85: #{tpu_custom_call.1} parent=0 // pred_check_branch
    %6336 = sbr.rel (0) target = $region87
  $region86: #{tpu_custom_call.1} parent=0 // pred_region
    _
  $region87: #{tpu_custom_call.1} parent=0 // pred_fallthru
    _
  // Predicated region
  $region88: #{tpu_custom_call.1} parent=0 // pred_check
    _
  $region89: #{tpu_custom_call.1} parent=0 // pred_check_branch
    %6338 = sbr.rel (0) target = $region91
  $region90: #{tpu_custom_call.1} parent=0 // pred_region
    _
  $region91: #{tpu_custom_call.1} parent=0 // pred_fallthru
    _

</llo_original>
